<compile_context>
chip_gen: v5e
topology: v5e:2x2
jax: 0.10.0
libtpu: 0.0.40
codegen_flags: <defaults>
</compile_context>

<pallas_src>
import functools

import jax
import jax.numpy as jnp
from jax.experimental import pallas as pl
from jax.experimental.pallas import tpu as pltpu

F32 = jnp.float32
FF_DIM = 2048  # nn.TransformerEncoderLayer default dim_feedforward


# ----------------------------- in-kernel helpers ---------------------------- #

def _add_layernorm(x, r, g, b):
    """LayerNorm(x + r) with eps=1e-5; g/b are (1, E)."""
    y = x + r
    mu = jnp.mean(y, axis=-1, keepdims=True)
    var = jnp.mean(jnp.square(y - mu), axis=-1, keepdims=True)
    return (y - mu) * jax.lax.rsqrt(var + 1e-5) * g + b


def _mha_core(q2d, k2d, v2d, B, Sq, Sk, num_heads, Dh, scale):
    """Multi-head scaled-dot-product attention.

    q2d: (B*Sq, E), k2d/v2d: (B*Sk, E); rows ordered (batch, seq).
    Per-head loop uses static lane slices + leading-dim reshapes only
    (no transposes inside the kernel). Returns (B*Sq, E).
    """
    outs = []
    for hd in range(num_heads):
        sl = slice(hd * Dh, (hd + 1) * Dh)
        qh = q2d[:, sl].reshape(B, Sq, Dh)
        kh = k2d[:, sl].reshape(B, Sk, Dh)
        vh = v2d[:, sl].reshape(B, Sk, Dh)
        s = jnp.einsum('bqd,bkd->bqk', qh, kh,
                       preferred_element_type=F32) * scale
        m = jnp.max(s, axis=-1, keepdims=True)
        p = jnp.exp(s - m)
        a = p * pl.reciprocal(jnp.sum(p, axis=-1, keepdims=True), approx=True)
        oh = jnp.einsum('bqk,bkd->bqd', a, vh, preferred_element_type=F32)
        outs.append(oh.reshape(B * Sq, Dh))
    return jnp.concatenate(outs, axis=-1)


# ------------------------------- Pallas kernels ----------------------------- #

def _encoder_kernel(x_ref, emb_wt_ref, emb_b_ref,
                    qkv_wt_ref, qkv_b_ref, wo_t_ref, bo_ref,
                    ln1_g_ref, ln1_b_ref,
                    w1_t_ref, b1_ref, w2_t_ref, b2_ref,
                    ln2_g_ref, ln2_b_ref,
                    o_ref, *, num_heads):
    """Whole TransformerEncoder for one stream (grid axis selects the stream)."""
    _, B, S, K = x_ref.shape
    E = emb_wt_ref.shape[2]
    L = qkv_wt_ref.shape[1]
    Dh = E // num_heads
    scale = 1.0 / (Dh ** 0.5)
    M = B * S

    # embedding linear
    x2d = x_ref[0].reshape(M, K)
    h = jnp.dot(x2d, emb_wt_ref[0], preferred_element_type=F32) + emb_b_ref[0]

    for l in range(L):
        # --- self-attention (fused QKV projection) ---
        qkv = (jnp.dot(h, qkv_wt_ref[0, l], preferred_element_type=F32)
               + qkv_b_ref[0, l])
        attn = _mha_core(qkv[:, :E], qkv[:, E:2 * E], qkv[:, 2 * E:],
                         B, S, S, num_heads, Dh, scale)
        sa = jnp.dot(attn, wo_t_ref[0, l], preferred_element_type=F32) + bo_ref[0, l]
        h = _add_layernorm(h, sa, ln1_g_ref[0, l], ln1_b_ref[0, l])

        # --- feed-forward (ReLU) ---
        ff = jnp.maximum(
            jnp.dot(h, w1_t_ref[0, l], preferred_element_type=F32) + b1_ref[0, l],
            0.0)
        ff = jnp.dot(ff, w2_t_ref[0, l], preferred_element_type=F32) + b2_ref[0, l]
        h = _add_layernorm(h, ff, ln2_g_ref[0, l], ln2_b_ref[0, l])

    o_ref[0] = h.reshape(B, S, E)


def _cross_kernel(feats_ref, q_wt_ref, q_b_ref, kv_wt_ref, kv_b_ref,
                  wo_t_ref, bo_ref, fc_wt_ref, fc_b_ref, o_ref, *, num_heads):
    """Cross-attention (q=appearance, kv=edge) + out-proj + mean over seq + fc."""
    _, B, S, E = feats_ref.shape
    Dh = E // num_heads
    scale = 1.0 / (Dh ** 0.5)
    M = B * S

    af = feats_ref[0].reshape(M, E)   # appearance features -> query
    ef = feats_ref[1].reshape(M, E)   # edge features       -> key / value

    q = jnp.dot(af, q_wt_ref[...], preferred_element_type=F32) + q_b_ref[...]
    kv = jnp.dot(ef, kv_wt_ref[...], preferred_element_type=F32) + kv_b_ref[...]

    attn = _mha_core(q, kv[:, :E], kv[:, E:], B, S, S, num_heads, Dh, scale)
    c = jnp.dot(attn, wo_t_ref[...], preferred_element_type=F32) + bo_ref[...]

    pooled = jnp.mean(c.reshape(B, S, E), axis=1)                      # (B, E)
    o_ref[...] = (jnp.dot(pooled, fc_wt_ref[...], preferred_element_type=F32)
                  + fc_b_ref[...])


# ------------------------------ kernel wrappers ------------------------------ #

def _enc_spec(arr):
    """BlockSpec selecting the encoder along the leading (grid) axis."""
    n_rest = arr.ndim - 1
    return pl.BlockSpec((1,) + arr.shape[1:],
                        lambda g, n=n_rest: (g,) + (0,) * n)


def fused_encoders(x_stacked, enc, num_heads):
    """x_stacked: (2, B, S, K) -> features (2, B, S, E); grid parallel over 2."""
    _, B, S, _ = x_stacked.shape
    E = enc['emb_wt'].shape[2]

    in_arrays = [x_stacked,
                 enc['emb_wt'], enc['emb_b'],
                 enc['qkv_wt'], enc['qkv_b'], enc['wo_t'], enc['bo'],
                 enc['ln1_g'], enc['ln1_b'],
                 enc['w1_t'], enc['b1'], enc['w2_t'], enc['b2'],
                 enc['ln2_g'], enc['ln2_b']]

    return pl.pallas_call(
        functools.partial(_encoder_kernel, num_heads=num_heads),
        out_shape=jax.ShapeDtypeStruct((2, B, S, E), F32),
        grid=(2,),
        in_specs=[_enc_spec(a) for a in in_arrays],
        out_specs=pl.BlockSpec((1, B, S, E), lambda g: (g, 0, 0, 0)),
        compiler_params=pltpu.CompilerParams(
            dimension_semantics=("parallel",)),
    )(*in_arrays)


def cross_attn_mean_fc(feats, cross, num_heads):
    """feats: (2, B, S, E) -> logits (B, 2)."""
    _, B, _, _ = feats.shape
    N = cross['fc_wt'].shape[1]
    vmem = pl.BlockSpec(memory_space=pltpu.MemorySpace.VMEM)
    in_arrays = [feats, cross['q_wt'], cross['q_b'], cross['kv_wt'],
                 cross['kv_b'], cross['wo_t'], cross['bo'],
                 cross['fc_wt'], cross['fc_b']]
    return pl.pallas_call(
        functools.partial(_cross_kernel, num_heads=num_heads),
        out_shape=jax.ShapeDtypeStruct((B, N), F32),
        in_specs=[vmem] * len(in_arrays),
        out_specs=pl.BlockSpec(memory_space=pltpu.MemorySpace.VMEM),
    )(*in_arrays)


def cael_forward(prep, appearance, edge, *, num_heads):
    """appearance/edge: (S, B, input_dim) — PyTorch (seq, batch, feature) layout."""
    x = jnp.stack([appearance, edge], axis=0).astype(F32)   # (2, S, B, K)
    x = jnp.transpose(x, (0, 2, 1, 3))                      # (2, B, S, K) batch-leading
    feats = fused_encoders(x, prep['enc'], num_heads)       # (2, B, S, E)
    return cross_attn_mean_fc(feats, prep['cross'], num_heads)  # (B, 2)


# ------------------------- parameter init (torch layout) -------------------- #

def _uniform(key, shape, scale):
    return jax.random.uniform(key, shape, F32, -scale, scale)


def init_mha_params(key, E):
    ks = jax.random.split(key, 4)
    s = 1.0 / (E ** 0.5)
    return dict(
        wq=_uniform(ks[0], (E, E), s), bq=jnp.zeros((E,), F32),
        wk=_uniform(ks[1], (E, E), s), bk=jnp.zeros((E,), F32),
        wv=_uniform(ks[2], (E, E), s), bv=jnp.zeros((E,), F32),
        wo=_uniform(ks[3], (E, E), s), bo=jnp.zeros((E,), F32),
    )


def init_layer_params(key, E, Fdim):
    ks = jax.random.split(key, 3)
    return dict(
        attn=init_mha_params(ks[0], E),
        w1=_uniform(ks[1], (Fdim, E), 1.0 / (E ** 0.5)), b1=jnp.zeros((Fdim,), F32),
        w2=_uniform(ks[2], (E, Fdim), 1.0 / (Fdim ** 0.5)), b2=jnp.zeros((E,), F32),
        ln1_g=jnp.ones((E,), F32), ln1_b=jnp.zeros((E,), F32),
        ln2_g=jnp.ones((E,), F32), ln2_b=jnp.zeros((E,), F32),
    )


def init_encoder_params(key, input_dim, E, num_layers, Fdim):
    ks = jax.random.split(key, num_layers + 1)
    return dict(
        emb_w=_uniform(ks[0], (E, input_dim), 1.0 / (input_dim ** 0.5)),
        emb_b=jnp.zeros((E,), F32),
        layers=[init_layer_params(ks[i + 1], E, Fdim) for i in range(num_layers)],
    )


def init_cael_params(key, input_dim, E, num_layers, Fdim=FF_DIM):
    ks = jax.random.split(key, 4)
    return dict(
        appearance=init_encoder_params(ks[0], input_dim, E, num_layers, Fdim),
        edge=init_encoder_params(ks[1], input_dim, E, num_layers, Fdim),
        cross=init_mha_params(ks[2], E),
        fc_w=_uniform(ks[3], (2, E), 1.0 / (E ** 0.5)),
        fc_b=jnp.zeros((2,), F32),
    )


# -------------------- one-time weight prep (pre-transposed) ----------------- #

def _prep_encoder(p):
    def stack(fn):
        return jnp.stack([fn(lp) for lp in p['layers']], axis=0)
    return dict(
        emb_wt=p['emb_w'].T,                            # (K, E)
        emb_b=p['emb_b'].reshape(1, -1),                # (1, E)
        qkv_wt=stack(lambda lp: jnp.concatenate(
            [lp['attn']['wq'], lp['attn']['wk'], lp['attn']['wv']], axis=0).T),
        qkv_b=stack(lambda lp: jnp.concatenate(
            [lp['attn']['bq'], lp['attn']['bk'], lp['attn']['bv']]).reshape(1, -1)),
        wo_t=stack(lambda lp: lp['attn']['wo'].T),
        bo=stack(lambda lp: lp['attn']['bo'].reshape(1, -1)),
        ln1_g=stack(lambda lp: lp['ln1_g'].reshape(1, -1)),
        ln1_b=stack(lambda lp: lp['ln1_b'].reshape(1, -1)),
        w1_t=stack(lambda lp: lp['w1'].T),
        b1=stack(lambda lp: lp['b1'].reshape(1, -1)),
        w2_t=stack(lambda lp: lp['w2'].T),
        b2=stack(lambda lp: lp['b2'].reshape(1, -1)),
        ln2_g=stack(lambda lp: lp['ln2_g'].reshape(1, -1)),
        ln2_b=stack(lambda lp: lp['ln2_b'].reshape(1, -1)),
    )


def prepare_params(params):
    enc_a = _prep_encoder(params['appearance'])
    enc_e = _prep_encoder(params['edge'])
    enc = {k: jnp.stack([enc_a[k], enc_e[k]], axis=0).astype(F32) for k in enc_a}
    c = params['cross']
    cross = dict(
        q_wt=c['wq'].T.astype(F32),
        q_b=c['bq'].reshape(1, -1).astype(F32),
        kv_wt=jnp.concatenate([c['wk'], c['wv']], axis=0).T.astype(F32),
        kv_b=jnp.concatenate([c['bk'], c['bv']]).reshape(1, -1).astype(F32),
        wo_t=c['wo'].T.astype(F32),
        bo=c['bo'].reshape(1, -1).astype(F32),
        fc_wt=params['fc_w'].T.astype(F32),
        fc_b=params['fc_b'].reshape(1, -1).astype(F32),
    )
    return dict(enc=enc, cross=cross)


# ----------------------------------- main ----------------------------------- #

if __name__ == "__main__":
    input_dim, embed_dim, num_heads, num_layers = 16, 32, 4, 2
    S, B = 8, 2  # (seq, batch)

    key = jax.random.PRNGKey(0)
    k_app, k_edge, k_par = jax.random.split(key, 3)
    appearance = jax.random.normal(k_app, (S, B, input_dim), F32)
    edge = jax.random.normal(k_edge, (S, B, input_dim), F32)

    params = init_cael_params(k_par, input_dim, embed_dim, num_layers)
    prep = prepare_params(params)  # weights transposed / fused / stacked once

    # TODO(synk): dropout layers inside TransformerEncoderLayer / MHA are treated
    # as identity (eval mode).
    forward = jax.jit(functools.partial(cael_forward, num_heads=num_heads))
    out = jax.block_until_ready(forward(prep, appearance, edge))
    assert out.shape == (B, 2) and out.dtype == F32
    print("KERNEL_OK")
</pallas_src>

<mosaic_0001>
module attributes {stable_mosaic.version = 11 : i64} {
  func.func @_cross_kernel(%arg0: memref<2x2x8x32xf32, #tpu.memory_space<vmem>>, %arg1: memref<32x32xf32, #tpu.memory_space<vmem>>, %arg2: memref<1x32xf32, #tpu.memory_space<vmem>>, %arg3: memref<32x64xf32, #tpu.memory_space<vmem>>, %arg4: memref<1x64xf32, #tpu.memory_space<vmem>>, %arg5: memref<32x32xf32, #tpu.memory_space<vmem>>, %arg6: memref<1x32xf32, #tpu.memory_space<vmem>>, %arg7: memref<32x2xf32, #tpu.memory_space<vmem>>, %arg8: memref<1x2xf32, #tpu.memory_space<vmem>>, %arg9: memref<2x2xf32, #tpu.memory_space<vmem>>) attributes {dimension_semantics = [], scalar_prefetch = 0 : i64, scratch_operands = 0 : i64, tpu.core_type = #tpu.core_type<tc>} {
    %c0 = arith.constant 0 : index
    %c0_0 = arith.constant 0 : index
    %c0_1 = arith.constant 0 : index
    %c0_2 = arith.constant 0 : index
    %0 = vector.load %arg0[%c0, %c0_0, %c0_1, %c0_2] : memref<2x2x8x32xf32, #tpu.memory_space<vmem>>, vector<1x2x8x32xf32>
    %1 = vector.shape_cast %0 : vector<1x2x8x32xf32> to vector<2x8x32xf32>
    %2 = vector.shape_cast %1 : vector<2x8x32xf32> to vector<16x32xf32>
    %c1 = arith.constant 1 : index
    %c0_3 = arith.constant 0 : index
    %c0_4 = arith.constant 0 : index
    %c0_5 = arith.constant 0 : index
    %3 = vector.load %arg0[%c1, %c0_3, %c0_4, %c0_5] : memref<2x2x8x32xf32, #tpu.memory_space<vmem>>, vector<1x2x8x32xf32>
    %4 = vector.shape_cast %3 : vector<1x2x8x32xf32> to vector<2x8x32xf32>
    %5 = vector.shape_cast %4 : vector<2x8x32xf32> to vector<16x32xf32>
    %c0_6 = arith.constant 0 : index
    %c0_7 = arith.constant 0 : index
    %6 = vector.load %arg1[%c0_6, %c0_7] : memref<32x32xf32, #tpu.memory_space<vmem>>, vector<32x32xf32>
    %cst = arith.constant dense<0.000000e+00> : vector<16x32xf32>
    %7 = tpu.matmul %2, %6, %cst {dimension_numbers = #tpu.dot_dimension_numbers<[1], [0], [0], [1], [0, 0, 1, 1], [], []>} : vector<16x32xf32>, vector<32x32xf32>, vector<16x32xf32> -> vector<16x32xf32>
    %c0_8 = arith.constant 0 : index
    %c0_9 = arith.constant 0 : index
    %8 = vector.load %arg2[%c0_8, %c0_9] : memref<1x32xf32, #tpu.memory_space<vmem>>, vector<1x32xf32>
    %9 = vector.broadcast %8 : vector<1x32xf32> to vector<16x32xf32>
    %10 = arith.addf %7, %9 : vector<16x32xf32>
    %c0_10 = arith.constant 0 : index
    %c0_11 = arith.constant 0 : index
    %11 = vector.load %arg3[%c0_10, %c0_11] : memref<32x64xf32, #tpu.memory_space<vmem>>, vector<32x64xf32>
    %cst_12 = arith.constant dense<0.000000e+00> : vector<16x64xf32>
    %12 = tpu.matmul %5, %11, %cst_12 {dimension_numbers = #tpu.dot_dimension_numbers<[1], [0], [0], [1], [0, 0, 1, 1], [], []>} : vector<16x32xf32>, vector<32x64xf32>, vector<16x64xf32> -> vector<16x64xf32>
    %c0_13 = arith.constant 0 : index
    %c0_14 = arith.constant 0 : index
    %13 = vector.load %arg4[%c0_13, %c0_14] : memref<1x64xf32, #tpu.memory_space<vmem>>, vector<1x64xf32>
    %14 = vector.broadcast %13 : vector<1x64xf32> to vector<16x64xf32>
    %15 = arith.addf %12, %14 : vector<16x64xf32>
    %16 = vector.extract_strided_slice %15 {offsets = [0, 0], sizes = [16, 32], strides = [1, 1]} : vector<16x64xf32> to vector<16x32xf32>
    %17 = vector.extract_strided_slice %15 {offsets = [0, 32], sizes = [16, 32], strides = [1, 1]} : vector<16x64xf32> to vector<16x32xf32>
    %18 = vector.extract_strided_slice %10 {offsets = [0, 0], sizes = [16, 8], strides = [1, 1]} : vector<16x32xf32> to vector<16x8xf32>
    %19 = vector.shape_cast %18 : vector<16x8xf32> to vector<2x8x8xf32>
    %20 = vector.extract_strided_slice %16 {offsets = [0, 0], sizes = [16, 8], strides = [1, 1]} : vector<16x32xf32> to vector<16x8xf32>
    %21 = vector.shape_cast %20 : vector<16x8xf32> to vector<2x8x8xf32>
    %22 = vector.extract_strided_slice %17 {offsets = [0, 0], sizes = [16, 8], strides = [1, 1]} : vector<16x32xf32> to vector<16x8xf32>
    %23 = vector.shape_cast %22 : vector<16x8xf32> to vector<2x8x8xf32>
    "tpu.trace_start"() <{level = 10 : i32, message = "bqd,bkd->bqk"}> : () -> ()
    %cst_15 = arith.constant dense<0.000000e+00> : vector<2x8x8xf32>
    %24 = tpu.matmul %19, %21, %cst_15 {dimension_numbers = #tpu.dot_dimension_numbers<[2], [2], [1], [1], [0, 0, 0, 1, 1, 1], [0], [0]>} : vector<2x8x8xf32>, vector<2x8x8xf32>, vector<2x8x8xf32> -> vector<2x8x8xf32>
    "tpu.trace_stop"() : () -> ()
    %cst_16 = arith.constant 0.353553385 : f32
    %25 = vector.broadcast %cst_16 : f32 to vector<2x8x8xf32>
    %26 = arith.mulf %24, %25 : vector<2x8x8xf32>
    %cst_17 = arith.constant dense<0xFF800000> : vector<2x8xf32>
    %27 = vector.multi_reduction <maximumf>, %26, %cst_17 [2] : vector<2x8x8xf32> to vector<2x8xf32>
    %28 = vector.shape_cast %27 : vector<2x8xf32> to vector<2x8x1xf32>
    %29 = vector.broadcast %28 : vector<2x8x1xf32> to vector<2x8x8xf32>
    %30 = arith.subf %26, %29 : vector<2x8x8xf32>
    %31 = math.exp %30 : vector<2x8x8xf32>
    %cst_18 = arith.constant dense<0.000000e+00> : vector<2x8xf32>
    %32 = vector.multi_reduction <add>, %31, %cst_18 [2] : vector<2x8x8xf32> to vector<2x8xf32>
    %33 = vector.shape_cast %32 : vector<2x8xf32> to vector<2x8x1xf32>
    %34 = tpu.reciprocal %33 {approx = true} : vector<2x8x1xf32> -> vector<2x8x1xf32>
    %35 = vector.broadcast %34 : vector<2x8x1xf32> to vector<2x8x8xf32>
    %36 = arith.mulf %31, %35 : vector<2x8x8xf32>
    "tpu.trace_start"() <{level = 10 : i32, message = "bqk,bkd->bqd"}> : () -> ()
    %cst_19 = arith.constant dense<0.000000e+00> : vector<2x8x8xf32>
    %37 = tpu.matmul %36, %23, %cst_19 {dimension_numbers = #tpu.dot_dimension_numbers<[2], [1], [1], [2], [0, 0, 0, 1, 1, 2], [0], [0]>} : vector<2x8x8xf32>, vector<2x8x8xf32>, vector<2x8x8xf32> -> vector<2x8x8xf32>
    "tpu.trace_stop"() : () -> ()
    %38 = vector.shape_cast %37 : vector<2x8x8xf32> to vector<16x8xf32>
    %39 = vector.extract_strided_slice %10 {offsets = [0, 8], sizes = [16, 8], strides = [1, 1]} : vector<16x32xf32> to vector<16x8xf32>
    %40 = vector.shape_cast %39 : vector<16x8xf32> to vector<2x8x8xf32>
    %41 = vector.extract_strided_slice %16 {offsets = [0, 8], sizes = [16, 8], strides = [1, 1]} : vector<16x32xf32> to vector<16x8xf32>
    %42 = vector.shape_cast %41 : vector<16x8xf32> to vector<2x8x8xf32>
    %43 = vector.extract_strided_slice %17 {offsets = [0, 8], sizes = [16, 8], strides = [1, 1]} : vector<16x32xf32> to vector<16x8xf32>
    %44 = vector.shape_cast %43 : vector<16x8xf32> to vector<2x8x8xf32>
    "tpu.trace_start"() <{level = 10 : i32, message = "bqd,bkd->bqk"}> : () -> ()
    %cst_20 = arith.constant dense<0.000000e+00> : vector<2x8x8xf32>
    %45 = tpu.matmul %40, %42, %cst_20 {dimension_numbers = #tpu.dot_dimension_numbers<[2], [2], [1], [1], [0, 0, 0, 1, 1, 1], [0], [0]>} : vector<2x8x8xf32>, vector<2x8x8xf32>, vector<2x8x8xf32> -> vector<2x8x8xf32>
    "tpu.trace_stop"() : () -> ()
    %cst_21 = arith.constant 0.353553385 : f32
    %46 = vector.broadcast %cst_21 : f32 to vector<2x8x8xf32>
    %47 = arith.mulf %45, %46 : vector<2x8x8xf32>
    %cst_22 = arith.constant dense<0xFF800000> : vector<2x8xf32>
    %48 = vector.multi_reduction <maximumf>, %47, %cst_22 [2] : vector<2x8x8xf32> to vector<2x8xf32>
    %49 = vector.shape_cast %48 : vector<2x8xf32> to vector<2x8x1xf32>
    %50 = vector.broadcast %49 : vector<2x8x1xf32> to vector<2x8x8xf32>
    %51 = arith.subf %47, %50 : vector<2x8x8xf32>
    %52 = math.exp %51 : vector<2x8x8xf32>
    %cst_23 = arith.constant dense<0.000000e+00> : vector<2x8xf32>
    %53 = vector.multi_reduction <add>, %52, %cst_23 [2] : vector<2x8x8xf32> to vector<2x8xf32>
    %54 = vector.shape_cast %53 : vector<2x8xf32> to vector<2x8x1xf32>
    %55 = tpu.reciprocal %54 {approx = true} : vector<2x8x1xf32> -> vector<2x8x1xf32>
    %56 = vector.broadcast %55 : vector<2x8x1xf32> to vector<2x8x8xf32>
    %57 = arith.mulf %52, %56 : vector<2x8x8xf32>
    "tpu.trace_start"() <{level = 10 : i32, message = "bqk,bkd->bqd"}> : () -> ()
    %cst_24 = arith.constant dense<0.000000e+00> : vector<2x8x8xf32>
    %58 = tpu.matmul %57, %44, %cst_24 {dimension_numbers = #tpu.dot_dimension_numbers<[2], [1], [1], [2], [0, 0, 0, 1, 1, 2], [0], [0]>} : vector<2x8x8xf32>, vector<2x8x8xf32>, vector<2x8x8xf32> -> vector<2x8x8xf32>
    "tpu.trace_stop"() : () -> ()
    %59 = vector.shape_cast %58 : vector<2x8x8xf32> to vector<16x8xf32>
    %60 = vector.extract_strided_slice %10 {offsets = [0, 16], sizes = [16, 8], strides = [1, 1]} : vector<16x32xf32> to vector<16x8xf32>
    %61 = vector.shape_cast %60 : vector<16x8xf32> to vector<2x8x8xf32>
    %62 = vector.extract_strided_slice %16 {offsets = [0, 16], sizes = [16, 8], strides = [1, 1]} : vector<16x32xf32> to vector<16x8xf32>
    %63 = vector.shape_cast %62 : vector<16x8xf32> to vector<2x8x8xf32>
    %64 = vector.extract_strided_slice %17 {offsets = [0, 16], sizes = [16, 8], strides = [1, 1]} : vector<16x32xf32> to vector<16x8xf32>
    %65 = vector.shape_cast %64 : vector<16x8xf32> to vector<2x8x8xf32>
    "tpu.trace_start"() <{level = 10 : i32, message = "bqd,bkd->bqk"}> : () -> ()
    %cst_25 = arith.constant dense<0.000000e+00> : vector<2x8x8xf32>
    %66 = tpu.matmul %61, %63, %cst_25 {dimension_numbers = #tpu.dot_dimension_numbers<[2], [2], [1], [1], [0, 0, 0, 1, 1, 1], [0], [0]>} : vector<2x8x8xf32>, vector<2x8x8xf32>, vector<2x8x8xf32> -> vector<2x8x8xf32>
    "tpu.trace_stop"() : () -> ()
    %cst_26 = arith.constant 0.353553385 : f32
    %67 = vector.broadcast %cst_26 : f32 to vector<2x8x8xf32>
    %68 = arith.mulf %66, %67 : vector<2x8x8xf32>
    %cst_27 = arith.constant dense<0xFF800000> : vector<2x8xf32>
    %69 = vector.multi_reduction <maximumf>, %68, %cst_27 [2] : vector<2x8x8xf32> to vector<2x8xf32>
    %70 = vector.shape_cast %69 : vector<2x8xf32> to vector<2x8x1xf32>
    %71 = vector.broadcast %70 : vector<2x8x1xf32> to vector<2x8x8xf32>
    %72 = arith.subf %68, %71 : vector<2x8x8xf32>
    %73 = math.exp %72 : vector<2x8x8xf32>
    %cst_28 = arith.constant dense<0.000000e+00> : vector<2x8xf32>
    %74 = vector.multi_reduction <add>, %73, %cst_28 [2] : vector<2x8x8xf32> to vector<2x8xf32>
    %75 = vector.shape_cast %74 : vector<2x8xf32> to vector<2x8x1xf32>
    %76 = tpu.reciprocal %75 {approx = true} : vector<2x8x1xf32> -> vector<2x8x1xf32>
    %77 = vector.broadcast %76 : vector<2x8x1xf32> to vector<2x8x8xf32>
    %78 = arith.mulf %73, %77 : vector<2x8x8xf32>
    "tpu.trace_start"() <{level = 10 : i32, message = "bqk,bkd->bqd"}> : () -> ()
    %cst_29 = arith.constant dense<0.000000e+00> : vector<2x8x8xf32>
    %79 = tpu.matmul %78, %65, %cst_29 {dimension_numbers = #tpu.dot_dimension_numbers<[2], [1], [1], [2], [0, 0, 0, 1, 1, 2], [0], [0]>} : vector<2x8x8xf32>, vector<2x8x8xf32>, vector<2x8x8xf32> -> vector<2x8x8xf32>
    "tpu.trace_stop"() : () -> ()
    %80 = vector.shape_cast %79 : vector<2x8x8xf32> to vector<16x8xf32>
    %81 = vector.extract_strided_slice %10 {offsets = [0, 24], sizes = [16, 8], strides = [1, 1]} : vector<16x32xf32> to vector<16x8xf32>
    %82 = vector.shape_cast %81 : vector<16x8xf32> to vector<2x8x8xf32>
    %83 = vector.extract_strided_slice %16 {offsets = [0, 24], sizes = [16, 8], strides = [1, 1]} : vector<16x32xf32> to vector<16x8xf32>
    %84 = vector.shape_cast %83 : vector<16x8xf32> to vector<2x8x8xf32>
    %85 = vector.extract_strided_slice %17 {offsets = [0, 24], sizes = [16, 8], strides = [1, 1]} : vector<16x32xf32> to vector<16x8xf32>
    %86 = vector.shape_cast %85 : vector<16x8xf32> to vector<2x8x8xf32>
    "tpu.trace_start"() <{level = 10 : i32, message = "bqd,bkd->bqk"}> : () -> ()
    %cst_30 = arith.constant dense<0.000000e+00> : vector<2x8x8xf32>
    %87 = tpu.matmul %82, %84, %cst_30 {dimension_numbers = #tpu.dot_dimension_numbers<[2], [2], [1], [1], [0, 0, 0, 1, 1, 1], [0], [0]>} : vector<2x8x8xf32>, vector<2x8x8xf32>, vector<2x8x8xf32> -> vector<2x8x8xf32>
    "tpu.trace_stop"() : () -> ()
    %cst_31 = arith.constant 0.353553385 : f32
    %88 = vector.broadcast %cst_31 : f32 to vector<2x8x8xf32>
    %89 = arith.mulf %87, %88 : vector<2x8x8xf32>
    %cst_32 = arith.constant dense<0xFF800000> : vector<2x8xf32>
    %90 = vector.multi_reduction <maximumf>, %89, %cst_32 [2] : vector<2x8x8xf32> to vector<2x8xf32>
    %91 = vector.shape_cast %90 : vector<2x8xf32> to vector<2x8x1xf32>
    %92 = vector.broadcast %91 : vector<2x8x1xf32> to vector<2x8x8xf32>
    %93 = arith.subf %89, %92 : vector<2x8x8xf32>
    %94 = math.exp %93 : vector<2x8x8xf32>
    %cst_33 = arith.constant dense<0.000000e+00> : vector<2x8xf32>
    %95 = vector.multi_reduction <add>, %94, %cst_33 [2] : vector<2x8x8xf32> to vector<2x8xf32>
    %96 = vector.shape_cast %95 : vector<2x8xf32> to vector<2x8x1xf32>
    %97 = tpu.reciprocal %96 {approx = true} : vector<2x8x1xf32> -> vector<2x8x1xf32>
    %98 = vector.broadcast %97 : vector<2x8x1xf32> to vector<2x8x8xf32>
    %99 = arith.mulf %94, %98 : vector<2x8x8xf32>
    "tpu.trace_start"() <{level = 10 : i32, message = "bqk,bkd->bqd"}> : () -> ()
    %cst_34 = arith.constant dense<0.000000e+00> : vector<2x8x8xf32>
    %100 = tpu.matmul %99, %86, %cst_34 {dimension_numbers = #tpu.dot_dimension_numbers<[2], [1], [1], [2], [0, 0, 0, 1, 1, 2], [0], [0]>} : vector<2x8x8xf32>, vector<2x8x8xf32>, vector<2x8x8xf32> -> vector<2x8x8xf32>
    "tpu.trace_stop"() : () -> ()
    %101 = vector.shape_cast %100 : vector<2x8x8xf32> to vector<16x8xf32>
    %102 = tpu.concatenate %38, %59, %80, %101 in 1 : vector<16x8xf32>, vector<16x8xf32>, vector<16x8xf32>, vector<16x8xf32> -> vector<16x32xf32>
    %c0_35 = arith.constant 0 : index
    %c0_36 = arith.constant 0 : index
    %103 = vector.load %arg5[%c0_35, %c0_36] : memref<32x32xf32, #tpu.memory_space<vmem>>, vector<32x32xf32>
    %cst_37 = arith.constant dense<0.000000e+00> : vector<16x32xf32>
    %104 = tpu.matmul %102, %103, %cst_37 {dimension_numbers = #tpu.dot_dimension_numbers<[1], [0], [0], [1], [0, 0, 1, 1], [], []>} : vector<16x32xf32>, vector<32x32xf32>, vector<16x32xf32> -> vector<16x32xf32>
    %c0_38 = arith.constant 0 : index
    %c0_39 = arith.constant 0 : index
    %105 = vector.load %arg6[%c0_38, %c0_39] : memref<1x32xf32, #tpu.memory_space<vmem>>, vector<1x32xf32>
    %106 = vector.broadcast %105 : vector<1x32xf32> to vector<16x32xf32>
    %107 = arith.addf %104, %106 : vector<16x32xf32>
    %108 = vector.shape_cast %107 : vector<16x32xf32> to vector<2x8x32xf32>
    %cst_40 = arith.constant dense<0.000000e+00> : vector<2x32xf32>
    %109 = vector.multi_reduction <add>, %108, %cst_40 [1] : vector<2x8x32xf32> to vector<2x32xf32>
    %cst_41 = arith.constant 8.000000e+00 : f32
    %110 = vector.broadcast %cst_41 : f32 to vector<2x32xf32>
    %111 = arith.divf %109, %110 : vector<2x32xf32>
    %c0_42 = arith.constant 0 : index
    %c0_43 = arith.constant 0 : index
    %112 = vector.load %arg7[%c0_42, %c0_43] : memref<32x2xf32, #tpu.memory_space<vmem>>, vector<32x2xf32>
    %cst_44 = arith.constant dense<0.000000e+00> : vector<2x2xf32>
    %113 = tpu.matmul %111, %112, %cst_44 {dimension_numbers = #tpu.dot_dimension_numbers<[1], [0], [0], [1], [0, 0, 1, 1], [], []>} : vector<2x32xf32>, vector<32x2xf32>, vector<2x2xf32> -> vector<2x2xf32>
    %c0_45 = arith.constant 0 : index
    %c0_46 = arith.constant 0 : index
    %114 = vector.load %arg8[%c0_45, %c0_46] : memref<1x2xf32, #tpu.memory_space<vmem>>, vector<1x2xf32>
    %115 = vector.broadcast %114 : vector<1x2xf32> to vector<2x2xf32>
    %116 = arith.addf %113, %115 : vector<2x2xf32>
    %c0_47 = arith.constant 0 : index
    %c0_48 = arith.constant 0 : index
    %117 = vector.load %arg9[%c0_47, %c0_48] : memref<2x2xf32, #tpu.memory_space<vmem>>, vector<2x2xf32>
    tpu.vector_store %arg9[%c0_47, %c0_48], %116 {strides = array<i32>} : memref<2x2xf32, #tpu.memory_space<vmem>>, vector<2x2xf32>,
    return
  }
}

module attributes {stable_mosaic.version = 11 : i64} {
  func.func @_encoder_kernel(%arg0: i32, %arg1: memref<1x2x8x16xf32, #tpu.memory_space<vmem>>, %arg2: memref<1x16x32xf32, #tpu.memory_space<vmem>>, %arg3: memref<1x1x32xf32, #tpu.memory_space<vmem>>, %arg4: memref<1x2x32x96xf32, #tpu.memory_space<vmem>>, %arg5: memref<1x2x1x96xf32, #tpu.memory_space<vmem>>, %arg6: memref<1x2x32x32xf32, #tpu.memory_space<vmem>>, %arg7: memref<1x2x1x32xf32, #tpu.memory_space<vmem>>, %arg8: memref<1x2x1x32xf32, #tpu.memory_space<vmem>>, %arg9: memref<1x2x1x32xf32, #tpu.memory_space<vmem>>, %arg10: memref<1x2x32x2048xf32, #tpu.memory_space<vmem>>, %arg11: memref<1x2x1x2048xf32, #tpu.memory_space<vmem>>, %arg12: memref<1x2x2048x32xf32, #tpu.memory_space<vmem>>, %arg13: memref<1x2x1x32xf32, #tpu.memory_space<vmem>>, %arg14: memref<1x2x1x32xf32, #tpu.memory_space<vmem>>, %arg15: memref<1x2x1x32xf32, #tpu.memory_space<vmem>>, %arg16: memref<1x2x8x32xf32, #tpu.memory_space<vmem>>) attributes {dimension_semantics = [#tpu.dimension_semantics<parallel>], iteration_bounds = array<i64: 2>, scalar_prefetch = 0 : i64, scratch_operands = 0 : i64, tpu.core_type = #tpu.core_type<tc>, window_params = [{transform_indices = @transform_0, window_bounds = array<i64: 1, 2, 8, 16>}, {transform_indices = @transform_1, window_bounds = array<i64: 1, 16, 32>}, {transform_indices = @transform_2, window_bounds = array<i64: 1, 1, 32>}, {transform_indices = @transform_3, window_bounds = array<i64: 1, 2, 32, 96>}, {transform_indices = @transform_4, window_bounds = array<i64: 1, 2, 1, 96>}, {transform_indices = @transform_5, window_bounds = array<i64: 1, 2, 32, 32>}, {transform_indices = @transform_6, window_bounds = array<i64: 1, 2, 1, 32>}, {transform_indices = @transform_7, window_bounds = array<i64: 1, 2, 1, 32>}, {transform_indices = @transform_8, window_bounds = array<i64: 1, 2, 1, 32>}, {transform_indices = @transform_9, window_bounds = array<i64: 1, 2, 32, 2048>}, {transform_indices = @transform_10, window_bounds = array<i64: 1, 2, 1, 2048>}, {transform_indices = @transform_11, window_bounds = array<i64: 1, 2, 2048, 32>}, {transform_indices = @transform_12, window_bounds = array<i64: 1, 2, 1, 32>}, {transform_indices = @transform_13, window_bounds = array<i64: 1, 2, 1, 32>}, {transform_indices = @transform_14, window_bounds = array<i64: 1, 2, 1, 32>}, {transform_indices = @transform_15, window_bounds = array<i64: 1, 2, 8, 32>}]} {
    %c0 = arith.constant 0 : index
    %c0_0 = arith.constant 0 : index
    %c0_1 = arith.constant 0 : index
    %c0_2 = arith.constant 0 : index
    %0 = vector.load %arg1[%c0, %c0_0, %c0_1, %c0_2] : memref<1x2x8x16xf32, #tpu.memory_space<vmem>>, vector<1x2x8x16xf32>
    %1 = vector.shape_cast %0 : vector<1x2x8x16xf32> to vector<2x8x16xf32>
    %2 = vector.shape_cast %1 : vector<2x8x16xf32> to vector<16x16xf32>
    %c0_3 = arith.constant 0 : index
    %c0_4 = arith.constant 0 : index
    %c0_5 = arith.constant 0 : index
    %3 = vector.load %arg2[%c0_3, %c0_4, %c0_5] : memref<1x16x32xf32, #tpu.memory_space<vmem>>, vector<1x16x32xf32>
    %4 = vector.shape_cast %3 : vector<1x16x32xf32> to vector<16x32xf32>
    %cst = arith.constant dense<0.000000e+00> : vector<16x32xf32>
    %5 = tpu.matmul %2, %4, %cst {dimension_numbers = #tpu.dot_dimension_numbers<[1], [0], [0], [1], [0, 0, 1, 1], [], []>} : vector<16x16xf32>, vector<16x32xf32>, vector<16x32xf32> -> vector<16x32xf32>
    %c0_6 = arith.constant 0 : index
    %c0_7 = arith.constant 0 : index
    %c0_8 = arith.constant 0 : index
    %6 = vector.load %arg3[%c0_6, %c0_7, %c0_8] : memref<1x1x32xf32, #tpu.memory_space<vmem>>, vector<1x1x32xf32>
    %7 = vector.shape_cast %6 : vector<1x1x32xf32> to vector<1x32xf32>
    %8 = vector.broadcast %7 : vector<1x32xf32> to vector<16x32xf32>
    %9 = arith.addf %5, %8 : vector<16x32xf32>
    %c0_9 = arith.constant 0 : index
    %c0_10 = arith.constant 0 : index
    %c0_11 = arith.constant 0 : index
    %c0_12 = arith.constant 0 : index
    %10 = vector.load %arg4[%c0_9, %c0_10, %c0_11, %c0_12] : memref<1x2x32x96xf32, #tpu.memory_space<vmem>>, vector<1x1x32x96xf32>
    %11 = vector.shape_cast %10 : vector<1x1x32x96xf32> to vector<32x96xf32>
    %cst_13 = arith.constant dense<0.000000e+00> : vector<16x96xf32>
    %12 = tpu.matmul %9, %11, %cst_13 {dimension_numbers = #tpu.dot_dimension_numbers<[1], [0], [0], [1], [0, 0, 1, 1], [], []>} : vector<16x32xf32>, vector<32x96xf32>, vector<16x96xf32> -> vector<16x96xf32>
    %c0_14 = arith.constant 0 : index
    %c0_15 = arith.constant 0 : index
    %c0_16 = arith.constant 0 : index
    %c0_17 = arith.constant 0 : index
    %13 = vector.load %arg5[%c0_14, %c0_15, %c0_16, %c0_17] : memref<1x2x1x96xf32, #tpu.memory_space<vmem>>, vector<1x1x1x96xf32>
    %14 = vector.shape_cast %13 : vector<1x1x1x96xf32> to vector<1x96xf32>
    %15 = vector.broadcast %14 : vector<1x96xf32> to vector<16x96xf32>
    %16 = arith.addf %12, %15 : vector<16x96xf32>
    %17 = vector.extract_strided_slice %16 {offsets = [0, 0], sizes = [16, 32], strides = [1, 1]} : vector<16x96xf32> to vector<16x32xf32>
    %18 = vector.extract_strided_slice %16 {offsets = [0, 32], sizes = [16, 32], strides = [1, 1]} : vector<16x96xf32> to vector<16x32xf32>
    %19 = vector.extract_strided_slice %16 {offsets = [0, 64], sizes = [16, 32], strides = [1, 1]} : vector<16x96xf32> to vector<16x32xf32>
    %20 = vector.extract_strided_slice %17 {offsets = [0, 0], sizes = [16, 8], strides = [1, 1]} : vector<16x32xf32> to vector<16x8xf32>
    %21 = vector.shape_cast %20 : vector<16x8xf32> to vector<2x8x8xf32>
    %22 = vector.extract_strided_slice %18 {offsets = [0, 0], sizes = [16, 8], strides = [1, 1]} : vector<16x32xf32> to vector<16x8xf32>
    %23 = vector.shape_cast %22 : vector<16x8xf32> to vector<2x8x8xf32>
    %24 = vector.extract_strided_slice %19 {offsets = [0, 0], sizes = [16, 8], strides = [1, 1]} : vector<16x32xf32> to vector<16x8xf32>
    %25 = vector.shape_cast %24 : vector<16x8xf32> to vector<2x8x8xf32>
    "tpu.trace_start"() <{level = 10 : i32, message = "bqd,bkd->bqk"}> : () -> ()
    %cst_18 = arith.constant dense<0.000000e+00> : vector<2x8x8xf32>
    %26 = tpu.matmul %21, %23, %cst_18 {dimension_numbers = #tpu.dot_dimension_numbers<[2], [2], [1], [1], [0, 0, 0, 1, 1, 1], [0], [0]>} : vector<2x8x8xf32>, vector<2x8x8xf32>, vector<2x8x8xf32> -> vector<2x8x8xf32>
    "tpu.trace_stop"() : () -> ()
    %cst_19 = arith.constant 0.353553385 : f32
    %27 = vector.broadcast %cst_19 : f32 to vector<2x8x8xf32>
    %28 = arith.mulf %26, %27 : vector<2x8x8xf32>
    %cst_20 = arith.constant dense<0xFF800000> : vector<2x8xf32>
    %29 = vector.multi_reduction <maximumf>, %28, %cst_20 [2] : vector<2x8x8xf32> to vector<2x8xf32>
    %30 = vector.shape_cast %29 : vector<2x8xf32> to vector<2x8x1xf32>
    %31 = vector.broadcast %30 : vector<2x8x1xf32> to vector<2x8x8xf32>
    %32 = arith.subf %28, %31 : vector<2x8x8xf32>
    %33 = math.exp %32 : vector<2x8x8xf32>
    %cst_21 = arith.constant dense<0.000000e+00> : vector<2x8xf32>
    %34 = vector.multi_reduction <add>, %33, %cst_21 [2] : vector<2x8x8xf32> to vector<2x8xf32>
    %35 = vector.shape_cast %34 : vector<2x8xf32> to vector<2x8x1xf32>
    %36 = tpu.reciprocal %35 {approx = true} : vector<2x8x1xf32> -> vector<2x8x1xf32>
    %37 = vector.broadcast %36 : vector<2x8x1xf32> to vector<2x8x8xf32>
    %38 = arith.mulf %33, %37 : vector<2x8x8xf32>
    "tpu.trace_start"() <{level = 10 : i32, message = "bqk,bkd->bqd"}> : () -> ()
    %cst_22 = arith.constant dense<0.000000e+00> : vector<2x8x8xf32>
    %39 = tpu.matmul %38, %25, %cst_22 {dimension_numbers = #tpu.dot_dimension_numbers<[2], [1], [1], [2], [0, 0, 0, 1, 1, 2], [0], [0]>} : vector<2x8x8xf32>, vector<2x8x8xf32>, vector<2x8x8xf32> -> vector<2x8x8xf32>
    "tpu.trace_stop"() : () -> ()
    %40 = vector.shape_cast %39 : vector<2x8x8xf32> to vector<16x8xf32>
    %41 = vector.extract_strided_slice %17 {offsets = [0, 8], sizes = [16, 8], strides = [1, 1]} : vector<16x32xf32> to vector<16x8xf32>
    %42 = vector.shape_cast %41 : vector<16x8xf32> to vector<2x8x8xf32>
    %43 = vector.extract_strided_slice %18 {offsets = [0, 8], sizes = [16, 8], strides = [1, 1]} : vector<16x32xf32> to vector<16x8xf32>
    %44 = vector.shape_cast %43 : vector<16x8xf32> to vector<2x8x8xf32>
    %45 = vector.extract_strided_slice %19 {offsets = [0, 8], sizes = [16, 8], strides = [1, 1]} : vector<16x32xf32> to vector<16x8xf32>
    %46 = vector.shape_cast %45 : vector<16x8xf32> to vector<2x8x8xf32>
    "tpu.trace_start"() <{level = 10 : i32, message = "bqd,bkd->bqk"}> : () -> ()
    %cst_23 = arith.constant dense<0.000000e+00> : vector<2x8x8xf32>
    %47 = tpu.matmul %42, %44, %cst_23 {dimension_numbers = #tpu.dot_dimension_numbers<[2], [2], [1], [1], [0, 0, 0, 1, 1, 1], [0], [0]>} : vector<2x8x8xf32>, vector<2x8x8xf32>, vector<2x8x8xf32> -> vector<2x8x8xf32>
    "tpu.trace_stop"() : () -> ()
    %cst_24 = arith.constant 0.353553385 : f32
    %48 = vector.broadcast %cst_24 : f32 to vector<2x8x8xf32>
    %49 = arith.mulf %47, %48 : vector<2x8x8xf32>
    %cst_25 = arith.constant dense<0xFF800000> : vector<2x8xf32>
    %50 = vector.multi_reduction <maximumf>, %49, %cst_25 [2] : vector<2x8x8xf32> to vector<2x8xf32>
    %51 = vector.shape_cast %50 : vector<2x8xf32> to vector<2x8x1xf32>
    %52 = vector.broadcast %51 : vector<2x8x1xf32> to vector<2x8x8xf32>
    %53 = arith.subf %49, %52 : vector<2x8x8xf32>
    %54 = math.exp %53 : vector<2x8x8xf32>
    %cst_26 = arith.constant dense<0.000000e+00> : vector<2x8xf32>
    %55 = vector.multi_reduction <add>, %54, %cst_26 [2] : vector<2x8x8xf32> to vector<2x8xf32>
    %56 = vector.shape_cast %55 : vector<2x8xf32> to vector<2x8x1xf32>
    %57 = tpu.reciprocal %56 {approx = true} : vector<2x8x1xf32> -> vector<2x8x1xf32>
    %58 = vector.broadcast %57 : vector<2x8x1xf32> to vector<2x8x8xf32>
    %59 = arith.mulf %54, %58 : vector<2x8x8xf32>
    "tpu.trace_start"() <{level = 10 : i32, message = "bqk,bkd->bqd"}> : () -> ()
    %cst_27 = arith.constant dense<0.000000e+00> : vector<2x8x8xf32>
    %60 = tpu.matmul %59, %46, %cst_27 {dimension_numbers = #tpu.dot_dimension_numbers<[2], [1], [1], [2], [0, 0, 0, 1, 1, 2], [0], [0]>} : vector<2x8x8xf32>, vector<2x8x8xf32>, vector<2x8x8xf32> -> vector<2x8x8xf32>
    "tpu.trace_stop"() : () -> ()
    %61 = vector.shape_cast %60 : vector<2x8x8xf32> to vector<16x8xf32>
    %62 = vector.extract_strided_slice %17 {offsets = [0, 16], sizes = [16, 8], strides = [1, 1]} : vector<16x32xf32> to vector<16x8xf32>
    %63 = vector.shape_cast %62 : vector<16x8xf32> to vector<2x8x8xf32>
    %64 = vector.extract_strided_slice %18 {offsets = [0, 16], sizes = [16, 8], strides = [1, 1]} : vector<16x32xf32> to vector<16x8xf32>
    %65 = vector.shape_cast %64 : vector<16x8xf32> to vector<2x8x8xf32>
    %66 = vector.extract_strided_slice %19 {offsets = [0, 16], sizes = [16, 8], strides = [1, 1]} : vector<16x32xf32> to vector<16x8xf32>
    %67 = vector.shape_cast %66 : vector<16x8xf32> to vector<2x8x8xf32>
    "tpu.trace_start"() <{level = 10 : i32, message = "bqd,bkd->bqk"}> : () -> ()
    %cst_28 = arith.constant dense<0.000000e+00> : vector<2x8x8xf32>
    %68 = tpu.matmul %63, %65, %cst_28 {dimension_numbers = #tpu.dot_dimension_numbers<[2], [2], [1], [1], [0, 0, 0, 1, 1, 1], [0], [0]>} : vector<2x8x8xf32>, vector<2x8x8xf32>, vector<2x8x8xf32> -> vector<2x8x8xf32>
    "tpu.trace_stop"() : () -> ()
    %cst_29 = arith.constant 0.353553385 : f32
    %69 = vector.broadcast %cst_29 : f32 to vector<2x8x8xf32>
    %70 = arith.mulf %68, %69 : vector<2x8x8xf32>
    %cst_30 = arith.constant dense<0xFF800000> : vector<2x8xf32>
    %71 = vector.multi_reduction <maximumf>, %70, %cst_30 [2] : vector<2x8x8xf32> to vector<2x8xf32>
    %72 = vector.shape_cast %71 : vector<2x8xf32> to vector<2x8x1xf32>
    %73 = vector.broadcast %72 : vector<2x8x1xf32> to vector<2x8x8xf32>
    %74 = arith.subf %70, %73 : vector<2x8x8xf32>
    %75 = math.exp %74 : vector<2x8x8xf32>
    %cst_31 = arith.constant dense<0.000000e+00> : vector<2x8xf32>
    %76 = vector.multi_reduction <add>, %75, %cst_31 [2] : vector<2x8x8xf32> to vector<2x8xf32>
    %77 = vector.shape_cast %76 : vector<2x8xf32> to vector<2x8x1xf32>
    %78 = tpu.reciprocal %77 {approx = true} : vector<2x8x1xf32> -> vector<2x8x1xf32>
    %79 = vector.broadcast %78 : vector<2x8x1xf32> to vector<2x8x8xf32>
    %80 = arith.mulf %75, %79 : vector<2x8x8xf32>
    "tpu.trace_start"() <{level = 10 : i32, message = "bqk,bkd->bqd"}> : () -> ()
    %cst_32 = arith.constant dense<0.000000e+00> : vector<2x8x8xf32>
    %81 = tpu.matmul %80, %67, %cst_32 {dimension_numbers = #tpu.dot_dimension_numbers<[2], [1], [1], [2], [0, 0, 0, 1, 1, 2], [0], [0]>} : vector<2x8x8xf32>, vector<2x8x8xf32>, vector<2x8x8xf32> -> vector<2x8x8xf32>
    "tpu.trace_stop"() : () -> ()
    %82 = vector.shape_cast %81 : vector<2x8x8xf32> to vector<16x8xf32>
    %83 = vector.extract_strided_slice %17 {offsets = [0, 24], sizes = [16, 8], strides = [1, 1]} : vector<16x32xf32> to vector<16x8xf32>
    %84 = vector.shape_cast %83 : vector<16x8xf32> to vector<2x8x8xf32>
    %85 = vector.extract_strided_slice %18 {offsets = [0, 24], sizes = [16, 8], strides = [1, 1]} : vector<16x32xf32> to vector<16x8xf32>
    %86 = vector.shape_cast %85 : vector<16x8xf32> to vector<2x8x8xf32>
    %87 = vector.extract_strided_slice %19 {offsets = [0, 24], sizes = [16, 8], strides = [1, 1]} : vector<16x32xf32> to vector<16x8xf32>
    %88 = vector.shape_cast %87 : vector<16x8xf32> to vector<2x8x8xf32>
    "tpu.trace_start"() <{level = 10 : i32, message = "bqd,bkd->bqk"}> : () -> ()
    %cst_33 = arith.constant dense<0.000000e+00> : vector<2x8x8xf32>
    %89 = tpu.matmul %84, %86, %cst_33 {dimension_numbers = #tpu.dot_dimension_numbers<[2], [2], [1], [1], [0, 0, 0, 1, 1, 1], [0], [0]>} : vector<2x8x8xf32>, vector<2x8x8xf32>, vector<2x8x8xf32> -> vector<2x8x8xf32>
    "tpu.trace_stop"() : () -> ()
    %cst_34 = arith.constant 0.353553385 : f32
    %90 = vector.broadcast %cst_34 : f32 to vector<2x8x8xf32>
    %91 = arith.mulf %89, %90 : vector<2x8x8xf32>
    %cst_35 = arith.constant dense<0xFF800000> : vector<2x8xf32>
    %92 = vector.multi_reduction <maximumf>, %91, %cst_35 [2] : vector<2x8x8xf32> to vector<2x8xf32>
    %93 = vector.shape_cast %92 : vector<2x8xf32> to vector<2x8x1xf32>
    %94 = vector.broadcast %93 : vector<2x8x1xf32> to vector<2x8x8xf32>
    %95 = arith.subf %91, %94 : vector<2x8x8xf32>
    %96 = math.exp %95 : vector<2x8x8xf32>
    %cst_36 = arith.constant dense<0.000000e+00> : vector<2x8xf32>
    %97 = vector.multi_reduction <add>, %96, %cst_36 [2] : vector<2x8x8xf32> to vector<2x8xf32>
    %98 = vector.shape_cast %97 : vector<2x8xf32> to vector<2x8x1xf32>
    %99 = tpu.reciprocal %98 {approx = true} : vector<2x8x1xf32> -> vector<2x8x1xf32>
    %100 = vector.broadcast %99 : vector<2x8x1xf32> to vector<2x8x8xf32>
    %101 = arith.mulf %96, %100 : vector<2x8x8xf32>
    "tpu.trace_start"() <{level = 10 : i32, message = "bqk,bkd->bqd"}> : () -> ()
    %cst_37 = arith.constant dense<0.000000e+00> : vector<2x8x8xf32>
    %102 = tpu.matmul %101, %88, %cst_37 {dimension_numbers = #tpu.dot_dimension_numbers<[2], [1], [1], [2], [0, 0, 0, 1, 1, 2], [0], [0]>} : vector<2x8x8xf32>, vector<2x8x8xf32>, vector<2x8x8xf32> -> vector<2x8x8xf32>
    "tpu.trace_stop"() : () -> ()
    %103 = vector.shape_cast %102 : vector<2x8x8xf32> to vector<16x8xf32>
    %104 = tpu.concatenate %40, %61, %82, %103 in 1 : vector<16x8xf32>, vector<16x8xf32>, vector<16x8xf32>, vector<16x8xf32> -> vector<16x32xf32>
    %c0_38 = arith.constant 0 : index
    %c0_39 = arith.constant 0 : index
    %c0_40 = arith.constant 0 : index
    %c0_41 = arith.constant 0 : index
    %105 = vector.load %arg6[%c0_38, %c0_39, %c0_40, %c0_41] : memref<1x2x32x32xf32, #tpu.memory_space<vmem>>, vector<1x1x32x32xf32>
    %106 = vector.shape_cast %105 : vector<1x1x32x32xf32> to vector<32x32xf32>
    %cst_42 = arith.constant dense<0.000000e+00> : vector<16x32xf32>
    %107 = tpu.matmul %104, %106, %cst_42 {dimension_numbers = #tpu.dot_dimension_numbers<[1], [0], [0], [1], [0, 0, 1, 1], [], []>} : vector<16x32xf32>, vector<32x32xf32>, vector<16x32xf32> -> vector<16x32xf32>
    %c0_43 = arith.constant 0 : index
    %c0_44 = arith.constant 0 : index
    %c0_45 = arith.constant 0 : index
    %c0_46 = arith.constant 0 : index
    %108 = vector.load %arg7[%c0_43, %c0_44, %c0_45, %c0_46] : memref<1x2x1x32xf32, #tpu.memory_space<vmem>>, vector<1x1x1x32xf32>
    %109 = vector.shape_cast %108 : vector<1x1x1x32xf32> to vector<1x32xf32>
    %110 = vector.broadcast %109 : vector<1x32xf32> to vector<16x32xf32>
    %111 = arith.addf %107, %110 : vector<16x32xf32>
    %c0_47 = arith.constant 0 : index
    %c0_48 = arith.constant 0 : index
    %c0_49 = arith.constant 0 : index
    %c0_50 = arith.constant 0 : index
    %112 = vector.load %arg8[%c0_47, %c0_48, %c0_49, %c0_50] : memref<1x2x1x32xf32, #tpu.memory_space<vmem>>, vector<1x1x1x32xf32>
    %113 = vector.shape_cast %112 : vector<1x1x1x32xf32> to vector<1x32xf32>
    %c0_51 = arith.constant 0 : index
    %c0_52 = arith.constant 0 : index
    %c0_53 = arith.constant 0 : index
    %c0_54 = arith.constant 0 : index
    %114 = vector.load %arg9[%c0_51, %c0_52, %c0_53, %c0_54] : memref<1x2x1x32xf32, #tpu.memory_space<vmem>>, vector<1x1x1x32xf32>
    %115 = vector.shape_cast %114 : vector<1x1x1x32xf32> to vector<1x32xf32>
    %116 = arith.addf %9, %111 : vector<16x32xf32>
    %cst_55 = arith.constant dense<0.000000e+00> : vector<16xf32>
    %117 = vector.multi_reduction <add>, %116, %cst_55 [1] : vector<16x32xf32> to vector<16xf32>
    %118 = vector.shape_cast %117 : vector<16xf32> to vector<16x1xf32>
    %cst_56 = arith.constant 3.200000e+01 : f32
    %119 = vector.broadcast %cst_56 : f32 to vector<16x1xf32>
    %120 = arith.divf %118, %119 : vector<16x1xf32>
    %121 = vector.broadcast %120 : vector<16x1xf32> to vector<16x32xf32>
    %122 = arith.subf %116, %121 : vector<16x32xf32>
    %123 = arith.mulf %122, %122 : vector<16x32xf32>
    %cst_57 = arith.constant dense<0.000000e+00> : vector<16xf32>
    %124 = vector.multi_reduction <add>, %123, %cst_57 [1] : vector<16x32xf32> to vector<16xf32>
    %125 = vector.shape_cast %124 : vector<16xf32> to vector<16x1xf32>
    %cst_58 = arith.constant 3.200000e+01 : f32
    %126 = vector.broadcast %cst_58 : f32 to vector<16x1xf32>
    %127 = arith.divf %125, %126 : vector<16x1xf32>
    %128 = vector.broadcast %120 : vector<16x1xf32> to vector<16x32xf32>
    %129 = arith.subf %116, %128 : vector<16x32xf32>
    %cst_59 = arith.constant 9.99999974E-6 : f32
    %130 = vector.broadcast %cst_59 : f32 to vector<16x1xf32>
    %131 = arith.addf %127, %130 : vector<16x1xf32>
    %132 = math.rsqrt %131 : vector<16x1xf32>
    %133 = vector.broadcast %132 : vector<16x1xf32> to vector<16x32xf32>
    %134 = arith.mulf %129, %133 : vector<16x32xf32>
    %135 = vector.broadcast %113 : vector<1x32xf32> to vector<16x32xf32>
    %136 = arith.mulf %134, %135 : vector<16x32xf32>
    %137 = vector.broadcast %115 : vector<1x32xf32> to vector<16x32xf32>
    %138 = arith.addf %136, %137 : vector<16x32xf32>
    %c0_60 = arith.constant 0 : index
    %c0_61 = arith.constant 0 : index
    %c0_62 = arith.constant 0 : index
    %c0_63 = arith.constant 0 : index
    %139 = vector.load %arg10[%c0_60, %c0_61, %c0_62, %c0_63] : memref<1x2x32x2048xf32, #tpu.memory_space<vmem>>, vector<1x1x32x2048xf32>
    %140 = vector.shape_cast %139 : vector<1x1x32x2048xf32> to vector<32x2048xf32>
    %cst_64 = arith.constant dense<0.000000e+00> : vector<16x2048xf32>
    %141 = tpu.matmul %138, %140, %cst_64 {dimension_numbers = #tpu.dot_dimension_numbers<[1], [0], [0], [1], [0, 0, 1, 1], [], []>} : vector<16x32xf32>, vector<32x2048xf32>, vector<16x2048xf32> -> vector<16x2048xf32>
    %c0_65 = arith.constant 0 : index
    %c0_66 = arith.constant 0 : index
    %c0_67 = arith.constant 0 : index
    %c0_68 = arith.constant 0 : index
    %142 = vector.load %arg11[%c0_65, %c0_66, %c0_67, %c0_68] : memref<1x2x1x2048xf32, #tpu.memory_space<vmem>>, vector<1x1x1x2048xf32>
    %143 = vector.shape_cast %142 : vector<1x1x1x2048xf32> to vector<1x2048xf32>
    %144 = vector.broadcast %143 : vector<1x2048xf32> to vector<16x2048xf32>
    %145 = arith.addf %141, %144 : vector<16x2048xf32>
    %cst_69 = arith.constant 0.000000e+00 : f32
    %146 = vector.broadcast %cst_69 : f32 to vector<16x2048xf32>
    %147 = arith.maximumf %145, %146 : vector<16x2048xf32>
    %c0_70 = arith.constant 0 : index
    %c0_71 = arith.constant 0 : index
    %c0_72 = arith.constant 0 : index
    %c0_73 = arith.constant 0 : index
    %148 = vector.load %arg12[%c0_70, %c0_71, %c0_72, %c0_73] : memref<1x2x2048x32xf32, #tpu.memory_space<vmem>>, vector<1x1x2048x32xf32>
    %149 = vector.shape_cast %148 : vector<1x1x2048x32xf32> to vector<2048x32xf32>
    %cst_74 = arith.constant dense<0.000000e+00> : vector<16x32xf32>
    %150 = tpu.matmul %147, %149, %cst_74 {dimension_numbers = #tpu.dot_dimension_numbers<[1], [0], [0], [1], [0, 0, 1, 1], [], []>} : vector<16x2048xf32>, vector<2048x32xf32>, vector<16x32xf32> -> vector<16x32xf32>
    %c0_75 = arith.constant 0 : index
    %c0_76 = arith.constant 0 : index
    %c0_77 = arith.constant 0 : index
    %c0_78 = arith.constant 0 : index
    %151 = vector.load %arg13[%c0_75, %c0_76, %c0_77, %c0_78] : memref<1x2x1x32xf32, #tpu.memory_space<vmem>>, vector<1x1x1x32xf32>
    %152 = vector.shape_cast %151 : vector<1x1x1x32xf32> to vector<1x32xf32>
    %153 = vector.broadcast %152 : vector<1x32xf32> to vector<16x32xf32>
    %154 = arith.addf %150, %153 : vector<16x32xf32>
    %c0_79 = arith.constant 0 : index
    %c0_80 = arith.constant 0 : index
    %c0_81 = arith.constant 0 : index
    %c0_82 = arith.constant 0 : index
    %155 = vector.load %arg14[%c0_79, %c0_80, %c0_81, %c0_82] : memref<1x2x1x32xf32, #tpu.memory_space<vmem>>, vector<1x1x1x32xf32>
    %156 = vector.shape_cast %155 : vector<1x1x1x32xf32> to vector<1x32xf32>
    %c0_83 = arith.constant 0 : index
    %c0_84 = arith.constant 0 : index
    %c0_85 = arith.constant 0 : index
    %c0_86 = arith.constant 0 : index
    %157 = vector.load %arg15[%c0_83, %c0_84, %c0_85, %c0_86] : memref<1x2x1x32xf32, #tpu.memory_space<vmem>>, vector<1x1x1x32xf32>
    %158 = vector.shape_cast %157 : vector<1x1x1x32xf32> to vector<1x32xf32>
    %159 = arith.addf %138, %154 : vector<16x32xf32>
    %cst_87 = arith.constant dense<0.000000e+00> : vector<16xf32>
    %160 = vector.multi_reduction <add>, %159, %cst_87 [1] : vector<16x32xf32> to vector<16xf32>
    %161 = vector.shape_cast %160 : vector<16xf32> to vector<16x1xf32>
    %cst_88 = arith.constant 3.200000e+01 : f32
    %162 = vector.broadcast %cst_88 : f32 to vector<16x1xf32>
    %163 = arith.divf %161, %162 : vector<16x1xf32>
    %164 = vector.broadcast %163 : vector<16x1xf32> to vector<16x32xf32>
    %165 = arith.subf %159, %164 : vector<16x32xf32>
    %166 = arith.mulf %165, %165 : vector<16x32xf32>
    %cst_89 = arith.constant dense<0.000000e+00> : vector<16xf32>
    %167 = vector.multi_reduction <add>, %166, %cst_89 [1] : vector<16x32xf32> to vector<16xf32>
    %168 = vector.shape_cast %167 : vector<16xf32> to vector<16x1xf32>
    %cst_90 = arith.constant 3.200000e+01 : f32
    %169 = vector.broadcast %cst_90 : f32 to vector<16x1xf32>
    %170 = arith.divf %168, %169 : vector<16x1xf32>
    %171 = vector.broadcast %163 : vector<16x1xf32> to vector<16x32xf32>
    %172 = arith.subf %159, %171 : vector<16x32xf32>
    %cst_91 = arith.constant 9.99999974E-6 : f32
    %173 = vector.broadcast %cst_91 : f32 to vector<16x1xf32>
    %174 = arith.addf %170, %173 : vector<16x1xf32>
    %175 = math.rsqrt %174 : vector<16x1xf32>
    %176 = vector.broadcast %175 : vector<16x1xf32> to vector<16x32xf32>
    %177 = arith.mulf %172, %176 : vector<16x32xf32>
    %178 = vector.broadcast %156 : vector<1x32xf32> to vector<16x32xf32>
    %179 = arith.mulf %177, %178 : vector<16x32xf32>
    %180 = vector.broadcast %158 : vector<1x32xf32> to vector<16x32xf32>
    %181 = arith.addf %179, %180 : vector<16x32xf32>
    %c0_92 = arith.constant 0 : index
    %c1 = arith.constant 1 : index
    %c0_93 = arith.constant 0 : index
    %c0_94 = arith.constant 0 : index
    %182 = vector.load %arg4[%c0_92, %c1, %c0_93, %c0_94] : memref<1x2x32x96xf32, #tpu.memory_space<vmem>>, vector<1x1x32x96xf32>
    %183 = vector.shape_cast %182 : vector<1x1x32x96xf32> to vector<32x96xf32>
    %cst_95 = arith.constant dense<0.000000e+00> : vector<16x96xf32>
    %184 = tpu.matmul %181, %183, %cst_95 {dimension_numbers = #tpu.dot_dimension_numbers<[1], [0], [0], [1], [0, 0, 1, 1], [], []>} : vector<16x32xf32>, vector<32x96xf32>, vector<16x96xf32> -> vector<16x96xf32>
    %c0_96 = arith.constant 0 : index
    %c1_97 = arith.constant 1 : index
    %c0_98 = arith.constant 0 : index
    %c0_99 = arith.constant 0 : index
    %185 = vector.load %arg5[%c0_96, %c1_97, %c0_98, %c0_99] : memref<1x2x1x96xf32, #tpu.memory_space<vmem>>, vector<1x1x1x96xf32>
    %186 = vector.shape_cast %185 : vector<1x1x1x96xf32> to vector<1x96xf32>
    %187 = vector.broadcast %186 : vector<1x96xf32> to vector<16x96xf32>
    %188 = arith.addf %184, %187 : vector<16x96xf32>
    %189 = vector.extract_strided_slice %188 {offsets = [0, 0], sizes = [16, 32], strides = [1, 1]} : vector<16x96xf32> to vector<16x32xf32>
    %190 = vector.extract_strided_slice %188 {offsets = [0, 32], sizes = [16, 32], strides = [1, 1]} : vector<16x96xf32> to vector<16x32xf32>
    %191 = vector.extract_strided_slice %188 {offsets = [0, 64], sizes = [16, 32], strides = [1, 1]} : vector<16x96xf32> to vector<16x32xf32>
    %192 = vector.extract_strided_slice %189 {offsets = [0, 0], sizes = [16, 8], strides = [1, 1]} : vector<16x32xf32> to vector<16x8xf32>
    %193 = vector.shape_cast %192 : vector<16x8xf32> to vector<2x8x8xf32>
    %194 = vector.extract_strided_slice %190 {offsets = [0, 0], sizes = [16, 8], strides = [1, 1]} : vector<16x32xf32> to vector<16x8xf32>
    %195 = vector.shape_cast %194 : vector<16x8xf32> to vector<2x8x8xf32>
    %196 = vector.extract_strided_slice %191 {offsets = [0, 0], sizes = [16, 8], strides = [1, 1]} : vector<16x32xf32> to vector<16x8xf32>
    %197 = vector.shape_cast %196 : vector<16x8xf32> to vector<2x8x8xf32>
    "tpu.trace_start"() <{level = 10 : i32, message = "bqd,bkd->bqk"}> : () -> ()
    %cst_100 = arith.constant dense<0.000000e+00> : vector<2x8x8xf32>
    %198 = tpu.matmul %193, %195, %cst_100 {dimension_numbers = #tpu.dot_dimension_numbers<[2], [2], [1], [1], [0, 0, 0, 1, 1, 1], [0], [0]>} : vector<2x8x8xf32>, vector<2x8x8xf32>, vector<2x8x8xf32> -> vector<2x8x8xf32>
    "tpu.trace_stop"() : () -> ()
    %cst_101 = arith.constant 0.353553385 : f32
    %199 = vector.broadcast %cst_101 : f32 to vector<2x8x8xf32>
    %200 = arith.mulf %198, %199 : vector<2x8x8xf32>
    %cst_102 = arith.constant dense<0xFF800000> : vector<2x8xf32>
    %201 = vector.multi_reduction <maximumf>, %200, %cst_102 [2] : vector<2x8x8xf32> to vector<2x8xf32>
    %202 = vector.shape_cast %201 : vector<2x8xf32> to vector<2x8x1xf32>
    %203 = vector.broadcast %202 : vector<2x8x1xf32> to vector<2x8x8xf32>
    %204 = arith.subf %200, %203 : vector<2x8x8xf32>
    %205 = math.exp %204 : vector<2x8x8xf32>
    %cst_103 = arith.constant dense<0.000000e+00> : vector<2x8xf32>
    %206 = vector.multi_reduction <add>, %205, %cst_103 [2] : vector<2x8x8xf32> to vector<2x8xf32>
    %207 = vector.shape_cast %206 : vector<2x8xf32> to vector<2x8x1xf32>
    %208 = tpu.reciprocal %207 {approx = true} : vector<2x8x1xf32> -> vector<2x8x1xf32>
    %209 = vector.broadcast %208 : vector<2x8x1xf32> to vector<2x8x8xf32>
    %210 = arith.mulf %205, %209 : vector<2x8x8xf32>
    "tpu.trace_start"() <{level = 10 : i32, message = "bqk,bkd->bqd"}> : () -> ()
    %cst_104 = arith.constant dense<0.000000e+00> : vector<2x8x8xf32>
    %211 = tpu.matmul %210, %197, %cst_104 {dimension_numbers = #tpu.dot_dimension_numbers<[2], [1], [1], [2], [0, 0, 0, 1, 1, 2], [0], [0]>} : vector<2x8x8xf32>, vector<2x8x8xf32>, vector<2x8x8xf32> -> vector<2x8x8xf32>
    "tpu.trace_stop"() : () -> ()
    %212 = vector.shape_cast %211 : vector<2x8x8xf32> to vector<16x8xf32>
    %213 = vector.extract_strided_slice %189 {offsets = [0, 8], sizes = [16, 8], strides = [1, 1]} : vector<16x32xf32> to vector<16x8xf32>
    %214 = vector.shape_cast %213 : vector<16x8xf32> to vector<2x8x8xf32>
    %215 = vector.extract_strided_slice %190 {offsets = [0, 8], sizes = [16, 8], strides = [1, 1]} : vector<16x32xf32> to vector<16x8xf32>
    %216 = vector.shape_cast %215 : vector<16x8xf32> to vector<2x8x8xf32>
    %217 = vector.extract_strided_slice %191 {offsets = [0, 8], sizes = [16, 8], strides = [1, 1]} : vector<16x32xf32> to vector<16x8xf32>
    %218 = vector.shape_cast %217 : vector<16x8xf32> to vector<2x8x8xf32>
    "tpu.trace_start"() <{level = 10 : i32, message = "bqd,bkd->bqk"}> : () -> ()
    %cst_105 = arith.constant dense<0.000000e+00> : vector<2x8x8xf32>
    %219 = tpu.matmul %214, %216, %cst_105 {dimension_numbers = #tpu.dot_dimension_numbers<[2], [2], [1], [1], [0, 0, 0, 1, 1, 1], [0], [0]>} : vector<2x8x8xf32>, vector<2x8x8xf32>, vector<2x8x8xf32> -> vector<2x8x8xf32>
    "tpu.trace_stop"() : () -> ()
    %cst_106 = arith.constant 0.353553385 : f32
    %220 = vector.broadcast %cst_106 : f32 to vector<2x8x8xf32>
    %221 = arith.mulf %219, %220 : vector<2x8x8xf32>
    %cst_107 = arith.constant dense<0xFF800000> : vector<2x8xf32>
    %222 = vector.multi_reduction <maximumf>, %221, %cst_107 [2] : vector<2x8x8xf32> to vector<2x8xf32>
    %223 = vector.shape_cast %222 : vector<2x8xf32> to vector<2x8x1xf32>
    %224 = vector.broadcast %223 : vector<2x8x1xf32> to vector<2x8x8xf32>
    %225 = arith.subf %221, %224 : vector<2x8x8xf32>
    %226 = math.exp %225 : vector<2x8x8xf32>
    %cst_108 = arith.constant dense<0.000000e+00> : vector<2x8xf32>
    %227 = vector.multi_reduction <add>, %226, %cst_108 [2] : vector<2x8x8xf32> to vector<2x8xf32>
    %228 = vector.shape_cast %227 : vector<2x8xf32> to vector<2x8x1xf32>
    %229 = tpu.reciprocal %228 {approx = true} : vector<2x8x1xf32> -> vector<2x8x1xf32>
    %230 = vector.broadcast %229 : vector<2x8x1xf32> to vector<2x8x8xf32>
    %231 = arith.mulf %226, %230 : vector<2x8x8xf32>
    "tpu.trace_start"() <{level = 10 : i32, message = "bqk,bkd->bqd"}> : () -> ()
    %cst_109 = arith.constant dense<0.000000e+00> : vector<2x8x8xf32>
    %232 = tpu.matmul %231, %218, %cst_109 {dimension_numbers = #tpu.dot_dimension_numbers<[2], [1], [1], [2], [0, 0, 0, 1, 1, 2], [0], [0]>} : vector<2x8x8xf32>, vector<2x8x8xf32>, vector<2x8x8xf32> -> vector<2x8x8xf32>
    "tpu.trace_stop"() : () -> ()
    %233 = vector.shape_cast %232 : vector<2x8x8xf32> to vector<16x8xf32>
    %234 = vector.extract_strided_slice %189 {offsets = [0, 16], sizes = [16, 8], strides = [1, 1]} : vector<16x32xf32> to vector<16x8xf32>
    %235 = vector.shape_cast %234 : vector<16x8xf32> to vector<2x8x8xf32>
    %236 = vector.extract_strided_slice %190 {offsets = [0, 16], sizes = [16, 8], strides = [1, 1]} : vector<16x32xf32> to vector<16x8xf32>
    %237 = vector.shape_cast %236 : vector<16x8xf32> to vector<2x8x8xf32>
    %238 = vector.extract_strided_slice %191 {offsets = [0, 16], sizes = [16, 8], strides = [1, 1]} : vector<16x32xf32> to vector<16x8xf32>
    %239 = vector.shape_cast %238 : vector<16x8xf32> to vector<2x8x8xf32>
    "tpu.trace_start"() <{level = 10 : i32, message = "bqd,bkd->bqk"}> : () -> ()
    %cst_110 = arith.constant dense<0.000000e+00> : vector<2x8x8xf32>
    %240 = tpu.matmul %235, %237, %cst_110 {dimension_numbers = #tpu.dot_dimension_numbers<[2], [2], [1], [1], [0, 0, 0, 1, 1, 1], [0], [0]>} : vector<2x8x8xf32>, vector<2x8x8xf32>, vector<2x8x8xf32> -> vector<2x8x8xf32>
    "tpu.trace_stop"() : () -> ()
    %cst_111 = arith.constant 0.353553385 : f32
    %241 = vector.broadcast %cst_111 : f32 to vector<2x8x8xf32>
    %242 = arith.mulf %240, %241 : vector<2x8x8xf32>
    %cst_112 = arith.constant dense<0xFF800000> : vector<2x8xf32>
    %243 = vector.multi_reduction <maximumf>, %242, %cst_112 [2] : vector<2x8x8xf32> to vector<2x8xf32>
    %244 = vector.shape_cast %243 : vector<2x8xf32> to vector<2x8x1xf32>
    %245 = vector.broadcast %244 : vector<2x8x1xf32> to vector<2x8x8xf32>
    %246 = arith.subf %242, %245 : vector<2x8x8xf32>
    %247 = math.exp %246 : vector<2x8x8xf32>
    %cst_113 = arith.constant dense<0.000000e+00> : vector<2x8xf32>
    %248 = vector.multi_reduction <add>, %247, %cst_113 [2] : vector<2x8x8xf32> to vector<2x8xf32>
    %249 = vector.shape_cast %248 : vector<2x8xf32> to vector<2x8x1xf32>
    %250 = tpu.reciprocal %249 {approx = true} : vector<2x8x1xf32> -> vector<2x8x1xf32>
    %251 = vector.broadcast %250 : vector<2x8x1xf32> to vector<2x8x8xf32>
    %252 = arith.mulf %247, %251 : vector<2x8x8xf32>
    "tpu.trace_start"() <{level = 10 : i32, message = "bqk,bkd->bqd"}> : () -> ()
    %cst_114 = arith.constant dense<0.000000e+00> : vector<2x8x8xf32>
    %253 = tpu.matmul %252, %239, %cst_114 {dimension_numbers = #tpu.dot_dimension_numbers<[2], [1], [1], [2], [0, 0, 0, 1, 1, 2], [0], [0]>} : vector<2x8x8xf32>, vector<2x8x8xf32>, vector<2x8x8xf32> -> vector<2x8x8xf32>
    "tpu.trace_stop"() : () -> ()
    %254 = vector.shape_cast %253 : vector<2x8x8xf32> to vector<16x8xf32>
    %255 = vector.extract_strided_slice %189 {offsets = [0, 24], sizes = [16, 8], strides = [1, 1]} : vector<16x32xf32> to vector<16x8xf32>
    %256 = vector.shape_cast %255 : vector<16x8xf32> to vector<2x8x8xf32>
    %257 = vector.extract_strided_slice %190 {offsets = [0, 24], sizes = [16, 8], strides = [1, 1]} : vector<16x32xf32> to vector<16x8xf32>
    %258 = vector.shape_cast %257 : vector<16x8xf32> to vector<2x8x8xf32>
    %259 = vector.extract_strided_slice %191 {offsets = [0, 24], sizes = [16, 8], strides = [1, 1]} : vector<16x32xf32> to vector<16x8xf32>
    %260 = vector.shape_cast %259 : vector<16x8xf32> to vector<2x8x8xf32>
    "tpu.trace_start"() <{level = 10 : i32, message = "bqd,bkd->bqk"}> : () -> ()
    %cst_115 = arith.constant dense<0.000000e+00> : vector<2x8x8xf32>
    %261 = tpu.matmul %256, %258, %cst_115 {dimension_numbers = #tpu.dot_dimension_numbers<[2], [2], [1], [1], [0, 0, 0, 1, 1, 1], [0], [0]>} : vector<2x8x8xf32>, vector<2x8x8xf32>, vector<2x8x8xf32> -> vector<2x8x8xf32>
    "tpu.trace_stop"() : () -> ()
    %cst_116 = arith.constant 0.353553385 : f32
    %262 = vector.broadcast %cst_116 : f32 to vector<2x8x8xf32>
    %263 = arith.mulf %261, %262 : vector<2x8x8xf32>
    %cst_117 = arith.constant dense<0xFF800000> : vector<2x8xf32>
    %264 = vector.multi_reduction <maximumf>, %263, %cst_117 [2] : vector<2x8x8xf32> to vector<2x8xf32>
    %265 = vector.shape_cast %264 : vector<2x8xf32> to vector<2x8x1xf32>
    %266 = vector.broadcast %265 : vector<2x8x1xf32> to vector<2x8x8xf32>
    %267 = arith.subf %263, %266 : vector<2x8x8xf32>
    %268 = math.exp %267 : vector<2x8x8xf32>
    %cst_118 = arith.constant dense<0.000000e+00> : vector<2x8xf32>
    %269 = vector.multi_reduction <add>, %268, %cst_118 [2] : vector<2x8x8xf32> to vector<2x8xf32>
    %270 = vector.shape_cast %269 : vector<2x8xf32> to vector<2x8x1xf32>
    %271 = tpu.reciprocal %270 {approx = true} : vector<2x8x1xf32> -> vector<2x8x1xf32>
    %272 = vector.broadcast %271 : vector<2x8x1xf32> to vector<2x8x8xf32>
    %273 = arith.mulf %268, %272 : vector<2x8x8xf32>
    "tpu.trace_start"() <{level = 10 : i32, message = "bqk,bkd->bqd"}> : () -> ()
    %cst_119 = arith.constant dense<0.000000e+00> : vector<2x8x8xf32>
    %274 = tpu.matmul %273, %260, %cst_119 {dimension_numbers = #tpu.dot_dimension_numbers<[2], [1], [1], [2], [0, 0, 0, 1, 1, 2], [0], [0]>} : vector<2x8x8xf32>, vector<2x8x8xf32>, vector<2x8x8xf32> -> vector<2x8x8xf32>
    "tpu.trace_stop"() : () -> ()
    %275 = vector.shape_cast %274 : vector<2x8x8xf32> to vector<16x8xf32>
    %276 = tpu.concatenate %212, %233, %254, %275 in 1 : vector<16x8xf32>, vector<16x8xf32>, vector<16x8xf32>, vector<16x8xf32> -> vector<16x32xf32>
    %c0_120 = arith.constant 0 : index
    %c1_121 = arith.constant 1 : index
    %c0_122 = arith.constant 0 : index
    %c0_123 = arith.constant 0 : index
    %277 = vector.load %arg6[%c0_120, %c1_121, %c0_122, %c0_123] : memref<1x2x32x32xf32, #tpu.memory_space<vmem>>, vector<1x1x32x32xf32>
    %278 = vector.shape_cast %277 : vector<1x1x32x32xf32> to vector<32x32xf32>
    %cst_124 = arith.constant dense<0.000000e+00> : vector<16x32xf32>
    %279 = tpu.matmul %276, %278, %cst_124 {dimension_numbers = #tpu.dot_dimension_numbers<[1], [0], [0], [1], [0, 0, 1, 1], [], []>} : vector<16x32xf32>, vector<32x32xf32>, vector<16x32xf32> -> vector<16x32xf32>
    %c0_125 = arith.constant 0 : index
    %c1_126 = arith.constant 1 : index
    %c0_127 = arith.constant 0 : index
    %c0_128 = arith.constant 0 : index
    %280 = vector.load %arg7[%c0_125, %c1_126, %c0_127, %c0_128] : memref<1x2x1x32xf32, #tpu.memory_space<vmem>>, vector<1x1x1x32xf32>
    %281 = vector.shape_cast %280 : vector<1x1x1x32xf32> to vector<1x32xf32>
    %282 = vector.broadcast %281 : vector<1x32xf32> to vector<16x32xf32>
    %283 = arith.addf %279, %282 : vector<16x32xf32>
    %c0_129 = arith.constant 0 : index
    %c1_130 = arith.constant 1 : index
    %c0_131 = arith.constant 0 : index
    %c0_132 = arith.constant 0 : index
    %284 = vector.load %arg8[%c0_129, %c1_130, %c0_131, %c0_132] : memref<1x2x1x32xf32, #tpu.memory_space<vmem>>, vector<1x1x1x32xf32>
    %285 = vector.shape_cast %284 : vector<1x1x1x32xf32> to vector<1x32xf32>
    %c0_133 = arith.constant 0 : index
    %c1_134 = arith.constant 1 : index
    %c0_135 = arith.constant 0 : index
    %c0_136 = arith.constant 0 : index
    %286 = vector.load %arg9[%c0_133, %c1_134, %c0_135, %c0_136] : memref<1x2x1x32xf32, #tpu.memory_space<vmem>>, vector<1x1x1x32xf32>
    %287 = vector.shape_cast %286 : vector<1x1x1x32xf32> to vector<1x32xf32>
    %288 = arith.addf %181, %283 : vector<16x32xf32>
    %cst_137 = arith.constant dense<0.000000e+00> : vector<16xf32>
    %289 = vector.multi_reduction <add>, %288, %cst_137 [1] : vector<16x32xf32> to vector<16xf32>
    %290 = vector.shape_cast %289 : vector<16xf32> to vector<16x1xf32>
    %cst_138 = arith.constant 3.200000e+01 : f32
    %291 = vector.broadcast %cst_138 : f32 to vector<16x1xf32>
    %292 = arith.divf %290, %291 : vector<16x1xf32>
    %293 = vector.broadcast %292 : vector<16x1xf32> to vector<16x32xf32>
    %294 = arith.subf %288, %293 : vector<16x32xf32>
    %295 = arith.mulf %294, %294 : vector<16x32xf32>
    %cst_139 = arith.constant dense<0.000000e+00> : vector<16xf32>
    %296 = vector.multi_reduction <add>, %295, %cst_139 [1] : vector<16x32xf32> to vector<16xf32>
    %297 = vector.shape_cast %296 : vector<16xf32> to vector<16x1xf32>
    %cst_140 = arith.constant 3.200000e+01 : f32
    %298 = vector.broadcast %cst_140 : f32 to vector<16x1xf32>
    %299 = arith.divf %297, %298 : vector<16x1xf32>
    %300 = vector.broadcast %292 : vector<16x1xf32> to vector<16x32xf32>
    %301 = arith.subf %288, %300 : vector<16x32xf32>
    %cst_141 = arith.constant 9.99999974E-6 : f32
    %302 = vector.broadcast %cst_141 : f32 to vector<16x1xf32>
    %303 = arith.addf %299, %302 : vector<16x1xf32>
    %304 = math.rsqrt %303 : vector<16x1xf32>
    %305 = vector.broadcast %304 : vector<16x1xf32> to vector<16x32xf32>
    %306 = arith.mulf %301, %305 : vector<16x32xf32>
    %307 = vector.broadcast %285 : vector<1x32xf32> to vector<16x32xf32>
    %308 = arith.mulf %306, %307 : vector<16x32xf32>
    %309 = vector.broadcast %287 : vector<1x32xf32> to vector<16x32xf32>
    %310 = arith.addf %308, %309 : vector<16x32xf32>
    %c0_142 = arith.constant 0 : index
    %c1_143 = arith.constant 1 : index
    %c0_144 = arith.constant 0 : index
    %c0_145 = arith.constant 0 : index
    %311 = vector.load %arg10[%c0_142, %c1_143, %c0_144, %c0_145] : memref<1x2x32x2048xf32, #tpu.memory_space<vmem>>, vector<1x1x32x2048xf32>
    %312 = vector.shape_cast %311 : vector<1x1x32x2048xf32> to vector<32x2048xf32>
    %cst_146 = arith.constant dense<0.000000e+00> : vector<16x2048xf32>
    %313 = tpu.matmul %310, %312, %cst_146 {dimension_numbers = #tpu.dot_dimension_numbers<[1], [0], [0], [1], [0, 0, 1, 1], [], []>} : vector<16x32xf32>, vector<32x2048xf32>, vector<16x2048xf32> -> vector<16x2048xf32>
    %c0_147 = arith.constant 0 : index
    %c1_148 = arith.constant 1 : index
    %c0_149 = arith.constant 0 : index
    %c0_150 = arith.constant 0 : index
    %314 = vector.load %arg11[%c0_147, %c1_148, %c0_149, %c0_150] : memref<1x2x1x2048xf32, #tpu.memory_space<vmem>>, vector<1x1x1x2048xf32>
    %315 = vector.shape_cast %314 : vector<1x1x1x2048xf32> to vector<1x2048xf32>
    %316 = vector.broadcast %315 : vector<1x2048xf32> to vector<16x2048xf32>
    %317 = arith.addf %313, %316 : vector<16x2048xf32>
    %cst_151 = arith.constant 0.000000e+00 : f32
    %318 = vector.broadcast %cst_151 : f32 to vector<16x2048xf32>
    %319 = arith.maximumf %317, %318 : vector<16x2048xf32>
    %c0_152 = arith.constant 0 : index
    %c1_153 = arith.constant 1 : index
    %c0_154 = arith.constant 0 : index
    %c0_155 = arith.constant 0 : index
    %320 = vector.load %arg12[%c0_152, %c1_153, %c0_154, %c0_155] : memref<1x2x2048x32xf32, #tpu.memory_space<vmem>>, vector<1x1x2048x32xf32>
    %321 = vector.shape_cast %320 : vector<1x1x2048x32xf32> to vector<2048x32xf32>
    %cst_156 = arith.constant dense<0.000000e+00> : vector<16x32xf32>
    %322 = tpu.matmul %319, %321, %cst_156 {dimension_numbers = #tpu.dot_dimension_numbers<[1], [0], [0], [1], [0, 0, 1, 1], [], []>} : vector<16x2048xf32>, vector<2048x32xf32>, vector<16x32xf32> -> vector<16x32xf32>
    %c0_157 = arith.constant 0 : index
    %c1_158 = arith.constant 1 : index
    %c0_159 = arith.constant 0 : index
    %c0_160 = arith.constant 0 : index
    %323 = vector.load %arg13[%c0_157, %c1_158, %c0_159, %c0_160] : memref<1x2x1x32xf32, #tpu.memory_space<vmem>>, vector<1x1x1x32xf32>
    %324 = vector.shape_cast %323 : vector<1x1x1x32xf32> to vector<1x32xf32>
    %325 = vector.broadcast %324 : vector<1x32xf32> to vector<16x32xf32>
    %326 = arith.addf %322, %325 : vector<16x32xf32>
    %c0_161 = arith.constant 0 : index
    %c1_162 = arith.constant 1 : index
    %c0_163 = arith.constant 0 : index
    %c0_164 = arith.constant 0 : index
    %327 = vector.load %arg14[%c0_161, %c1_162, %c0_163, %c0_164] : memref<1x2x1x32xf32, #tpu.memory_space<vmem>>, vector<1x1x1x32xf32>
    %328 = vector.shape_cast %327 : vector<1x1x1x32xf32> to vector<1x32xf32>
    %c0_165 = arith.constant 0 : index
    %c1_166 = arith.constant 1 : index
    %c0_167 = arith.constant 0 : index
    %c0_168 = arith.constant 0 : index
    %329 = vector.load %arg15[%c0_165, %c1_166, %c0_167, %c0_168] : memref<1x2x1x32xf32, #tpu.memory_space<vmem>>, vector<1x1x1x32xf32>
    %330 = vector.shape_cast %329 : vector<1x1x1x32xf32> to vector<1x32xf32>
    %331 = arith.addf %310, %326 : vector<16x32xf32>
    %cst_169 = arith.constant dense<0.000000e+00> : vector<16xf32>
    %332 = vector.multi_reduction <add>, %331, %cst_169 [1] : vector<16x32xf32> to vector<16xf32>
    %333 = vector.shape_cast %332 : vector<16xf32> to vector<16x1xf32>
    %cst_170 = arith.constant 3.200000e+01 : f32
    %334 = vector.broadcast %cst_170 : f32 to vector<16x1xf32>
    %335 = arith.divf %333, %334 : vector<16x1xf32>
    %336 = vector.broadcast %335 : vector<16x1xf32> to vector<16x32xf32>
    %337 = arith.subf %331, %336 : vector<16x32xf32>
    %338 = arith.mulf %337, %337 : vector<16x32xf32>
    %cst_171 = arith.constant dense<0.000000e+00> : vector<16xf32>
    %339 = vector.multi_reduction <add>, %338, %cst_171 [1] : vector<16x32xf32> to vector<16xf32>
    %340 = vector.shape_cast %339 : vector<16xf32> to vector<16x1xf32>
    %cst_172 = arith.constant 3.200000e+01 : f32
    %341 = vector.broadcast %cst_172 : f32 to vector<16x1xf32>
    %342 = arith.divf %340, %341 : vector<16x1xf32>
    %343 = vector.broadcast %335 : vector<16x1xf32> to vector<16x32xf32>
    %344 = arith.subf %331, %343 : vector<16x32xf32>
    %cst_173 = arith.constant 9.99999974E-6 : f32
    %345 = vector.broadcast %cst_173 : f32 to vector<16x1xf32>
    %346 = arith.addf %342, %345 : vector<16x1xf32>
    %347 = math.rsqrt %346 : vector<16x1xf32>
    %348 = vector.broadcast %347 : vector<16x1xf32> to vector<16x32xf32>
    %349 = arith.mulf %344, %348 : vector<16x32xf32>
    %350 = vector.broadcast %328 : vector<1x32xf32> to vector<16x32xf32>
    %351 = arith.mulf %349, %350 : vector<16x32xf32>
    %352 = vector.broadcast %330 : vector<1x32xf32> to vector<16x32xf32>
    %353 = arith.addf %351, %352 : vector<16x32xf32>
    %354 = vector.shape_cast %353 : vector<16x32xf32> to vector<2x8x32xf32>
    %c0_174 = arith.constant 0 : index
    %c0_175 = arith.constant 0 : index
    %c0_176 = arith.constant 0 : index
    %c0_177 = arith.constant 0 : index
    %355 = vector.load %arg16[%c0_174, %c0_175, %c0_176, %c0_177] : memref<1x2x8x32xf32, #tpu.memory_space<vmem>>, vector<1x2x8x32xf32>
    %356 = vector.shape_cast %355 : vector<1x2x8x32xf32> to vector<2x8x32xf32>
    %357 = vector.shape_cast %354 : vector<2x8x32xf32> to vector<1x2x8x32xf32>
    tpu.vector_store %arg16[%c0_174, %c0_175, %c0_176, %c0_177], %357 {strides = array<i32>} : memref<1x2x8x32xf32, #tpu.memory_space<vmem>>, vector<1x2x8x32xf32>,
    return
  }
  func.func @transform_0(%arg0: i32) -> (i32, i32, i32, i32) {
    %c0_i32 = arith.constant 0 : i32
    %c0_i32_0 = arith.constant 0 : i32
    %c0_i32_1 = arith.constant 0 : i32
    %c0_i32_2 = arith.constant 0 : i32
    return %arg0, %c0_i32, %c0_i32_0, %c0_i32_1 : i32, i32, i32, i32
  }
  func.func @transform_1(%arg0: i32) -> (i32, i32, i32) {
    %c0_i32 = arith.constant 0 : i32
    %c0_i32_0 = arith.constant 0 : i32
    %c0_i32_1 = arith.constant 0 : i32
    return %arg0, %c0_i32, %c0_i32_0 : i32, i32, i32
  }
  func.func @transform_2(%arg0: i32) -> (i32, i32, i32) {
    %c0_i32 = arith.constant 0 : i32
    %c0_i32_0 = arith.constant 0 : i32
    %c0_i32_1 = arith.constant 0 : i32
    return %arg0, %c0_i32, %c0_i32_0 : i32, i32, i32
  }
  func.func @transform_3(%arg0: i32) -> (i32, i32, i32, i32) {
    %c0_i32 = arith.constant 0 : i32
    %c0_i32_0 = arith.constant 0 : i32
    %c0_i32_1 = arith.constant 0 : i32
    %c0_i32_2 = arith.constant 0 : i32
    return %arg0, %c0_i32, %c0_i32_0, %c0_i32_1 : i32, i32, i32, i32
  }
  func.func @transform_4(%arg0: i32) -> (i32, i32, i32, i32) {
    %c0_i32 = arith.constant 0 : i32
    %c0_i32_0 = arith.constant 0 : i32
    %c0_i32_1 = arith.constant 0 : i32
    %c0_i32_2 = arith.constant 0 : i32
    return %arg0, %c0_i32, %c0_i32_0, %c0_i32_1 : i32, i32, i32, i32
  }
  func.func @transform_5(%arg0: i32) -> (i32, i32, i32, i32) {
    %c0_i32 = arith.constant 0 : i32
    %c0_i32_0 = arith.constant 0 : i32
    %c0_i32_1 = arith.constant 0 : i32
    %c0_i32_2 = arith.constant 0 : i32
    return %arg0, %c0_i32, %c0_i32_0, %c0_i32_1 : i32, i32, i32, i32
  }
  func.func @transform_6(%arg0: i32) -> (i32, i32, i32, i32) {
    %c0_i32 = arith.constant 0 : i32
    %c0_i32_0 = arith.constant 0 : i32
    %c0_i32_1 = arith.constant 0 : i32
    %c0_i32_2 = arith.constant 0 : i32
    return %arg0, %c0_i32, %c0_i32_0, %c0_i32_1 : i32, i32, i32, i32
  }
  func.func @transform_7(%arg0: i32) -> (i32, i32, i32, i32) {
    %c0_i32 = arith.constant 0 : i32
    %c0_i32_0 = arith.constant 0 : i32
    %c0_i32_1 = arith.constant 0 : i32
    %c0_i32_2 = arith.constant 0 : i32
    return %arg0, %c0_i32, %c0_i32_0, %c0_i32_1 : i32, i32, i32, i32
  }
  func.func @transform_8(%arg0: i32) -> (i32, i32, i32, i32) {
    %c0_i32 = arith.constant 0 : i32
    %c0_i32_0 = arith.constant 0 : i32
    %c0_i32_1 = arith.constant 0 : i32
    %c0_i32_2 = arith.constant 0 : i32
    return %arg0, %c0_i32, %c0_i32_0, %c0_i32_1 : i32, i32, i32, i32
  }
  func.func @transform_9(%arg0: i32) -> (i32, i32, i32, i32) {
    %c0_i32 = arith.constant 0 : i32
    %c0_i32_0 = arith.constant 0 : i32
    %c0_i32_1 = arith.constant 0 : i32
    %c0_i32_2 = arith.constant 0 : i32
    return %arg0, %c0_i32, %c0_i32_0, %c0_i32_1 : i32, i32, i32, i32
  }
  func.func @transform_10(%arg0: i32) -> (i32, i32, i32, i32) {
    %c0_i32 = arith.constant 0 : i32
    %c0_i32_0 = arith.constant 0 : i32
    %c0_i32_1 = arith.constant 0 : i32
    %c0_i32_2 = arith.constant 0 : i32
    return %arg0, %c0_i32, %c0_i32_0, %c0_i32_1 : i32, i32, i32, i32
  }
  func.func @transform_11(%arg0: i32) -> (i32, i32, i32, i32) {
    %c0_i32 = arith.constant 0 : i32
    %c0_i32_0 = arith.constant 0 : i32
    %c0_i32_1 = arith.constant 0 : i32
    %c0_i32_2 = arith.constant 0 : i32
    return %arg0, %c0_i32, %c0_i32_0, %c0_i32_1 : i32, i32, i32, i32
  }
  func.func @transform_12(%arg0: i32) -> (i32, i32, i32, i32) {
    %c0_i32 = arith.constant 0 : i32
    %c0_i32_0 = arith.constant 0 : i32
    %c0_i32_1 = arith.constant 0 : i32
    %c0_i32_2 = arith.constant 0 : i32
    return %arg0, %c0_i32, %c0_i32_0, %c0_i32_1 : i32, i32, i32, i32
  }
  func.func @transform_13(%arg0: i32) -> (i32, i32, i32, i32) {
    %c0_i32 = arith.constant 0 : i32
    %c0_i32_0 = arith.constant 0 : i32
    %c0_i32_1 = arith.constant 0 : i32
    %c0_i32_2 = arith.constant 0 : i32
    return %arg0, %c0_i32, %c0_i32_0, %c0_i32_1 : i32, i32, i32, i32
  }
  func.func @transform_14(%arg0: i32) -> (i32, i32, i32, i32) {
    %c0_i32 = arith.constant 0 : i32
    %c0_i32_0 = arith.constant 0 : i32
    %c0_i32_1 = arith.constant 0 : i32
    %c0_i32_2 = arith.constant 0 : i32
    return %arg0, %c0_i32, %c0_i32_0, %c0_i32_1 : i32, i32, i32, i32
  }
  func.func @transform_15(%arg0: i32) -> (i32, i32, i32, i32) {
    %c0_i32 = arith.constant 0 : i32
    %c0_i32_0 = arith.constant 0 : i32
    %c0_i32_1 = arith.constant 0 : i32
    %c0_i32_2 = arith.constant 0 : i32
    return %arg0, %c0_i32, %c0_i32_0, %c0_i32_1 : i32, i32, i32, i32
  }
}

</mosaic_0001>

<llo_original>
// kernel: cael_forward.3
$region0: #{cael_forward.3}
  #allocation0 [shape = 'u32[]', space=smem, size = 0x4, offset = 0x4, fixed_abs, tag = 'smem constant byte address 0x4 - core index']
  #allocation1 [shape = 'u32[72,128]{1,0:T(1,128)}', space=vmem, size = 0x9000, scoped, tag = 'internal scratch']
  %s0 = inlined_call_operand.vmem [shape: f32[2,2,8,32], index: 0, kind: input, shape index: {}]
  %s1 = inlined_call_operand.vmem [shape: f32[32,32], index: 1, kind: input, shape index: {}]
  %s2 = inlined_call_operand.vmem [shape: f32[1,32], index: 2, kind: input, shape index: {}]
  %s3 = inlined_call_operand.vmem [shape: f32[32,64], index: 3, kind: input, shape index: {}]
  %s4 = inlined_call_operand.vmem [shape: f32[1,64], index: 4, kind: input, shape index: {}]
  %s5 = inlined_call_operand.vmem [shape: f32[32,32], index: 5, kind: input, shape index: {}]
  %s6 = inlined_call_operand.vmem [shape: f32[1,32], index: 6, kind: input, shape index: {}]
  %s7 = inlined_call_operand.vmem [shape: f32[32,2], index: 7, kind: input, shape index: {}]
  %s8 = inlined_call_operand.vmem [shape: f32[1,2], index: 8, kind: input, shape index: {}]
  %s9 = inlined_call_operand.hbm [shape: f32[2,2], index: 9, kind: output, shape index: {}]
  %s10 = sld [smem:[#allocation0]]
  $region46: #{cael_forward.3} parent=0
    _
  %s12 = ssub.s32 1, %s10
  %s13 = scalar_select 0, %s12, %s10
  $region1: #{cael_forward.3} parent=0
    #allocation2 [shape = 'u8[1024]{0}', space=vmem, size = 0x400, scoped, tag = 'output window, operand 0, single buffered']
    #allocation3 [shape = 's32[1]{0}', space=sflag, size = 0x4, scoped, tag = 'scoped memory for cael_forward.3']
    %14 = vsyncpa [#allocation3], 0
    // Predicated region
    $region2: #{cael_forward.3} parent=1 // pred_check
      _
    $region3: #{cael_forward.3} parent=1 // pred_check_branch
      %16 = sbr.rel (0) target = $region5
    $region4: #{cael_forward.3} parent=1 // pred_region
      _
    $region5: #{cael_forward.3} parent=1 // pred_fallthru
      _
    // Predicated region
    $region6: #{cael_forward.3} parent=1 // pred_check
      _
    $region7: #{cael_forward.3} parent=1 // pred_check_branch
      %18 = sbr.rel (0) target = $region9
    $region8: #{cael_forward.3} parent=1 // pred_region
      _
    $region9: #{cael_forward.3} parent=1 // pred_fallthru
      _
    // Predicated region
    $region10: #{cael_forward.3} parent=1 // pred_check
      _
    $region11: #{cael_forward.3} parent=1 // pred_check_branch
      %20 = sbr.rel (0) target = $region13
    $region12: #{cael_forward.3} parent=1 // pred_region
      _
    $region13: #{cael_forward.3} parent=1 // pred_fallthru
      _
    // Predicated region
    $region14: #{cael_forward.3} parent=1 // pred_check
      _
    $region15: #{cael_forward.3} parent=1 // pred_check_branch
      %22 = sbr.rel (0) target = $region17
    $region16: #{cael_forward.3} parent=1 // pred_region
      _
    $region17: #{cael_forward.3} parent=1 // pred_fallthru
      _
    // Predicated region
    $region18: #{cael_forward.3} parent=1 // pred_check
      _
    $region19: #{cael_forward.3} parent=1 // pred_check_branch
      %24 = sbr.rel (0) target = $region21
    $region20: #{cael_forward.3} parent=1 // pred_region
      _
    $region21: #{cael_forward.3} parent=1 // pred_fallthru
      _
    // Predicated region
    $region22: #{cael_forward.3} parent=1 // pred_check
      _
    $region23: #{cael_forward.3} parent=1 // pred_check_branch
      %26 = sbr.rel (0) target = $region25
    $region24: #{cael_forward.3} parent=1 // pred_region
      _
    $region25: #{cael_forward.3} parent=1 // pred_fallthru
      _
    // Predicated region
    $region26: #{cael_forward.3} parent=1 // pred_check
      _
    $region27: #{cael_forward.3} parent=1 // pred_check_branch
      %28 = sbr.rel (0) target = $region29
    $region28: #{cael_forward.3} parent=1 // pred_region
      _
    $region29: #{cael_forward.3} parent=1 // pred_fallthru
      _
    // Predicated region
    $region30: #{cael_forward.3} parent=1 // pred_check
      _
    $region31: #{cael_forward.3} parent=1 // pred_check_branch
      %30 = sbr.rel (0) target = $region33
    $region32: #{cael_forward.3} parent=1 // pred_region
      _
    $region33: #{cael_forward.3} parent=1 // pred_fallthru
      _
    // Predicated region
    $region34: #{cael_forward.3} parent=1 // pred_check
      _
    $region35: #{cael_forward.3} parent=1 // pred_check_branch
      %32 = sbr.rel (0) target = $region37
    $region36: #{cael_forward.3} parent=1 // pred_region
      _
    $region37: #{cael_forward.3} parent=1 // pred_fallthru
      _
    %v33 = vld [vmem:[%s0] sm:$0xff]
    %v34 = vld [vmem:[%s0 + $0x8] sm:$0xff]
    %s35 = scalar_lea.vmem %s0, 16
    %v36 = vld [vmem:[%s35] sm:$0xff]
    %v37 = vld [vmem:[%s35 + $0x8] sm:$0xff]
    %v38 = vld [vmem:[%s1] sm:$0xff]
    %v39 = vld [vmem:[%s1 + $0x8] sm:$0xff]
    %v40 = vld [vmem:[%s1 + $0x10] sm:$0xff]
    %v41 = vld [vmem:[%s1 + $0x18] sm:$0xff]
    %v42 = vld [vmem:[%s2] sm:$0x1]
    %v44 = vperm.slane %v42, 0
    %vm46 = vcmask 261120
    %v48 = vsel %vm46, %v33, 0
    %v51 = vsel %vm46, %v34, 0
    %53 = vmatpush.msra.mxu0 0.0
    %54 = vmatpush.msra.mxu0 0.0
    %55 = vmatpush.msra.mxu0 0.0
    %56 = vmatpush.msra.mxu0 0.0
    %57 = vmatpush.msra.mxu0 0.0
    %58 = vmatpush.msra.mxu0 0.0
    %59 = vmatpush.msra.mxu0 0.0
    %60 = vmatpush.msra.mxu0 0.0
    %61 = vmatpush.msra.mxu0 0.0
    %62 = vmatpush.msra.mxu0 0.0
    %63 = vmatpush.msra.mxu0 0.0
    %64 = vmatpush.msra.mxu0 0.0
    %65 = vmatpush.msra.mxu0 %v41
    %66 = vmatpush.msra.mxu0 %v40
    %67 = vmatpush.msra.mxu0 %v39
    %68 = vmatpush.msra.mxu0 %v38
    %69 = vmatmul.f32.gmra.mxu0 %v48
    %v70 = vpop.f32.mrf.mxu0
    %v71 = vadd.f32 %v44, %v70
    %72 = vmatmul.f32.gmra.mxu0 %v51
    %v73 = vpop.f32.mrf.mxu0
    %v74 = vadd.f32 %v44, %v73
    %75 = vdwg.mxu0
    %v76 = vld [vmem:[%s3] sm:$0xff]
    %v77 = vld [vmem:[%s3 + $0x8] sm:$0xff]
    %v78 = vld [vmem:[%s3 + $0x10] sm:$0xff]
    %v79 = vld [vmem:[%s3 + $0x18] sm:$0xff]
    %v80 = vld [vmem:[%s4] sm:$0x1]
    %v82 = vperm.slane %v80, 0
    %v85 = vsel %vm46, %v36, 0
    %v88 = vsel %vm46, %v37, 0
    %90 = vmatpush.msra.mxu0 0.0
    %91 = vmatpush.msra.mxu0 0.0
    %92 = vmatpush.msra.mxu0 0.0
    %93 = vmatpush.msra.mxu0 0.0
    %94 = vmatpush.msra.mxu0 0.0
    %95 = vmatpush.msra.mxu0 0.0
    %96 = vmatpush.msra.mxu0 0.0
    %97 = vmatpush.msra.mxu0 0.0
    %98 = vmatpush.msra.mxu0 0.0
    %99 = vmatpush.msra.mxu0 0.0
    %100 = vmatpush.msra.mxu0 0.0
    %101 = vmatpush.msra.mxu0 0.0
    %102 = vmatpush.msra.mxu0 %v79
    %103 = vmatpush.msra.mxu0 %v78
    %104 = vmatpush.msra.mxu0 %v77
    %105 = vmatpush.msra.mxu0 %v76
    %106 = vmatmul.f32.gmra.mxu0 %v85
    %v107 = vpop.f32.mrf.mxu0
    %v108 = vadd.f32 %v82, %v107
    %109 = vmatmul.f32.gmra.mxu0 %v88
    %v110 = vpop.f32.mrf.mxu0
    %v111 = vadd.f32 %v82, %v110
    %112 = vdwg.mxu0
    %vm113 = vcmask 64512
    %v115 = vsel %vm113, %v71, 0
    %v118 = vsel %vm113, %v108, 0
    %120 = vmatpush.xpose.msra.mxu0 0.0
    %121 = vmatpush.xpose.msra.mxu0 0.0
    %122 = vmatpush.xpose.msra.mxu0 0.0
    %123 = vmatpush.xpose.msra.mxu0 0.0
    %124 = vmatpush.xpose.msra.mxu0 0.0
    %125 = vmatpush.xpose.msra.mxu0 0.0
    %126 = vmatpush.xpose.msra.mxu0 0.0
    %127 = vmatpush.xpose.msra.mxu0 0.0
    %128 = vmatpush.xpose.msra.mxu0 0.0
    %129 = vmatpush.xpose.msra.mxu0 0.0
    %130 = vmatpush.xpose.msra.mxu0 0.0
    %131 = vmatpush.xpose.msra.mxu0 0.0
    %132 = vmatpush.xpose.msra.mxu0 0.0
    %133 = vmatpush.xpose.msra.mxu0 0.0
    %134 = vmatpush.xpose.msra.mxu0 0.0
    %135 = vmatpush.xpose.msra.mxu0 %v118
    %136 = vmatmul.f32.gmra.mxu0 %v115
    %v137 = vpop.f32.mrf.mxu0
    %v138 = vadd.f32 0.0, %v137
    %139 = vdwg.mxu0
    %v141 = vsel %vm113, %v74, 0
    %v144 = vsel %vm113, %v111, 0
    %146 = vmatpush.xpose.msra.mxu0 0.0
    %147 = vmatpush.xpose.msra.mxu0 0.0
    %148 = vmatpush.xpose.msra.mxu0 0.0
    %149 = vmatpush.xpose.msra.mxu0 0.0
    %150 = vmatpush.xpose.msra.mxu0 0.0
    %151 = vmatpush.xpose.msra.mxu0 0.0
    %152 = vmatpush.xpose.msra.mxu0 0.0
    %153 = vmatpush.xpose.msra.mxu0 0.0
    %154 = vmatpush.xpose.msra.mxu0 0.0
    %155 = vmatpush.xpose.msra.mxu0 0.0
    %156 = vmatpush.xpose.msra.mxu0 0.0
    %157 = vmatpush.xpose.msra.mxu0 0.0
    %158 = vmatpush.xpose.msra.mxu0 0.0
    %159 = vmatpush.xpose.msra.mxu0 0.0
    %160 = vmatpush.xpose.msra.mxu0 0.0
    %161 = vmatpush.xpose.msra.mxu0 %v144
    %162 = vmatmul.f32.gmra.mxu0 %v141
    %v163 = vpop.f32.mrf.mxu0
    %v164 = vadd.f32 0.0, %v163
    %165 = vdwg.mxu0
    %v166 = vmul.f32 %v138, 0.35355338
    %v167 = vmul.f32 %v164, 0.35355338
    %v168 = vsel %vm113, %v166, -inf
    %169 = vmax.xlane.f32.xlu0 %v168
    %v170 = vpop.xlane.xlu0 %169
    %v171 = vsel %vm113, %v167, -inf
    %172 = vmax.xlane.f32.xlu0 %v171
    %v173 = vpop.xlane.xlu0 %172
    %v174 = vsub.f32 %v166, %v170
    %v175 = vsub.f32 %v167, %v173
    %v176 = vmul.f32 %v174, 1.442695
    %v177 = vpow.pop %v176
    %v178 = vmul.f32 %v175, 1.442695
    %v179 = vpow.pop %v178
    %v180 = vsel %vm113, %v177, 0.0
    %181 = vadd.xlane.f32.xlu0 %v180
    %v182 = vpop.xlane.xlu0 %181
    %v183 = vsel %vm113, %v179, 0.0
    %184 = vadd.xlane.f32.xlu0 %v183
    %v185 = vpop.xlane.xlu0 %184
    %v186 = vrcp.pop %v182
    %v187 = vrcp.pop %v185
    %v188 = vmul.f32 %v177, %v186
    %v189 = vmul.f32 %v179, %v187
    %190 = vrot.lane.b32.xlu0 %v108, 96
    %v191 = vpop.permute.xlu0 %190
    %v194 = vsel %vm113, %v188, 0
    %196 = vmatpush.msra.mxu0 0.0
    %197 = vmatpush.msra.mxu0 0.0
    %198 = vmatpush.msra.mxu0 0.0
    %199 = vmatpush.msra.mxu0 0.0
    %200 = vmatpush.msra.mxu0 0.0
    %201 = vmatpush.msra.mxu0 0.0
    %202 = vmatpush.msra.mxu0 0.0
    %203 = vmatpush.msra.mxu0 0.0
    %204 = vmatpush.msra.mxu0 0.0
    %205 = vmatpush.msra.mxu0 0.0
    %206 = vmatpush.msra.mxu0 0.0
    %207 = vmatpush.msra.mxu0 0.0
    %208 = vmatpush.msra.mxu0 0.0
    %209 = vmatpush.msra.mxu0 0.0
    %210 = vmatpush.msra.mxu0 0.0
    %211 = vmatpush.msra.mxu0 %v191
    %212 = vmatmul.f32.gmra.mxu0 %v194
    %v213 = vpop.f32.mrf.mxu0
    %v214 = vadd.f32 0.0, %v213
    %215 = vdwg.mxu0
    %216 = vrot.lane.b32.xlu0 %v111, 96
    %v217 = vpop.permute.xlu0 %216
    %v220 = vsel %vm113, %v189, 0
    %222 = vmatpush.msra.mxu0 0.0
    %223 = vmatpush.msra.mxu0 0.0
    %224 = vmatpush.msra.mxu0 0.0
    %225 = vmatpush.msra.mxu0 0.0
    %226 = vmatpush.msra.mxu0 0.0
    %227 = vmatpush.msra.mxu0 0.0
    %228 = vmatpush.msra.mxu0 0.0
    %229 = vmatpush.msra.mxu0 0.0
    %230 = vmatpush.msra.mxu0 0.0
    %231 = vmatpush.msra.mxu0 0.0
    %232 = vmatpush.msra.mxu0 0.0
    %233 = vmatpush.msra.mxu0 0.0
    %234 = vmatpush.msra.mxu0 0.0
    %235 = vmatpush.msra.mxu0 0.0
    %236 = vmatpush.msra.mxu0 0.0
    %237 = vmatpush.msra.mxu0 %v217
    %238 = vmatmul.f32.gmra.mxu0 %v220
    %v239 = vpop.f32.mrf.mxu0
    %v240 = vadd.f32 0.0, %v239
    %241 = vdwg.mxu0
    %242 = vrot.lane.b32.xlu0 %v71, 120
    %v243 = vpop.permute.xlu0 %242
    %244 = vrot.lane.b32.xlu0 %v108, 120
    %v245 = vpop.permute.xlu0 %244
    %v246 = vsel %vm113, %v243, 0
    %v248 = vsel %vm113, %v245, 0
    %250 = vmatpush.xpose.msra.mxu0 0.0
    %251 = vmatpush.xpose.msra.mxu0 0.0
    %252 = vmatpush.xpose.msra.mxu0 0.0
    %253 = vmatpush.xpose.msra.mxu0 0.0
    %254 = vmatpush.xpose.msra.mxu0 0.0
    %255 = vmatpush.xpose.msra.mxu0 0.0
    %256 = vmatpush.xpose.msra.mxu0 0.0
    %257 = vmatpush.xpose.msra.mxu0 0.0
    %258 = vmatpush.xpose.msra.mxu0 0.0
    %259 = vmatpush.xpose.msra.mxu0 0.0
    %260 = vmatpush.xpose.msra.mxu0 0.0
    %261 = vmatpush.xpose.msra.mxu0 0.0
    %262 = vmatpush.xpose.msra.mxu0 0.0
    %263 = vmatpush.xpose.msra.mxu0 0.0
    %264 = vmatpush.xpose.msra.mxu0 0.0
    %265 = vmatpush.xpose.msra.mxu0 %v248
    %266 = vmatmul.f32.gmra.mxu0 %v246
    %v267 = vpop.f32.mrf.mxu0
    %v268 = vadd.f32 0.0, %v267
    %269 = vdwg.mxu0
    %270 = vrot.lane.b32.xlu0 %v74, 120
    %v271 = vpop.permute.xlu0 %270
    %272 = vrot.lane.b32.xlu0 %v111, 120
    %v273 = vpop.permute.xlu0 %272
    %v274 = vsel %vm113, %v271, 0
    %v276 = vsel %vm113, %v273, 0
    %278 = vmatpush.xpose.msra.mxu0 0.0
    %279 = vmatpush.xpose.msra.mxu0 0.0
    %280 = vmatpush.xpose.msra.mxu0 0.0
    %281 = vmatpush.xpose.msra.mxu0 0.0
    %282 = vmatpush.xpose.msra.mxu0 0.0
    %283 = vmatpush.xpose.msra.mxu0 0.0
    %284 = vmatpush.xpose.msra.mxu0 0.0
    %285 = vmatpush.xpose.msra.mxu0 0.0
    %286 = vmatpush.xpose.msra.mxu0 0.0
    %287 = vmatpush.xpose.msra.mxu0 0.0
    %288 = vmatpush.xpose.msra.mxu0 0.0
    %289 = vmatpush.xpose.msra.mxu0 0.0
    %290 = vmatpush.xpose.msra.mxu0 0.0
    %291 = vmatpush.xpose.msra.mxu0 0.0
    %292 = vmatpush.xpose.msra.mxu0 0.0
    %293 = vmatpush.xpose.msra.mxu0 %v276
    %294 = vmatmul.f32.gmra.mxu0 %v274
    %v295 = vpop.f32.mrf.mxu0
    %v296 = vadd.f32 0.0, %v295
    %297 = vdwg.mxu0
    %v298 = vmul.f32 %v268, 0.35355338
    %v299 = vmul.f32 %v296, 0.35355338
    %v300 = vsel %vm113, %v298, -inf
    %301 = vmax.xlane.f32.xlu0 %v300
    %v302 = vpop.xlane.xlu0 %301
    %v303 = vsel %vm113, %v299, -inf
    %304 = vmax.xlane.f32.xlu0 %v303
    %v305 = vpop.xlane.xlu0 %304
    %v306 = vsub.f32 %v298, %v302
    %v307 = vsub.f32 %v299, %v305
    %v308 = vmul.f32 %v306, 1.442695
    %v309 = vpow.pop %v308
    %v310 = vmul.f32 %v307, 1.442695
    %v311 = vpow.pop %v310
    %v312 = vsel %vm113, %v309, 0.0
    %313 = vadd.xlane.f32.xlu0 %v312
    %v314 = vpop.xlane.xlu0 %313
    %v315 = vsel %vm113, %v311, 0.0
    %316 = vadd.xlane.f32.xlu0 %v315
    %v317 = vpop.xlane.xlu0 %316
    %v318 = vrcp.pop %v314
    %v319 = vrcp.pop %v317
    %v320 = vmul.f32 %v309, %v318
    %v321 = vmul.f32 %v311, %v319
    %322 = vrot.lane.b32.xlu0 %v108, 88
    %v323 = vpop.permute.xlu0 %322
    %v326 = vsel %vm113, %v320, 0
    %328 = vmatpush.msra.mxu0 0.0
    %329 = vmatpush.msra.mxu0 0.0
    %330 = vmatpush.msra.mxu0 0.0
    %331 = vmatpush.msra.mxu0 0.0
    %332 = vmatpush.msra.mxu0 0.0
    %333 = vmatpush.msra.mxu0 0.0
    %334 = vmatpush.msra.mxu0 0.0
    %335 = vmatpush.msra.mxu0 0.0
    %336 = vmatpush.msra.mxu0 0.0
    %337 = vmatpush.msra.mxu0 0.0
    %338 = vmatpush.msra.mxu0 0.0
    %339 = vmatpush.msra.mxu0 0.0
    %340 = vmatpush.msra.mxu0 0.0
    %341 = vmatpush.msra.mxu0 0.0
    %342 = vmatpush.msra.mxu0 0.0
    %343 = vmatpush.msra.mxu0 %v323
    %344 = vmatmul.f32.gmra.mxu0 %v326
    %v345 = vpop.f32.mrf.mxu0
    %v346 = vadd.f32 0.0, %v345
    %347 = vdwg.mxu0
    %348 = vrot.lane.b32.xlu0 %v111, 88
    %v349 = vpop.permute.xlu0 %348
    %v352 = vsel %vm113, %v321, 0
    %354 = vmatpush.msra.mxu0 0.0
    %355 = vmatpush.msra.mxu0 0.0
    %356 = vmatpush.msra.mxu0 0.0
    %357 = vmatpush.msra.mxu0 0.0
    %358 = vmatpush.msra.mxu0 0.0
    %359 = vmatpush.msra.mxu0 0.0
    %360 = vmatpush.msra.mxu0 0.0
    %361 = vmatpush.msra.mxu0 0.0
    %362 = vmatpush.msra.mxu0 0.0
    %363 = vmatpush.msra.mxu0 0.0
    %364 = vmatpush.msra.mxu0 0.0
    %365 = vmatpush.msra.mxu0 0.0
    %366 = vmatpush.msra.mxu0 0.0
    %367 = vmatpush.msra.mxu0 0.0
    %368 = vmatpush.msra.mxu0 0.0
    %369 = vmatpush.msra.mxu0 %v349
    %370 = vmatmul.f32.gmra.mxu0 %v352
    %v371 = vpop.f32.mrf.mxu0
    %v372 = vadd.f32 0.0, %v371
    %373 = vdwg.mxu0
    %374 = vrot.lane.b32.xlu0 %v71, 112
    %v375 = vpop.permute.xlu0 %374
    %376 = vrot.lane.b32.xlu0 %v108, 112
    %v377 = vpop.permute.xlu0 %376
    %v378 = vsel %vm113, %v375, 0
    %v380 = vsel %vm113, %v377, 0
    %382 = vmatpush.xpose.msra.mxu0 0.0
    %383 = vmatpush.xpose.msra.mxu0 0.0
    %384 = vmatpush.xpose.msra.mxu0 0.0
    %385 = vmatpush.xpose.msra.mxu0 0.0
    %386 = vmatpush.xpose.msra.mxu0 0.0
    %387 = vmatpush.xpose.msra.mxu0 0.0
    %388 = vmatpush.xpose.msra.mxu0 0.0
    %389 = vmatpush.xpose.msra.mxu0 0.0
    %390 = vmatpush.xpose.msra.mxu0 0.0
    %391 = vmatpush.xpose.msra.mxu0 0.0
    %392 = vmatpush.xpose.msra.mxu0 0.0
    %393 = vmatpush.xpose.msra.mxu0 0.0
    %394 = vmatpush.xpose.msra.mxu0 0.0
    %395 = vmatpush.xpose.msra.mxu0 0.0
    %396 = vmatpush.xpose.msra.mxu0 0.0
    %397 = vmatpush.xpose.msra.mxu0 %v380
    %398 = vmatmul.f32.gmra.mxu0 %v378
    %v399 = vpop.f32.mrf.mxu0
    %v400 = vadd.f32 0.0, %v399
    %401 = vdwg.mxu0
    %402 = vrot.lane.b32.xlu0 %v74, 112
    %v403 = vpop.permute.xlu0 %402
    %404 = vrot.lane.b32.xlu0 %v111, 112
    %v405 = vpop.permute.xlu0 %404
    %v406 = vsel %vm113, %v403, 0
    %v408 = vsel %vm113, %v405, 0
    %410 = vmatpush.xpose.msra.mxu0 0.0
    %411 = vmatpush.xpose.msra.mxu0 0.0
    %412 = vmatpush.xpose.msra.mxu0 0.0
    %413 = vmatpush.xpose.msra.mxu0 0.0
    %414 = vmatpush.xpose.msra.mxu0 0.0
    %415 = vmatpush.xpose.msra.mxu0 0.0
    %416 = vmatpush.xpose.msra.mxu0 0.0
    %417 = vmatpush.xpose.msra.mxu0 0.0
    %418 = vmatpush.xpose.msra.mxu0 0.0
    %419 = vmatpush.xpose.msra.mxu0 0.0
    %420 = vmatpush.xpose.msra.mxu0 0.0
    %421 = vmatpush.xpose.msra.mxu0 0.0
    %422 = vmatpush.xpose.msra.mxu0 0.0
    %423 = vmatpush.xpose.msra.mxu0 0.0
    %424 = vmatpush.xpose.msra.mxu0 0.0
    %425 = vmatpush.xpose.msra.mxu0 %v408
    %426 = vmatmul.f32.gmra.mxu0 %v406
    %v427 = vpop.f32.mrf.mxu0
    %v428 = vadd.f32 0.0, %v427
    %429 = vdwg.mxu0
    %v430 = vmul.f32 %v400, 0.35355338
    %v431 = vmul.f32 %v428, 0.35355338
    %v432 = vsel %vm113, %v430, -inf
    %433 = vmax.xlane.f32.xlu0 %v432
    %v434 = vpop.xlane.xlu0 %433
    %v435 = vsel %vm113, %v431, -inf
    %436 = vmax.xlane.f32.xlu0 %v435
    %v437 = vpop.xlane.xlu0 %436
    %v438 = vsub.f32 %v430, %v434
    %v439 = vsub.f32 %v431, %v437
    %v440 = vmul.f32 %v438, 1.442695
    %v441 = vpow.pop %v440
    %v442 = vmul.f32 %v439, 1.442695
    %v443 = vpow.pop %v442
    %v444 = vsel %vm113, %v441, 0.0
    %445 = vadd.xlane.f32.xlu0 %v444
    %v446 = vpop.xlane.xlu0 %445
    %v447 = vsel %vm113, %v443, 0.0
    %448 = vadd.xlane.f32.xlu0 %v447
    %v449 = vpop.xlane.xlu0 %448
    %v450 = vrcp.pop %v446
    %v451 = vrcp.pop %v449
    %v452 = vmul.f32 %v441, %v450
    %v453 = vmul.f32 %v443, %v451
    %454 = vrot.lane.b32.xlu0 %v108, 80
    %v455 = vpop.permute.xlu0 %454
    %v458 = vsel %vm113, %v452, 0
    %460 = vmatpush.msra.mxu0 0.0
    %461 = vmatpush.msra.mxu0 0.0
    %462 = vmatpush.msra.mxu0 0.0
    %463 = vmatpush.msra.mxu0 0.0
    %464 = vmatpush.msra.mxu0 0.0
    %465 = vmatpush.msra.mxu0 0.0
    %466 = vmatpush.msra.mxu0 0.0
    %467 = vmatpush.msra.mxu0 0.0
    %468 = vmatpush.msra.mxu0 0.0
    %469 = vmatpush.msra.mxu0 0.0
    %470 = vmatpush.msra.mxu0 0.0
    %471 = vmatpush.msra.mxu0 0.0
    %472 = vmatpush.msra.mxu0 0.0
    %473 = vmatpush.msra.mxu0 0.0
    %474 = vmatpush.msra.mxu0 0.0
    %475 = vmatpush.msra.mxu0 %v455
    %476 = vmatmul.f32.gmra.mxu0 %v458
    %v477 = vpop.f32.mrf.mxu0
    %v478 = vadd.f32 0.0, %v477
    %479 = vdwg.mxu0
    %480 = vrot.lane.b32.xlu0 %v111, 80
    %v481 = vpop.permute.xlu0 %480
    %v484 = vsel %vm113, %v453, 0
    %486 = vmatpush.msra.mxu0 0.0
    %487 = vmatpush.msra.mxu0 0.0
    %488 = vmatpush.msra.mxu0 0.0
    %489 = vmatpush.msra.mxu0 0.0
    %490 = vmatpush.msra.mxu0 0.0
    %491 = vmatpush.msra.mxu0 0.0
    %492 = vmatpush.msra.mxu0 0.0
    %493 = vmatpush.msra.mxu0 0.0
    %494 = vmatpush.msra.mxu0 0.0
    %495 = vmatpush.msra.mxu0 0.0
    %496 = vmatpush.msra.mxu0 0.0
    %497 = vmatpush.msra.mxu0 0.0
    %498 = vmatpush.msra.mxu0 0.0
    %499 = vmatpush.msra.mxu0 0.0
    %500 = vmatpush.msra.mxu0 0.0
    %501 = vmatpush.msra.mxu0 %v481
    %502 = vmatmul.f32.gmra.mxu0 %v484
    %v503 = vpop.f32.mrf.mxu0
    %v504 = vadd.f32 0.0, %v503
    %505 = vdwg.mxu0
    %506 = vrot.lane.b32.xlu0 %v71, 104
    %v507 = vpop.permute.xlu0 %506
    %508 = vrot.lane.b32.xlu0 %v108, 104
    %v509 = vpop.permute.xlu0 %508
    %v510 = vsel %vm113, %v507, 0
    %v512 = vsel %vm113, %v509, 0
    %514 = vmatpush.xpose.msra.mxu0 0.0
    %515 = vmatpush.xpose.msra.mxu0 0.0
    %516 = vmatpush.xpose.msra.mxu0 0.0
    %517 = vmatpush.xpose.msra.mxu0 0.0
    %518 = vmatpush.xpose.msra.mxu0 0.0
    %519 = vmatpush.xpose.msra.mxu0 0.0
    %520 = vmatpush.xpose.msra.mxu0 0.0
    %521 = vmatpush.xpose.msra.mxu0 0.0
    %522 = vmatpush.xpose.msra.mxu0 0.0
    %523 = vmatpush.xpose.msra.mxu0 0.0
    %524 = vmatpush.xpose.msra.mxu0 0.0
    %525 = vmatpush.xpose.msra.mxu0 0.0
    %526 = vmatpush.xpose.msra.mxu0 0.0
    %527 = vmatpush.xpose.msra.mxu0 0.0
    %528 = vmatpush.xpose.msra.mxu0 0.0
    %529 = vmatpush.xpose.msra.mxu0 %v512
    %530 = vmatmul.f32.gmra.mxu0 %v510
    %v531 = vpop.f32.mrf.mxu0
    %v532 = vadd.f32 0.0, %v531
    %533 = vdwg.mxu0
    %534 = vrot.lane.b32.xlu0 %v74, 104
    %v535 = vpop.permute.xlu0 %534
    %536 = vrot.lane.b32.xlu0 %v111, 104
    %v537 = vpop.permute.xlu0 %536
    %v538 = vsel %vm113, %v535, 0
    %v540 = vsel %vm113, %v537, 0
    %542 = vmatpush.xpose.msra.mxu0 0.0
    %543 = vmatpush.xpose.msra.mxu0 0.0
    %544 = vmatpush.xpose.msra.mxu0 0.0
    %545 = vmatpush.xpose.msra.mxu0 0.0
    %546 = vmatpush.xpose.msra.mxu0 0.0
    %547 = vmatpush.xpose.msra.mxu0 0.0
    %548 = vmatpush.xpose.msra.mxu0 0.0
    %549 = vmatpush.xpose.msra.mxu0 0.0
    %550 = vmatpush.xpose.msra.mxu0 0.0
    %551 = vmatpush.xpose.msra.mxu0 0.0
    %552 = vmatpush.xpose.msra.mxu0 0.0
    %553 = vmatpush.xpose.msra.mxu0 0.0
    %554 = vmatpush.xpose.msra.mxu0 0.0
    %555 = vmatpush.xpose.msra.mxu0 0.0
    %556 = vmatpush.xpose.msra.mxu0 0.0
    %557 = vmatpush.xpose.msra.mxu0 %v540
    %558 = vmatmul.f32.gmra.mxu0 %v538
    %v559 = vpop.f32.mrf.mxu0
    %v560 = vadd.f32 0.0, %v559
    %561 = vdwg.mxu0
    %v562 = vmul.f32 %v532, 0.35355338
    %v563 = vmul.f32 %v560, 0.35355338
    %v564 = vsel %vm113, %v562, -inf
    %565 = vmax.xlane.f32.xlu0 %v564
    %v566 = vpop.xlane.xlu0 %565
    %v567 = vsel %vm113, %v563, -inf
    %568 = vmax.xlane.f32.xlu0 %v567
    %v569 = vpop.xlane.xlu0 %568
    %v570 = vsub.f32 %v562, %v566
    %v571 = vsub.f32 %v563, %v569
    %v572 = vmul.f32 %v570, 1.442695
    %v573 = vpow.pop %v572
    %v574 = vmul.f32 %v571, 1.442695
    %v575 = vpow.pop %v574
    %v576 = vsel %vm113, %v573, 0.0
    %577 = vadd.xlane.f32.xlu0 %v576
    %v578 = vpop.xlane.xlu0 %577
    %v579 = vsel %vm113, %v575, 0.0
    %580 = vadd.xlane.f32.xlu0 %v579
    %v581 = vpop.xlane.xlu0 %580
    %v582 = vrcp.pop %v578
    %v583 = vrcp.pop %v581
    %v584 = vmul.f32 %v573, %v582
    %v585 = vmul.f32 %v575, %v583
    %586 = vrot.lane.b32.xlu0 %v108, 72
    %v587 = vpop.permute.xlu0 %586
    %v590 = vsel %vm113, %v584, 0
    %592 = vmatpush.msra.mxu0 0.0
    %593 = vmatpush.msra.mxu0 0.0
    %594 = vmatpush.msra.mxu0 0.0
    %595 = vmatpush.msra.mxu0 0.0
    %596 = vmatpush.msra.mxu0 0.0
    %597 = vmatpush.msra.mxu0 0.0
    %598 = vmatpush.msra.mxu0 0.0
    %599 = vmatpush.msra.mxu0 0.0
    %600 = vmatpush.msra.mxu0 0.0
    %601 = vmatpush.msra.mxu0 0.0
    %602 = vmatpush.msra.mxu0 0.0
    %603 = vmatpush.msra.mxu0 0.0
    %604 = vmatpush.msra.mxu0 0.0
    %605 = vmatpush.msra.mxu0 0.0
    %606 = vmatpush.msra.mxu0 0.0
    %607 = vmatpush.msra.mxu0 %v587
    %608 = vmatmul.f32.gmra.mxu0 %v590
    %v609 = vpop.f32.mrf.mxu0
    %v610 = vadd.f32 0.0, %v609
    %611 = vdwg.mxu0
    %612 = vrot.lane.b32.xlu0 %v111, 72
    %v613 = vpop.permute.xlu0 %612
    %v616 = vsel %vm113, %v585, 0
    %618 = vmatpush.msra.mxu0 0.0
    %619 = vmatpush.msra.mxu0 0.0
    %620 = vmatpush.msra.mxu0 0.0
    %621 = vmatpush.msra.mxu0 0.0
    %622 = vmatpush.msra.mxu0 0.0
    %623 = vmatpush.msra.mxu0 0.0
    %624 = vmatpush.msra.mxu0 0.0
    %625 = vmatpush.msra.mxu0 0.0
    %626 = vmatpush.msra.mxu0 0.0
    %627 = vmatpush.msra.mxu0 0.0
    %628 = vmatpush.msra.mxu0 0.0
    %629 = vmatpush.msra.mxu0 0.0
    %630 = vmatpush.msra.mxu0 0.0
    %631 = vmatpush.msra.mxu0 0.0
    %632 = vmatpush.msra.mxu0 0.0
    %633 = vmatpush.msra.mxu0 %v613
    %634 = vmatmul.f32.gmra.mxu0 %v616
    %v635 = vpop.f32.mrf.mxu0
    %v636 = vadd.f32 0.0, %v635
    %637 = vdwg.mxu0
    %640 = vrot.lane.b32.xlu0 %v346, 8
    %v641 = vpop.permute.xlu0 %640
    %642 = vrot.lane.b32.xlu0 %v372, 8
    %v643 = vpop.permute.xlu0 %642
    %648 = vrot.lane.b32.xlu0 %v478, 16
    %v649 = vpop.permute.xlu0 %648
    %650 = vrot.lane.b32.xlu0 %v504, 16
    %v651 = vpop.permute.xlu0 %650
    %656 = vrot.lane.b32.xlu0 %v610, 24
    %v657 = vpop.permute.xlu0 %656
    %658 = vrot.lane.b32.xlu0 %v636, 24
    %v659 = vpop.permute.xlu0 %658
    %v662 = vsel %vm113, %v214, %v641
    %v663 = vsel %vm113, %v240, %v643
    %vm664 = vcmask 130048
    %v665 = vsel %vm664, %v662, %v649
    %v666 = vsel %vm664, %v663, %v651
    %vm667 = vcmask 195584
    %v668 = vsel %vm667, %v665, %v657
    %v669 = vsel %vm667, %v666, %v659
    %v670 = vld [vmem:[%s5] sm:$0xff]
    %v671 = vld [vmem:[%s5 + $0x8] sm:$0xff]
    %v672 = vld [vmem:[%s5 + $0x10] sm:$0xff]
    %v673 = vld [vmem:[%s5 + $0x18] sm:$0xff]
    %v674 = vld [vmem:[%s6] sm:$0x1]
    %v676 = vperm.slane %v674, 0
    %v679 = vsel %vm46, %v668, 0
    %v682 = vsel %vm46, %v669, 0
    %684 = vmatpush.msra.mxu0 0.0
    %685 = vmatpush.msra.mxu0 0.0
    %686 = vmatpush.msra.mxu0 0.0
    %687 = vmatpush.msra.mxu0 0.0
    %688 = vmatpush.msra.mxu0 0.0
    %689 = vmatpush.msra.mxu0 0.0
    %690 = vmatpush.msra.mxu0 0.0
    %691 = vmatpush.msra.mxu0 0.0
    %692 = vmatpush.msra.mxu0 0.0
    %693 = vmatpush.msra.mxu0 0.0
    %694 = vmatpush.msra.mxu0 0.0
    %695 = vmatpush.msra.mxu0 0.0
    %696 = vmatpush.msra.mxu0 %v673
    %697 = vmatpush.msra.mxu0 %v672
    %698 = vmatpush.msra.mxu0 %v671
    %699 = vmatpush.msra.mxu0 %v670
    %700 = vmatmul.f32.gmra.mxu0 %v679
    %v701 = vpop.f32.mrf.mxu0
    %v702 = vadd.f32 %v676, %v701
    %703 = vmatmul.f32.gmra.mxu0 %v682
    %v704 = vpop.f32.mrf.mxu0
    %v705 = vadd.f32 %v676, %v704
    %706 = vdwg.mxu0
    %v707 = vsel %vm46, %v702, 0.0
    %v708 = vrot.slane %v707, 4
    %v709 = vadd.f32 %v707, %v708
    %v710 = vrot.slane %v709, 2
    %v711 = vadd.f32 %v709, %v710
    %v712 = vrot.slane %v711, 1
    %v713 = vadd.f32 %v711, %v712
    %v714 = vsel %vm46, %v705, 0.0
    %v715 = vrot.slane %v714, 4
    %v716 = vadd.f32 %v714, %v715
    %v717 = vrot.slane %v716, 2
    %v718 = vadd.f32 %v716, %v717
    %v719 = vrot.slane %v718, 1
    %v720 = vadd.f32 %v718, %v719
    %v721 = vrcp.pop 8.0
    %v722 = vmul.f32 8.0, %v721
    %v723 = vsub.f32 1.0, %v722
    %v724 = vmul.f32 %v721, %v723
    %v725 = vadd.f32 %v721, %v724
    %vm726 = vweird.f32 %v721
    %v727 = vsel %vm726, %v721, %v725
    %v728 = vmul.f32 %v713, %v727
    %v729 = vmul.f32 %v720, %v727
    %v730 = vld [vmem:[%s7] sm:$0xff]
    %v731 = vld [vmem:[%s7 + $0x8] sm:$0xff]
    %v732 = vld [vmem:[%s7 + $0x10] sm:$0xff]
    %v733 = vld [vmem:[%s7 + $0x18] sm:$0xff]
    %v734 = vld [vmem:[%s8] sm:$0x1]
    %v736 = vperm.slane %v734, 0
    %vm740 = vcmask 1041409
    %v741 = vsel %vm740, %v729, %v728
    %v742 = vsel %vm46, %v741, 0
    %744 = vmatpush.msra.mxu0 0.0
    %745 = vmatpush.msra.mxu0 0.0
    %746 = vmatpush.msra.mxu0 0.0
    %747 = vmatpush.msra.mxu0 0.0
    %748 = vmatpush.msra.mxu0 0.0
    %749 = vmatpush.msra.mxu0 0.0
    %750 = vmatpush.msra.mxu0 0.0
    %751 = vmatpush.msra.mxu0 0.0
    %752 = vmatpush.msra.mxu0 0.0
    %753 = vmatpush.msra.mxu0 0.0
    %754 = vmatpush.msra.mxu0 0.0
    %755 = vmatpush.msra.mxu0 0.0
    %756 = vmatpush.msra.mxu0 %v733
    %757 = vmatpush.msra.mxu0 %v732
    %758 = vmatpush.msra.mxu0 %v731
    %759 = vmatpush.msra.mxu0 %v730
    %760 = vmatmul.f32.gmra.mxu0 %v742
    %v761 = vpop.f32.mrf.mxu0
    %v762 = vadd.f32 %v736, %v761
    %763 = vdwg.mxu0
    %vm764 = vcmask 9216
    %765 = vst.msk [vmem:[#allocation2] sm:$0x3] %vm764, %v762
    // Predicated region
    $region38: #{cael_forward.3} parent=1 // pred_check
      _
    $region39: #{cael_forward.3} parent=1 // pred_check_branch
      %767 = sbr.rel (0) target = $region41
    $region40: #{cael_forward.3} parent=1 // pred_region
      %769 = vsyncadd [#allocation3], 0
      %s771 = sshll.u32 [#allocation2], 4
      %s772 = int_to_ptr.vmem [resolvable:$true] %s771
      %s773 = sshll.u32 %s9, 4
      %s774 = int_to_ptr.hbm [resolvable:$true] %s773
      %776 = dma.vmem_to_hbm [thread:$0]  %s772, 32, %s774, [#allocation3]
    $region41: #{cael_forward.3} parent=1 // pred_fallthru
      _
    // Predicated region
    $region42: #{cael_forward.3} parent=1 // pred_check
      _
    $region43: #{cael_forward.3} parent=1 // pred_check_branch
      %778 = sbr.rel (0) target = $region45
    $region44: #{cael_forward.3} parent=1 // pred_region
      %780 = dma.done [#allocation3], 32
    $region45: #{cael_forward.3} parent=1 // pred_fallthru
      _
    %781 = vsyncpa [#allocation3], 1

// kernel: cael_forward.2
$region0: #{cael_forward.2}
  #allocation0 [shape = 'u32[]', space=smem, size = 0x4, offset = 0x4, fixed_abs, tag = 'smem constant byte address 0x4 - core index']
  #allocation1 [shape = 'u32[72,128]{1,0:T(1,128)}', space=vmem, size = 0x9000, scoped, tag = 'internal scratch']
  %s0 = inlined_call_operand.vmem [shape: f32[2,2,8,16], index: 0, kind: input, shape index: {}]
  %s1 = inlined_call_operand.vmem [shape: f32[2,16,32], index: 1, kind: input, shape index: {}]
  %s2 = inlined_call_operand.vmem [shape: f32[2,1,32], index: 2, kind: input, shape index: {}]
  %s3 = inlined_call_operand.vmem [shape: f32[2,2,32,96], index: 3, kind: input, shape index: {}]
  %s4 = inlined_call_operand.vmem [shape: f32[2,2,1,96], index: 4, kind: input, shape index: {}]
  %s5 = inlined_call_operand.vmem [shape: f32[2,2,32,32], index: 5, kind: input, shape index: {}]
  %s6 = inlined_call_operand.vmem [shape: f32[2,2,1,32], index: 6, kind: input, shape index: {}]
  %s7 = inlined_call_operand.vmem [shape: f32[2,2,1,32], index: 7, kind: input, shape index: {}]
  %s8 = inlined_call_operand.vmem [shape: f32[2,2,1,32], index: 8, kind: input, shape index: {}]
  %s9 = inlined_call_operand.vmem [shape: f32[2,2,32,2048], index: 9, kind: input, shape index: {}]
  %s10 = inlined_call_operand.vmem [shape: f32[2,2,1,2048], index: 10, kind: input, shape index: {}]
  %s11 = inlined_call_operand.vmem [shape: f32[2,2,2048,32], index: 11, kind: input, shape index: {}]
  %s12 = inlined_call_operand.vmem [shape: f32[2,2,1,32], index: 12, kind: input, shape index: {}]
  %s13 = inlined_call_operand.vmem [shape: f32[2,2,1,32], index: 13, kind: input, shape index: {}]
  %s14 = inlined_call_operand.vmem [shape: f32[2,2,1,32], index: 14, kind: input, shape index: {}]
  %s15 = inlined_call_operand.vmem [shape: f32[2,2,8,32], index: 15, kind: output, shape index: {}]
  %s16 = sld [smem:[#allocation0]]
  $region93: #{cael_forward.2} parent=0
    _
  %s18 = ssub.s32 1, %s16
  %s19 = scalar_select 0, %s18, %s16
  loop: start=0, step=1, limit=4
  $region2: #{cael_forward.2} parent=0 // loop_pre_header
    _
  $region3: #{cael_forward.2} parent=0 // loop_header
    %s21 = sphi 0, %s25
    %p22 = scmp.ge.s32.totalorder %s21, 4
    %s31 = sphi 0, %s33
    %s34 = sphi 0, %s31
    %s35 = sphi 0, %s34
    %s51 = sphi 0, %s35
    %s57 = sphi 0, %s59
    %s60 = sphi 0, %s57
    %s61 = sphi 0, %s60
    %s77 = sphi 0, %s61
    %s83 = sphi 0, %s85
    %s86 = sphi 0, %s83
    %s87 = sphi 0, %s86
    %s103 = sphi 0, %s87
    %s109 = sphi 0, %s111
    %s112 = sphi 0, %s109
    %s113 = sphi 0, %s112
    %s129 = sphi 0, %s113
    %s135 = sphi 0, %s137
    %s138 = sphi 0, %s135
    %s139 = sphi 0, %s138
    %s155 = sphi 0, %s139
    %s161 = sphi 0, %s163
    %s164 = sphi 0, %s161
    %s165 = sphi 0, %s164
    %s181 = sphi 0, %s165
    %s187 = sphi 0, %s189
    %s190 = sphi 0, %s187
    %s191 = sphi 0, %s190
    %s207 = sphi 0, %s191
    %s213 = sphi 0, %s215
    %s216 = sphi 0, %s213
    %s217 = sphi 0, %s216
    %s233 = sphi 0, %s217
    %s239 = sphi 0, %s241
    %s242 = sphi 0, %s239
    %s243 = sphi 0, %s242
    %s259 = sphi 0, %s243
    %s265 = sphi 0, %s267
    %s268 = sphi 0, %s265
    %s269 = sphi 0, %s268
    %s285 = sphi 0, %s269
    %s291 = sphi 0, %s293
    %s294 = sphi 0, %s291
    %s295 = sphi 0, %s294
    %s311 = sphi 0, %s295
    %s317 = sphi 0, %s319
    %s320 = sphi 0, %s317
    %s321 = sphi 0, %s320
    %s337 = sphi 0, %s321
    %s343 = sphi 0, %s345
    %s346 = sphi 0, %s343
    %s347 = sphi 0, %s346
    %s363 = sphi 0, %s347
    %s369 = sphi 0, %s371
    %s372 = sphi 0, %s369
    %s373 = sphi 0, %s372
    %s389 = sphi 0, %s373
    %s395 = sphi 0, %s397
    %s398 = sphi 0, %s395
    %s399 = sphi 0, %s398
    %s415 = sphi 0, %s399
    %s421 = sphi 0, %s423
    %s424 = sphi 0, %s421
    %s425 = sphi 0, %s424
    %s441 = sphi 0, %s425
  $region4: #{cael_forward.2} parent=0 // loop_header_branch
    %24 = sbr.rel (%p22) target = $region8
  $region5: #{cael_forward.2} parent=0 // loop_body
    %s26 = ssub.s32 %s21, 1
    %s27 = ssub.s32 %s21, 2
    %s28 = sadd.s32 %s21, 1
    %s29 = ssub.s32 %s21, %s28
    %p30 = scmp.eq.s32.totalorder %s29, 0
    %s32 = sadd.s32 %s31, 1
    %s33 = scalar_select %p30, %s31, %s32
    %p36 = pneg %p30
    %p37 = scmp.eq.s32.totalorder %s21, 1
    %p38 = por %p36, %p37
    %p39 = scmp.ne.s32.totalorder %s31, %s34
    %p40 = scmp.eq.s32.totalorder %s21, 0
    %p41 = por %p39, %p40
    %p42 = scmp.ne.s32.totalorder %s31, %s34
    %p43 = scmp.eq.s32.totalorder %s26, 1
    %p44 = por %p42, %p43
    %p45 = scmp.ne.s32.totalorder %s34, %s35
    %p46 = scmp.eq.s32.totalorder %s26, 0
    %p47 = por %p45, %p46
    %p48 = scmp.ne.s32.totalorder %s34, %s35
    %p49 = scmp.eq.s32.totalorder %s27, 1
    %p50 = por %p48, %p49
    %p52 = scmp.ne.s32.totalorder %s35, %s51
    %p53 = scmp.eq.s32.totalorder %s27, 0
    %p54 = por %p52, %p53
    %s55 = ssub.s32 %s21, %s28
    %p56 = scmp.eq.s32.totalorder %s55, 0
    %s58 = sadd.s32 %s57, 1
    %s59 = scalar_select %p56, %s57, %s58
    %p62 = pneg %p56
    %p63 = scmp.eq.s32.totalorder %s21, 1
    %p64 = por %p62, %p63
    %p65 = scmp.ne.s32.totalorder %s57, %s60
    %p66 = scmp.eq.s32.totalorder %s21, 0
    %p67 = por %p65, %p66
    %p68 = scmp.ne.s32.totalorder %s57, %s60
    %p69 = scmp.eq.s32.totalorder %s26, 1
    %p70 = por %p68, %p69
    %p71 = scmp.ne.s32.totalorder %s60, %s61
    %p72 = scmp.eq.s32.totalorder %s26, 0
    %p73 = por %p71, %p72
    %p74 = scmp.ne.s32.totalorder %s60, %s61
    %p75 = scmp.eq.s32.totalorder %s27, 1
    %p76 = por %p74, %p75
    %p78 = scmp.ne.s32.totalorder %s61, %s77
    %p79 = scmp.eq.s32.totalorder %s27, 0
    %p80 = por %p78, %p79
    %s81 = ssub.s32 %s21, %s28
    %p82 = scmp.eq.s32.totalorder %s81, 0
    %s84 = sadd.s32 %s83, 1
    %s85 = scalar_select %p82, %s83, %s84
    %p88 = pneg %p82
    %p89 = scmp.eq.s32.totalorder %s21, 1
    %p90 = por %p88, %p89
    %p91 = scmp.ne.s32.totalorder %s83, %s86
    %p92 = scmp.eq.s32.totalorder %s21, 0
    %p93 = por %p91, %p92
    %p94 = scmp.ne.s32.totalorder %s83, %s86
    %p95 = scmp.eq.s32.totalorder %s26, 1
    %p96 = por %p94, %p95
    %p97 = scmp.ne.s32.totalorder %s86, %s87
    %p98 = scmp.eq.s32.totalorder %s26, 0
    %p99 = por %p97, %p98
    %p100 = scmp.ne.s32.totalorder %s86, %s87
    %p101 = scmp.eq.s32.totalorder %s27, 1
    %p102 = por %p100, %p101
    %p104 = scmp.ne.s32.totalorder %s87, %s103
    %p105 = scmp.eq.s32.totalorder %s27, 0
    %p106 = por %p104, %p105
    %s107 = ssub.s32 %s21, %s28
    %p108 = scmp.eq.s32.totalorder %s107, 0
    %s110 = sadd.s32 %s109, 1
    %s111 = scalar_select %p108, %s109, %s110
    %p114 = pneg %p108
    %p115 = scmp.eq.s32.totalorder %s21, 1
    %p116 = por %p114, %p115
    %p117 = scmp.ne.s32.totalorder %s109, %s112
    %p118 = scmp.eq.s32.totalorder %s21, 0
    %p119 = por %p117, %p118
    %p120 = scmp.ne.s32.totalorder %s109, %s112
    %p121 = scmp.eq.s32.totalorder %s26, 1
    %p122 = por %p120, %p121
    %p123 = scmp.ne.s32.totalorder %s112, %s113
    %p124 = scmp.eq.s32.totalorder %s26, 0
    %p125 = por %p123, %p124
    %p126 = scmp.ne.s32.totalorder %s112, %s113
    %p127 = scmp.eq.s32.totalorder %s27, 1
    %p128 = por %p126, %p127
    %p130 = scmp.ne.s32.totalorder %s113, %s129
    %p131 = scmp.eq.s32.totalorder %s27, 0
    %p132 = por %p130, %p131
    %s133 = ssub.s32 %s21, %s28
    %p134 = scmp.eq.s32.totalorder %s133, 0
    %s136 = sadd.s32 %s135, 1
    %s137 = scalar_select %p134, %s135, %s136
    %p140 = pneg %p134
    %p141 = scmp.eq.s32.totalorder %s21, 1
    %p142 = por %p140, %p141
    %p143 = scmp.ne.s32.totalorder %s135, %s138
    %p144 = scmp.eq.s32.totalorder %s21, 0
    %p145 = por %p143, %p144
    %p146 = scmp.ne.s32.totalorder %s135, %s138
    %p147 = scmp.eq.s32.totalorder %s26, 1
    %p148 = por %p146, %p147
    %p149 = scmp.ne.s32.totalorder %s138, %s139
    %p150 = scmp.eq.s32.totalorder %s26, 0
    %p151 = por %p149, %p150
    %p152 = scmp.ne.s32.totalorder %s138, %s139
    %p153 = scmp.eq.s32.totalorder %s27, 1
    %p154 = por %p152, %p153
    %p156 = scmp.ne.s32.totalorder %s139, %s155
    %p157 = scmp.eq.s32.totalorder %s27, 0
    %p158 = por %p156, %p157
    %s159 = ssub.s32 %s21, %s28
    %p160 = scmp.eq.s32.totalorder %s159, 0
    %s162 = sadd.s32 %s161, 1
    %s163 = scalar_select %p160, %s161, %s162
    %p166 = pneg %p160
    %p167 = scmp.eq.s32.totalorder %s21, 1
    %p168 = por %p166, %p167
    %p169 = scmp.ne.s32.totalorder %s161, %s164
    %p170 = scmp.eq.s32.totalorder %s21, 0
    %p171 = por %p169, %p170
    %p172 = scmp.ne.s32.totalorder %s161, %s164
    %p173 = scmp.eq.s32.totalorder %s26, 1
    %p174 = por %p172, %p173
    %p175 = scmp.ne.s32.totalorder %s164, %s165
    %p176 = scmp.eq.s32.totalorder %s26, 0
    %p177 = por %p175, %p176
    %p178 = scmp.ne.s32.totalorder %s164, %s165
    %p179 = scmp.eq.s32.totalorder %s27, 1
    %p180 = por %p178, %p179
    %p182 = scmp.ne.s32.totalorder %s165, %s181
    %p183 = scmp.eq.s32.totalorder %s27, 0
    %p184 = por %p182, %p183
    %s185 = ssub.s32 %s21, %s28
    %p186 = scmp.eq.s32.totalorder %s185, 0
    %s188 = sadd.s32 %s187, 1
    %s189 = scalar_select %p186, %s187, %s188
    %p192 = pneg %p186
    %p193 = scmp.eq.s32.totalorder %s21, 1
    %p194 = por %p192, %p193
    %p195 = scmp.ne.s32.totalorder %s187, %s190
    %p196 = scmp.eq.s32.totalorder %s21, 0
    %p197 = por %p195, %p196
    %p198 = scmp.ne.s32.totalorder %s187, %s190
    %p199 = scmp.eq.s32.totalorder %s26, 1
    %p200 = por %p198, %p199
    %p201 = scmp.ne.s32.totalorder %s190, %s191
    %p202 = scmp.eq.s32.totalorder %s26, 0
    %p203 = por %p201, %p202
    %p204 = scmp.ne.s32.totalorder %s190, %s191
    %p205 = scmp.eq.s32.totalorder %s27, 1
    %p206 = por %p204, %p205
    %p208 = scmp.ne.s32.totalorder %s191, %s207
    %p209 = scmp.eq.s32.totalorder %s27, 0
    %p210 = por %p208, %p209
    %s211 = ssub.s32 %s21, %s28
    %p212 = scmp.eq.s32.totalorder %s211, 0
    %s214 = sadd.s32 %s213, 1
    %s215 = scalar_select %p212, %s213, %s214
    %p218 = pneg %p212
    %p219 = scmp.eq.s32.totalorder %s21, 1
    %p220 = por %p218, %p219
    %p221 = scmp.ne.s32.totalorder %s213, %s216
    %p222 = scmp.eq.s32.totalorder %s21, 0
    %p223 = por %p221, %p222
    %p224 = scmp.ne.s32.totalorder %s213, %s216
    %p225 = scmp.eq.s32.totalorder %s26, 1
    %p226 = por %p224, %p225
    %p227 = scmp.ne.s32.totalorder %s216, %s217
    %p228 = scmp.eq.s32.totalorder %s26, 0
    %p229 = por %p227, %p228
    %p230 = scmp.ne.s32.totalorder %s216, %s217
    %p231 = scmp.eq.s32.totalorder %s27, 1
    %p232 = por %p230, %p231
    %p234 = scmp.ne.s32.totalorder %s217, %s233
    %p235 = scmp.eq.s32.totalorder %s27, 0
    %p236 = por %p234, %p235
    %s237 = ssub.s32 %s21, %s28
    %p238 = scmp.eq.s32.totalorder %s237, 0
    %s240 = sadd.s32 %s239, 1
    %s241 = scalar_select %p238, %s239, %s240
    %p244 = pneg %p238
    %p245 = scmp.eq.s32.totalorder %s21, 1
    %p246 = por %p244, %p245
    %p247 = scmp.ne.s32.totalorder %s239, %s242
    %p248 = scmp.eq.s32.totalorder %s21, 0
    %p249 = por %p247, %p248
    %p250 = scmp.ne.s32.totalorder %s239, %s242
    %p251 = scmp.eq.s32.totalorder %s26, 1
    %p252 = por %p250, %p251
    %p253 = scmp.ne.s32.totalorder %s242, %s243
    %p254 = scmp.eq.s32.totalorder %s26, 0
    %p255 = por %p253, %p254
    %p256 = scmp.ne.s32.totalorder %s242, %s243
    %p257 = scmp.eq.s32.totalorder %s27, 1
    %p258 = por %p256, %p257
    %p260 = scmp.ne.s32.totalorder %s243, %s259
    %p261 = scmp.eq.s32.totalorder %s27, 0
    %p262 = por %p260, %p261
    %s263 = ssub.s32 %s21, %s28
    %p264 = scmp.eq.s32.totalorder %s263, 0
    %s266 = sadd.s32 %s265, 1
    %s267 = scalar_select %p264, %s265, %s266
    %p270 = pneg %p264
    %p271 = scmp.eq.s32.totalorder %s21, 1
    %p272 = por %p270, %p271
    %p273 = scmp.ne.s32.totalorder %s265, %s268
    %p274 = scmp.eq.s32.totalorder %s21, 0
    %p275 = por %p273, %p274
    %p276 = scmp.ne.s32.totalorder %s265, %s268
    %p277 = scmp.eq.s32.totalorder %s26, 1
    %p278 = por %p276, %p277
    %p279 = scmp.ne.s32.totalorder %s268, %s269
    %p280 = scmp.eq.s32.totalorder %s26, 0
    %p281 = por %p279, %p280
    %p282 = scmp.ne.s32.totalorder %s268, %s269
    %p283 = scmp.eq.s32.totalorder %s27, 1
    %p284 = por %p282, %p283
    %p286 = scmp.ne.s32.totalorder %s269, %s285
    %p287 = scmp.eq.s32.totalorder %s27, 0
    %p288 = por %p286, %p287
    %s289 = ssub.s32 %s21, %s28
    %p290 = scmp.eq.s32.totalorder %s289, 0
    %s292 = sadd.s32 %s291, 1
    %s293 = scalar_select %p290, %s291, %s292
    %p296 = pneg %p290
    %p297 = scmp.eq.s32.totalorder %s21, 1
    %p298 = por %p296, %p297
    %p299 = scmp.ne.s32.totalorder %s291, %s294
    %p300 = scmp.eq.s32.totalorder %s21, 0
    %p301 = por %p299, %p300
    %p302 = scmp.ne.s32.totalorder %s291, %s294
    %p303 = scmp.eq.s32.totalorder %s26, 1
    %p304 = por %p302, %p303
    %p305 = scmp.ne.s32.totalorder %s294, %s295
    %p306 = scmp.eq.s32.totalorder %s26, 0
    %p307 = por %p305, %p306
    %p308 = scmp.ne.s32.totalorder %s294, %s295
    %p309 = scmp.eq.s32.totalorder %s27, 1
    %p310 = por %p308, %p309
    %p312 = scmp.ne.s32.totalorder %s295, %s311
    %p313 = scmp.eq.s32.totalorder %s27, 0
    %p314 = por %p312, %p313
    %s315 = ssub.s32 %s21, %s28
    %p316 = scmp.eq.s32.totalorder %s315, 0
    %s318 = sadd.s32 %s317, 1
    %s319 = scalar_select %p316, %s317, %s318
    %p322 = pneg %p316
    %p323 = scmp.eq.s32.totalorder %s21, 1
    %p324 = por %p322, %p323
    %p325 = scmp.ne.s32.totalorder %s317, %s320
    %p326 = scmp.eq.s32.totalorder %s21, 0
    %p327 = por %p325, %p326
    %p328 = scmp.ne.s32.totalorder %s317, %s320
    %p329 = scmp.eq.s32.totalorder %s26, 1
    %p330 = por %p328, %p329
    %p331 = scmp.ne.s32.totalorder %s320, %s321
    %p332 = scmp.eq.s32.totalorder %s26, 0
    %p333 = por %p331, %p332
    %p334 = scmp.ne.s32.totalorder %s320, %s321
    %p335 = scmp.eq.s32.totalorder %s27, 1
    %p336 = por %p334, %p335
    %p338 = scmp.ne.s32.totalorder %s321, %s337
    %p339 = scmp.eq.s32.totalorder %s27, 0
    %p340 = por %p338, %p339
    %s341 = ssub.s32 %s21, %s28
    %p342 = scmp.eq.s32.totalorder %s341, 0
    %s344 = sadd.s32 %s343, 1
    %s345 = scalar_select %p342, %s343, %s344
    %p348 = pneg %p342
    %p349 = scmp.eq.s32.totalorder %s21, 1
    %p350 = por %p348, %p349
    %p351 = scmp.ne.s32.totalorder %s343, %s346
    %p352 = scmp.eq.s32.totalorder %s21, 0
    %p353 = por %p351, %p352
    %p354 = scmp.ne.s32.totalorder %s343, %s346
    %p355 = scmp.eq.s32.totalorder %s26, 1
    %p356 = por %p354, %p355
    %p357 = scmp.ne.s32.totalorder %s346, %s347
    %p358 = scmp.eq.s32.totalorder %s26, 0
    %p359 = por %p357, %p358
    %p360 = scmp.ne.s32.totalorder %s346, %s347
    %p361 = scmp.eq.s32.totalorder %s27, 1
    %p362 = por %p360, %p361
    %p364 = scmp.ne.s32.totalorder %s347, %s363
    %p365 = scmp.eq.s32.totalorder %s27, 0
    %p366 = por %p364, %p365
    %s367 = ssub.s32 %s21, %s28
    %p368 = scmp.eq.s32.totalorder %s367, 0
    %s370 = sadd.s32 %s369, 1
    %s371 = scalar_select %p368, %s369, %s370
    %p374 = pneg %p368
    %p375 = scmp.eq.s32.totalorder %s21, 1
    %p376 = por %p374, %p375
    %p377 = scmp.ne.s32.totalorder %s369, %s372
    %p378 = scmp.eq.s32.totalorder %s21, 0
    %p379 = por %p377, %p378
    %p380 = scmp.ne.s32.totalorder %s369, %s372
    %p381 = scmp.eq.s32.totalorder %s26, 1
    %p382 = por %p380, %p381
    %p383 = scmp.ne.s32.totalorder %s372, %s373
    %p384 = scmp.eq.s32.totalorder %s26, 0
    %p385 = por %p383, %p384
    %p386 = scmp.ne.s32.totalorder %s372, %s373
    %p387 = scmp.eq.s32.totalorder %s27, 1
    %p388 = por %p386, %p387
    %p390 = scmp.ne.s32.totalorder %s373, %s389
    %p391 = scmp.eq.s32.totalorder %s27, 0
    %p392 = por %p390, %p391
    %s393 = ssub.s32 %s21, %s28
    %p394 = scmp.eq.s32.totalorder %s393, 0
    %s396 = sadd.s32 %s395, 1
    %s397 = scalar_select %p394, %s395, %s396
    %p400 = pneg %p394
    %p401 = scmp.eq.s32.totalorder %s21, 1
    %p402 = por %p400, %p401
    %p403 = scmp.ne.s32.totalorder %s395, %s398
    %p404 = scmp.eq.s32.totalorder %s21, 0
    %p405 = por %p403, %p404
    %p406 = scmp.ne.s32.totalorder %s395, %s398
    %p407 = scmp.eq.s32.totalorder %s26, 1
    %p408 = por %p406, %p407
    %p409 = scmp.ne.s32.totalorder %s398, %s399
    %p410 = scmp.eq.s32.totalorder %s26, 0
    %p411 = por %p409, %p410
    %p412 = scmp.ne.s32.totalorder %s398, %s399
    %p413 = scmp.eq.s32.totalorder %s27, 1
    %p414 = por %p412, %p413
    %p416 = scmp.ne.s32.totalorder %s399, %s415
    %p417 = scmp.eq.s32.totalorder %s27, 0
    %p418 = por %p416, %p417
    %s419 = ssub.s32 %s21, %s28
    %p420 = scmp.eq.s32.totalorder %s419, 0
    %s422 = sadd.s32 %s421, 1
    %s423 = scalar_select %p420, %s421, %s422
    %p426 = pneg %p420
    %p427 = scmp.eq.s32.totalorder %s21, 1
    %p428 = por %p426, %p427
    %p429 = scmp.ne.s32.totalorder %s421, %s424
    %p430 = scmp.eq.s32.totalorder %s21, 0
    %p431 = por %p429, %p430
    %p432 = scmp.ne.s32.totalorder %s421, %s424
    %p433 = scmp.eq.s32.totalorder %s26, 1
    %p434 = por %p432, %p433
    %p435 = scmp.ne.s32.totalorder %s424, %s425
    %p436 = scmp.eq.s32.totalorder %s26, 0
    %p437 = por %p435, %p436
    %p438 = scmp.ne.s32.totalorder %s424, %s425
    %p439 = scmp.eq.s32.totalorder %s27, 1
    %p440 = por %p438, %p439
    %p442 = scmp.ne.s32.totalorder %s425, %s441
    %p443 = scmp.eq.s32.totalorder %s27, 0
    %p444 = por %p442, %p443
    %p445 = scmp.le.s32.totalorder 1, %s21
    %p446 = scmp.lt.s32.totalorder %s21, 3
    %p447 = pnand %p445, %p446
    %p448 = pneg %p447
    // Predicated region
    $region9: #{cael_forward.2} parent=5 // pred_check
      _
    $region10: #{cael_forward.2} parent=5 // pred_check_branch
      %450 = sbr.rel (%p447) target = $region12
    $region11: #{cael_forward.2} parent=5 // pred_region
      %s451 = ssub.s32 %s21, 1
    $region12: #{cael_forward.2} parent=5 // pred_fallthru
      _
    %p452 = scmp.lt.s32.totalorder %s21, 2
    // Predicated region
    $region13: #{cael_forward.2} parent=5 // pred_check
      %p453 = pneg %p452
    $region14: #{cael_forward.2} parent=5 // pred_check_branch
      %455 = sbr.rel (%p453) target = $region16
    $region15: #{cael_forward.2} parent=5 // pred_region
      // Predicated region
      $region17: #{cael_forward.2} parent=15 // pred_check
        %p456 = pneg %p41
      $region18: #{cael_forward.2} parent=15 // pred_check_branch
        %458 = sbr.rel (%p456) target = $region20
      $region19: #{cael_forward.2} parent=15 // pred_region
        %p459 = scmp.lt.s32.totalorder %s21, 1
        %s460 = scalar_select %p459, %s21, 1
        %s461 = smul.addr %s460, 2
        %s462 = smul.addr %s461, 8
        %s463 = scalar_lea.vmem %s0, %s462
      $region20: #{cael_forward.2} parent=15 // pred_fallthru
        _
      // Predicated region
      $region21: #{cael_forward.2} parent=15 // pred_check
        %p464 = pneg %p67
      $region22: #{cael_forward.2} parent=15 // pred_check_branch
        %466 = sbr.rel (%p464) target = $region24
      $region23: #{cael_forward.2} parent=15 // pred_region
        %p467 = scmp.lt.s32.totalorder %s21, 1
        %s468 = scalar_select %p467, %s21, 1
        %s469 = smul.addr %s468, 2
        %s470 = smul.addr %s469, 8
        %s471 = scalar_lea.vmem %s1, %s470
      $region24: #{cael_forward.2} parent=15 // pred_fallthru
        _
      // Predicated region
      $region25: #{cael_forward.2} parent=15 // pred_check
        %p472 = pneg %p93
      $region26: #{cael_forward.2} parent=15 // pred_check_branch
        %474 = sbr.rel (%p472) target = $region28
      $region27: #{cael_forward.2} parent=15 // pred_region
        %p475 = scmp.lt.s32.totalorder %s21, 1
        %s476 = scalar_select %p475, %s21, 1
        %s477 = scalar_lea.vmem %s2, %s476
      $region28: #{cael_forward.2} parent=15 // pred_fallthru
        _
      // Predicated region
      $region29: #{cael_forward.2} parent=15 // pred_check
        %p478 = pneg %p119
      $region30: #{cael_forward.2} parent=15 // pred_check_branch
        %480 = sbr.rel (%p478) target = $region32
      $region31: #{cael_forward.2} parent=15 // pred_region
        %p481 = scmp.lt.s32.totalorder %s21, 1
        %s482 = scalar_select %p481, %s21, 1
        %s483 = smul.addr %s482, 8
        %s484 = smul.addr %s483, 8
        %s485 = scalar_lea.vmem %s3, %s484
      $region32: #{cael_forward.2} parent=15 // pred_fallthru
        _
      // Predicated region
      $region33: #{cael_forward.2} parent=15 // pred_check
        %p486 = pneg %p145
      $region34: #{cael_forward.2} parent=15 // pred_check_branch
        %488 = sbr.rel (%p486) target = $region36
      $region35: #{cael_forward.2} parent=15 // pred_region
        %p489 = scmp.lt.s32.totalorder %s21, 1
        %s490 = scalar_select %p489, %s21, 1
        %s491 = smul.addr %s490, 2
        %s492 = scalar_lea.vmem %s4, %s491
      $region36: #{cael_forward.2} parent=15 // pred_fallthru
        _
      // Predicated region
      $region37: #{cael_forward.2} parent=15 // pred_check
        %p493 = pneg %p171
      $region38: #{cael_forward.2} parent=15 // pred_check_branch
        %495 = sbr.rel (%p493) target = $region40
      $region39: #{cael_forward.2} parent=15 // pred_region
        %p496 = scmp.lt.s32.totalorder %s21, 1
        %s497 = scalar_select %p496, %s21, 1
        %s498 = smul.addr %s497, 8
        %s499 = smul.addr %s498, 8
        %s500 = scalar_lea.vmem %s5, %s499
      $region40: #{cael_forward.2} parent=15 // pred_fallthru
        _
      // Predicated region
      $region41: #{cael_forward.2} parent=15 // pred_check
        %p501 = pneg %p197
      $region42: #{cael_forward.2} parent=15 // pred_check_branch
        %503 = sbr.rel (%p501) target = $region44
      $region43: #{cael_forward.2} parent=15 // pred_region
        %p504 = scmp.lt.s32.totalorder %s21, 1
        %s505 = scalar_select %p504, %s21, 1
        %s506 = smul.addr %s505, 2
        %s507 = scalar_lea.vmem %s6, %s506
      $region44: #{cael_forward.2} parent=15 // pred_fallthru
        _
      // Predicated region
      $region45: #{cael_forward.2} parent=15 // pred_check
        %p508 = pneg %p223
      $region46: #{cael_forward.2} parent=15 // pred_check_branch
        %510 = sbr.rel (%p508) target = $region48
      $region47: #{cael_forward.2} parent=15 // pred_region
        %p511 = scmp.lt.s32.totalorder %s21, 1
        %s512 = scalar_select %p511, %s21, 1
        %s513 = smul.addr %s512, 2
        %s514 = scalar_lea.vmem %s7, %s513
      $region48: #{cael_forward.2} parent=15 // pred_fallthru
        _
      // Predicated region
      $region49: #{cael_forward.2} parent=15 // pred_check
        %p515 = pneg %p249
      $region50: #{cael_forward.2} parent=15 // pred_check_branch
        %517 = sbr.rel (%p515) target = $region52
      $region51: #{cael_forward.2} parent=15 // pred_region
        %p518 = scmp.lt.s32.totalorder %s21, 1
        %s519 = scalar_select %p518, %s21, 1
        %s520 = smul.addr %s519, 2
        %s521 = scalar_lea.vmem %s8, %s520
      $region52: #{cael_forward.2} parent=15 // pred_fallthru
        _
      // Predicated region
      $region53: #{cael_forward.2} parent=15 // pred_check
        %p522 = pneg %p275
      $region54: #{cael_forward.2} parent=15 // pred_check_branch
        %524 = sbr.rel (%p522) target = $region56
      $region55: #{cael_forward.2} parent=15 // pred_region
        %p525 = scmp.lt.s32.totalorder %s21, 1
        %s526 = scalar_select %p525, %s21, 1
        %s527 = smul.addr %s526, 128
        %s528 = smul.addr %s527, 8
        %s529 = scalar_lea.vmem %s9, %s528
      $region56: #{cael_forward.2} parent=15 // pred_fallthru
        _
      // Predicated region
      $region57: #{cael_forward.2} parent=15 // pred_check
        %p530 = pneg %p301
      $region58: #{cael_forward.2} parent=15 // pred_check_branch
        %532 = sbr.rel (%p530) target = $region60
      $region59: #{cael_forward.2} parent=15 // pred_region
        %p533 = scmp.lt.s32.totalorder %s21, 1
        %s534 = scalar_select %p533, %s21, 1
        %s535 = smul.addr %s534, 32
        %s536 = scalar_lea.vmem %s10, %s535
      $region60: #{cael_forward.2} parent=15 // pred_fallthru
        _
      // Predicated region
      $region61: #{cael_forward.2} parent=15 // pred_check
        %p537 = pneg %p327
      $region62: #{cael_forward.2} parent=15 // pred_check_branch
        %539 = sbr.rel (%p537) target = $region64
      $region63: #{cael_forward.2} parent=15 // pred_region
        %p540 = scmp.lt.s32.totalorder %s21, 1
        %s541 = scalar_select %p540, %s21, 1
        %s542 = smul.addr %s541, 512
        %s543 = smul.addr %s542, 8
        %s544 = scalar_lea.vmem %s11, %s543
      $region64: #{cael_forward.2} parent=15 // pred_fallthru
        _
      // Predicated region
      $region65: #{cael_forward.2} parent=15 // pred_check
        %p545 = pneg %p353
      $region66: #{cael_forward.2} parent=15 // pred_check_branch
        %547 = sbr.rel (%p545) target = $region68
      $region67: #{cael_forward.2} parent=15 // pred_region
        %p548 = scmp.lt.s32.totalorder %s21, 1
        %s549 = scalar_select %p548, %s21, 1
        %s550 = smul.addr %s549, 2
        %s551 = scalar_lea.vmem %s12, %s550
      $region68: #{cael_forward.2} parent=15 // pred_fallthru
        _
      // Predicated region
      $region69: #{cael_forward.2} parent=15 // pred_check
        %p552 = pneg %p379
      $region70: #{cael_forward.2} parent=15 // pred_check_branch
        %554 = sbr.rel (%p552) target = $region72
      $region71: #{cael_forward.2} parent=15 // pred_region
        %p555 = scmp.lt.s32.totalorder %s21, 1
        %s556 = scalar_select %p555, %s21, 1
        %s557 = smul.addr %s556, 2
        %s558 = scalar_lea.vmem %s13, %s557
      $region72: #{cael_forward.2} parent=15 // pred_fallthru
        _
      // Predicated region
      $region73: #{cael_forward.2} parent=15 // pred_check
        %p559 = pneg %p405
      $region74: #{cael_forward.2} parent=15 // pred_check_branch
        %561 = sbr.rel (%p559) target = $region76
      $region75: #{cael_forward.2} parent=15 // pred_region
        %p562 = scmp.lt.s32.totalorder %s21, 1
        %s563 = scalar_select %p562, %s21, 1
        %s564 = smul.addr %s563, 2
        %s565 = scalar_lea.vmem %s14, %s564
      $region76: #{cael_forward.2} parent=15 // pred_fallthru
        _
    $region16: #{cael_forward.2} parent=5 // pred_fallthru
      _
    %p566 = scmp.le.s32.totalorder 1, %s21
    %p567 = scmp.lt.s32.totalorder %s21, 3
    %p568 = pnand %p566, %p567
    %p569 = pneg %p568
    // Predicated region
    $region77: #{cael_forward.2} parent=5 // pred_check
      _
    $region78: #{cael_forward.2} parent=5 // pred_check_branch
      %571 = sbr.rel (%p568) target = $region80
    $region79: #{cael_forward.2} parent=5 // pred_region
      %s572 = ssub.s32 %s21, 1
      %p573 = scmp.lt.s32.totalorder %s26, 1
      %s574 = scalar_select %p573, %s26, 1
      %s575 = smul.addr %s574, 2
      %s576 = smul.addr %s575, 8
      %s577 = scalar_lea.vmem %s0, %s576
      %p578 = pneg %p47
      %p579 = pneg %p44
      %p580 = scmp.lt.s32.totalorder %s26, 1
      %s581 = scalar_select %p580, %s26, 1
      %s582 = smul.addr %s581, 2
      %s583 = smul.addr %s582, 8
      %s584 = scalar_lea.vmem %s1, %s583
      %p585 = pneg %p73
      %p586 = pneg %p70
      %p587 = scmp.lt.s32.totalorder %s26, 1
      %s588 = scalar_select %p587, %s26, 1
      %s589 = scalar_lea.vmem %s2, %s588
      %p590 = pneg %p99
      %p591 = pneg %p96
      %p592 = scmp.lt.s32.totalorder %s26, 1
      %s593 = scalar_select %p592, %s26, 1
      %s594 = smul.addr %s593, 8
      %s595 = smul.addr %s594, 8
      %s596 = scalar_lea.vmem %s3, %s595
      %p597 = pneg %p125
      %p598 = pneg %p122
      %p599 = scmp.lt.s32.totalorder %s26, 1
      %s600 = scalar_select %p599, %s26, 1
      %s601 = smul.addr %s600, 2
      %s602 = scalar_lea.vmem %s4, %s601
      %p603 = pneg %p151
      %p604 = pneg %p148
      %p605 = scmp.lt.s32.totalorder %s26, 1
      %s606 = scalar_select %p605, %s26, 1
      %s607 = smul.addr %s606, 8
      %s608 = smul.addr %s607, 8
      %s609 = scalar_lea.vmem %s5, %s608
      %p610 = pneg %p177
      %p611 = pneg %p174
      %p612 = scmp.lt.s32.totalorder %s26, 1
      %s613 = scalar_select %p612, %s26, 1
      %s614 = smul.addr %s613, 2
      %s615 = scalar_lea.vmem %s6, %s614
      %p616 = pneg %p203
      %p617 = pneg %p200
      %p618 = scmp.lt.s32.totalorder %s26, 1
      %s619 = scalar_select %p618, %s26, 1
      %s620 = smul.addr %s619, 2
      %s621 = scalar_lea.vmem %s7, %s620
      %p622 = pneg %p229
      %p623 = pneg %p226
      %p624 = scmp.lt.s32.totalorder %s26, 1
      %s625 = scalar_select %p624, %s26, 1
      %s626 = smul.addr %s625, 2
      %s627 = scalar_lea.vmem %s8, %s626
      %p628 = pneg %p255
      %p629 = pneg %p252
      %p630 = scmp.lt.s32.totalorder %s26, 1
      %s631 = scalar_select %p630, %s26, 1
      %s632 = smul.addr %s631, 128
      %s633 = smul.addr %s632, 8
      %s634 = scalar_lea.vmem %s9, %s633
      %p635 = pneg %p281
      %p636 = pneg %p278
      %p637 = scmp.lt.s32.totalorder %s26, 1
      %s638 = scalar_select %p637, %s26, 1
      %s639 = smul.addr %s638, 32
      %s640 = scalar_lea.vmem %s10, %s639
      %p641 = pneg %p307
      %p642 = pneg %p304
      %p643 = scmp.lt.s32.totalorder %s26, 1
      %s644 = scalar_select %p643, %s26, 1
      %s645 = smul.addr %s644, 512
      %s646 = smul.addr %s645, 8
      %s647 = scalar_lea.vmem %s11, %s646
      %p648 = pneg %p333
      %p649 = pneg %p330
      %p650 = scmp.lt.s32.totalorder %s26, 1
      %s651 = scalar_select %p650, %s26, 1
      %s652 = smul.addr %s651, 2
      %s653 = scalar_lea.vmem %s12, %s652
      %p654 = pneg %p359
      %p655 = pneg %p356
      %p656 = scmp.lt.s32.totalorder %s26, 1
      %s657 = scalar_select %p656, %s26, 1
      %s658 = smul.addr %s657, 2
      %s659 = scalar_lea.vmem %s13, %s658
      %p660 = pneg %p385
      %p661 = pneg %p382
      %p662 = scmp.lt.s32.totalorder %s26, 1
      %s663 = scalar_select %p662, %s26, 1
      %s664 = smul.addr %s663, 2
      %s665 = scalar_lea.vmem %s14, %s664
      %p666 = pneg %p411
      %p667 = pneg %p408
      %p668 = pneg %p437
      %p669 = pneg %p434
      %p670 = scmp.lt.s32.totalorder %s26, 1
      %s671 = scalar_select %p670, %s26, 1
      %s672 = smul.addr %s671, 2
      %s673 = smul.addr %s672, 8
      %s674 = scalar_lea.vmem %s15, %s673
      %p675 = scmp.lt.s32.totalorder %s26, 1
      %s676 = scalar_select %p675, %s26, 1
      %s677 = smul.addr %s676, 2
      %s678 = smul.addr %s677, 8
      %s679 = scalar_lea.vmem %s0, %s678
      %p680 = scmp.lt.s32.totalorder %s26, 1
      %s681 = scalar_select %p680, %s26, 1
      %s682 = smul.addr %s681, 2
      %s683 = smul.addr %s682, 8
      %s684 = scalar_lea.vmem %s1, %s683
      %p685 = scmp.lt.s32.totalorder %s26, 1
      %s686 = scalar_select %p685, %s26, 1
      %s687 = scalar_lea.vmem %s2, %s686
      %p688 = scmp.lt.s32.totalorder %s26, 1
      %s689 = scalar_select %p688, %s26, 1
      %s690 = smul.addr %s689, 8
      %s691 = smul.addr %s690, 8
      %s692 = scalar_lea.vmem %s3, %s691
      %p693 = scmp.lt.s32.totalorder %s26, 1
      %s694 = scalar_select %p693, %s26, 1
      %s695 = smul.addr %s694, 2
      %s696 = scalar_lea.vmem %s4, %s695
      %p697 = scmp.lt.s32.totalorder %s26, 1
      %s698 = scalar_select %p697, %s26, 1
      %s699 = smul.addr %s698, 8
      %s700 = smul.addr %s699, 8
      %s701 = scalar_lea.vmem %s5, %s700
      %p702 = scmp.lt.s32.totalorder %s26, 1
      %s703 = scalar_select %p702, %s26, 1
      %s704 = smul.addr %s703, 2
      %s705 = scalar_lea.vmem %s6, %s704
      %p706 = scmp.lt.s32.totalorder %s26, 1
      %s707 = scalar_select %p706, %s26, 1
      %s708 = smul.addr %s707, 2
      %s709 = scalar_lea.vmem %s7, %s708
      %p710 = scmp.lt.s32.totalorder %s26, 1
      %s711 = scalar_select %p710, %s26, 1
      %s712 = smul.addr %s711, 2
      %s713 = scalar_lea.vmem %s8, %s712
      %p714 = scmp.lt.s32.totalorder %s26, 1
      %s715 = scalar_select %p714, %s26, 1
      %s716 = smul.addr %s715, 128
      %s717 = smul.addr %s716, 8
      %s718 = scalar_lea.vmem %s9, %s717
      %p719 = scmp.lt.s32.totalorder %s26, 1
      %s720 = scalar_select %p719, %s26, 1
      %s721 = smul.addr %s720, 32
      %s722 = scalar_lea.vmem %s10, %s721
      %p723 = scmp.lt.s32.totalorder %s26, 1
      %s724 = scalar_select %p723, %s26, 1
      %s725 = smul.addr %s724, 512
      %s726 = smul.addr %s725, 8
      %s727 = scalar_lea.vmem %s11, %s726
      %p728 = scmp.lt.s32.totalorder %s26, 1
      %s729 = scalar_select %p728, %s26, 1
      %s730 = smul.addr %s729, 2
      %s731 = scalar_lea.vmem %s12, %s730
      %p732 = scmp.lt.s32.totalorder %s26, 1
      %s733 = scalar_select %p732, %s26, 1
      %s734 = smul.addr %s733, 2
      %s735 = scalar_lea.vmem %s13, %s734
      %p736 = scmp.lt.s32.totalorder %s26, 1
      %s737 = scalar_select %p736, %s26, 1
      %s738 = smul.addr %s737, 2
      %s739 = scalar_lea.vmem %s14, %s738
      %p740 = scmp.lt.s32.totalorder %s26, 1
      %s741 = scalar_select %p740, %s26, 1
      %s742 = smul.addr %s741, 2
      %s743 = smul.addr %s742, 8
      %s744 = scalar_lea.vmem %s15, %s743
      %v745 = vld [vmem:[%s679] sm:$0xff]
      %v746 = vld [vmem:[%s679 + $0x8] sm:$0xff]
      %v747 = vld [vmem:[%s684] sm:$0xff]
      %v748 = vld [vmem:[%s684 + $0x8] sm:$0xff]
      %v749 = vld [vmem:[%s687] sm:$0x1]
      %v751 = vperm.slane %v749, 0
      %vm753 = vcmask 130048
      %v755 = vsel %vm753, %v745, 0
      %v758 = vsel %vm753, %v746, 0
      %760 = vmatpush.msra.mxu0 0.0
      %761 = vmatpush.msra.mxu0 0.0
      %762 = vmatpush.msra.mxu0 0.0
      %763 = vmatpush.msra.mxu0 0.0
      %764 = vmatpush.msra.mxu0 0.0
      %765 = vmatpush.msra.mxu0 0.0
      %766 = vmatpush.msra.mxu0 0.0
      %767 = vmatpush.msra.mxu0 0.0
      %768 = vmatpush.msra.mxu0 0.0
      %769 = vmatpush.msra.mxu0 0.0
      %770 = vmatpush.msra.mxu0 0.0
      %771 = vmatpush.msra.mxu0 0.0
      %772 = vmatpush.msra.mxu0 0.0
      %773 = vmatpush.msra.mxu0 0.0
      %774 = vmatpush.msra.mxu0 %v748
      %775 = vmatpush.msra.mxu0 %v747
      %776 = vmatmul.f32.gmra.mxu0 %v755
      %v777 = vpop.f32.mrf.mxu0
      %v778 = vadd.f32 %v751, %v777
      %779 = vmatmul.f32.gmra.mxu0 %v758
      %v780 = vpop.f32.mrf.mxu0
      %v781 = vadd.f32 %v751, %v780
      %782 = vdwg.mxu0
      %v783 = vld [vmem:[%s692] sm:$0xff]
      %v784 = vld [vmem:[%s692 + $0x8] sm:$0xff]
      %v785 = vld [vmem:[%s692 + $0x10] sm:$0xff]
      %v786 = vld [vmem:[%s692 + $0x18] sm:$0xff]
      %v787 = vld [vmem:[%s696] sm:$0x1]
      %v789 = vperm.slane %v787, 0
      %vm791 = vcmask 261120
      %v793 = vsel %vm791, %v778, 0
      %v796 = vsel %vm791, %v781, 0
      %798 = vmatpush.msra.mxu0 0.0
      %799 = vmatpush.msra.mxu0 0.0
      %800 = vmatpush.msra.mxu0 0.0
      %801 = vmatpush.msra.mxu0 0.0
      %802 = vmatpush.msra.mxu0 0.0
      %803 = vmatpush.msra.mxu0 0.0
      %804 = vmatpush.msra.mxu0 0.0
      %805 = vmatpush.msra.mxu0 0.0
      %806 = vmatpush.msra.mxu0 0.0
      %807 = vmatpush.msra.mxu0 0.0
      %808 = vmatpush.msra.mxu0 0.0
      %809 = vmatpush.msra.mxu0 0.0
      %810 = vmatpush.msra.mxu0 %v786
      %811 = vmatpush.msra.mxu0 %v785
      %812 = vmatpush.msra.mxu0 %v784
      %813 = vmatpush.msra.mxu0 %v783
      %814 = vmatmul.f32.gmra.mxu0 %v793
      %v815 = vpop.f32.mrf.mxu0
      %v816 = vadd.f32 %v789, %v815
      %817 = vmatmul.f32.gmra.mxu0 %v796
      %v818 = vpop.f32.mrf.mxu0
      %v819 = vadd.f32 %v789, %v818
      %820 = vdwg.mxu0
      %822 = vrot.lane.b32.xlu0 %v816, 96
      %v823 = vpop.permute.xlu0 %822
      %vm824 = vcmask 64512
      %v825 = vsel %vm824, %v816, 0
      %v827 = vsel %vm824, %v823, 0
      %829 = vmatpush.xpose.msra.mxu0 0.0
      %830 = vmatpush.xpose.msra.mxu0 0.0
      %831 = vmatpush.xpose.msra.mxu0 0.0
      %832 = vmatpush.xpose.msra.mxu0 0.0
      %833 = vmatpush.xpose.msra.mxu0 0.0
      %834 = vmatpush.xpose.msra.mxu0 0.0
      %835 = vmatpush.xpose.msra.mxu0 0.0
      %836 = vmatpush.xpose.msra.mxu0 0.0
      %837 = vmatpush.xpose.msra.mxu0 0.0
      %838 = vmatpush.xpose.msra.mxu0 0.0
      %839 = vmatpush.xpose.msra.mxu0 0.0
      %840 = vmatpush.xpose.msra.mxu0 0.0
      %841 = vmatpush.xpose.msra.mxu0 0.0
      %842 = vmatpush.xpose.msra.mxu0 0.0
      %843 = vmatpush.xpose.msra.mxu0 0.0
      %844 = vmatpush.xpose.msra.mxu0 %v827
      %845 = vmatmul.f32.gmra.mxu0 %v825
      %v846 = vpop.f32.mrf.mxu0
      %v847 = vadd.f32 0.0, %v846
      %848 = vdwg.mxu0
      %850 = vrot.lane.b32.xlu0 %v819, 96
      %v851 = vpop.permute.xlu0 %850
      %v852 = vsel %vm824, %v819, 0
      %v854 = vsel %vm824, %v851, 0
      %856 = vmatpush.xpose.msra.mxu0 0.0
      %857 = vmatpush.xpose.msra.mxu0 0.0
      %858 = vmatpush.xpose.msra.mxu0 0.0
      %859 = vmatpush.xpose.msra.mxu0 0.0
      %860 = vmatpush.xpose.msra.mxu0 0.0
      %861 = vmatpush.xpose.msra.mxu0 0.0
      %862 = vmatpush.xpose.msra.mxu0 0.0
      %863 = vmatpush.xpose.msra.mxu0 0.0
      %864 = vmatpush.xpose.msra.mxu0 0.0
      %865 = vmatpush.xpose.msra.mxu0 0.0
      %866 = vmatpush.xpose.msra.mxu0 0.0
      %867 = vmatpush.xpose.msra.mxu0 0.0
      %868 = vmatpush.xpose.msra.mxu0 0.0
      %869 = vmatpush.xpose.msra.mxu0 0.0
      %870 = vmatpush.xpose.msra.mxu0 0.0
      %871 = vmatpush.xpose.msra.mxu0 %v854
      %872 = vmatmul.f32.gmra.mxu0 %v852
      %v873 = vpop.f32.mrf.mxu0
      %v874 = vadd.f32 0.0, %v873
      %875 = vdwg.mxu0
      %v876 = vmul.f32 %v847, 0.35355338
      %v877 = vmul.f32 %v874, 0.35355338
      %v878 = vsel %vm824, %v876, -inf
      %879 = vmax.xlane.f32.xlu0 %v878
      %v880 = vpop.xlane.xlu0 %879
      %v881 = vsel %vm824, %v877, -inf
      %882 = vmax.xlane.f32.xlu0 %v881
      %v883 = vpop.xlane.xlu0 %882
      %v884 = vsub.f32 %v876, %v880
      %v885 = vsub.f32 %v877, %v883
      %v886 = vmul.f32 %v884, 1.442695
      %v887 = vpow.pop %v886
      %v888 = vmul.f32 %v885, 1.442695
      %v889 = vpow.pop %v888
      %v890 = vsel %vm824, %v887, 0.0
      %891 = vadd.xlane.f32.xlu0 %v890
      %v892 = vpop.xlane.xlu0 %891
      %v893 = vsel %vm824, %v889, 0.0
      %894 = vadd.xlane.f32.xlu0 %v893
      %v895 = vpop.xlane.xlu0 %894
      %v896 = vrcp.pop %v892
      %v897 = vrcp.pop %v895
      %v898 = vmul.f32 %v887, %v896
      %v899 = vmul.f32 %v889, %v897
      %900 = vrot.lane.b32.xlu0 %v816, 64
      %v901 = vpop.permute.xlu0 %900
      %v904 = vsel %vm824, %v898, 0
      %906 = vmatpush.msra.mxu0 0.0
      %907 = vmatpush.msra.mxu0 0.0
      %908 = vmatpush.msra.mxu0 0.0
      %909 = vmatpush.msra.mxu0 0.0
      %910 = vmatpush.msra.mxu0 0.0
      %911 = vmatpush.msra.mxu0 0.0
      %912 = vmatpush.msra.mxu0 0.0
      %913 = vmatpush.msra.mxu0 0.0
      %914 = vmatpush.msra.mxu0 0.0
      %915 = vmatpush.msra.mxu0 0.0
      %916 = vmatpush.msra.mxu0 0.0
      %917 = vmatpush.msra.mxu0 0.0
      %918 = vmatpush.msra.mxu0 0.0
      %919 = vmatpush.msra.mxu0 0.0
      %920 = vmatpush.msra.mxu0 0.0
      %921 = vmatpush.msra.mxu0 %v901
      %922 = vmatmul.f32.gmra.mxu0 %v904
      %v923 = vpop.f32.mrf.mxu0
      %v924 = vadd.f32 0.0, %v923
      %925 = vdwg.mxu0
      %926 = vrot.lane.b32.xlu0 %v819, 64
      %v927 = vpop.permute.xlu0 %926
      %v930 = vsel %vm824, %v899, 0
      %932 = vmatpush.msra.mxu0 0.0
      %933 = vmatpush.msra.mxu0 0.0
      %934 = vmatpush.msra.mxu0 0.0
      %935 = vmatpush.msra.mxu0 0.0
      %936 = vmatpush.msra.mxu0 0.0
      %937 = vmatpush.msra.mxu0 0.0
      %938 = vmatpush.msra.mxu0 0.0
      %939 = vmatpush.msra.mxu0 0.0
      %940 = vmatpush.msra.mxu0 0.0
      %941 = vmatpush.msra.mxu0 0.0
      %942 = vmatpush.msra.mxu0 0.0
      %943 = vmatpush.msra.mxu0 0.0
      %944 = vmatpush.msra.mxu0 0.0
      %945 = vmatpush.msra.mxu0 0.0
      %946 = vmatpush.msra.mxu0 0.0
      %947 = vmatpush.msra.mxu0 %v927
      %948 = vmatmul.f32.gmra.mxu0 %v930
      %v949 = vpop.f32.mrf.mxu0
      %v950 = vadd.f32 0.0, %v949
      %951 = vdwg.mxu0
      %952 = vrot.lane.b32.xlu0 %v816, 120
      %v953 = vpop.permute.xlu0 %952
      %954 = vrot.lane.b32.xlu0 %v816, 88
      %v955 = vpop.permute.xlu0 %954
      %v956 = vsel %vm824, %v953, 0
      %v958 = vsel %vm824, %v955, 0
      %960 = vmatpush.xpose.msra.mxu0 0.0
      %961 = vmatpush.xpose.msra.mxu0 0.0
      %962 = vmatpush.xpose.msra.mxu0 0.0
      %963 = vmatpush.xpose.msra.mxu0 0.0
      %964 = vmatpush.xpose.msra.mxu0 0.0
      %965 = vmatpush.xpose.msra.mxu0 0.0
      %966 = vmatpush.xpose.msra.mxu0 0.0
      %967 = vmatpush.xpose.msra.mxu0 0.0
      %968 = vmatpush.xpose.msra.mxu0 0.0
      %969 = vmatpush.xpose.msra.mxu0 0.0
      %970 = vmatpush.xpose.msra.mxu0 0.0
      %971 = vmatpush.xpose.msra.mxu0 0.0
      %972 = vmatpush.xpose.msra.mxu0 0.0
      %973 = vmatpush.xpose.msra.mxu0 0.0
      %974 = vmatpush.xpose.msra.mxu0 0.0
      %975 = vmatpush.xpose.msra.mxu0 %v958
      %976 = vmatmul.f32.gmra.mxu0 %v956
      %v977 = vpop.f32.mrf.mxu0
      %v978 = vadd.f32 0.0, %v977
      %979 = vdwg.mxu0
      %980 = vrot.lane.b32.xlu0 %v819, 120
      %v981 = vpop.permute.xlu0 %980
      %982 = vrot.lane.b32.xlu0 %v819, 88
      %v983 = vpop.permute.xlu0 %982
      %v984 = vsel %vm824, %v981, 0
      %v986 = vsel %vm824, %v983, 0
      %988 = vmatpush.xpose.msra.mxu0 0.0
      %989 = vmatpush.xpose.msra.mxu0 0.0
      %990 = vmatpush.xpose.msra.mxu0 0.0
      %991 = vmatpush.xpose.msra.mxu0 0.0
      %992 = vmatpush.xpose.msra.mxu0 0.0
      %993 = vmatpush.xpose.msra.mxu0 0.0
      %994 = vmatpush.xpose.msra.mxu0 0.0
      %995 = vmatpush.xpose.msra.mxu0 0.0
      %996 = vmatpush.xpose.msra.mxu0 0.0
      %997 = vmatpush.xpose.msra.mxu0 0.0
      %998 = vmatpush.xpose.msra.mxu0 0.0
      %999 = vmatpush.xpose.msra.mxu0 0.0
      %1000 = vmatpush.xpose.msra.mxu0 0.0
      %1001 = vmatpush.xpose.msra.mxu0 0.0
      %1002 = vmatpush.xpose.msra.mxu0 0.0
      %1003 = vmatpush.xpose.msra.mxu0 %v986
      %1004 = vmatmul.f32.gmra.mxu0 %v984
      %v1005 = vpop.f32.mrf.mxu0
      %v1006 = vadd.f32 0.0, %v1005
      %1007 = vdwg.mxu0
      %v1008 = vmul.f32 %v978, 0.35355338
      %v1009 = vmul.f32 %v1006, 0.35355338
      %v1010 = vsel %vm824, %v1008, -inf
      %1011 = vmax.xlane.f32.xlu0 %v1010
      %v1012 = vpop.xlane.xlu0 %1011
      %v1013 = vsel %vm824, %v1009, -inf
      %1014 = vmax.xlane.f32.xlu0 %v1013
      %v1015 = vpop.xlane.xlu0 %1014
      %v1016 = vsub.f32 %v1008, %v1012
      %v1017 = vsub.f32 %v1009, %v1015
      %v1018 = vmul.f32 %v1016, 1.442695
      %v1019 = vpow.pop %v1018
      %v1020 = vmul.f32 %v1017, 1.442695
      %v1021 = vpow.pop %v1020
      %v1022 = vsel %vm824, %v1019, 0.0
      %1023 = vadd.xlane.f32.xlu0 %v1022
      %v1024 = vpop.xlane.xlu0 %1023
      %v1025 = vsel %vm824, %v1021, 0.0
      %1026 = vadd.xlane.f32.xlu0 %v1025
      %v1027 = vpop.xlane.xlu0 %1026
      %v1028 = vrcp.pop %v1024
      %v1029 = vrcp.pop %v1027
      %v1030 = vmul.f32 %v1019, %v1028
      %v1031 = vmul.f32 %v1021, %v1029
      %1032 = vrot.lane.b32.xlu0 %v816, 56
      %v1033 = vpop.permute.xlu0 %1032
      %v1036 = vsel %vm824, %v1030, 0
      %1038 = vmatpush.msra.mxu0 0.0
      %1039 = vmatpush.msra.mxu0 0.0
      %1040 = vmatpush.msra.mxu0 0.0
      %1041 = vmatpush.msra.mxu0 0.0
      %1042 = vmatpush.msra.mxu0 0.0
      %1043 = vmatpush.msra.mxu0 0.0
      %1044 = vmatpush.msra.mxu0 0.0
      %1045 = vmatpush.msra.mxu0 0.0
      %1046 = vmatpush.msra.mxu0 0.0
      %1047 = vmatpush.msra.mxu0 0.0
      %1048 = vmatpush.msra.mxu0 0.0
      %1049 = vmatpush.msra.mxu0 0.0
      %1050 = vmatpush.msra.mxu0 0.0
      %1051 = vmatpush.msra.mxu0 0.0
      %1052 = vmatpush.msra.mxu0 0.0
      %1053 = vmatpush.msra.mxu0 %v1033
      %1054 = vmatmul.f32.gmra.mxu0 %v1036
      %v1055 = vpop.f32.mrf.mxu0
      %v1056 = vadd.f32 0.0, %v1055
      %1057 = vdwg.mxu0
      %1058 = vrot.lane.b32.xlu0 %v819, 56
      %v1059 = vpop.permute.xlu0 %1058
      %v1062 = vsel %vm824, %v1031, 0
      %1064 = vmatpush.msra.mxu0 0.0
      %1065 = vmatpush.msra.mxu0 0.0
      %1066 = vmatpush.msra.mxu0 0.0
      %1067 = vmatpush.msra.mxu0 0.0
      %1068 = vmatpush.msra.mxu0 0.0
      %1069 = vmatpush.msra.mxu0 0.0
      %1070 = vmatpush.msra.mxu0 0.0
      %1071 = vmatpush.msra.mxu0 0.0
      %1072 = vmatpush.msra.mxu0 0.0
      %1073 = vmatpush.msra.mxu0 0.0
      %1074 = vmatpush.msra.mxu0 0.0
      %1075 = vmatpush.msra.mxu0 0.0
      %1076 = vmatpush.msra.mxu0 0.0
      %1077 = vmatpush.msra.mxu0 0.0
      %1078 = vmatpush.msra.mxu0 0.0
      %1079 = vmatpush.msra.mxu0 %v1059
      %1080 = vmatmul.f32.gmra.mxu0 %v1062
      %v1081 = vpop.f32.mrf.mxu0
      %v1082 = vadd.f32 0.0, %v1081
      %1083 = vdwg.mxu0
      %1084 = vrot.lane.b32.xlu0 %v816, 112
      %v1085 = vpop.permute.xlu0 %1084
      %1086 = vrot.lane.b32.xlu0 %v816, 80
      %v1087 = vpop.permute.xlu0 %1086
      %v1088 = vsel %vm824, %v1085, 0
      %v1090 = vsel %vm824, %v1087, 0
      %1092 = vmatpush.xpose.msra.mxu0 0.0
      %1093 = vmatpush.xpose.msra.mxu0 0.0
      %1094 = vmatpush.xpose.msra.mxu0 0.0
      %1095 = vmatpush.xpose.msra.mxu0 0.0
      %1096 = vmatpush.xpose.msra.mxu0 0.0
      %1097 = vmatpush.xpose.msra.mxu0 0.0
      %1098 = vmatpush.xpose.msra.mxu0 0.0
      %1099 = vmatpush.xpose.msra.mxu0 0.0
      %1100 = vmatpush.xpose.msra.mxu0 0.0
      %1101 = vmatpush.xpose.msra.mxu0 0.0
      %1102 = vmatpush.xpose.msra.mxu0 0.0
      %1103 = vmatpush.xpose.msra.mxu0 0.0
      %1104 = vmatpush.xpose.msra.mxu0 0.0
      %1105 = vmatpush.xpose.msra.mxu0 0.0
      %1106 = vmatpush.xpose.msra.mxu0 0.0
      %1107 = vmatpush.xpose.msra.mxu0 %v1090
      %1108 = vmatmul.f32.gmra.mxu0 %v1088
      %v1109 = vpop.f32.mrf.mxu0
      %v1110 = vadd.f32 0.0, %v1109
      %1111 = vdwg.mxu0
      %1112 = vrot.lane.b32.xlu0 %v819, 112
      %v1113 = vpop.permute.xlu0 %1112
      %1114 = vrot.lane.b32.xlu0 %v819, 80
      %v1115 = vpop.permute.xlu0 %1114
      %v1116 = vsel %vm824, %v1113, 0
      %v1118 = vsel %vm824, %v1115, 0
      %1120 = vmatpush.xpose.msra.mxu0 0.0
      %1121 = vmatpush.xpose.msra.mxu0 0.0
      %1122 = vmatpush.xpose.msra.mxu0 0.0
      %1123 = vmatpush.xpose.msra.mxu0 0.0
      %1124 = vmatpush.xpose.msra.mxu0 0.0
      %1125 = vmatpush.xpose.msra.mxu0 0.0
      %1126 = vmatpush.xpose.msra.mxu0 0.0
      %1127 = vmatpush.xpose.msra.mxu0 0.0
      %1128 = vmatpush.xpose.msra.mxu0 0.0
      %1129 = vmatpush.xpose.msra.mxu0 0.0
      %1130 = vmatpush.xpose.msra.mxu0 0.0
      %1131 = vmatpush.xpose.msra.mxu0 0.0
      %1132 = vmatpush.xpose.msra.mxu0 0.0
      %1133 = vmatpush.xpose.msra.mxu0 0.0
      %1134 = vmatpush.xpose.msra.mxu0 0.0
      %1135 = vmatpush.xpose.msra.mxu0 %v1118
      %1136 = vmatmul.f32.gmra.mxu0 %v1116
      %v1137 = vpop.f32.mrf.mxu0
      %v1138 = vadd.f32 0.0, %v1137
      %1139 = vdwg.mxu0
      %v1140 = vmul.f32 %v1110, 0.35355338
      %v1141 = vmul.f32 %v1138, 0.35355338
      %v1142 = vsel %vm824, %v1140, -inf
      %1143 = vmax.xlane.f32.xlu0 %v1142
      %v1144 = vpop.xlane.xlu0 %1143
      %v1145 = vsel %vm824, %v1141, -inf
      %1146 = vmax.xlane.f32.xlu0 %v1145
      %v1147 = vpop.xlane.xlu0 %1146
      %v1148 = vsub.f32 %v1140, %v1144
      %v1149 = vsub.f32 %v1141, %v1147
      %v1150 = vmul.f32 %v1148, 1.442695
      %v1151 = vpow.pop %v1150
      %v1152 = vmul.f32 %v1149, 1.442695
      %v1153 = vpow.pop %v1152
      %v1154 = vsel %vm824, %v1151, 0.0
      %1155 = vadd.xlane.f32.xlu0 %v1154
      %v1156 = vpop.xlane.xlu0 %1155
      %v1157 = vsel %vm824, %v1153, 0.0
      %1158 = vadd.xlane.f32.xlu0 %v1157
      %v1159 = vpop.xlane.xlu0 %1158
      %v1160 = vrcp.pop %v1156
      %v1161 = vrcp.pop %v1159
      %v1162 = vmul.f32 %v1151, %v1160
      %v1163 = vmul.f32 %v1153, %v1161
      %1164 = vrot.lane.b32.xlu0 %v816, 48
      %v1165 = vpop.permute.xlu0 %1164
      %v1168 = vsel %vm824, %v1162, 0
      %1170 = vmatpush.msra.mxu0 0.0
      %1171 = vmatpush.msra.mxu0 0.0
      %1172 = vmatpush.msra.mxu0 0.0
      %1173 = vmatpush.msra.mxu0 0.0
      %1174 = vmatpush.msra.mxu0 0.0
      %1175 = vmatpush.msra.mxu0 0.0
      %1176 = vmatpush.msra.mxu0 0.0
      %1177 = vmatpush.msra.mxu0 0.0
      %1178 = vmatpush.msra.mxu0 0.0
      %1179 = vmatpush.msra.mxu0 0.0
      %1180 = vmatpush.msra.mxu0 0.0
      %1181 = vmatpush.msra.mxu0 0.0
      %1182 = vmatpush.msra.mxu0 0.0
      %1183 = vmatpush.msra.mxu0 0.0
      %1184 = vmatpush.msra.mxu0 0.0
      %1185 = vmatpush.msra.mxu0 %v1165
      %1186 = vmatmul.f32.gmra.mxu0 %v1168
      %v1187 = vpop.f32.mrf.mxu0
      %v1188 = vadd.f32 0.0, %v1187
      %1189 = vdwg.mxu0
      %1190 = vrot.lane.b32.xlu0 %v819, 48
      %v1191 = vpop.permute.xlu0 %1190
      %v1194 = vsel %vm824, %v1163, 0
      %1196 = vmatpush.msra.mxu0 0.0
      %1197 = vmatpush.msra.mxu0 0.0
      %1198 = vmatpush.msra.mxu0 0.0
      %1199 = vmatpush.msra.mxu0 0.0
      %1200 = vmatpush.msra.mxu0 0.0
      %1201 = vmatpush.msra.mxu0 0.0
      %1202 = vmatpush.msra.mxu0 0.0
      %1203 = vmatpush.msra.mxu0 0.0
      %1204 = vmatpush.msra.mxu0 0.0
      %1205 = vmatpush.msra.mxu0 0.0
      %1206 = vmatpush.msra.mxu0 0.0
      %1207 = vmatpush.msra.mxu0 0.0
      %1208 = vmatpush.msra.mxu0 0.0
      %1209 = vmatpush.msra.mxu0 0.0
      %1210 = vmatpush.msra.mxu0 0.0
      %1211 = vmatpush.msra.mxu0 %v1191
      %1212 = vmatmul.f32.gmra.mxu0 %v1194
      %v1213 = vpop.f32.mrf.mxu0
      %v1214 = vadd.f32 0.0, %v1213
      %1215 = vdwg.mxu0
      %1216 = vrot.lane.b32.xlu0 %v816, 104
      %v1217 = vpop.permute.xlu0 %1216
      %1218 = vrot.lane.b32.xlu0 %v816, 72
      %v1219 = vpop.permute.xlu0 %1218
      %v1220 = vsel %vm824, %v1217, 0
      %v1222 = vsel %vm824, %v1219, 0
      %1224 = vmatpush.xpose.msra.mxu0 0.0
      %1225 = vmatpush.xpose.msra.mxu0 0.0
      %1226 = vmatpush.xpose.msra.mxu0 0.0
      %1227 = vmatpush.xpose.msra.mxu0 0.0
      %1228 = vmatpush.xpose.msra.mxu0 0.0
      %1229 = vmatpush.xpose.msra.mxu0 0.0
      %1230 = vmatpush.xpose.msra.mxu0 0.0
      %1231 = vmatpush.xpose.msra.mxu0 0.0
      %1232 = vmatpush.xpose.msra.mxu0 0.0
      %1233 = vmatpush.xpose.msra.mxu0 0.0
      %1234 = vmatpush.xpose.msra.mxu0 0.0
      %1235 = vmatpush.xpose.msra.mxu0 0.0
      %1236 = vmatpush.xpose.msra.mxu0 0.0
      %1237 = vmatpush.xpose.msra.mxu0 0.0
      %1238 = vmatpush.xpose.msra.mxu0 0.0
      %1239 = vmatpush.xpose.msra.mxu0 %v1222
      %1240 = vmatmul.f32.gmra.mxu0 %v1220
      %v1241 = vpop.f32.mrf.mxu0
      %v1242 = vadd.f32 0.0, %v1241
      %1243 = vdwg.mxu0
      %1244 = vrot.lane.b32.xlu0 %v819, 104
      %v1245 = vpop.permute.xlu0 %1244
      %1246 = vrot.lane.b32.xlu0 %v819, 72
      %v1247 = vpop.permute.xlu0 %1246
      %v1248 = vsel %vm824, %v1245, 0
      %v1250 = vsel %vm824, %v1247, 0
      %1252 = vmatpush.xpose.msra.mxu0 0.0
      %1253 = vmatpush.xpose.msra.mxu0 0.0
      %1254 = vmatpush.xpose.msra.mxu0 0.0
      %1255 = vmatpush.xpose.msra.mxu0 0.0
      %1256 = vmatpush.xpose.msra.mxu0 0.0
      %1257 = vmatpush.xpose.msra.mxu0 0.0
      %1258 = vmatpush.xpose.msra.mxu0 0.0
      %1259 = vmatpush.xpose.msra.mxu0 0.0
      %1260 = vmatpush.xpose.msra.mxu0 0.0
      %1261 = vmatpush.xpose.msra.mxu0 0.0
      %1262 = vmatpush.xpose.msra.mxu0 0.0
      %1263 = vmatpush.xpose.msra.mxu0 0.0
      %1264 = vmatpush.xpose.msra.mxu0 0.0
      %1265 = vmatpush.xpose.msra.mxu0 0.0
      %1266 = vmatpush.xpose.msra.mxu0 0.0
      %1267 = vmatpush.xpose.msra.mxu0 %v1250
      %1268 = vmatmul.f32.gmra.mxu0 %v1248
      %v1269 = vpop.f32.mrf.mxu0
      %v1270 = vadd.f32 0.0, %v1269
      %1271 = vdwg.mxu0
      %v1272 = vmul.f32 %v1242, 0.35355338
      %v1273 = vmul.f32 %v1270, 0.35355338
      %v1274 = vsel %vm824, %v1272, -inf
      %1275 = vmax.xlane.f32.xlu0 %v1274
      %v1276 = vpop.xlane.xlu0 %1275
      %v1277 = vsel %vm824, %v1273, -inf
      %1278 = vmax.xlane.f32.xlu0 %v1277
      %v1279 = vpop.xlane.xlu0 %1278
      %v1280 = vsub.f32 %v1272, %v1276
      %v1281 = vsub.f32 %v1273, %v1279
      %v1282 = vmul.f32 %v1280, 1.442695
      %v1283 = vpow.pop %v1282
      %v1284 = vmul.f32 %v1281, 1.442695
      %v1285 = vpow.pop %v1284
      %v1286 = vsel %vm824, %v1283, 0.0
      %1287 = vadd.xlane.f32.xlu0 %v1286
      %v1288 = vpop.xlane.xlu0 %1287
      %v1289 = vsel %vm824, %v1285, 0.0
      %1290 = vadd.xlane.f32.xlu0 %v1289
      %v1291 = vpop.xlane.xlu0 %1290
      %v1292 = vrcp.pop %v1288
      %v1293 = vrcp.pop %v1291
      %v1294 = vmul.f32 %v1283, %v1292
      %v1295 = vmul.f32 %v1285, %v1293
      %1296 = vrot.lane.b32.xlu0 %v816, 40
      %v1297 = vpop.permute.xlu0 %1296
      %v1300 = vsel %vm824, %v1294, 0
      %1302 = vmatpush.msra.mxu0 0.0
      %1303 = vmatpush.msra.mxu0 0.0
      %1304 = vmatpush.msra.mxu0 0.0
      %1305 = vmatpush.msra.mxu0 0.0
      %1306 = vmatpush.msra.mxu0 0.0
      %1307 = vmatpush.msra.mxu0 0.0
      %1308 = vmatpush.msra.mxu0 0.0
      %1309 = vmatpush.msra.mxu0 0.0
      %1310 = vmatpush.msra.mxu0 0.0
      %1311 = vmatpush.msra.mxu0 0.0
      %1312 = vmatpush.msra.mxu0 0.0
      %1313 = vmatpush.msra.mxu0 0.0
      %1314 = vmatpush.msra.mxu0 0.0
      %1315 = vmatpush.msra.mxu0 0.0
      %1316 = vmatpush.msra.mxu0 0.0
      %1317 = vmatpush.msra.mxu0 %v1297
      %1318 = vmatmul.f32.gmra.mxu0 %v1300
      %v1319 = vpop.f32.mrf.mxu0
      %v1320 = vadd.f32 0.0, %v1319
      %1321 = vdwg.mxu0
      %1322 = vrot.lane.b32.xlu0 %v819, 40
      %v1323 = vpop.permute.xlu0 %1322
      %v1326 = vsel %vm824, %v1295, 0
      %1328 = vmatpush.msra.mxu0 0.0
      %1329 = vmatpush.msra.mxu0 0.0
      %1330 = vmatpush.msra.mxu0 0.0
      %1331 = vmatpush.msra.mxu0 0.0
      %1332 = vmatpush.msra.mxu0 0.0
      %1333 = vmatpush.msra.mxu0 0.0
      %1334 = vmatpush.msra.mxu0 0.0
      %1335 = vmatpush.msra.mxu0 0.0
      %1336 = vmatpush.msra.mxu0 0.0
      %1337 = vmatpush.msra.mxu0 0.0
      %1338 = vmatpush.msra.mxu0 0.0
      %1339 = vmatpush.msra.mxu0 0.0
      %1340 = vmatpush.msra.mxu0 0.0
      %1341 = vmatpush.msra.mxu0 0.0
      %1342 = vmatpush.msra.mxu0 0.0
      %1343 = vmatpush.msra.mxu0 %v1323
      %1344 = vmatmul.f32.gmra.mxu0 %v1326
      %v1345 = vpop.f32.mrf.mxu0
      %v1346 = vadd.f32 0.0, %v1345
      %1347 = vdwg.mxu0
      %1350 = vrot.lane.b32.xlu0 %v1056, 8
      %v1351 = vpop.permute.xlu0 %1350
      %1352 = vrot.lane.b32.xlu0 %v1082, 8
      %v1353 = vpop.permute.xlu0 %1352
      %1358 = vrot.lane.b32.xlu0 %v1188, 16
      %v1359 = vpop.permute.xlu0 %1358
      %1360 = vrot.lane.b32.xlu0 %v1214, 16
      %v1361 = vpop.permute.xlu0 %1360
      %1366 = vrot.lane.b32.xlu0 %v1320, 24
      %v1367 = vpop.permute.xlu0 %1366
      %1368 = vrot.lane.b32.xlu0 %v1346, 24
      %v1369 = vpop.permute.xlu0 %1368
      %v1372 = vsel %vm824, %v924, %v1351
      %v1373 = vsel %vm824, %v950, %v1353
      %v1374 = vsel %vm753, %v1372, %v1359
      %v1375 = vsel %vm753, %v1373, %v1361
      %vm1376 = vcmask 195584
      %v1377 = vsel %vm1376, %v1374, %v1367
      %v1378 = vsel %vm1376, %v1375, %v1369
      %v1379 = vld [vmem:[%s701] sm:$0xff]
      %v1380 = vld [vmem:[%s701 + $0x8] sm:$0xff]
      %v1381 = vld [vmem:[%s701 + $0x10] sm:$0xff]
      %v1382 = vld [vmem:[%s701 + $0x18] sm:$0xff]
      %v1383 = vld [vmem:[%s705] sm:$0x1]
      %v1385 = vperm.slane %v1383, 0
      %v1388 = vsel %vm791, %v1377, 0
      %v1391 = vsel %vm791, %v1378, 0
      %1393 = vmatpush.msra.mxu0 0.0
      %1394 = vmatpush.msra.mxu0 0.0
      %1395 = vmatpush.msra.mxu0 0.0
      %1396 = vmatpush.msra.mxu0 0.0
      %1397 = vmatpush.msra.mxu0 0.0
      %1398 = vmatpush.msra.mxu0 0.0
      %1399 = vmatpush.msra.mxu0 0.0
      %1400 = vmatpush.msra.mxu0 0.0
      %1401 = vmatpush.msra.mxu0 0.0
      %1402 = vmatpush.msra.mxu0 0.0
      %1403 = vmatpush.msra.mxu0 0.0
      %1404 = vmatpush.msra.mxu0 0.0
      %1405 = vmatpush.msra.mxu0 %v1382
      %1406 = vmatpush.msra.mxu0 %v1381
      %1407 = vmatpush.msra.mxu0 %v1380
      %1408 = vmatpush.msra.mxu0 %v1379
      %1409 = vmatmul.f32.gmra.mxu0 %v1388
      %v1410 = vpop.f32.mrf.mxu0
      %v1411 = vadd.f32 %v1385, %v1410
      %1412 = vmatmul.f32.gmra.mxu0 %v1391
      %v1413 = vpop.f32.mrf.mxu0
      %v1414 = vadd.f32 %v1385, %v1413
      %1415 = vdwg.mxu0
      %v1416 = vld [vmem:[%s709] sm:$0x1]
      %v1417 = vld [vmem:[%s713] sm:$0x1]
      %v1418 = vadd.f32 %v778, %v1411
      %v1419 = vadd.f32 %v781, %v1414
      %v1420 = vsel %vm791, %v1418, 0.0
      %1421 = vadd.xlane.f32.xlu0 %v1420
      %v1422 = vpop.xlane.xlu0 %1421
      %v1423 = vsel %vm791, %v1419, 0.0
      %1424 = vadd.xlane.f32.xlu0 %v1423
      %v1425 = vpop.xlane.xlu0 %1424
      %v1426 = vrcp.pop 32.0
      %v1427 = vmul.f32 32.0, %v1426
      %v1428 = vsub.f32 1.0, %v1427
      %v1429 = vmul.f32 %v1426, %v1428
      %v1430 = vadd.f32 %v1426, %v1429
      %vm1431 = vweird.f32 %v1426
      %v1432 = vsel %vm1431, %v1426, %v1430
      %v1433 = vmul.f32 %v1422, %v1432
      %v1434 = vmul.f32 %v1425, %v1432
      %v1435 = vsub.f32 %v1418, %v1433
      %v1436 = vsub.f32 %v1419, %v1434
      %v1437 = vmul.f32 %v1435, %v1435
      %v1438 = vmul.f32 %v1436, %v1436
      %v1439 = vsel %vm791, %v1437, 0.0
      %1440 = vadd.xlane.f32.xlu0 %v1439
      %v1441 = vpop.xlane.xlu0 %1440
      %v1442 = vsel %vm791, %v1438, 0.0
      %1443 = vadd.xlane.f32.xlu0 %v1442
      %v1444 = vpop.xlane.xlu0 %1443
      %v1445 = vmul.f32 %v1441, %v1432
      %v1446 = vmul.f32 %v1444, %v1432
      %v1447 = vadd.f32 %v1445, 1e-05
      %v1448 = vadd.f32 %v1446, 1e-05
      %v1449 = vrsqrt.pop %v1447
      %v1450 = vmul.f32 %v1449, %v1447
      %v1451 = vmul.f32 %v1450, %v1449
      %v1452 = vmul.f32 0.5, %v1451
      %v1453 = vsub.f32 1.5, %v1452
      %v1454 = vmul.f32 %v1449, %v1453
      %vm1455 = vweird.f32 %v1447
      %vm1456 = vweird.f32 %v1449
      %vm1457 = vmor %vm1455, %vm1456
      %v1458 = vsel %vm1457, %v1449, %v1454
      %v1459 = vrsqrt.pop %v1448
      %v1460 = vmul.f32 %v1459, %v1448
      %v1461 = vmul.f32 %v1460, %v1459
      %v1462 = vmul.f32 0.5, %v1461
      %v1463 = vsub.f32 1.5, %v1462
      %v1464 = vmul.f32 %v1459, %v1463
      %vm1465 = vweird.f32 %v1448
      %vm1466 = vweird.f32 %v1459
      %vm1467 = vmor %vm1465, %vm1466
      %v1468 = vsel %vm1467, %v1459, %v1464
      %v1469 = vmul.f32 %v1435, %v1458
      %v1470 = vmul.f32 %v1436, %v1468
      %v1472 = vperm.slane %v1416, 0
      %v1474 = vmul.f32 %v1469, %v1472
      %v1475 = vmul.f32 %v1470, %v1472
      %v1477 = vperm.slane %v1417, 0
      %v1479 = vadd.f32 %v1474, %v1477
      %v1480 = vadd.f32 %v1475, %v1477
      %v1481 = vld [vmem:[%s718] sm:$0xff]
      %v1482 = vld [vmem:[%s718 + $0x8] sm:$0xff]
      %v1483 = vld [vmem:[%s718 + $0x10] sm:$0xff]
      %v1484 = vld [vmem:[%s718 + $0x18] sm:$0xff]
      %v1485 = vld [vmem:[%s718 + $0x20] sm:$0xff]
      %v1486 = vld [vmem:[%s718 + $0x28] sm:$0xff]
      %v1487 = vld [vmem:[%s718 + $0x30] sm:$0xff]
      %v1488 = vld [vmem:[%s718 + $0x38] sm:$0xff]
      %v1489 = vld [vmem:[%s718 + $0x40] sm:$0xff]
      %v1490 = vld [vmem:[%s718 + $0x48] sm:$0xff]
      %v1491 = vld [vmem:[%s718 + $0x50] sm:$0xff]
      %v1492 = vld [vmem:[%s718 + $0x58] sm:$0xff]
      %v1493 = vld [vmem:[%s718 + $0x60] sm:$0xff]
      %v1494 = vld [vmem:[%s718 + $0x68] sm:$0xff]
      %v1495 = vld [vmem:[%s718 + $0x70] sm:$0xff]
      %v1496 = vld [vmem:[%s718 + $0x78] sm:$0xff]
      %v1497 = vld [vmem:[%s718 + $0x80] sm:$0xff]
      %v1498 = vld [vmem:[%s718 + $0x88] sm:$0xff]
      %v1499 = vld [vmem:[%s718 + $0x90] sm:$0xff]
      %v1500 = vld [vmem:[%s718 + $0x98] sm:$0xff]
      %v1501 = vld [vmem:[%s718 + $0xa0] sm:$0xff]
      %v1502 = vld [vmem:[%s718 + $0xa8] sm:$0xff]
      %v1503 = vld [vmem:[%s718 + $0xb0] sm:$0xff]
      %v1504 = vld [vmem:[%s718 + $0xb8] sm:$0xff]
      %v1505 = vld [vmem:[%s718 + $0xc0] sm:$0xff]
      %v1506 = vld [vmem:[%s718 + $0xc8] sm:$0xff]
      %v1507 = vld [vmem:[%s718 + $0xd0] sm:$0xff]
      %v1508 = vld [vmem:[%s718 + $0xd8] sm:$0xff]
      %v1509 = vld [vmem:[%s718 + $0xe0] sm:$0xff]
      %v1510 = vld [vmem:[%s718 + $0xe8] sm:$0xff]
      %v1511 = vld [vmem:[%s718 + $0xf0] sm:$0xff]
      %v1512 = vld [vmem:[%s718 + $0xf8] sm:$0xff]
      %v1513 = vld [vmem:[%s718 + $0x100] sm:$0xff]
      %v1514 = vld [vmem:[%s718 + $0x108] sm:$0xff]
      %v1515 = vld [vmem:[%s718 + $0x110] sm:$0xff]
      %v1516 = vld [vmem:[%s718 + $0x118] sm:$0xff]
      %v1517 = vld [vmem:[%s718 + $0x120] sm:$0xff]
      %v1518 = vld [vmem:[%s718 + $0x128] sm:$0xff]
      %v1519 = vld [vmem:[%s718 + $0x130] sm:$0xff]
      %v1520 = vld [vmem:[%s718 + $0x138] sm:$0xff]
      %v1521 = vld [vmem:[%s718 + $0x140] sm:$0xff]
      %v1522 = vld [vmem:[%s718 + $0x148] sm:$0xff]
      %v1523 = vld [vmem:[%s718 + $0x150] sm:$0xff]
      %v1524 = vld [vmem:[%s718 + $0x158] sm:$0xff]
      %v1525 = vld [vmem:[%s718 + $0x160] sm:$0xff]
      %v1526 = vld [vmem:[%s718 + $0x168] sm:$0xff]
      %v1527 = vld [vmem:[%s718 + $0x170] sm:$0xff]
      %v1528 = vld [vmem:[%s718 + $0x178] sm:$0xff]
      %v1529 = vld [vmem:[%s718 + $0x180] sm:$0xff]
      %v1530 = vld [vmem:[%s718 + $0x188] sm:$0xff]
      %v1531 = vld [vmem:[%s718 + $0x190] sm:$0xff]
      %v1532 = vld [vmem:[%s718 + $0x198] sm:$0xff]
      %v1533 = vld [vmem:[%s718 + $0x1a0] sm:$0xff]
      %v1534 = vld [vmem:[%s718 + $0x1a8] sm:$0xff]
      %v1535 = vld [vmem:[%s718 + $0x1b0] sm:$0xff]
      %v1536 = vld [vmem:[%s718 + $0x1b8] sm:$0xff]
      %v1537 = vld [vmem:[%s718 + $0x1c0] sm:$0xff]
      %v1538 = vld [vmem:[%s718 + $0x1c8] sm:$0xff]
      %v1539 = vld [vmem:[%s718 + $0x1d0] sm:$0xff]
      %v1540 = vld [vmem:[%s718 + $0x1d8] sm:$0xff]
      %v1541 = vld [vmem:[%s718 + $0x1e0] sm:$0xff]
      %v1542 = vld [vmem:[%s718 + $0x1e8] sm:$0xff]
      %v1543 = vld [vmem:[%s718 + $0x1f0] sm:$0xff]
      %v1544 = vld [vmem:[%s718 + $0x1f8] sm:$0xff]
      %v1545 = vld [vmem:[%s722] sm:$0xff]
      %v1546 = vld [vmem:[%s722 + $0x8] sm:$0xff]
      %v1549 = vperm.slane %v1545, 0
      %v1550 = vperm.slane %v1545, 1
      %v1551 = vperm.slane %v1545, 2
      %v1552 = vperm.slane %v1545, 3
      %v1553 = vperm.slane %v1545, 4
      %v1554 = vperm.slane %v1545, 5
      %v1555 = vperm.slane %v1545, 6
      %v1556 = vperm.slane %v1545, 7
      %v1557 = vperm.slane %v1546, 0
      %v1558 = vperm.slane %v1546, 1
      %v1559 = vperm.slane %v1546, 2
      %v1560 = vperm.slane %v1546, 3
      %v1561 = vperm.slane %v1546, 4
      %v1562 = vperm.slane %v1546, 5
      %v1563 = vperm.slane %v1546, 6
      %v1564 = vperm.slane %v1546, 7
      %v1582 = vsel %vm791, %v1479, 0
      %v1585 = vsel %vm791, %v1480, 0
      %1587 = vmatpush.msra.mxu0 0.0
      %1588 = vmatpush.msra.mxu0 0.0
      %1589 = vmatpush.msra.mxu0 0.0
      %1590 = vmatpush.msra.mxu0 0.0
      %1591 = vmatpush.msra.mxu0 0.0
      %1592 = vmatpush.msra.mxu0 0.0
      %1593 = vmatpush.msra.mxu0 0.0
      %1594 = vmatpush.msra.mxu0 0.0
      %1595 = vmatpush.msra.mxu0 0.0
      %1596 = vmatpush.msra.mxu0 0.0
      %1597 = vmatpush.msra.mxu0 0.0
      %1598 = vmatpush.msra.mxu0 0.0
      %1599 = vmatpush.msra.mxu0 %v1529
      %1600 = vmatpush.msra.mxu0 %v1513
      %1601 = vmatpush.msra.mxu0 %v1497
      %1602 = vmatpush.msra.mxu0 %v1481
      %1603 = vmatmul.f32.gmra.mxu0 %v1582
      %v1604 = vpop.f32.mrf.mxu0
      %v1605 = vadd.f32 %v1549, %v1604
      %1606 = vmatmul.f32.gmra.mxu0 %v1585
      %v1607 = vpop.f32.mrf.mxu0
      %v1608 = vadd.f32 %v1549, %v1607
      %1609 = vdwg.mxu0
      %1610 = vmatpush.msra.mxu0 0.0
      %1611 = vmatpush.msra.mxu0 0.0
      %1612 = vmatpush.msra.mxu0 0.0
      %1613 = vmatpush.msra.mxu0 0.0
      %1614 = vmatpush.msra.mxu0 0.0
      %1615 = vmatpush.msra.mxu0 0.0
      %1616 = vmatpush.msra.mxu0 0.0
      %1617 = vmatpush.msra.mxu0 0.0
      %1618 = vmatpush.msra.mxu0 0.0
      %1619 = vmatpush.msra.mxu0 0.0
      %1620 = vmatpush.msra.mxu0 0.0
      %1621 = vmatpush.msra.mxu0 0.0
      %1622 = vmatpush.msra.mxu0 %v1530
      %1623 = vmatpush.msra.mxu0 %v1514
      %1624 = vmatpush.msra.mxu0 %v1498
      %1625 = vmatpush.msra.mxu0 %v1482
      %1626 = vmatmul.f32.gmra.mxu0 %v1582
      %v1627 = vpop.f32.mrf.mxu0
      %v1628 = vadd.f32 %v1550, %v1627
      %1629 = vmatmul.f32.gmra.mxu0 %v1585
      %v1630 = vpop.f32.mrf.mxu0
      %v1631 = vadd.f32 %v1550, %v1630
      %1632 = vdwg.mxu0
      %1633 = vmatpush.msra.mxu0 0.0
      %1634 = vmatpush.msra.mxu0 0.0
      %1635 = vmatpush.msra.mxu0 0.0
      %1636 = vmatpush.msra.mxu0 0.0
      %1637 = vmatpush.msra.mxu0 0.0
      %1638 = vmatpush.msra.mxu0 0.0
      %1639 = vmatpush.msra.mxu0 0.0
      %1640 = vmatpush.msra.mxu0 0.0
      %1641 = vmatpush.msra.mxu0 0.0
      %1642 = vmatpush.msra.mxu0 0.0
      %1643 = vmatpush.msra.mxu0 0.0
      %1644 = vmatpush.msra.mxu0 0.0
      %1645 = vmatpush.msra.mxu0 %v1531
      %1646 = vmatpush.msra.mxu0 %v1515
      %1647 = vmatpush.msra.mxu0 %v1499
      %1648 = vmatpush.msra.mxu0 %v1483
      %1649 = vmatmul.f32.gmra.mxu0 %v1582
      %v1650 = vpop.f32.mrf.mxu0
      %v1651 = vadd.f32 %v1551, %v1650
      %1652 = vmatmul.f32.gmra.mxu0 %v1585
      %v1653 = vpop.f32.mrf.mxu0
      %v1654 = vadd.f32 %v1551, %v1653
      %1655 = vdwg.mxu0
      %1656 = vmatpush.msra.mxu0 0.0
      %1657 = vmatpush.msra.mxu0 0.0
      %1658 = vmatpush.msra.mxu0 0.0
      %1659 = vmatpush.msra.mxu0 0.0
      %1660 = vmatpush.msra.mxu0 0.0
      %1661 = vmatpush.msra.mxu0 0.0
      %1662 = vmatpush.msra.mxu0 0.0
      %1663 = vmatpush.msra.mxu0 0.0
      %1664 = vmatpush.msra.mxu0 0.0
      %1665 = vmatpush.msra.mxu0 0.0
      %1666 = vmatpush.msra.mxu0 0.0
      %1667 = vmatpush.msra.mxu0 0.0
      %1668 = vmatpush.msra.mxu0 %v1532
      %1669 = vmatpush.msra.mxu0 %v1516
      %1670 = vmatpush.msra.mxu0 %v1500
      %1671 = vmatpush.msra.mxu0 %v1484
      %1672 = vmatmul.f32.gmra.mxu0 %v1582
      %v1673 = vpop.f32.mrf.mxu0
      %v1674 = vadd.f32 %v1552, %v1673
      %1675 = vmatmul.f32.gmra.mxu0 %v1585
      %v1676 = vpop.f32.mrf.mxu0
      %v1677 = vadd.f32 %v1552, %v1676
      %1678 = vdwg.mxu0
      %1679 = vmatpush.msra.mxu0 0.0
      %1680 = vmatpush.msra.mxu0 0.0
      %1681 = vmatpush.msra.mxu0 0.0
      %1682 = vmatpush.msra.mxu0 0.0
      %1683 = vmatpush.msra.mxu0 0.0
      %1684 = vmatpush.msra.mxu0 0.0
      %1685 = vmatpush.msra.mxu0 0.0
      %1686 = vmatpush.msra.mxu0 0.0
      %1687 = vmatpush.msra.mxu0 0.0
      %1688 = vmatpush.msra.mxu0 0.0
      %1689 = vmatpush.msra.mxu0 0.0
      %1690 = vmatpush.msra.mxu0 0.0
      %1691 = vmatpush.msra.mxu0 %v1533
      %1692 = vmatpush.msra.mxu0 %v1517
      %1693 = vmatpush.msra.mxu0 %v1501
      %1694 = vmatpush.msra.mxu0 %v1485
      %1695 = vmatmul.f32.gmra.mxu0 %v1582
      %v1696 = vpop.f32.mrf.mxu0
      %v1697 = vadd.f32 %v1553, %v1696
      %1698 = vmatmul.f32.gmra.mxu0 %v1585
      %v1699 = vpop.f32.mrf.mxu0
      %v1700 = vadd.f32 %v1553, %v1699
      %1701 = vdwg.mxu0
      %1702 = vmatpush.msra.mxu0 0.0
      %1703 = vmatpush.msra.mxu0 0.0
      %1704 = vmatpush.msra.mxu0 0.0
      %1705 = vmatpush.msra.mxu0 0.0
      %1706 = vmatpush.msra.mxu0 0.0
      %1707 = vmatpush.msra.mxu0 0.0
      %1708 = vmatpush.msra.mxu0 0.0
      %1709 = vmatpush.msra.mxu0 0.0
      %1710 = vmatpush.msra.mxu0 0.0
      %1711 = vmatpush.msra.mxu0 0.0
      %1712 = vmatpush.msra.mxu0 0.0
      %1713 = vmatpush.msra.mxu0 0.0
      %1714 = vmatpush.msra.mxu0 %v1534
      %1715 = vmatpush.msra.mxu0 %v1518
      %1716 = vmatpush.msra.mxu0 %v1502
      %1717 = vmatpush.msra.mxu0 %v1486
      %1718 = vmatmul.f32.gmra.mxu0 %v1582
      %v1719 = vpop.f32.mrf.mxu0
      %v1720 = vadd.f32 %v1554, %v1719
      %1721 = vmatmul.f32.gmra.mxu0 %v1585
      %v1722 = vpop.f32.mrf.mxu0
      %v1723 = vadd.f32 %v1554, %v1722
      %1724 = vdwg.mxu0
      %1725 = vmatpush.msra.mxu0 0.0
      %1726 = vmatpush.msra.mxu0 0.0
      %1727 = vmatpush.msra.mxu0 0.0
      %1728 = vmatpush.msra.mxu0 0.0
      %1729 = vmatpush.msra.mxu0 0.0
      %1730 = vmatpush.msra.mxu0 0.0
      %1731 = vmatpush.msra.mxu0 0.0
      %1732 = vmatpush.msra.mxu0 0.0
      %1733 = vmatpush.msra.mxu0 0.0
      %1734 = vmatpush.msra.mxu0 0.0
      %1735 = vmatpush.msra.mxu0 0.0
      %1736 = vmatpush.msra.mxu0 0.0
      %1737 = vmatpush.msra.mxu0 %v1535
      %1738 = vmatpush.msra.mxu0 %v1519
      %1739 = vmatpush.msra.mxu0 %v1503
      %1740 = vmatpush.msra.mxu0 %v1487
      %1741 = vmatmul.f32.gmra.mxu0 %v1582
      %v1742 = vpop.f32.mrf.mxu0
      %v1743 = vadd.f32 %v1555, %v1742
      %1744 = vmatmul.f32.gmra.mxu0 %v1585
      %v1745 = vpop.f32.mrf.mxu0
      %v1746 = vadd.f32 %v1555, %v1745
      %1747 = vdwg.mxu0
      %1748 = vmatpush.msra.mxu0 0.0
      %1749 = vmatpush.msra.mxu0 0.0
      %1750 = vmatpush.msra.mxu0 0.0
      %1751 = vmatpush.msra.mxu0 0.0
      %1752 = vmatpush.msra.mxu0 0.0
      %1753 = vmatpush.msra.mxu0 0.0
      %1754 = vmatpush.msra.mxu0 0.0
      %1755 = vmatpush.msra.mxu0 0.0
      %1756 = vmatpush.msra.mxu0 0.0
      %1757 = vmatpush.msra.mxu0 0.0
      %1758 = vmatpush.msra.mxu0 0.0
      %1759 = vmatpush.msra.mxu0 0.0
      %1760 = vmatpush.msra.mxu0 %v1536
      %1761 = vmatpush.msra.mxu0 %v1520
      %1762 = vmatpush.msra.mxu0 %v1504
      %1763 = vmatpush.msra.mxu0 %v1488
      %1764 = vmatmul.f32.gmra.mxu0 %v1582
      %v1765 = vpop.f32.mrf.mxu0
      %v1766 = vadd.f32 %v1556, %v1765
      %1767 = vmatmul.f32.gmra.mxu0 %v1585
      %v1768 = vpop.f32.mrf.mxu0
      %v1769 = vadd.f32 %v1556, %v1768
      %1770 = vdwg.mxu0
      %1771 = vmatpush.msra.mxu0 0.0
      %1772 = vmatpush.msra.mxu0 0.0
      %1773 = vmatpush.msra.mxu0 0.0
      %1774 = vmatpush.msra.mxu0 0.0
      %1775 = vmatpush.msra.mxu0 0.0
      %1776 = vmatpush.msra.mxu0 0.0
      %1777 = vmatpush.msra.mxu0 0.0
      %1778 = vmatpush.msra.mxu0 0.0
      %1779 = vmatpush.msra.mxu0 0.0
      %1780 = vmatpush.msra.mxu0 0.0
      %1781 = vmatpush.msra.mxu0 0.0
      %1782 = vmatpush.msra.mxu0 0.0
      %1783 = vmatpush.msra.mxu0 %v1537
      %1784 = vmatpush.msra.mxu0 %v1521
      %1785 = vmatpush.msra.mxu0 %v1505
      %1786 = vmatpush.msra.mxu0 %v1489
      %1787 = vmatmul.f32.gmra.mxu0 %v1582
      %v1788 = vpop.f32.mrf.mxu0
      %v1789 = vadd.f32 %v1557, %v1788
      %1790 = vmatmul.f32.gmra.mxu0 %v1585
      %v1791 = vpop.f32.mrf.mxu0
      %v1792 = vadd.f32 %v1557, %v1791
      %1793 = vdwg.mxu0
      %1794 = vmatpush.msra.mxu0 0.0
      %1795 = vmatpush.msra.mxu0 0.0
      %1796 = vmatpush.msra.mxu0 0.0
      %1797 = vmatpush.msra.mxu0 0.0
      %1798 = vmatpush.msra.mxu0 0.0
      %1799 = vmatpush.msra.mxu0 0.0
      %1800 = vmatpush.msra.mxu0 0.0
      %1801 = vmatpush.msra.mxu0 0.0
      %1802 = vmatpush.msra.mxu0 0.0
      %1803 = vmatpush.msra.mxu0 0.0
      %1804 = vmatpush.msra.mxu0 0.0
      %1805 = vmatpush.msra.mxu0 0.0
      %1806 = vmatpush.msra.mxu0 %v1538
      %1807 = vmatpush.msra.mxu0 %v1522
      %1808 = vmatpush.msra.mxu0 %v1506
      %1809 = vmatpush.msra.mxu0 %v1490
      %1810 = vmatmul.f32.gmra.mxu0 %v1582
      %v1811 = vpop.f32.mrf.mxu0
      %v1812 = vadd.f32 %v1558, %v1811
      %1813 = vmatmul.f32.gmra.mxu0 %v1585
      %v1814 = vpop.f32.mrf.mxu0
      %v1815 = vadd.f32 %v1558, %v1814
      %1816 = vdwg.mxu0
      %1817 = vmatpush.msra.mxu0 0.0
      %1818 = vmatpush.msra.mxu0 0.0
      %1819 = vmatpush.msra.mxu0 0.0
      %1820 = vmatpush.msra.mxu0 0.0
      %1821 = vmatpush.msra.mxu0 0.0
      %1822 = vmatpush.msra.mxu0 0.0
      %1823 = vmatpush.msra.mxu0 0.0
      %1824 = vmatpush.msra.mxu0 0.0
      %1825 = vmatpush.msra.mxu0 0.0
      %1826 = vmatpush.msra.mxu0 0.0
      %1827 = vmatpush.msra.mxu0 0.0
      %1828 = vmatpush.msra.mxu0 0.0
      %1829 = vmatpush.msra.mxu0 %v1539
      %1830 = vmatpush.msra.mxu0 %v1523
      %1831 = vmatpush.msra.mxu0 %v1507
      %1832 = vmatpush.msra.mxu0 %v1491
      %1833 = vmatmul.f32.gmra.mxu0 %v1582
      %v1834 = vpop.f32.mrf.mxu0
      %v1835 = vadd.f32 %v1559, %v1834
      %1836 = vmatmul.f32.gmra.mxu0 %v1585
      %v1837 = vpop.f32.mrf.mxu0
      %v1838 = vadd.f32 %v1559, %v1837
      %1839 = vdwg.mxu0
      %1840 = vmatpush.msra.mxu0 0.0
      %1841 = vmatpush.msra.mxu0 0.0
      %1842 = vmatpush.msra.mxu0 0.0
      %1843 = vmatpush.msra.mxu0 0.0
      %1844 = vmatpush.msra.mxu0 0.0
      %1845 = vmatpush.msra.mxu0 0.0
      %1846 = vmatpush.msra.mxu0 0.0
      %1847 = vmatpush.msra.mxu0 0.0
      %1848 = vmatpush.msra.mxu0 0.0
      %1849 = vmatpush.msra.mxu0 0.0
      %1850 = vmatpush.msra.mxu0 0.0
      %1851 = vmatpush.msra.mxu0 0.0
      %1852 = vmatpush.msra.mxu0 %v1540
      %1853 = vmatpush.msra.mxu0 %v1524
      %1854 = vmatpush.msra.mxu0 %v1508
      %1855 = vmatpush.msra.mxu0 %v1492
      %1856 = vmatmul.f32.gmra.mxu0 %v1582
      %v1857 = vpop.f32.mrf.mxu0
      %v1858 = vadd.f32 %v1560, %v1857
      %1859 = vmatmul.f32.gmra.mxu0 %v1585
      %v1860 = vpop.f32.mrf.mxu0
      %v1861 = vadd.f32 %v1560, %v1860
      %1862 = vdwg.mxu0
      %1863 = vmatpush.msra.mxu0 0.0
      %1864 = vmatpush.msra.mxu0 0.0
      %1865 = vmatpush.msra.mxu0 0.0
      %1866 = vmatpush.msra.mxu0 0.0
      %1867 = vmatpush.msra.mxu0 0.0
      %1868 = vmatpush.msra.mxu0 0.0
      %1869 = vmatpush.msra.mxu0 0.0
      %1870 = vmatpush.msra.mxu0 0.0
      %1871 = vmatpush.msra.mxu0 0.0
      %1872 = vmatpush.msra.mxu0 0.0
      %1873 = vmatpush.msra.mxu0 0.0
      %1874 = vmatpush.msra.mxu0 0.0
      %1875 = vmatpush.msra.mxu0 %v1541
      %1876 = vmatpush.msra.mxu0 %v1525
      %1877 = vmatpush.msra.mxu0 %v1509
      %1878 = vmatpush.msra.mxu0 %v1493
      %1879 = vmatmul.f32.gmra.mxu0 %v1582
      %v1880 = vpop.f32.mrf.mxu0
      %v1881 = vadd.f32 %v1561, %v1880
      %1882 = vmatmul.f32.gmra.mxu0 %v1585
      %v1883 = vpop.f32.mrf.mxu0
      %v1884 = vadd.f32 %v1561, %v1883
      %1885 = vdwg.mxu0
      %1886 = vmatpush.msra.mxu0 0.0
      %1887 = vmatpush.msra.mxu0 0.0
      %1888 = vmatpush.msra.mxu0 0.0
      %1889 = vmatpush.msra.mxu0 0.0
      %1890 = vmatpush.msra.mxu0 0.0
      %1891 = vmatpush.msra.mxu0 0.0
      %1892 = vmatpush.msra.mxu0 0.0
      %1893 = vmatpush.msra.mxu0 0.0
      %1894 = vmatpush.msra.mxu0 0.0
      %1895 = vmatpush.msra.mxu0 0.0
      %1896 = vmatpush.msra.mxu0 0.0
      %1897 = vmatpush.msra.mxu0 0.0
      %1898 = vmatpush.msra.mxu0 %v1542
      %1899 = vmatpush.msra.mxu0 %v1526
      %1900 = vmatpush.msra.mxu0 %v1510
      %1901 = vmatpush.msra.mxu0 %v1494
      %1902 = vmatmul.f32.gmra.mxu0 %v1582
      %v1903 = vpop.f32.mrf.mxu0
      %v1904 = vadd.f32 %v1562, %v1903
      %1905 = vmatmul.f32.gmra.mxu0 %v1585
      %v1906 = vpop.f32.mrf.mxu0
      %v1907 = vadd.f32 %v1562, %v1906
      %1908 = vdwg.mxu0
      %1909 = vmatpush.msra.mxu0 0.0
      %1910 = vmatpush.msra.mxu0 0.0
      %1911 = vmatpush.msra.mxu0 0.0
      %1912 = vmatpush.msra.mxu0 0.0
      %1913 = vmatpush.msra.mxu0 0.0
      %1914 = vmatpush.msra.mxu0 0.0
      %1915 = vmatpush.msra.mxu0 0.0
      %1916 = vmatpush.msra.mxu0 0.0
      %1917 = vmatpush.msra.mxu0 0.0
      %1918 = vmatpush.msra.mxu0 0.0
      %1919 = vmatpush.msra.mxu0 0.0
      %1920 = vmatpush.msra.mxu0 0.0
      %1921 = vmatpush.msra.mxu0 %v1543
      %1922 = vmatpush.msra.mxu0 %v1527
      %1923 = vmatpush.msra.mxu0 %v1511
      %1924 = vmatpush.msra.mxu0 %v1495
      %1925 = vmatmul.f32.gmra.mxu0 %v1582
      %v1926 = vpop.f32.mrf.mxu0
      %v1927 = vadd.f32 %v1563, %v1926
      %1928 = vmatmul.f32.gmra.mxu0 %v1585
      %v1929 = vpop.f32.mrf.mxu0
      %v1930 = vadd.f32 %v1563, %v1929
      %1931 = vdwg.mxu0
      %1932 = vmatpush.msra.mxu0 0.0
      %1933 = vmatpush.msra.mxu0 0.0
      %1934 = vmatpush.msra.mxu0 0.0
      %1935 = vmatpush.msra.mxu0 0.0
      %1936 = vmatpush.msra.mxu0 0.0
      %1937 = vmatpush.msra.mxu0 0.0
      %1938 = vmatpush.msra.mxu0 0.0
      %1939 = vmatpush.msra.mxu0 0.0
      %1940 = vmatpush.msra.mxu0 0.0
      %1941 = vmatpush.msra.mxu0 0.0
      %1942 = vmatpush.msra.mxu0 0.0
      %1943 = vmatpush.msra.mxu0 0.0
      %1944 = vmatpush.msra.mxu0 %v1544
      %1945 = vmatpush.msra.mxu0 %v1528
      %1946 = vmatpush.msra.mxu0 %v1512
      %1947 = vmatpush.msra.mxu0 %v1496
      %1948 = vmatmul.f32.gmra.mxu0 %v1582
      %v1949 = vpop.f32.mrf.mxu0
      %v1950 = vadd.f32 %v1564, %v1949
      %1951 = vmatmul.f32.gmra.mxu0 %v1585
      %v1952 = vpop.f32.mrf.mxu0
      %v1953 = vadd.f32 %v1564, %v1952
      %1954 = vdwg.mxu0
      %v1955 = vmax.f32 %v1605, 0.0
      %v1956 = vmax.f32 %v1628, 0.0
      %v1957 = vmax.f32 %v1651, 0.0
      %v1958 = vmax.f32 %v1674, 0.0
      %v1959 = vmax.f32 %v1697, 0.0
      %v1960 = vmax.f32 %v1720, 0.0
      %v1961 = vmax.f32 %v1743, 0.0
      %v1962 = vmax.f32 %v1766, 0.0
      %v1963 = vmax.f32 %v1789, 0.0
      %v1964 = vmax.f32 %v1812, 0.0
      %v1965 = vmax.f32 %v1835, 0.0
      %v1966 = vmax.f32 %v1858, 0.0
      %v1967 = vmax.f32 %v1881, 0.0
      %v1968 = vmax.f32 %v1904, 0.0
      %v1969 = vmax.f32 %v1927, 0.0
      %v1970 = vmax.f32 %v1950, 0.0
      %v1971 = vmax.f32 %v1608, 0.0
      %v1972 = vmax.f32 %v1631, 0.0
      %v1973 = vmax.f32 %v1654, 0.0
      %v1974 = vmax.f32 %v1677, 0.0
      %v1975 = vmax.f32 %v1700, 0.0
      %v1976 = vmax.f32 %v1723, 0.0
      %v1977 = vmax.f32 %v1746, 0.0
      %v1978 = vmax.f32 %v1769, 0.0
      %v1979 = vmax.f32 %v1792, 0.0
      %v1980 = vmax.f32 %v1815, 0.0
      %v1981 = vmax.f32 %v1838, 0.0
      %v1982 = vmax.f32 %v1861, 0.0
      %v1983 = vmax.f32 %v1884, 0.0
      %v1984 = vmax.f32 %v1907, 0.0
      %v1985 = vmax.f32 %v1930, 0.0
      %v1986 = vmax.f32 %v1953, 0.0
      %v1987 = vld [vmem:[%s727] sm:$0xff]
      %v1988 = vld [vmem:[%s727 + $0x8] sm:$0xff]
      %v1989 = vld [vmem:[%s727 + $0x10] sm:$0xff]
      %v1990 = vld [vmem:[%s727 + $0x18] sm:$0xff]
      %v1991 = vld [vmem:[%s727 + $0x20] sm:$0xff]
      %v1992 = vld [vmem:[%s727 + $0x28] sm:$0xff]
      %v1993 = vld [vmem:[%s727 + $0x30] sm:$0xff]
      %v1994 = vld [vmem:[%s727 + $0x38] sm:$0xff]
      %v1995 = vld [vmem:[%s727 + $0x40] sm:$0xff]
      %v1996 = vld [vmem:[%s727 + $0x48] sm:$0xff]
      %v1997 = vld [vmem:[%s727 + $0x50] sm:$0xff]
      %v1998 = vld [vmem:[%s727 + $0x58] sm:$0xff]
      %v1999 = vld [vmem:[%s727 + $0x60] sm:$0xff]
      %v2000 = vld [vmem:[%s727 + $0x68] sm:$0xff]
      %v2001 = vld [vmem:[%s727 + $0x70] sm:$0xff]
      %v2002 = vld [vmem:[%s727 + $0x78] sm:$0xff]
      %v2003 = vld [vmem:[%s727 + $0x80] sm:$0xff]
      %v2004 = vld [vmem:[%s727 + $0x88] sm:$0xff]
      %v2005 = vld [vmem:[%s727 + $0x90] sm:$0xff]
      %v2006 = vld [vmem:[%s727 + $0x98] sm:$0xff]
      %v2007 = vld [vmem:[%s727 + $0xa0] sm:$0xff]
      %v2008 = vld [vmem:[%s727 + $0xa8] sm:$0xff]
      %v2009 = vld [vmem:[%s727 + $0xb0] sm:$0xff]
      %v2010 = vld [vmem:[%s727 + $0xb8] sm:$0xff]
      %v2011 = vld [vmem:[%s727 + $0xc0] sm:$0xff]
      %v2012 = vld [vmem:[%s727 + $0xc8] sm:$0xff]
      %v2013 = vld [vmem:[%s727 + $0xd0] sm:$0xff]
      %v2014 = vld [vmem:[%s727 + $0xd8] sm:$0xff]
      %v2015 = vld [vmem:[%s727 + $0xe0] sm:$0xff]
      %v2016 = vld [vmem:[%s727 + $0xe8] sm:$0xff]
      %v2017 = vld [vmem:[%s727 + $0xf0] sm:$0xff]
      %v2018 = vld [vmem:[%s727 + $0xf8] sm:$0xff]
      %v2019 = vld [vmem:[%s727 + $0x100] sm:$0xff]
      %v2020 = vld [vmem:[%s727 + $0x108] sm:$0xff]
      %v2021 = vld [vmem:[%s727 + $0x110] sm:$0xff]
      %v2022 = vld [vmem:[%s727 + $0x118] sm:$0xff]
      %v2023 = vld [vmem:[%s727 + $0x120] sm:$0xff]
      %v2024 = vld [vmem:[%s727 + $0x128] sm:$0xff]
      %v2025 = vld [vmem:[%s727 + $0x130] sm:$0xff]
      %v2026 = vld [vmem:[%s727 + $0x138] sm:$0xff]
      %v2027 = vld [vmem:[%s727 + $0x140] sm:$0xff]
      %v2028 = vld [vmem:[%s727 + $0x148] sm:$0xff]
      %v2029 = vld [vmem:[%s727 + $0x150] sm:$0xff]
      %v2030 = vld [vmem:[%s727 + $0x158] sm:$0xff]
      %v2031 = vld [vmem:[%s727 + $0x160] sm:$0xff]
      %v2032 = vld [vmem:[%s727 + $0x168] sm:$0xff]
      %v2033 = vld [vmem:[%s727 + $0x170] sm:$0xff]
      %v2034 = vld [vmem:[%s727 + $0x178] sm:$0xff]
      %v2035 = vld [vmem:[%s727 + $0x180] sm:$0xff]
      %v2036 = vld [vmem:[%s727 + $0x188] sm:$0xff]
      %v2037 = vld [vmem:[%s727 + $0x190] sm:$0xff]
      %v2038 = vld [vmem:[%s727 + $0x198] sm:$0xff]
      %v2039 = vld [vmem:[%s727 + $0x1a0] sm:$0xff]
      %v2040 = vld [vmem:[%s727 + $0x1a8] sm:$0xff]
      %v2041 = vld [vmem:[%s727 + $0x1b0] sm:$0xff]
      %v2042 = vld [vmem:[%s727 + $0x1b8] sm:$0xff]
      %v2043 = vld [vmem:[%s727 + $0x1c0] sm:$0xff]
      %v2044 = vld [vmem:[%s727 + $0x1c8] sm:$0xff]
      %v2045 = vld [vmem:[%s727 + $0x1d0] sm:$0xff]
      %v2046 = vld [vmem:[%s727 + $0x1d8] sm:$0xff]
      %v2047 = vld [vmem:[%s727 + $0x1e0] sm:$0xff]
      %v2048 = vld [vmem:[%s727 + $0x1e8] sm:$0xff]
      %v2049 = vld [vmem:[%s727 + $0x1f0] sm:$0xff]
      %v2050 = vld [vmem:[%s727 + $0x1f8] sm:$0xff]
      %v2051 = vld [vmem:[%s727 + $0x200] sm:$0xff]
      %v2052 = vld [vmem:[%s727 + $0x208] sm:$0xff]
      %v2053 = vld [vmem:[%s727 + $0x210] sm:$0xff]
      %v2054 = vld [vmem:[%s727 + $0x218] sm:$0xff]
      %v2055 = vld [vmem:[%s727 + $0x220] sm:$0xff]
      %v2056 = vld [vmem:[%s727 + $0x228] sm:$0xff]
      %v2057 = vld [vmem:[%s727 + $0x230] sm:$0xff]
      %v2058 = vld [vmem:[%s727 + $0x238] sm:$0xff]
      %v2059 = vld [vmem:[%s727 + $0x240] sm:$0xff]
      %v2060 = vld [vmem:[%s727 + $0x248] sm:$0xff]
      %v2061 = vld [vmem:[%s727 + $0x250] sm:$0xff]
      %v2062 = vld [vmem:[%s727 + $0x258] sm:$0xff]
      %v2063 = vld [vmem:[%s727 + $0x260] sm:$0xff]
      %v2064 = vld [vmem:[%s727 + $0x268] sm:$0xff]
      %v2065 = vld [vmem:[%s727 + $0x270] sm:$0xff]
      %v2066 = vld [vmem:[%s727 + $0x278] sm:$0xff]
      %v2067 = vld [vmem:[%s727 + $0x280] sm:$0xff]
      %v2068 = vld [vmem:[%s727 + $0x288] sm:$0xff]
      %v2069 = vld [vmem:[%s727 + $0x290] sm:$0xff]
      %v2070 = vld [vmem:[%s727 + $0x298] sm:$0xff]
      %v2071 = vld [vmem:[%s727 + $0x2a0] sm:$0xff]
      %v2072 = vld [vmem:[%s727 + $0x2a8] sm:$0xff]
      %v2073 = vld [vmem:[%s727 + $0x2b0] sm:$0xff]
      %v2074 = vld [vmem:[%s727 + $0x2b8] sm:$0xff]
      %v2075 = vld [vmem:[%s727 + $0x2c0] sm:$0xff]
      %v2076 = vld [vmem:[%s727 + $0x2c8] sm:$0xff]
      %v2077 = vld [vmem:[%s727 + $0x2d0] sm:$0xff]
      %v2078 = vld [vmem:[%s727 + $0x2d8] sm:$0xff]
      %v2079 = vld [vmem:[%s727 + $0x2e0] sm:$0xff]
      %v2080 = vld [vmem:[%s727 + $0x2e8] sm:$0xff]
      %v2081 = vld [vmem:[%s727 + $0x2f0] sm:$0xff]
      %v2082 = vld [vmem:[%s727 + $0x2f8] sm:$0xff]
      %v2083 = vld [vmem:[%s727 + $0x300] sm:$0xff]
      %v2084 = vld [vmem:[%s727 + $0x308] sm:$0xff]
      %v2085 = vld [vmem:[%s727 + $0x310] sm:$0xff]
      %v2086 = vld [vmem:[%s727 + $0x318] sm:$0xff]
      %v2087 = vld [vmem:[%s727 + $0x320] sm:$0xff]
      %v2088 = vld [vmem:[%s727 + $0x328] sm:$0xff]
      %v2089 = vld [vmem:[%s727 + $0x330] sm:$0xff]
      %v2090 = vld [vmem:[%s727 + $0x338] sm:$0xff]
      %v2091 = vld [vmem:[%s727 + $0x340] sm:$0xff]
      %v2092 = vld [vmem:[%s727 + $0x348] sm:$0xff]
      %v2093 = vld [vmem:[%s727 + $0x350] sm:$0xff]
      %v2094 = vld [vmem:[%s727 + $0x358] sm:$0xff]
      %v2095 = vld [vmem:[%s727 + $0x360] sm:$0xff]
      %v2096 = vld [vmem:[%s727 + $0x368] sm:$0xff]
      %v2097 = vld [vmem:[%s727 + $0x370] sm:$0xff]
      %v2098 = vld [vmem:[%s727 + $0x378] sm:$0xff]
      %v2099 = vld [vmem:[%s727 + $0x380] sm:$0xff]
      %v2100 = vld [vmem:[%s727 + $0x388] sm:$0xff]
      %v2101 = vld [vmem:[%s727 + $0x390] sm:$0xff]
      %v2102 = vld [vmem:[%s727 + $0x398] sm:$0xff]
      %v2103 = vld [vmem:[%s727 + $0x3a0] sm:$0xff]
      %v2104 = vld [vmem:[%s727 + $0x3a8] sm:$0xff]
      %v2105 = vld [vmem:[%s727 + $0x3b0] sm:$0xff]
      %v2106 = vld [vmem:[%s727 + $0x3b8] sm:$0xff]
      %v2107 = vld [vmem:[%s727 + $0x3c0] sm:$0xff]
      %v2108 = vld [vmem:[%s727 + $0x3c8] sm:$0xff]
      %v2109 = vld [vmem:[%s727 + $0x3d0] sm:$0xff]
      %v2110 = vld [vmem:[%s727 + $0x3d8] sm:$0xff]
      %v2111 = vld [vmem:[%s727 + $0x3e0] sm:$0xff]
      %v2112 = vld [vmem:[%s727 + $0x3e8] sm:$0xff]
      %v2113 = vld [vmem:[%s727 + $0x3f0] sm:$0xff]
      %v2114 = vld [vmem:[%s727 + $0x3f8] sm:$0xff]
      %v2115 = vld [vmem:[%s727 + $0x400] sm:$0xff]
      %v2116 = vld [vmem:[%s727 + $0x408] sm:$0xff]
      %v2117 = vld [vmem:[%s727 + $0x410] sm:$0xff]
      %v2118 = vld [vmem:[%s727 + $0x418] sm:$0xff]
      %v2119 = vld [vmem:[%s727 + $0x420] sm:$0xff]
      %v2120 = vld [vmem:[%s727 + $0x428] sm:$0xff]
      %v2121 = vld [vmem:[%s727 + $0x430] sm:$0xff]
      %v2122 = vld [vmem:[%s727 + $0x438] sm:$0xff]
      %v2123 = vld [vmem:[%s727 + $0x440] sm:$0xff]
      %v2124 = vld [vmem:[%s727 + $0x448] sm:$0xff]
      %v2125 = vld [vmem:[%s727 + $0x450] sm:$0xff]
      %v2126 = vld [vmem:[%s727 + $0x458] sm:$0xff]
      %v2127 = vld [vmem:[%s727 + $0x460] sm:$0xff]
      %v2128 = vld [vmem:[%s727 + $0x468] sm:$0xff]
      %v2129 = vld [vmem:[%s727 + $0x470] sm:$0xff]
      %v2130 = vld [vmem:[%s727 + $0x478] sm:$0xff]
      %v2131 = vld [vmem:[%s727 + $0x480] sm:$0xff]
      %v2132 = vld [vmem:[%s727 + $0x488] sm:$0xff]
      %v2133 = vld [vmem:[%s727 + $0x490] sm:$0xff]
      %v2134 = vld [vmem:[%s727 + $0x498] sm:$0xff]
      %v2135 = vld [vmem:[%s727 + $0x4a0] sm:$0xff]
      %v2136 = vld [vmem:[%s727 + $0x4a8] sm:$0xff]
      %v2137 = vld [vmem:[%s727 + $0x4b0] sm:$0xff]
      %v2138 = vld [vmem:[%s727 + $0x4b8] sm:$0xff]
      %v2139 = vld [vmem:[%s727 + $0x4c0] sm:$0xff]
      %v2140 = vld [vmem:[%s727 + $0x4c8] sm:$0xff]
      %v2141 = vld [vmem:[%s727 + $0x4d0] sm:$0xff]
      %v2142 = vld [vmem:[%s727 + $0x4d8] sm:$0xff]
      %v2143 = vld [vmem:[%s727 + $0x4e0] sm:$0xff]
      %v2144 = vld [vmem:[%s727 + $0x4e8] sm:$0xff]
      %v2145 = vld [vmem:[%s727 + $0x4f0] sm:$0xff]
      %v2146 = vld [vmem:[%s727 + $0x4f8] sm:$0xff]
      %v2147 = vld [vmem:[%s727 + $0x500] sm:$0xff]
      %v2148 = vld [vmem:[%s727 + $0x508] sm:$0xff]
      %v2149 = vld [vmem:[%s727 + $0x510] sm:$0xff]
      %v2150 = vld [vmem:[%s727 + $0x518] sm:$0xff]
      %v2151 = vld [vmem:[%s727 + $0x520] sm:$0xff]
      %v2152 = vld [vmem:[%s727 + $0x528] sm:$0xff]
      %v2153 = vld [vmem:[%s727 + $0x530] sm:$0xff]
      %v2154 = vld [vmem:[%s727 + $0x538] sm:$0xff]
      %v2155 = vld [vmem:[%s727 + $0x540] sm:$0xff]
      %v2156 = vld [vmem:[%s727 + $0x548] sm:$0xff]
      %v2157 = vld [vmem:[%s727 + $0x550] sm:$0xff]
      %v2158 = vld [vmem:[%s727 + $0x558] sm:$0xff]
      %v2159 = vld [vmem:[%s727 + $0x560] sm:$0xff]
      %v2160 = vld [vmem:[%s727 + $0x568] sm:$0xff]
      %v2161 = vld [vmem:[%s727 + $0x570] sm:$0xff]
      %v2162 = vld [vmem:[%s727 + $0x578] sm:$0xff]
      %v2163 = vld [vmem:[%s727 + $0x580] sm:$0xff]
      %v2164 = vld [vmem:[%s727 + $0x588] sm:$0xff]
      %v2165 = vld [vmem:[%s727 + $0x590] sm:$0xff]
      %v2166 = vld [vmem:[%s727 + $0x598] sm:$0xff]
      %v2167 = vld [vmem:[%s727 + $0x5a0] sm:$0xff]
      %v2168 = vld [vmem:[%s727 + $0x5a8] sm:$0xff]
      %v2169 = vld [vmem:[%s727 + $0x5b0] sm:$0xff]
      %v2170 = vld [vmem:[%s727 + $0x5b8] sm:$0xff]
      %v2171 = vld [vmem:[%s727 + $0x5c0] sm:$0xff]
      %v2172 = vld [vmem:[%s727 + $0x5c8] sm:$0xff]
      %v2173 = vld [vmem:[%s727 + $0x5d0] sm:$0xff]
      %v2174 = vld [vmem:[%s727 + $0x5d8] sm:$0xff]
      %v2175 = vld [vmem:[%s727 + $0x5e0] sm:$0xff]
      %v2176 = vld [vmem:[%s727 + $0x5e8] sm:$0xff]
      %v2177 = vld [vmem:[%s727 + $0x5f0] sm:$0xff]
      %v2178 = vld [vmem:[%s727 + $0x5f8] sm:$0xff]
      %v2179 = vld [vmem:[%s727 + $0x600] sm:$0xff]
      %v2180 = vld [vmem:[%s727 + $0x608] sm:$0xff]
      %v2181 = vld [vmem:[%s727 + $0x610] sm:$0xff]
      %v2182 = vld [vmem:[%s727 + $0x618] sm:$0xff]
      %v2183 = vld [vmem:[%s727 + $0x620] sm:$0xff]
      %v2184 = vld [vmem:[%s727 + $0x628] sm:$0xff]
      %v2185 = vld [vmem:[%s727 + $0x630] sm:$0xff]
      %v2186 = vld [vmem:[%s727 + $0x638] sm:$0xff]
      %v2187 = vld [vmem:[%s727 + $0x640] sm:$0xff]
      %v2188 = vld [vmem:[%s727 + $0x648] sm:$0xff]
      %v2189 = vld [vmem:[%s727 + $0x650] sm:$0xff]
      %v2190 = vld [vmem:[%s727 + $0x658] sm:$0xff]
      %v2191 = vld [vmem:[%s727 + $0x660] sm:$0xff]
      %v2192 = vld [vmem:[%s727 + $0x668] sm:$0xff]
      %v2193 = vld [vmem:[%s727 + $0x670] sm:$0xff]
      %v2194 = vld [vmem:[%s727 + $0x678] sm:$0xff]
      %v2195 = vld [vmem:[%s727 + $0x680] sm:$0xff]
      %v2196 = vld [vmem:[%s727 + $0x688] sm:$0xff]
      %v2197 = vld [vmem:[%s727 + $0x690] sm:$0xff]
      %v2198 = vld [vmem:[%s727 + $0x698] sm:$0xff]
      %v2199 = vld [vmem:[%s727 + $0x6a0] sm:$0xff]
      %v2200 = vld [vmem:[%s727 + $0x6a8] sm:$0xff]
      %v2201 = vld [vmem:[%s727 + $0x6b0] sm:$0xff]
      %v2202 = vld [vmem:[%s727 + $0x6b8] sm:$0xff]
      %v2203 = vld [vmem:[%s727 + $0x6c0] sm:$0xff]
      %v2204 = vld [vmem:[%s727 + $0x6c8] sm:$0xff]
      %v2205 = vld [vmem:[%s727 + $0x6d0] sm:$0xff]
      %v2206 = vld [vmem:[%s727 + $0x6d8] sm:$0xff]
      %v2207 = vld [vmem:[%s727 + $0x6e0] sm:$0xff]
      %v2208 = vld [vmem:[%s727 + $0x6e8] sm:$0xff]
      %v2209 = vld [vmem:[%s727 + $0x6f0] sm:$0xff]
      %v2210 = vld [vmem:[%s727 + $0x6f8] sm:$0xff]
      %v2211 = vld [vmem:[%s727 + $0x700] sm:$0xff]
      %v2212 = vld [vmem:[%s727 + $0x708] sm:$0xff]
      %v2213 = vld [vmem:[%s727 + $0x710] sm:$0xff]
      %v2214 = vld [vmem:[%s727 + $0x718] sm:$0xff]
      %v2215 = vld [vmem:[%s727 + $0x720] sm:$0xff]
      %v2216 = vld [vmem:[%s727 + $0x728] sm:$0xff]
      %v2217 = vld [vmem:[%s727 + $0x730] sm:$0xff]
      %v2218 = vld [vmem:[%s727 + $0x738] sm:$0xff]
      %v2219 = vld [vmem:[%s727 + $0x740] sm:$0xff]
      %v2220 = vld [vmem:[%s727 + $0x748] sm:$0xff]
      %v2221 = vld [vmem:[%s727 + $0x750] sm:$0xff]
      %v2222 = vld [vmem:[%s727 + $0x758] sm:$0xff]
      %v2223 = vld [vmem:[%s727 + $0x760] sm:$0xff]
      %v2224 = vld [vmem:[%s727 + $0x768] sm:$0xff]
      %v2225 = vld [vmem:[%s727 + $0x770] sm:$0xff]
      %v2226 = vld [vmem:[%s727 + $0x778] sm:$0xff]
      %v2227 = vld [vmem:[%s727 + $0x780] sm:$0xff]
      %v2228 = vld [vmem:[%s727 + $0x788] sm:$0xff]
      %v2229 = vld [vmem:[%s727 + $0x790] sm:$0xff]
      %v2230 = vld [vmem:[%s727 + $0x798] sm:$0xff]
      %v2231 = vld [vmem:[%s727 + $0x7a0] sm:$0xff]
      %v2232 = vld [vmem:[%s727 + $0x7a8] sm:$0xff]
      %v2233 = vld [vmem:[%s727 + $0x7b0] sm:$0xff]
      %v2234 = vld [vmem:[%s727 + $0x7b8] sm:$0xff]
      %v2235 = vld [vmem:[%s727 + $0x7c0] sm:$0xff]
      %v2236 = vld [vmem:[%s727 + $0x7c8] sm:$0xff]
      %v2237 = vld [vmem:[%s727 + $0x7d0] sm:$0xff]
      %v2238 = vld [vmem:[%s727 + $0x7d8] sm:$0xff]
      %v2239 = vld [vmem:[%s727 + $0x7e0] sm:$0xff]
      %v2240 = vld [vmem:[%s727 + $0x7e8] sm:$0xff]
      %v2241 = vld [vmem:[%s727 + $0x7f0] sm:$0xff]
      %v2242 = vld [vmem:[%s727 + $0x7f8] sm:$0xff]
      %v2243 = vld [vmem:[%s731] sm:$0x1]
      %v2245 = vperm.slane %v2243, 0
      %2247 = vmatpush.msra.mxu0 %v2002
      %2248 = vmatpush.msra.mxu0 %v2001
      %2249 = vmatpush.msra.mxu0 %v2000
      %2250 = vmatpush.msra.mxu0 %v1999
      %2251 = vmatpush.msra.mxu0 %v1998
      %2252 = vmatpush.msra.mxu0 %v1997
      %2253 = vmatpush.msra.mxu0 %v1996
      %2254 = vmatpush.msra.mxu0 %v1995
      %2255 = vmatpush.msra.mxu0 %v1994
      %2256 = vmatpush.msra.mxu0 %v1993
      %2257 = vmatpush.msra.mxu0 %v1992
      %2258 = vmatpush.msra.mxu0 %v1991
      %2259 = vmatpush.msra.mxu0 %v1990
      %2260 = vmatpush.msra.mxu0 %v1989
      %2261 = vmatpush.msra.mxu0 %v1988
      %2262 = vmatpush.msra.mxu0 %v1987
      %2263 = vmatmul.f32.gmra.mxu0 %v1955
      %v2264 = vpop.f32.mrf.mxu0
      %v2265 = vadd.f32 %v2245, %v2264
      %2266 = vmatmul.f32.gmra.mxu0 %v1971
      %v2267 = vpop.f32.mrf.mxu0
      %v2268 = vadd.f32 %v2245, %v2267
      %2269 = vdwg.mxu0
      %2270 = vmatpush.msra.mxu0 %v2018
      %2271 = vmatpush.msra.mxu0 %v2017
      %2272 = vmatpush.msra.mxu0 %v2016
      %2273 = vmatpush.msra.mxu0 %v2015
      %2274 = vmatpush.msra.mxu0 %v2014
      %2275 = vmatpush.msra.mxu0 %v2013
      %2276 = vmatpush.msra.mxu0 %v2012
      %2277 = vmatpush.msra.mxu0 %v2011
      %2278 = vmatpush.msra.mxu0 %v2010
      %2279 = vmatpush.msra.mxu0 %v2009
      %2280 = vmatpush.msra.mxu0 %v2008
      %2281 = vmatpush.msra.mxu0 %v2007
      %2282 = vmatpush.msra.mxu0 %v2006
      %2283 = vmatpush.msra.mxu0 %v2005
      %2284 = vmatpush.msra.mxu0 %v2004
      %2285 = vmatpush.msra.mxu0 %v2003
      %2286 = vmatmul.f32.gmra.mxu0 %v1956
      %v2287 = vpop.f32.mrf.mxu0
      %v2288 = vadd.f32 %v2265, %v2287
      %2289 = vmatmul.f32.gmra.mxu0 %v1972
      %v2290 = vpop.f32.mrf.mxu0
      %v2291 = vadd.f32 %v2268, %v2290
      %2292 = vdwg.mxu0
      %2293 = vmatpush.msra.mxu0 %v2034
      %2294 = vmatpush.msra.mxu0 %v2033
      %2295 = vmatpush.msra.mxu0 %v2032
      %2296 = vmatpush.msra.mxu0 %v2031
      %2297 = vmatpush.msra.mxu0 %v2030
      %2298 = vmatpush.msra.mxu0 %v2029
      %2299 = vmatpush.msra.mxu0 %v2028
      %2300 = vmatpush.msra.mxu0 %v2027
      %2301 = vmatpush.msra.mxu0 %v2026
      %2302 = vmatpush.msra.mxu0 %v2025
      %2303 = vmatpush.msra.mxu0 %v2024
      %2304 = vmatpush.msra.mxu0 %v2023
      %2305 = vmatpush.msra.mxu0 %v2022
      %2306 = vmatpush.msra.mxu0 %v2021
      %2307 = vmatpush.msra.mxu0 %v2020
      %2308 = vmatpush.msra.mxu0 %v2019
      %2309 = vmatmul.f32.gmra.mxu0 %v1957
      %v2310 = vpop.f32.mrf.mxu0
      %v2311 = vadd.f32 %v2288, %v2310
      %2312 = vmatmul.f32.gmra.mxu0 %v1973
      %v2313 = vpop.f32.mrf.mxu0
      %v2314 = vadd.f32 %v2291, %v2313
      %2315 = vdwg.mxu0
      %2316 = vmatpush.msra.mxu0 %v2050
      %2317 = vmatpush.msra.mxu0 %v2049
      %2318 = vmatpush.msra.mxu0 %v2048
      %2319 = vmatpush.msra.mxu0 %v2047
      %2320 = vmatpush.msra.mxu0 %v2046
      %2321 = vmatpush.msra.mxu0 %v2045
      %2322 = vmatpush.msra.mxu0 %v2044
      %2323 = vmatpush.msra.mxu0 %v2043
      %2324 = vmatpush.msra.mxu0 %v2042
      %2325 = vmatpush.msra.mxu0 %v2041
      %2326 = vmatpush.msra.mxu0 %v2040
      %2327 = vmatpush.msra.mxu0 %v2039
      %2328 = vmatpush.msra.mxu0 %v2038
      %2329 = vmatpush.msra.mxu0 %v2037
      %2330 = vmatpush.msra.mxu0 %v2036
      %2331 = vmatpush.msra.mxu0 %v2035
      %2332 = vmatmul.f32.gmra.mxu0 %v1958
      %v2333 = vpop.f32.mrf.mxu0
      %v2334 = vadd.f32 %v2311, %v2333
      %2335 = vmatmul.f32.gmra.mxu0 %v1974
      %v2336 = vpop.f32.mrf.mxu0
      %v2337 = vadd.f32 %v2314, %v2336
      %2338 = vdwg.mxu0
      %2339 = vmatpush.msra.mxu0 %v2066
      %2340 = vmatpush.msra.mxu0 %v2065
      %2341 = vmatpush.msra.mxu0 %v2064
      %2342 = vmatpush.msra.mxu0 %v2063
      %2343 = vmatpush.msra.mxu0 %v2062
      %2344 = vmatpush.msra.mxu0 %v2061
      %2345 = vmatpush.msra.mxu0 %v2060
      %2346 = vmatpush.msra.mxu0 %v2059
      %2347 = vmatpush.msra.mxu0 %v2058
      %2348 = vmatpush.msra.mxu0 %v2057
      %2349 = vmatpush.msra.mxu0 %v2056
      %2350 = vmatpush.msra.mxu0 %v2055
      %2351 = vmatpush.msra.mxu0 %v2054
      %2352 = vmatpush.msra.mxu0 %v2053
      %2353 = vmatpush.msra.mxu0 %v2052
      %2354 = vmatpush.msra.mxu0 %v2051
      %2355 = vmatmul.f32.gmra.mxu0 %v1959
      %v2356 = vpop.f32.mrf.mxu0
      %v2357 = vadd.f32 %v2334, %v2356
      %2358 = vmatmul.f32.gmra.mxu0 %v1975
      %v2359 = vpop.f32.mrf.mxu0
      %v2360 = vadd.f32 %v2337, %v2359
      %2361 = vdwg.mxu0
      %2362 = vmatpush.msra.mxu0 %v2082
      %2363 = vmatpush.msra.mxu0 %v2081
      %2364 = vmatpush.msra.mxu0 %v2080
      %2365 = vmatpush.msra.mxu0 %v2079
      %2366 = vmatpush.msra.mxu0 %v2078
      %2367 = vmatpush.msra.mxu0 %v2077
      %2368 = vmatpush.msra.mxu0 %v2076
      %2369 = vmatpush.msra.mxu0 %v2075
      %2370 = vmatpush.msra.mxu0 %v2074
      %2371 = vmatpush.msra.mxu0 %v2073
      %2372 = vmatpush.msra.mxu0 %v2072
      %2373 = vmatpush.msra.mxu0 %v2071
      %2374 = vmatpush.msra.mxu0 %v2070
      %2375 = vmatpush.msra.mxu0 %v2069
      %2376 = vmatpush.msra.mxu0 %v2068
      %2377 = vmatpush.msra.mxu0 %v2067
      %2378 = vmatmul.f32.gmra.mxu0 %v1960
      %v2379 = vpop.f32.mrf.mxu0
      %v2380 = vadd.f32 %v2357, %v2379
      %2381 = vmatmul.f32.gmra.mxu0 %v1976
      %v2382 = vpop.f32.mrf.mxu0
      %v2383 = vadd.f32 %v2360, %v2382
      %2384 = vdwg.mxu0
      %2385 = vmatpush.msra.mxu0 %v2098
      %2386 = vmatpush.msra.mxu0 %v2097
      %2387 = vmatpush.msra.mxu0 %v2096
      %2388 = vmatpush.msra.mxu0 %v2095
      %2389 = vmatpush.msra.mxu0 %v2094
      %2390 = vmatpush.msra.mxu0 %v2093
      %2391 = vmatpush.msra.mxu0 %v2092
      %2392 = vmatpush.msra.mxu0 %v2091
      %2393 = vmatpush.msra.mxu0 %v2090
      %2394 = vmatpush.msra.mxu0 %v2089
      %2395 = vmatpush.msra.mxu0 %v2088
      %2396 = vmatpush.msra.mxu0 %v2087
      %2397 = vmatpush.msra.mxu0 %v2086
      %2398 = vmatpush.msra.mxu0 %v2085
      %2399 = vmatpush.msra.mxu0 %v2084
      %2400 = vmatpush.msra.mxu0 %v2083
      %2401 = vmatmul.f32.gmra.mxu0 %v1961
      %v2402 = vpop.f32.mrf.mxu0
      %v2403 = vadd.f32 %v2380, %v2402
      %2404 = vmatmul.f32.gmra.mxu0 %v1977
      %v2405 = vpop.f32.mrf.mxu0
      %v2406 = vadd.f32 %v2383, %v2405
      %2407 = vdwg.mxu0
      %2408 = vmatpush.msra.mxu0 %v2114
      %2409 = vmatpush.msra.mxu0 %v2113
      %2410 = vmatpush.msra.mxu0 %v2112
      %2411 = vmatpush.msra.mxu0 %v2111
      %2412 = vmatpush.msra.mxu0 %v2110
      %2413 = vmatpush.msra.mxu0 %v2109
      %2414 = vmatpush.msra.mxu0 %v2108
      %2415 = vmatpush.msra.mxu0 %v2107
      %2416 = vmatpush.msra.mxu0 %v2106
      %2417 = vmatpush.msra.mxu0 %v2105
      %2418 = vmatpush.msra.mxu0 %v2104
      %2419 = vmatpush.msra.mxu0 %v2103
      %2420 = vmatpush.msra.mxu0 %v2102
      %2421 = vmatpush.msra.mxu0 %v2101
      %2422 = vmatpush.msra.mxu0 %v2100
      %2423 = vmatpush.msra.mxu0 %v2099
      %2424 = vmatmul.f32.gmra.mxu0 %v1962
      %v2425 = vpop.f32.mrf.mxu0
      %v2426 = vadd.f32 %v2403, %v2425
      %2427 = vmatmul.f32.gmra.mxu0 %v1978
      %v2428 = vpop.f32.mrf.mxu0
      %v2429 = vadd.f32 %v2406, %v2428
      %2430 = vdwg.mxu0
      %2431 = vmatpush.msra.mxu0 %v2130
      %2432 = vmatpush.msra.mxu0 %v2129
      %2433 = vmatpush.msra.mxu0 %v2128
      %2434 = vmatpush.msra.mxu0 %v2127
      %2435 = vmatpush.msra.mxu0 %v2126
      %2436 = vmatpush.msra.mxu0 %v2125
      %2437 = vmatpush.msra.mxu0 %v2124
      %2438 = vmatpush.msra.mxu0 %v2123
      %2439 = vmatpush.msra.mxu0 %v2122
      %2440 = vmatpush.msra.mxu0 %v2121
      %2441 = vmatpush.msra.mxu0 %v2120
      %2442 = vmatpush.msra.mxu0 %v2119
      %2443 = vmatpush.msra.mxu0 %v2118
      %2444 = vmatpush.msra.mxu0 %v2117
      %2445 = vmatpush.msra.mxu0 %v2116
      %2446 = vmatpush.msra.mxu0 %v2115
      %2447 = vmatmul.f32.gmra.mxu0 %v1963
      %v2448 = vpop.f32.mrf.mxu0
      %v2449 = vadd.f32 %v2426, %v2448
      %2450 = vmatmul.f32.gmra.mxu0 %v1979
      %v2451 = vpop.f32.mrf.mxu0
      %v2452 = vadd.f32 %v2429, %v2451
      %2453 = vdwg.mxu0
      %2454 = vmatpush.msra.mxu0 %v2146
      %2455 = vmatpush.msra.mxu0 %v2145
      %2456 = vmatpush.msra.mxu0 %v2144
      %2457 = vmatpush.msra.mxu0 %v2143
      %2458 = vmatpush.msra.mxu0 %v2142
      %2459 = vmatpush.msra.mxu0 %v2141
      %2460 = vmatpush.msra.mxu0 %v2140
      %2461 = vmatpush.msra.mxu0 %v2139
      %2462 = vmatpush.msra.mxu0 %v2138
      %2463 = vmatpush.msra.mxu0 %v2137
      %2464 = vmatpush.msra.mxu0 %v2136
      %2465 = vmatpush.msra.mxu0 %v2135
      %2466 = vmatpush.msra.mxu0 %v2134
      %2467 = vmatpush.msra.mxu0 %v2133
      %2468 = vmatpush.msra.mxu0 %v2132
      %2469 = vmatpush.msra.mxu0 %v2131
      %2470 = vmatmul.f32.gmra.mxu0 %v1964
      %v2471 = vpop.f32.mrf.mxu0
      %v2472 = vadd.f32 %v2449, %v2471
      %2473 = vmatmul.f32.gmra.mxu0 %v1980
      %v2474 = vpop.f32.mrf.mxu0
      %v2475 = vadd.f32 %v2452, %v2474
      %2476 = vdwg.mxu0
      %2477 = vmatpush.msra.mxu0 %v2162
      %2478 = vmatpush.msra.mxu0 %v2161
      %2479 = vmatpush.msra.mxu0 %v2160
      %2480 = vmatpush.msra.mxu0 %v2159
      %2481 = vmatpush.msra.mxu0 %v2158
      %2482 = vmatpush.msra.mxu0 %v2157
      %2483 = vmatpush.msra.mxu0 %v2156
      %2484 = vmatpush.msra.mxu0 %v2155
      %2485 = vmatpush.msra.mxu0 %v2154
      %2486 = vmatpush.msra.mxu0 %v2153
      %2487 = vmatpush.msra.mxu0 %v2152
      %2488 = vmatpush.msra.mxu0 %v2151
      %2489 = vmatpush.msra.mxu0 %v2150
      %2490 = vmatpush.msra.mxu0 %v2149
      %2491 = vmatpush.msra.mxu0 %v2148
      %2492 = vmatpush.msra.mxu0 %v2147
      %2493 = vmatmul.f32.gmra.mxu0 %v1965
      %v2494 = vpop.f32.mrf.mxu0
      %v2495 = vadd.f32 %v2472, %v2494
      %2496 = vmatmul.f32.gmra.mxu0 %v1981
      %v2497 = vpop.f32.mrf.mxu0
      %v2498 = vadd.f32 %v2475, %v2497
      %2499 = vdwg.mxu0
      %2500 = vmatpush.msra.mxu0 %v2178
      %2501 = vmatpush.msra.mxu0 %v2177
      %2502 = vmatpush.msra.mxu0 %v2176
      %2503 = vmatpush.msra.mxu0 %v2175
      %2504 = vmatpush.msra.mxu0 %v2174
      %2505 = vmatpush.msra.mxu0 %v2173
      %2506 = vmatpush.msra.mxu0 %v2172
      %2507 = vmatpush.msra.mxu0 %v2171
      %2508 = vmatpush.msra.mxu0 %v2170
      %2509 = vmatpush.msra.mxu0 %v2169
      %2510 = vmatpush.msra.mxu0 %v2168
      %2511 = vmatpush.msra.mxu0 %v2167
      %2512 = vmatpush.msra.mxu0 %v2166
      %2513 = vmatpush.msra.mxu0 %v2165
      %2514 = vmatpush.msra.mxu0 %v2164
      %2515 = vmatpush.msra.mxu0 %v2163
      %2516 = vmatmul.f32.gmra.mxu0 %v1966
      %v2517 = vpop.f32.mrf.mxu0
      %v2518 = vadd.f32 %v2495, %v2517
      %2519 = vmatmul.f32.gmra.mxu0 %v1982
      %v2520 = vpop.f32.mrf.mxu0
      %v2521 = vadd.f32 %v2498, %v2520
      %2522 = vdwg.mxu0
      %2523 = vmatpush.msra.mxu0 %v2194
      %2524 = vmatpush.msra.mxu0 %v2193
      %2525 = vmatpush.msra.mxu0 %v2192
      %2526 = vmatpush.msra.mxu0 %v2191
      %2527 = vmatpush.msra.mxu0 %v2190
      %2528 = vmatpush.msra.mxu0 %v2189
      %2529 = vmatpush.msra.mxu0 %v2188
      %2530 = vmatpush.msra.mxu0 %v2187
      %2531 = vmatpush.msra.mxu0 %v2186
      %2532 = vmatpush.msra.mxu0 %v2185
      %2533 = vmatpush.msra.mxu0 %v2184
      %2534 = vmatpush.msra.mxu0 %v2183
      %2535 = vmatpush.msra.mxu0 %v2182
      %2536 = vmatpush.msra.mxu0 %v2181
      %2537 = vmatpush.msra.mxu0 %v2180
      %2538 = vmatpush.msra.mxu0 %v2179
      %2539 = vmatmul.f32.gmra.mxu0 %v1967
      %v2540 = vpop.f32.mrf.mxu0
      %v2541 = vadd.f32 %v2518, %v2540
      %2542 = vmatmul.f32.gmra.mxu0 %v1983
      %v2543 = vpop.f32.mrf.mxu0
      %v2544 = vadd.f32 %v2521, %v2543
      %2545 = vdwg.mxu0
      %2546 = vmatpush.msra.mxu0 %v2210
      %2547 = vmatpush.msra.mxu0 %v2209
      %2548 = vmatpush.msra.mxu0 %v2208
      %2549 = vmatpush.msra.mxu0 %v2207
      %2550 = vmatpush.msra.mxu0 %v2206
      %2551 = vmatpush.msra.mxu0 %v2205
      %2552 = vmatpush.msra.mxu0 %v2204
      %2553 = vmatpush.msra.mxu0 %v2203
      %2554 = vmatpush.msra.mxu0 %v2202
      %2555 = vmatpush.msra.mxu0 %v2201
      %2556 = vmatpush.msra.mxu0 %v2200
      %2557 = vmatpush.msra.mxu0 %v2199
      %2558 = vmatpush.msra.mxu0 %v2198
      %2559 = vmatpush.msra.mxu0 %v2197
      %2560 = vmatpush.msra.mxu0 %v2196
      %2561 = vmatpush.msra.mxu0 %v2195
      %2562 = vmatmul.f32.gmra.mxu0 %v1968
      %v2563 = vpop.f32.mrf.mxu0
      %v2564 = vadd.f32 %v2541, %v2563
      %2565 = vmatmul.f32.gmra.mxu0 %v1984
      %v2566 = vpop.f32.mrf.mxu0
      %v2567 = vadd.f32 %v2544, %v2566
      %2568 = vdwg.mxu0
      %2569 = vmatpush.msra.mxu0 %v2226
      %2570 = vmatpush.msra.mxu0 %v2225
      %2571 = vmatpush.msra.mxu0 %v2224
      %2572 = vmatpush.msra.mxu0 %v2223
      %2573 = vmatpush.msra.mxu0 %v2222
      %2574 = vmatpush.msra.mxu0 %v2221
      %2575 = vmatpush.msra.mxu0 %v2220
      %2576 = vmatpush.msra.mxu0 %v2219
      %2577 = vmatpush.msra.mxu0 %v2218
      %2578 = vmatpush.msra.mxu0 %v2217
      %2579 = vmatpush.msra.mxu0 %v2216
      %2580 = vmatpush.msra.mxu0 %v2215
      %2581 = vmatpush.msra.mxu0 %v2214
      %2582 = vmatpush.msra.mxu0 %v2213
      %2583 = vmatpush.msra.mxu0 %v2212
      %2584 = vmatpush.msra.mxu0 %v2211
      %2585 = vmatmul.f32.gmra.mxu0 %v1969
      %v2586 = vpop.f32.mrf.mxu0
      %v2587 = vadd.f32 %v2564, %v2586
      %2588 = vmatmul.f32.gmra.mxu0 %v1985
      %v2589 = vpop.f32.mrf.mxu0
      %v2590 = vadd.f32 %v2567, %v2589
      %2591 = vdwg.mxu0
      %2592 = vmatpush.msra.mxu0 %v2242
      %2593 = vmatpush.msra.mxu0 %v2241
      %2594 = vmatpush.msra.mxu0 %v2240
      %2595 = vmatpush.msra.mxu0 %v2239
      %2596 = vmatpush.msra.mxu0 %v2238
      %2597 = vmatpush.msra.mxu0 %v2237
      %2598 = vmatpush.msra.mxu0 %v2236
      %2599 = vmatpush.msra.mxu0 %v2235
      %2600 = vmatpush.msra.mxu0 %v2234
      %2601 = vmatpush.msra.mxu0 %v2233
      %2602 = vmatpush.msra.mxu0 %v2232
      %2603 = vmatpush.msra.mxu0 %v2231
      %2604 = vmatpush.msra.mxu0 %v2230
      %2605 = vmatpush.msra.mxu0 %v2229
      %2606 = vmatpush.msra.mxu0 %v2228
      %2607 = vmatpush.msra.mxu0 %v2227
      %2608 = vmatmul.f32.gmra.mxu0 %v1970
      %v2609 = vpop.f32.mrf.mxu0
      %v2610 = vadd.f32 %v2587, %v2609
      %2611 = vmatmul.f32.gmra.mxu0 %v1986
      %v2612 = vpop.f32.mrf.mxu0
      %v2613 = vadd.f32 %v2590, %v2612
      %2614 = vdwg.mxu0
      %v2615 = vld [vmem:[%s735] sm:$0x1]
      %v2616 = vld [vmem:[%s739] sm:$0x1]
      %v2617 = vadd.f32 %v1479, %v2610
      %v2618 = vadd.f32 %v1480, %v2613
      %v2619 = vsel %vm791, %v2617, 0.0
      %2620 = vadd.xlane.f32.xlu0 %v2619
      %v2621 = vpop.xlane.xlu0 %2620
      %v2622 = vsel %vm791, %v2618, 0.0
      %2623 = vadd.xlane.f32.xlu0 %v2622
      %v2624 = vpop.xlane.xlu0 %2623
      %v2625 = vmul.f32 %v2621, %v1432
      %v2626 = vmul.f32 %v2624, %v1432
      %v2627 = vsub.f32 %v2617, %v2625
      %v2628 = vsub.f32 %v2618, %v2626
      %v2629 = vmul.f32 %v2627, %v2627
      %v2630 = vmul.f32 %v2628, %v2628
      %v2631 = vsel %vm791, %v2629, 0.0
      %2632 = vadd.xlane.f32.xlu0 %v2631
      %v2633 = vpop.xlane.xlu0 %2632
      %v2634 = vsel %vm791, %v2630, 0.0
      %2635 = vadd.xlane.f32.xlu0 %v2634
      %v2636 = vpop.xlane.xlu0 %2635
      %v2637 = vmul.f32 %v2633, %v1432
      %v2638 = vmul.f32 %v2636, %v1432
      %v2639 = vadd.f32 %v2637, 1e-05
      %v2640 = vadd.f32 %v2638, 1e-05
      %v2641 = vrsqrt.pop %v2639
      %v2642 = vmul.f32 %v2641, %v2639
      %v2643 = vmul.f32 %v2642, %v2641
      %v2644 = vmul.f32 0.5, %v2643
      %v2645 = vsub.f32 1.5, %v2644
      %v2646 = vmul.f32 %v2641, %v2645
      %vm2647 = vweird.f32 %v2639
      %vm2648 = vweird.f32 %v2641
      %vm2649 = vmor %vm2647, %vm2648
      %v2650 = vsel %vm2649, %v2641, %v2646
      %v2651 = vrsqrt.pop %v2640
      %v2652 = vmul.f32 %v2651, %v2640
      %v2653 = vmul.f32 %v2652, %v2651
      %v2654 = vmul.f32 0.5, %v2653
      %v2655 = vsub.f32 1.5, %v2654
      %v2656 = vmul.f32 %v2651, %v2655
      %vm2657 = vweird.f32 %v2640
      %vm2658 = vweird.f32 %v2651
      %vm2659 = vmor %vm2657, %vm2658
      %v2660 = vsel %vm2659, %v2651, %v2656
      %v2661 = vmul.f32 %v2627, %v2650
      %v2662 = vmul.f32 %v2628, %v2660
      %v2664 = vperm.slane %v2615, 0
      %v2666 = vmul.f32 %v2661, %v2664
      %v2667 = vmul.f32 %v2662, %v2664
      %v2669 = vperm.slane %v2616, 0
      %v2671 = vadd.f32 %v2666, %v2669
      %v2672 = vadd.f32 %v2667, %v2669
      %s2673 = scalar_lea.vmem %s692, 32
      %v2674 = vld [vmem:[%s2673] sm:$0xff]
      %v2675 = vld [vmem:[%s2673 + $0x8] sm:$0xff]
      %v2676 = vld [vmem:[%s2673 + $0x10] sm:$0xff]
      %v2677 = vld [vmem:[%s2673 + $0x18] sm:$0xff]
      %s2678 = scalar_lea.vmem %s696, 1
      %v2679 = vld [vmem:[%s2678] sm:$0x1]
      %v2681 = vperm.slane %v2679, 0
      %v2684 = vsel %vm791, %v2671, 0
      %v2687 = vsel %vm791, %v2672, 0
      %2689 = vmatpush.msra.mxu0 0.0
      %2690 = vmatpush.msra.mxu0 0.0
      %2691 = vmatpush.msra.mxu0 0.0
      %2692 = vmatpush.msra.mxu0 0.0
      %2693 = vmatpush.msra.mxu0 0.0
      %2694 = vmatpush.msra.mxu0 0.0
      %2695 = vmatpush.msra.mxu0 0.0
      %2696 = vmatpush.msra.mxu0 0.0
      %2697 = vmatpush.msra.mxu0 0.0
      %2698 = vmatpush.msra.mxu0 0.0
      %2699 = vmatpush.msra.mxu0 0.0
      %2700 = vmatpush.msra.mxu0 0.0
      %2701 = vmatpush.msra.mxu0 %v2677
      %2702 = vmatpush.msra.mxu0 %v2676
      %2703 = vmatpush.msra.mxu0 %v2675
      %2704 = vmatpush.msra.mxu0 %v2674
      %2705 = vmatmul.f32.gmra.mxu0 %v2684
      %v2706 = vpop.f32.mrf.mxu0
      %v2707 = vadd.f32 %v2681, %v2706
      %2708 = vmatmul.f32.gmra.mxu0 %v2687
      %v2709 = vpop.f32.mrf.mxu0
      %v2710 = vadd.f32 %v2681, %v2709
      %2711 = vdwg.mxu0
      %2713 = vrot.lane.b32.xlu0 %v2707, 96
      %v2714 = vpop.permute.xlu0 %2713
      %v2715 = vsel %vm824, %v2707, 0
      %v2717 = vsel %vm824, %v2714, 0
      %2719 = vmatpush.xpose.msra.mxu0 0.0
      %2720 = vmatpush.xpose.msra.mxu0 0.0
      %2721 = vmatpush.xpose.msra.mxu0 0.0
      %2722 = vmatpush.xpose.msra.mxu0 0.0
      %2723 = vmatpush.xpose.msra.mxu0 0.0
      %2724 = vmatpush.xpose.msra.mxu0 0.0
      %2725 = vmatpush.xpose.msra.mxu0 0.0
      %2726 = vmatpush.xpose.msra.mxu0 0.0
      %2727 = vmatpush.xpose.msra.mxu0 0.0
      %2728 = vmatpush.xpose.msra.mxu0 0.0
      %2729 = vmatpush.xpose.msra.mxu0 0.0
      %2730 = vmatpush.xpose.msra.mxu0 0.0
      %2731 = vmatpush.xpose.msra.mxu0 0.0
      %2732 = vmatpush.xpose.msra.mxu0 0.0
      %2733 = vmatpush.xpose.msra.mxu0 0.0
      %2734 = vmatpush.xpose.msra.mxu0 %v2717
      %2735 = vmatmul.f32.gmra.mxu0 %v2715
      %v2736 = vpop.f32.mrf.mxu0
      %v2737 = vadd.f32 0.0, %v2736
      %2738 = vdwg.mxu0
      %2740 = vrot.lane.b32.xlu0 %v2710, 96
      %v2741 = vpop.permute.xlu0 %2740
      %v2742 = vsel %vm824, %v2710, 0
      %v2744 = vsel %vm824, %v2741, 0
      %2746 = vmatpush.xpose.msra.mxu0 0.0
      %2747 = vmatpush.xpose.msra.mxu0 0.0
      %2748 = vmatpush.xpose.msra.mxu0 0.0
      %2749 = vmatpush.xpose.msra.mxu0 0.0
      %2750 = vmatpush.xpose.msra.mxu0 0.0
      %2751 = vmatpush.xpose.msra.mxu0 0.0
      %2752 = vmatpush.xpose.msra.mxu0 0.0
      %2753 = vmatpush.xpose.msra.mxu0 0.0
      %2754 = vmatpush.xpose.msra.mxu0 0.0
      %2755 = vmatpush.xpose.msra.mxu0 0.0
      %2756 = vmatpush.xpose.msra.mxu0 0.0
      %2757 = vmatpush.xpose.msra.mxu0 0.0
      %2758 = vmatpush.xpose.msra.mxu0 0.0
      %2759 = vmatpush.xpose.msra.mxu0 0.0
      %2760 = vmatpush.xpose.msra.mxu0 0.0
      %2761 = vmatpush.xpose.msra.mxu0 %v2744
      %2762 = vmatmul.f32.gmra.mxu0 %v2742
      %v2763 = vpop.f32.mrf.mxu0
      %v2764 = vadd.f32 0.0, %v2763
      %2765 = vdwg.mxu0
      %v2766 = vmul.f32 %v2737, 0.35355338
      %v2767 = vmul.f32 %v2764, 0.35355338
      %v2768 = vsel %vm824, %v2766, -inf
      %2769 = vmax.xlane.f32.xlu0 %v2768
      %v2770 = vpop.xlane.xlu0 %2769
      %v2771 = vsel %vm824, %v2767, -inf
      %2772 = vmax.xlane.f32.xlu0 %v2771
      %v2773 = vpop.xlane.xlu0 %2772
      %v2774 = vsub.f32 %v2766, %v2770
      %v2775 = vsub.f32 %v2767, %v2773
      %v2776 = vmul.f32 %v2774, 1.442695
      %v2777 = vpow.pop %v2776
      %v2778 = vmul.f32 %v2775, 1.442695
      %v2779 = vpow.pop %v2778
      %v2780 = vsel %vm824, %v2777, 0.0
      %2781 = vadd.xlane.f32.xlu0 %v2780
      %v2782 = vpop.xlane.xlu0 %2781
      %v2783 = vsel %vm824, %v2779, 0.0
      %2784 = vadd.xlane.f32.xlu0 %v2783
      %v2785 = vpop.xlane.xlu0 %2784
      %v2786 = vrcp.pop %v2782
      %v2787 = vrcp.pop %v2785
      %v2788 = vmul.f32 %v2777, %v2786
      %v2789 = vmul.f32 %v2779, %v2787
      %2790 = vrot.lane.b32.xlu0 %v2707, 64
      %v2791 = vpop.permute.xlu0 %2790
      %v2794 = vsel %vm824, %v2788, 0
      %2796 = vmatpush.msra.mxu0 0.0
      %2797 = vmatpush.msra.mxu0 0.0
      %2798 = vmatpush.msra.mxu0 0.0
      %2799 = vmatpush.msra.mxu0 0.0
      %2800 = vmatpush.msra.mxu0 0.0
      %2801 = vmatpush.msra.mxu0 0.0
      %2802 = vmatpush.msra.mxu0 0.0
      %2803 = vmatpush.msra.mxu0 0.0
      %2804 = vmatpush.msra.mxu0 0.0
      %2805 = vmatpush.msra.mxu0 0.0
      %2806 = vmatpush.msra.mxu0 0.0
      %2807 = vmatpush.msra.mxu0 0.0
      %2808 = vmatpush.msra.mxu0 0.0
      %2809 = vmatpush.msra.mxu0 0.0
      %2810 = vmatpush.msra.mxu0 0.0
      %2811 = vmatpush.msra.mxu0 %v2791
      %2812 = vmatmul.f32.gmra.mxu0 %v2794
      %v2813 = vpop.f32.mrf.mxu0
      %v2814 = vadd.f32 0.0, %v2813
      %2815 = vdwg.mxu0
      %2816 = vrot.lane.b32.xlu0 %v2710, 64
      %v2817 = vpop.permute.xlu0 %2816
      %v2820 = vsel %vm824, %v2789, 0
      %2822 = vmatpush.msra.mxu0 0.0
      %2823 = vmatpush.msra.mxu0 0.0
      %2824 = vmatpush.msra.mxu0 0.0
      %2825 = vmatpush.msra.mxu0 0.0
      %2826 = vmatpush.msra.mxu0 0.0
      %2827 = vmatpush.msra.mxu0 0.0
      %2828 = vmatpush.msra.mxu0 0.0
      %2829 = vmatpush.msra.mxu0 0.0
      %2830 = vmatpush.msra.mxu0 0.0
      %2831 = vmatpush.msra.mxu0 0.0
      %2832 = vmatpush.msra.mxu0 0.0
      %2833 = vmatpush.msra.mxu0 0.0
      %2834 = vmatpush.msra.mxu0 0.0
      %2835 = vmatpush.msra.mxu0 0.0
      %2836 = vmatpush.msra.mxu0 0.0
      %2837 = vmatpush.msra.mxu0 %v2817
      %2838 = vmatmul.f32.gmra.mxu0 %v2820
      %v2839 = vpop.f32.mrf.mxu0
      %v2840 = vadd.f32 0.0, %v2839
      %2841 = vdwg.mxu0
      %2842 = vrot.lane.b32.xlu0 %v2707, 120
      %v2843 = vpop.permute.xlu0 %2842
      %2844 = vrot.lane.b32.xlu0 %v2707, 88
      %v2845 = vpop.permute.xlu0 %2844
      %v2846 = vsel %vm824, %v2843, 0
      %v2848 = vsel %vm824, %v2845, 0
      %2850 = vmatpush.xpose.msra.mxu0 0.0
      %2851 = vmatpush.xpose.msra.mxu0 0.0
      %2852 = vmatpush.xpose.msra.mxu0 0.0
      %2853 = vmatpush.xpose.msra.mxu0 0.0
      %2854 = vmatpush.xpose.msra.mxu0 0.0
      %2855 = vmatpush.xpose.msra.mxu0 0.0
      %2856 = vmatpush.xpose.msra.mxu0 0.0
      %2857 = vmatpush.xpose.msra.mxu0 0.0
      %2858 = vmatpush.xpose.msra.mxu0 0.0
      %2859 = vmatpush.xpose.msra.mxu0 0.0
      %2860 = vmatpush.xpose.msra.mxu0 0.0
      %2861 = vmatpush.xpose.msra.mxu0 0.0
      %2862 = vmatpush.xpose.msra.mxu0 0.0
      %2863 = vmatpush.xpose.msra.mxu0 0.0
      %2864 = vmatpush.xpose.msra.mxu0 0.0
      %2865 = vmatpush.xpose.msra.mxu0 %v2848
      %2866 = vmatmul.f32.gmra.mxu0 %v2846
      %v2867 = vpop.f32.mrf.mxu0
      %v2868 = vadd.f32 0.0, %v2867
      %2869 = vdwg.mxu0
      %2870 = vrot.lane.b32.xlu0 %v2710, 120
      %v2871 = vpop.permute.xlu0 %2870
      %2872 = vrot.lane.b32.xlu0 %v2710, 88
      %v2873 = vpop.permute.xlu0 %2872
      %v2874 = vsel %vm824, %v2871, 0
      %v2876 = vsel %vm824, %v2873, 0
      %2878 = vmatpush.xpose.msra.mxu0 0.0
      %2879 = vmatpush.xpose.msra.mxu0 0.0
      %2880 = vmatpush.xpose.msra.mxu0 0.0
      %2881 = vmatpush.xpose.msra.mxu0 0.0
      %2882 = vmatpush.xpose.msra.mxu0 0.0
      %2883 = vmatpush.xpose.msra.mxu0 0.0
      %2884 = vmatpush.xpose.msra.mxu0 0.0
      %2885 = vmatpush.xpose.msra.mxu0 0.0
      %2886 = vmatpush.xpose.msra.mxu0 0.0
      %2887 = vmatpush.xpose.msra.mxu0 0.0
      %2888 = vmatpush.xpose.msra.mxu0 0.0
      %2889 = vmatpush.xpose.msra.mxu0 0.0
      %2890 = vmatpush.xpose.msra.mxu0 0.0
      %2891 = vmatpush.xpose.msra.mxu0 0.0
      %2892 = vmatpush.xpose.msra.mxu0 0.0
      %2893 = vmatpush.xpose.msra.mxu0 %v2876
      %2894 = vmatmul.f32.gmra.mxu0 %v2874
      %v2895 = vpop.f32.mrf.mxu0
      %v2896 = vadd.f32 0.0, %v2895
      %2897 = vdwg.mxu0
      %v2898 = vmul.f32 %v2868, 0.35355338
      %v2899 = vmul.f32 %v2896, 0.35355338
      %v2900 = vsel %vm824, %v2898, -inf
      %2901 = vmax.xlane.f32.xlu0 %v2900
      %v2902 = vpop.xlane.xlu0 %2901
      %v2903 = vsel %vm824, %v2899, -inf
      %2904 = vmax.xlane.f32.xlu0 %v2903
      %v2905 = vpop.xlane.xlu0 %2904
      %v2906 = vsub.f32 %v2898, %v2902
      %v2907 = vsub.f32 %v2899, %v2905
      %v2908 = vmul.f32 %v2906, 1.442695
      %v2909 = vpow.pop %v2908
      %v2910 = vmul.f32 %v2907, 1.442695
      %v2911 = vpow.pop %v2910
      %v2912 = vsel %vm824, %v2909, 0.0
      %2913 = vadd.xlane.f32.xlu0 %v2912
      %v2914 = vpop.xlane.xlu0 %2913
      %v2915 = vsel %vm824, %v2911, 0.0
      %2916 = vadd.xlane.f32.xlu0 %v2915
      %v2917 = vpop.xlane.xlu0 %2916
      %v2918 = vrcp.pop %v2914
      %v2919 = vrcp.pop %v2917
      %v2920 = vmul.f32 %v2909, %v2918
      %v2921 = vmul.f32 %v2911, %v2919
      %2922 = vrot.lane.b32.xlu0 %v2707, 56
      %v2923 = vpop.permute.xlu0 %2922
      %v2926 = vsel %vm824, %v2920, 0
      %2928 = vmatpush.msra.mxu0 0.0
      %2929 = vmatpush.msra.mxu0 0.0
      %2930 = vmatpush.msra.mxu0 0.0
      %2931 = vmatpush.msra.mxu0 0.0
      %2932 = vmatpush.msra.mxu0 0.0
      %2933 = vmatpush.msra.mxu0 0.0
      %2934 = vmatpush.msra.mxu0 0.0
      %2935 = vmatpush.msra.mxu0 0.0
      %2936 = vmatpush.msra.mxu0 0.0
      %2937 = vmatpush.msra.mxu0 0.0
      %2938 = vmatpush.msra.mxu0 0.0
      %2939 = vmatpush.msra.mxu0 0.0
      %2940 = vmatpush.msra.mxu0 0.0
      %2941 = vmatpush.msra.mxu0 0.0
      %2942 = vmatpush.msra.mxu0 0.0
      %2943 = vmatpush.msra.mxu0 %v2923
      %2944 = vmatmul.f32.gmra.mxu0 %v2926
      %v2945 = vpop.f32.mrf.mxu0
      %v2946 = vadd.f32 0.0, %v2945
      %2947 = vdwg.mxu0
      %2948 = vrot.lane.b32.xlu0 %v2710, 56
      %v2949 = vpop.permute.xlu0 %2948
      %v2952 = vsel %vm824, %v2921, 0
      %2954 = vmatpush.msra.mxu0 0.0
      %2955 = vmatpush.msra.mxu0 0.0
      %2956 = vmatpush.msra.mxu0 0.0
      %2957 = vmatpush.msra.mxu0 0.0
      %2958 = vmatpush.msra.mxu0 0.0
      %2959 = vmatpush.msra.mxu0 0.0
      %2960 = vmatpush.msra.mxu0 0.0
      %2961 = vmatpush.msra.mxu0 0.0
      %2962 = vmatpush.msra.mxu0 0.0
      %2963 = vmatpush.msra.mxu0 0.0
      %2964 = vmatpush.msra.mxu0 0.0
      %2965 = vmatpush.msra.mxu0 0.0
      %2966 = vmatpush.msra.mxu0 0.0
      %2967 = vmatpush.msra.mxu0 0.0
      %2968 = vmatpush.msra.mxu0 0.0
      %2969 = vmatpush.msra.mxu0 %v2949
      %2970 = vmatmul.f32.gmra.mxu0 %v2952
      %v2971 = vpop.f32.mrf.mxu0
      %v2972 = vadd.f32 0.0, %v2971
      %2973 = vdwg.mxu0
      %2974 = vrot.lane.b32.xlu0 %v2707, 112
      %v2975 = vpop.permute.xlu0 %2974
      %2976 = vrot.lane.b32.xlu0 %v2707, 80
      %v2977 = vpop.permute.xlu0 %2976
      %v2978 = vsel %vm824, %v2975, 0
      %v2980 = vsel %vm824, %v2977, 0
      %2982 = vmatpush.xpose.msra.mxu0 0.0
      %2983 = vmatpush.xpose.msra.mxu0 0.0
      %2984 = vmatpush.xpose.msra.mxu0 0.0
      %2985 = vmatpush.xpose.msra.mxu0 0.0
      %2986 = vmatpush.xpose.msra.mxu0 0.0
      %2987 = vmatpush.xpose.msra.mxu0 0.0
      %2988 = vmatpush.xpose.msra.mxu0 0.0
      %2989 = vmatpush.xpose.msra.mxu0 0.0
      %2990 = vmatpush.xpose.msra.mxu0 0.0
      %2991 = vmatpush.xpose.msra.mxu0 0.0
      %2992 = vmatpush.xpose.msra.mxu0 0.0
      %2993 = vmatpush.xpose.msra.mxu0 0.0
      %2994 = vmatpush.xpose.msra.mxu0 0.0
      %2995 = vmatpush.xpose.msra.mxu0 0.0
      %2996 = vmatpush.xpose.msra.mxu0 0.0
      %2997 = vmatpush.xpose.msra.mxu0 %v2980
      %2998 = vmatmul.f32.gmra.mxu0 %v2978
      %v2999 = vpop.f32.mrf.mxu0
      %v3000 = vadd.f32 0.0, %v2999
      %3001 = vdwg.mxu0
      %3002 = vrot.lane.b32.xlu0 %v2710, 112
      %v3003 = vpop.permute.xlu0 %3002
      %3004 = vrot.lane.b32.xlu0 %v2710, 80
      %v3005 = vpop.permute.xlu0 %3004
      %v3006 = vsel %vm824, %v3003, 0
      %v3008 = vsel %vm824, %v3005, 0
      %3010 = vmatpush.xpose.msra.mxu0 0.0
      %3011 = vmatpush.xpose.msra.mxu0 0.0
      %3012 = vmatpush.xpose.msra.mxu0 0.0
      %3013 = vmatpush.xpose.msra.mxu0 0.0
      %3014 = vmatpush.xpose.msra.mxu0 0.0
      %3015 = vmatpush.xpose.msra.mxu0 0.0
      %3016 = vmatpush.xpose.msra.mxu0 0.0
      %3017 = vmatpush.xpose.msra.mxu0 0.0
      %3018 = vmatpush.xpose.msra.mxu0 0.0
      %3019 = vmatpush.xpose.msra.mxu0 0.0
      %3020 = vmatpush.xpose.msra.mxu0 0.0
      %3021 = vmatpush.xpose.msra.mxu0 0.0
      %3022 = vmatpush.xpose.msra.mxu0 0.0
      %3023 = vmatpush.xpose.msra.mxu0 0.0
      %3024 = vmatpush.xpose.msra.mxu0 0.0
      %3025 = vmatpush.xpose.msra.mxu0 %v3008
      %3026 = vmatmul.f32.gmra.mxu0 %v3006
      %v3027 = vpop.f32.mrf.mxu0
      %v3028 = vadd.f32 0.0, %v3027
      %3029 = vdwg.mxu0
      %v3030 = vmul.f32 %v3000, 0.35355338
      %v3031 = vmul.f32 %v3028, 0.35355338
      %v3032 = vsel %vm824, %v3030, -inf
      %3033 = vmax.xlane.f32.xlu0 %v3032
      %v3034 = vpop.xlane.xlu0 %3033
      %v3035 = vsel %vm824, %v3031, -inf
      %3036 = vmax.xlane.f32.xlu0 %v3035
      %v3037 = vpop.xlane.xlu0 %3036
      %v3038 = vsub.f32 %v3030, %v3034
      %v3039 = vsub.f32 %v3031, %v3037
      %v3040 = vmul.f32 %v3038, 1.442695
      %v3041 = vpow.pop %v3040
      %v3042 = vmul.f32 %v3039, 1.442695
      %v3043 = vpow.pop %v3042
      %v3044 = vsel %vm824, %v3041, 0.0
      %3045 = vadd.xlane.f32.xlu0 %v3044
      %v3046 = vpop.xlane.xlu0 %3045
      %v3047 = vsel %vm824, %v3043, 0.0
      %3048 = vadd.xlane.f32.xlu0 %v3047
      %v3049 = vpop.xlane.xlu0 %3048
      %v3050 = vrcp.pop %v3046
      %v3051 = vrcp.pop %v3049
      %v3052 = vmul.f32 %v3041, %v3050
      %v3053 = vmul.f32 %v3043, %v3051
      %3054 = vrot.lane.b32.xlu0 %v2707, 48
      %v3055 = vpop.permute.xlu0 %3054
      %v3058 = vsel %vm824, %v3052, 0
      %3060 = vmatpush.msra.mxu0 0.0
      %3061 = vmatpush.msra.mxu0 0.0
      %3062 = vmatpush.msra.mxu0 0.0
      %3063 = vmatpush.msra.mxu0 0.0
      %3064 = vmatpush.msra.mxu0 0.0
      %3065 = vmatpush.msra.mxu0 0.0
      %3066 = vmatpush.msra.mxu0 0.0
      %3067 = vmatpush.msra.mxu0 0.0
      %3068 = vmatpush.msra.mxu0 0.0
      %3069 = vmatpush.msra.mxu0 0.0
      %3070 = vmatpush.msra.mxu0 0.0
      %3071 = vmatpush.msra.mxu0 0.0
      %3072 = vmatpush.msra.mxu0 0.0
      %3073 = vmatpush.msra.mxu0 0.0
      %3074 = vmatpush.msra.mxu0 0.0
      %3075 = vmatpush.msra.mxu0 %v3055
      %3076 = vmatmul.f32.gmra.mxu0 %v3058
      %v3077 = vpop.f32.mrf.mxu0
      %v3078 = vadd.f32 0.0, %v3077
      %3079 = vdwg.mxu0
      %3080 = vrot.lane.b32.xlu0 %v2710, 48
      %v3081 = vpop.permute.xlu0 %3080
      %v3084 = vsel %vm824, %v3053, 0
      %3086 = vmatpush.msra.mxu0 0.0
      %3087 = vmatpush.msra.mxu0 0.0
      %3088 = vmatpush.msra.mxu0 0.0
      %3089 = vmatpush.msra.mxu0 0.0
      %3090 = vmatpush.msra.mxu0 0.0
      %3091 = vmatpush.msra.mxu0 0.0
      %3092 = vmatpush.msra.mxu0 0.0
      %3093 = vmatpush.msra.mxu0 0.0
      %3094 = vmatpush.msra.mxu0 0.0
      %3095 = vmatpush.msra.mxu0 0.0
      %3096 = vmatpush.msra.mxu0 0.0
      %3097 = vmatpush.msra.mxu0 0.0
      %3098 = vmatpush.msra.mxu0 0.0
      %3099 = vmatpush.msra.mxu0 0.0
      %3100 = vmatpush.msra.mxu0 0.0
      %3101 = vmatpush.msra.mxu0 %v3081
      %3102 = vmatmul.f32.gmra.mxu0 %v3084
      %v3103 = vpop.f32.mrf.mxu0
      %v3104 = vadd.f32 0.0, %v3103
      %3105 = vdwg.mxu0
      %3106 = vrot.lane.b32.xlu0 %v2707, 104
      %v3107 = vpop.permute.xlu0 %3106
      %3108 = vrot.lane.b32.xlu0 %v2707, 72
      %v3109 = vpop.permute.xlu0 %3108
      %v3110 = vsel %vm824, %v3107, 0
      %v3112 = vsel %vm824, %v3109, 0
      %3114 = vmatpush.xpose.msra.mxu0 0.0
      %3115 = vmatpush.xpose.msra.mxu0 0.0
      %3116 = vmatpush.xpose.msra.mxu0 0.0
      %3117 = vmatpush.xpose.msra.mxu0 0.0
      %3118 = vmatpush.xpose.msra.mxu0 0.0
      %3119 = vmatpush.xpose.msra.mxu0 0.0
      %3120 = vmatpush.xpose.msra.mxu0 0.0
      %3121 = vmatpush.xpose.msra.mxu0 0.0
      %3122 = vmatpush.xpose.msra.mxu0 0.0
      %3123 = vmatpush.xpose.msra.mxu0 0.0
      %3124 = vmatpush.xpose.msra.mxu0 0.0
      %3125 = vmatpush.xpose.msra.mxu0 0.0
      %3126 = vmatpush.xpose.msra.mxu0 0.0
      %3127 = vmatpush.xpose.msra.mxu0 0.0
      %3128 = vmatpush.xpose.msra.mxu0 0.0
      %3129 = vmatpush.xpose.msra.mxu0 %v3112
      %3130 = vmatmul.f32.gmra.mxu0 %v3110
      %v3131 = vpop.f32.mrf.mxu0
      %v3132 = vadd.f32 0.0, %v3131
      %3133 = vdwg.mxu0
      %3134 = vrot.lane.b32.xlu0 %v2710, 104
      %v3135 = vpop.permute.xlu0 %3134
      %3136 = vrot.lane.b32.xlu0 %v2710, 72
      %v3137 = vpop.permute.xlu0 %3136
      %v3138 = vsel %vm824, %v3135, 0
      %v3140 = vsel %vm824, %v3137, 0
      %3142 = vmatpush.xpose.msra.mxu0 0.0
      %3143 = vmatpush.xpose.msra.mxu0 0.0
      %3144 = vmatpush.xpose.msra.mxu0 0.0
      %3145 = vmatpush.xpose.msra.mxu0 0.0
      %3146 = vmatpush.xpose.msra.mxu0 0.0
      %3147 = vmatpush.xpose.msra.mxu0 0.0
      %3148 = vmatpush.xpose.msra.mxu0 0.0
      %3149 = vmatpush.xpose.msra.mxu0 0.0
      %3150 = vmatpush.xpose.msra.mxu0 0.0
      %3151 = vmatpush.xpose.msra.mxu0 0.0
      %3152 = vmatpush.xpose.msra.mxu0 0.0
      %3153 = vmatpush.xpose.msra.mxu0 0.0
      %3154 = vmatpush.xpose.msra.mxu0 0.0
      %3155 = vmatpush.xpose.msra.mxu0 0.0
      %3156 = vmatpush.xpose.msra.mxu0 0.0
      %3157 = vmatpush.xpose.msra.mxu0 %v3140
      %3158 = vmatmul.f32.gmra.mxu0 %v3138
      %v3159 = vpop.f32.mrf.mxu0
      %v3160 = vadd.f32 0.0, %v3159
      %3161 = vdwg.mxu0
      %v3162 = vmul.f32 %v3132, 0.35355338
      %v3163 = vmul.f32 %v3160, 0.35355338
      %v3164 = vsel %vm824, %v3162, -inf
      %3165 = vmax.xlane.f32.xlu0 %v3164
      %v3166 = vpop.xlane.xlu0 %3165
      %v3167 = vsel %vm824, %v3163, -inf
      %3168 = vmax.xlane.f32.xlu0 %v3167
      %v3169 = vpop.xlane.xlu0 %3168
      %v3170 = vsub.f32 %v3162, %v3166
      %v3171 = vsub.f32 %v3163, %v3169
      %v3172 = vmul.f32 %v3170, 1.442695
      %v3173 = vpow.pop %v3172
      %v3174 = vmul.f32 %v3171, 1.442695
      %v3175 = vpow.pop %v3174
      %v3176 = vsel %vm824, %v3173, 0.0
      %3177 = vadd.xlane.f32.xlu0 %v3176
      %v3178 = vpop.xlane.xlu0 %3177
      %v3179 = vsel %vm824, %v3175, 0.0
      %3180 = vadd.xlane.f32.xlu0 %v3179
      %v3181 = vpop.xlane.xlu0 %3180
      %v3182 = vrcp.pop %v3178
      %v3183 = vrcp.pop %v3181
      %v3184 = vmul.f32 %v3173, %v3182
      %v3185 = vmul.f32 %v3175, %v3183
      %3186 = vrot.lane.b32.xlu0 %v2707, 40
      %v3187 = vpop.permute.xlu0 %3186
      %v3190 = vsel %vm824, %v3184, 0
      %3192 = vmatpush.msra.mxu0 0.0
      %3193 = vmatpush.msra.mxu0 0.0
      %3194 = vmatpush.msra.mxu0 0.0
      %3195 = vmatpush.msra.mxu0 0.0
      %3196 = vmatpush.msra.mxu0 0.0
      %3197 = vmatpush.msra.mxu0 0.0
      %3198 = vmatpush.msra.mxu0 0.0
      %3199 = vmatpush.msra.mxu0 0.0
      %3200 = vmatpush.msra.mxu0 0.0
      %3201 = vmatpush.msra.mxu0 0.0
      %3202 = vmatpush.msra.mxu0 0.0
      %3203 = vmatpush.msra.mxu0 0.0
      %3204 = vmatpush.msra.mxu0 0.0
      %3205 = vmatpush.msra.mxu0 0.0
      %3206 = vmatpush.msra.mxu0 0.0
      %3207 = vmatpush.msra.mxu0 %v3187
      %3208 = vmatmul.f32.gmra.mxu0 %v3190
      %v3209 = vpop.f32.mrf.mxu0
      %v3210 = vadd.f32 0.0, %v3209
      %3211 = vdwg.mxu0
      %3212 = vrot.lane.b32.xlu0 %v2710, 40
      %v3213 = vpop.permute.xlu0 %3212
      %v3216 = vsel %vm824, %v3185, 0
      %3218 = vmatpush.msra.mxu0 0.0
      %3219 = vmatpush.msra.mxu0 0.0
      %3220 = vmatpush.msra.mxu0 0.0
      %3221 = vmatpush.msra.mxu0 0.0
      %3222 = vmatpush.msra.mxu0 0.0
      %3223 = vmatpush.msra.mxu0 0.0
      %3224 = vmatpush.msra.mxu0 0.0
      %3225 = vmatpush.msra.mxu0 0.0
      %3226 = vmatpush.msra.mxu0 0.0
      %3227 = vmatpush.msra.mxu0 0.0
      %3228 = vmatpush.msra.mxu0 0.0
      %3229 = vmatpush.msra.mxu0 0.0
      %3230 = vmatpush.msra.mxu0 0.0
      %3231 = vmatpush.msra.mxu0 0.0
      %3232 = vmatpush.msra.mxu0 0.0
      %3233 = vmatpush.msra.mxu0 %v3213
      %3234 = vmatmul.f32.gmra.mxu0 %v3216
      %v3235 = vpop.f32.mrf.mxu0
      %v3236 = vadd.f32 0.0, %v3235
      %3237 = vdwg.mxu0
      %3240 = vrot.lane.b32.xlu0 %v2946, 8
      %v3241 = vpop.permute.xlu0 %3240
      %3242 = vrot.lane.b32.xlu0 %v2972, 8
      %v3243 = vpop.permute.xlu0 %3242
      %3248 = vrot.lane.b32.xlu0 %v3078, 16
      %v3249 = vpop.permute.xlu0 %3248
      %3250 = vrot.lane.b32.xlu0 %v3104, 16
      %v3251 = vpop.permute.xlu0 %3250
      %3256 = vrot.lane.b32.xlu0 %v3210, 24
      %v3257 = vpop.permute.xlu0 %3256
      %3258 = vrot.lane.b32.xlu0 %v3236, 24
      %v3259 = vpop.permute.xlu0 %3258
      %v3262 = vsel %vm824, %v2814, %v3241
      %v3263 = vsel %vm824, %v2840, %v3243
      %v3264 = vsel %vm753, %v3262, %v3249
      %v3265 = vsel %vm753, %v3263, %v3251
      %v3266 = vsel %vm1376, %v3264, %v3257
      %v3267 = vsel %vm1376, %v3265, %v3259
      %s3268 = scalar_lea.vmem %s701, 32
      %v3269 = vld [vmem:[%s3268] sm:$0xff]
      %v3270 = vld [vmem:[%s3268 + $0x8] sm:$0xff]
      %v3271 = vld [vmem:[%s3268 + $0x10] sm:$0xff]
      %v3272 = vld [vmem:[%s3268 + $0x18] sm:$0xff]
      %s3273 = scalar_lea.vmem %s705, 1
      %v3274 = vld [vmem:[%s3273] sm:$0x1]
      %v3276 = vperm.slane %v3274, 0
      %v3279 = vsel %vm791, %v3266, 0
      %v3282 = vsel %vm791, %v3267, 0
      %3284 = vmatpush.msra.mxu0 0.0
      %3285 = vmatpush.msra.mxu0 0.0
      %3286 = vmatpush.msra.mxu0 0.0
      %3287 = vmatpush.msra.mxu0 0.0
      %3288 = vmatpush.msra.mxu0 0.0
      %3289 = vmatpush.msra.mxu0 0.0
      %3290 = vmatpush.msra.mxu0 0.0
      %3291 = vmatpush.msra.mxu0 0.0
      %3292 = vmatpush.msra.mxu0 0.0
      %3293 = vmatpush.msra.mxu0 0.0
      %3294 = vmatpush.msra.mxu0 0.0
      %3295 = vmatpush.msra.mxu0 0.0
      %3296 = vmatpush.msra.mxu0 %v3272
      %3297 = vmatpush.msra.mxu0 %v3271
      %3298 = vmatpush.msra.mxu0 %v3270
      %3299 = vmatpush.msra.mxu0 %v3269
      %3300 = vmatmul.f32.gmra.mxu0 %v3279
      %v3301 = vpop.f32.mrf.mxu0
      %v3302 = vadd.f32 %v3276, %v3301
      %3303 = vmatmul.f32.gmra.mxu0 %v3282
      %v3304 = vpop.f32.mrf.mxu0
      %v3305 = vadd.f32 %v3276, %v3304
      %3306 = vdwg.mxu0
      %s3307 = scalar_lea.vmem %s709, 1
      %v3308 = vld [vmem:[%s3307] sm:$0x1]
      %s3309 = scalar_lea.vmem %s713, 1
      %v3310 = vld [vmem:[%s3309] sm:$0x1]
      %v3311 = vadd.f32 %v2671, %v3302
      %v3312 = vadd.f32 %v2672, %v3305
      %v3313 = vsel %vm791, %v3311, 0.0
      %3314 = vadd.xlane.f32.xlu0 %v3313
      %v3315 = vpop.xlane.xlu0 %3314
      %v3316 = vsel %vm791, %v3312, 0.0
      %3317 = vadd.xlane.f32.xlu0 %v3316
      %v3318 = vpop.xlane.xlu0 %3317
      %v3319 = vmul.f32 %v3315, %v1432
      %v3320 = vmul.f32 %v3318, %v1432
      %v3321 = vsub.f32 %v3311, %v3319
      %v3322 = vsub.f32 %v3312, %v3320
      %v3323 = vmul.f32 %v3321, %v3321
      %v3324 = vmul.f32 %v3322, %v3322
      %v3325 = vsel %vm791, %v3323, 0.0
      %3326 = vadd.xlane.f32.xlu0 %v3325
      %v3327 = vpop.xlane.xlu0 %3326
      %v3328 = vsel %vm791, %v3324, 0.0
      %3329 = vadd.xlane.f32.xlu0 %v3328
      %v3330 = vpop.xlane.xlu0 %3329
      %v3331 = vmul.f32 %v3327, %v1432
      %v3332 = vmul.f32 %v3330, %v1432
      %v3333 = vadd.f32 %v3331, 1e-05
      %v3334 = vadd.f32 %v3332, 1e-05
      %v3335 = vrsqrt.pop %v3333
      %v3336 = vmul.f32 %v3335, %v3333
      %v3337 = vmul.f32 %v3336, %v3335
      %v3338 = vmul.f32 0.5, %v3337
      %v3339 = vsub.f32 1.5, %v3338
      %v3340 = vmul.f32 %v3335, %v3339
      %vm3341 = vweird.f32 %v3333
      %vm3342 = vweird.f32 %v3335
      %vm3343 = vmor %vm3341, %vm3342
      %v3344 = vsel %vm3343, %v3335, %v3340
      %v3345 = vrsqrt.pop %v3334
      %v3346 = vmul.f32 %v3345, %v3334
      %v3347 = vmul.f32 %v3346, %v3345
      %v3348 = vmul.f32 0.5, %v3347
      %v3349 = vsub.f32 1.5, %v3348
      %v3350 = vmul.f32 %v3345, %v3349
      %vm3351 = vweird.f32 %v3334
      %vm3352 = vweird.f32 %v3345
      %vm3353 = vmor %vm3351, %vm3352
      %v3354 = vsel %vm3353, %v3345, %v3350
      %v3355 = vmul.f32 %v3321, %v3344
      %v3356 = vmul.f32 %v3322, %v3354
      %v3358 = vperm.slane %v3308, 0
      %v3360 = vmul.f32 %v3355, %v3358
      %v3361 = vmul.f32 %v3356, %v3358
      %v3363 = vperm.slane %v3310, 0
      %v3365 = vadd.f32 %v3360, %v3363
      %v3366 = vadd.f32 %v3361, %v3363
      %s3367 = scalar_lea.vmem %s718, 512
      %v3368 = vld [vmem:[%s3367] sm:$0xff]
      %v3369 = vld [vmem:[%s3367 + $0x8] sm:$0xff]
      %v3370 = vld [vmem:[%s3367 + $0x10] sm:$0xff]
      %v3371 = vld [vmem:[%s3367 + $0x18] sm:$0xff]
      %v3372 = vld [vmem:[%s3367 + $0x20] sm:$0xff]
      %v3373 = vld [vmem:[%s3367 + $0x28] sm:$0xff]
      %v3374 = vld [vmem:[%s3367 + $0x30] sm:$0xff]
      %v3375 = vld [vmem:[%s3367 + $0x38] sm:$0xff]
      %v3376 = vld [vmem:[%s3367 + $0x40] sm:$0xff]
      %v3377 = vld [vmem:[%s3367 + $0x48] sm:$0xff]
      %v3378 = vld [vmem:[%s3367 + $0x50] sm:$0xff]
      %v3379 = vld [vmem:[%s3367 + $0x58] sm:$0xff]
      %v3380 = vld [vmem:[%s3367 + $0x60] sm:$0xff]
      %v3381 = vld [vmem:[%s3367 + $0x68] sm:$0xff]
      %v3382 = vld [vmem:[%s3367 + $0x70] sm:$0xff]
      %v3383 = vld [vmem:[%s3367 + $0x78] sm:$0xff]
      %v3384 = vld [vmem:[%s3367 + $0x80] sm:$0xff]
      %v3385 = vld [vmem:[%s3367 + $0x88] sm:$0xff]
      %v3386 = vld [vmem:[%s3367 + $0x90] sm:$0xff]
      %v3387 = vld [vmem:[%s3367 + $0x98] sm:$0xff]
      %v3388 = vld [vmem:[%s3367 + $0xa0] sm:$0xff]
      %v3389 = vld [vmem:[%s3367 + $0xa8] sm:$0xff]
      %v3390 = vld [vmem:[%s3367 + $0xb0] sm:$0xff]
      %v3391 = vld [vmem:[%s3367 + $0xb8] sm:$0xff]
      %v3392 = vld [vmem:[%s3367 + $0xc0] sm:$0xff]
      %v3393 = vld [vmem:[%s3367 + $0xc8] sm:$0xff]
      %v3394 = vld [vmem:[%s3367 + $0xd0] sm:$0xff]
      %v3395 = vld [vmem:[%s3367 + $0xd8] sm:$0xff]
      %v3396 = vld [vmem:[%s3367 + $0xe0] sm:$0xff]
      %v3397 = vld [vmem:[%s3367 + $0xe8] sm:$0xff]
      %v3398 = vld [vmem:[%s3367 + $0xf0] sm:$0xff]
      %v3399 = vld [vmem:[%s3367 + $0xf8] sm:$0xff]
      %v3400 = vld [vmem:[%s3367 + $0x100] sm:$0xff]
      %v3401 = vld [vmem:[%s3367 + $0x108] sm:$0xff]
      %v3402 = vld [vmem:[%s3367 + $0x110] sm:$0xff]
      %v3403 = vld [vmem:[%s3367 + $0x118] sm:$0xff]
      %v3404 = vld [vmem:[%s3367 + $0x120] sm:$0xff]
      %v3405 = vld [vmem:[%s3367 + $0x128] sm:$0xff]
      %v3406 = vld [vmem:[%s3367 + $0x130] sm:$0xff]
      %v3407 = vld [vmem:[%s3367 + $0x138] sm:$0xff]
      %v3408 = vld [vmem:[%s3367 + $0x140] sm:$0xff]
      %v3409 = vld [vmem:[%s3367 + $0x148] sm:$0xff]
      %v3410 = vld [vmem:[%s3367 + $0x150] sm:$0xff]
      %v3411 = vld [vmem:[%s3367 + $0x158] sm:$0xff]
      %v3412 = vld [vmem:[%s3367 + $0x160] sm:$0xff]
      %v3413 = vld [vmem:[%s3367 + $0x168] sm:$0xff]
      %v3414 = vld [vmem:[%s3367 + $0x170] sm:$0xff]
      %v3415 = vld [vmem:[%s3367 + $0x178] sm:$0xff]
      %v3416 = vld [vmem:[%s3367 + $0x180] sm:$0xff]
      %v3417 = vld [vmem:[%s3367 + $0x188] sm:$0xff]
      %v3418 = vld [vmem:[%s3367 + $0x190] sm:$0xff]
      %v3419 = vld [vmem:[%s3367 + $0x198] sm:$0xff]
      %v3420 = vld [vmem:[%s3367 + $0x1a0] sm:$0xff]
      %v3421 = vld [vmem:[%s3367 + $0x1a8] sm:$0xff]
      %v3422 = vld [vmem:[%s3367 + $0x1b0] sm:$0xff]
      %v3423 = vld [vmem:[%s3367 + $0x1b8] sm:$0xff]
      %v3424 = vld [vmem:[%s3367 + $0x1c0] sm:$0xff]
      %v3425 = vld [vmem:[%s3367 + $0x1c8] sm:$0xff]
      %v3426 = vld [vmem:[%s3367 + $0x1d0] sm:$0xff]
      %v3427 = vld [vmem:[%s3367 + $0x1d8] sm:$0xff]
      %v3428 = vld [vmem:[%s3367 + $0x1e0] sm:$0xff]
      %v3429 = vld [vmem:[%s3367 + $0x1e8] sm:$0xff]
      %v3430 = vld [vmem:[%s3367 + $0x1f0] sm:$0xff]
      %v3431 = vld [vmem:[%s3367 + $0x1f8] sm:$0xff]
      %s3432 = scalar_lea.vmem %s722, 16
      %v3433 = vld [vmem:[%s3432] sm:$0xff]
      %v3434 = vld [vmem:[%s3432 + $0x8] sm:$0xff]
      %v3437 = vperm.slane %v3433, 0
      %v3438 = vperm.slane %v3433, 1
      %v3439 = vperm.slane %v3433, 2
      %v3440 = vperm.slane %v3433, 3
      %v3441 = vperm.slane %v3433, 4
      %v3442 = vperm.slane %v3433, 5
      %v3443 = vperm.slane %v3433, 6
      %v3444 = vperm.slane %v3433, 7
      %v3445 = vperm.slane %v3434, 0
      %v3446 = vperm.slane %v3434, 1
      %v3447 = vperm.slane %v3434, 2
      %v3448 = vperm.slane %v3434, 3
      %v3449 = vperm.slane %v3434, 4
      %v3450 = vperm.slane %v3434, 5
      %v3451 = vperm.slane %v3434, 6
      %v3452 = vperm.slane %v3434, 7
      %v3470 = vsel %vm791, %v3365, 0
      %v3473 = vsel %vm791, %v3366, 0
      %3475 = vmatpush.msra.mxu0 0.0
      %3476 = vmatpush.msra.mxu0 0.0
      %3477 = vmatpush.msra.mxu0 0.0
      %3478 = vmatpush.msra.mxu0 0.0
      %3479 = vmatpush.msra.mxu0 0.0
      %3480 = vmatpush.msra.mxu0 0.0
      %3481 = vmatpush.msra.mxu0 0.0
      %3482 = vmatpush.msra.mxu0 0.0
      %3483 = vmatpush.msra.mxu0 0.0
      %3484 = vmatpush.msra.mxu0 0.0
      %3485 = vmatpush.msra.mxu0 0.0
      %3486 = vmatpush.msra.mxu0 0.0
      %3487 = vmatpush.msra.mxu0 %v3416
      %3488 = vmatpush.msra.mxu0 %v3400
      %3489 = vmatpush.msra.mxu0 %v3384
      %3490 = vmatpush.msra.mxu0 %v3368
      %3491 = vmatmul.f32.gmra.mxu0 %v3470
      %v3492 = vpop.f32.mrf.mxu0
      %v3493 = vadd.f32 %v3437, %v3492
      %3494 = vmatmul.f32.gmra.mxu0 %v3473
      %v3495 = vpop.f32.mrf.mxu0
      %v3496 = vadd.f32 %v3437, %v3495
      %3497 = vdwg.mxu0
      %3498 = vmatpush.msra.mxu0 0.0
      %3499 = vmatpush.msra.mxu0 0.0
      %3500 = vmatpush.msra.mxu0 0.0
      %3501 = vmatpush.msra.mxu0 0.0
      %3502 = vmatpush.msra.mxu0 0.0
      %3503 = vmatpush.msra.mxu0 0.0
      %3504 = vmatpush.msra.mxu0 0.0
      %3505 = vmatpush.msra.mxu0 0.0
      %3506 = vmatpush.msra.mxu0 0.0
      %3507 = vmatpush.msra.mxu0 0.0
      %3508 = vmatpush.msra.mxu0 0.0
      %3509 = vmatpush.msra.mxu0 0.0
      %3510 = vmatpush.msra.mxu0 %v3417
      %3511 = vmatpush.msra.mxu0 %v3401
      %3512 = vmatpush.msra.mxu0 %v3385
      %3513 = vmatpush.msra.mxu0 %v3369
      %3514 = vmatmul.f32.gmra.mxu0 %v3470
      %v3515 = vpop.f32.mrf.mxu0
      %v3516 = vadd.f32 %v3438, %v3515
      %3517 = vmatmul.f32.gmra.mxu0 %v3473
      %v3518 = vpop.f32.mrf.mxu0
      %v3519 = vadd.f32 %v3438, %v3518
      %3520 = vdwg.mxu0
      %3521 = vmatpush.msra.mxu0 0.0
      %3522 = vmatpush.msra.mxu0 0.0
      %3523 = vmatpush.msra.mxu0 0.0
      %3524 = vmatpush.msra.mxu0 0.0
      %3525 = vmatpush.msra.mxu0 0.0
      %3526 = vmatpush.msra.mxu0 0.0
      %3527 = vmatpush.msra.mxu0 0.0
      %3528 = vmatpush.msra.mxu0 0.0
      %3529 = vmatpush.msra.mxu0 0.0
      %3530 = vmatpush.msra.mxu0 0.0
      %3531 = vmatpush.msra.mxu0 0.0
      %3532 = vmatpush.msra.mxu0 0.0
      %3533 = vmatpush.msra.mxu0 %v3418
      %3534 = vmatpush.msra.mxu0 %v3402
      %3535 = vmatpush.msra.mxu0 %v3386
      %3536 = vmatpush.msra.mxu0 %v3370
      %3537 = vmatmul.f32.gmra.mxu0 %v3470
      %v3538 = vpop.f32.mrf.mxu0
      %v3539 = vadd.f32 %v3439, %v3538
      %3540 = vmatmul.f32.gmra.mxu0 %v3473
      %v3541 = vpop.f32.mrf.mxu0
      %v3542 = vadd.f32 %v3439, %v3541
      %3543 = vdwg.mxu0
      %3544 = vmatpush.msra.mxu0 0.0
      %3545 = vmatpush.msra.mxu0 0.0
      %3546 = vmatpush.msra.mxu0 0.0
      %3547 = vmatpush.msra.mxu0 0.0
      %3548 = vmatpush.msra.mxu0 0.0
      %3549 = vmatpush.msra.mxu0 0.0
      %3550 = vmatpush.msra.mxu0 0.0
      %3551 = vmatpush.msra.mxu0 0.0
      %3552 = vmatpush.msra.mxu0 0.0
      %3553 = vmatpush.msra.mxu0 0.0
      %3554 = vmatpush.msra.mxu0 0.0
      %3555 = vmatpush.msra.mxu0 0.0
      %3556 = vmatpush.msra.mxu0 %v3419
      %3557 = vmatpush.msra.mxu0 %v3403
      %3558 = vmatpush.msra.mxu0 %v3387
      %3559 = vmatpush.msra.mxu0 %v3371
      %3560 = vmatmul.f32.gmra.mxu0 %v3470
      %v3561 = vpop.f32.mrf.mxu0
      %v3562 = vadd.f32 %v3440, %v3561
      %3563 = vmatmul.f32.gmra.mxu0 %v3473
      %v3564 = vpop.f32.mrf.mxu0
      %v3565 = vadd.f32 %v3440, %v3564
      %3566 = vdwg.mxu0
      %3567 = vmatpush.msra.mxu0 0.0
      %3568 = vmatpush.msra.mxu0 0.0
      %3569 = vmatpush.msra.mxu0 0.0
      %3570 = vmatpush.msra.mxu0 0.0
      %3571 = vmatpush.msra.mxu0 0.0
      %3572 = vmatpush.msra.mxu0 0.0
      %3573 = vmatpush.msra.mxu0 0.0
      %3574 = vmatpush.msra.mxu0 0.0
      %3575 = vmatpush.msra.mxu0 0.0
      %3576 = vmatpush.msra.mxu0 0.0
      %3577 = vmatpush.msra.mxu0 0.0
      %3578 = vmatpush.msra.mxu0 0.0
      %3579 = vmatpush.msra.mxu0 %v3420
      %3580 = vmatpush.msra.mxu0 %v3404
      %3581 = vmatpush.msra.mxu0 %v3388
      %3582 = vmatpush.msra.mxu0 %v3372
      %3583 = vmatmul.f32.gmra.mxu0 %v3470
      %v3584 = vpop.f32.mrf.mxu0
      %v3585 = vadd.f32 %v3441, %v3584
      %3586 = vmatmul.f32.gmra.mxu0 %v3473
      %v3587 = vpop.f32.mrf.mxu0
      %v3588 = vadd.f32 %v3441, %v3587
      %3589 = vdwg.mxu0
      %3590 = vmatpush.msra.mxu0 0.0
      %3591 = vmatpush.msra.mxu0 0.0
      %3592 = vmatpush.msra.mxu0 0.0
      %3593 = vmatpush.msra.mxu0 0.0
      %3594 = vmatpush.msra.mxu0 0.0
      %3595 = vmatpush.msra.mxu0 0.0
      %3596 = vmatpush.msra.mxu0 0.0
      %3597 = vmatpush.msra.mxu0 0.0
      %3598 = vmatpush.msra.mxu0 0.0
      %3599 = vmatpush.msra.mxu0 0.0
      %3600 = vmatpush.msra.mxu0 0.0
      %3601 = vmatpush.msra.mxu0 0.0
      %3602 = vmatpush.msra.mxu0 %v3421
      %3603 = vmatpush.msra.mxu0 %v3405
      %3604 = vmatpush.msra.mxu0 %v3389
      %3605 = vmatpush.msra.mxu0 %v3373
      %3606 = vmatmul.f32.gmra.mxu0 %v3470
      %v3607 = vpop.f32.mrf.mxu0
      %v3608 = vadd.f32 %v3442, %v3607
      %3609 = vmatmul.f32.gmra.mxu0 %v3473
      %v3610 = vpop.f32.mrf.mxu0
      %v3611 = vadd.f32 %v3442, %v3610
      %3612 = vdwg.mxu0
      %3613 = vmatpush.msra.mxu0 0.0
      %3614 = vmatpush.msra.mxu0 0.0
      %3615 = vmatpush.msra.mxu0 0.0
      %3616 = vmatpush.msra.mxu0 0.0
      %3617 = vmatpush.msra.mxu0 0.0
      %3618 = vmatpush.msra.mxu0 0.0
      %3619 = vmatpush.msra.mxu0 0.0
      %3620 = vmatpush.msra.mxu0 0.0
      %3621 = vmatpush.msra.mxu0 0.0
      %3622 = vmatpush.msra.mxu0 0.0
      %3623 = vmatpush.msra.mxu0 0.0
      %3624 = vmatpush.msra.mxu0 0.0
      %3625 = vmatpush.msra.mxu0 %v3422
      %3626 = vmatpush.msra.mxu0 %v3406
      %3627 = vmatpush.msra.mxu0 %v3390
      %3628 = vmatpush.msra.mxu0 %v3374
      %3629 = vmatmul.f32.gmra.mxu0 %v3470
      %v3630 = vpop.f32.mrf.mxu0
      %v3631 = vadd.f32 %v3443, %v3630
      %3632 = vmatmul.f32.gmra.mxu0 %v3473
      %v3633 = vpop.f32.mrf.mxu0
      %v3634 = vadd.f32 %v3443, %v3633
      %3635 = vdwg.mxu0
      %3636 = vmatpush.msra.mxu0 0.0
      %3637 = vmatpush.msra.mxu0 0.0
      %3638 = vmatpush.msra.mxu0 0.0
      %3639 = vmatpush.msra.mxu0 0.0
      %3640 = vmatpush.msra.mxu0 0.0
      %3641 = vmatpush.msra.mxu0 0.0
      %3642 = vmatpush.msra.mxu0 0.0
      %3643 = vmatpush.msra.mxu0 0.0
      %3644 = vmatpush.msra.mxu0 0.0
      %3645 = vmatpush.msra.mxu0 0.0
      %3646 = vmatpush.msra.mxu0 0.0
      %3647 = vmatpush.msra.mxu0 0.0
      %3648 = vmatpush.msra.mxu0 %v3423
      %3649 = vmatpush.msra.mxu0 %v3407
      %3650 = vmatpush.msra.mxu0 %v3391
      %3651 = vmatpush.msra.mxu0 %v3375
      %3652 = vmatmul.f32.gmra.mxu0 %v3470
      %v3653 = vpop.f32.mrf.mxu0
      %v3654 = vadd.f32 %v3444, %v3653
      %3655 = vmatmul.f32.gmra.mxu0 %v3473
      %v3656 = vpop.f32.mrf.mxu0
      %v3657 = vadd.f32 %v3444, %v3656
      %3658 = vdwg.mxu0
      %3659 = vmatpush.msra.mxu0 0.0
      %3660 = vmatpush.msra.mxu0 0.0
      %3661 = vmatpush.msra.mxu0 0.0
      %3662 = vmatpush.msra.mxu0 0.0
      %3663 = vmatpush.msra.mxu0 0.0
      %3664 = vmatpush.msra.mxu0 0.0
      %3665 = vmatpush.msra.mxu0 0.0
      %3666 = vmatpush.msra.mxu0 0.0
      %3667 = vmatpush.msra.mxu0 0.0
      %3668 = vmatpush.msra.mxu0 0.0
      %3669 = vmatpush.msra.mxu0 0.0
      %3670 = vmatpush.msra.mxu0 0.0
      %3671 = vmatpush.msra.mxu0 %v3424
      %3672 = vmatpush.msra.mxu0 %v3408
      %3673 = vmatpush.msra.mxu0 %v3392
      %3674 = vmatpush.msra.mxu0 %v3376
      %3675 = vmatmul.f32.gmra.mxu0 %v3470
      %v3676 = vpop.f32.mrf.mxu0
      %v3677 = vadd.f32 %v3445, %v3676
      %3678 = vmatmul.f32.gmra.mxu0 %v3473
      %v3679 = vpop.f32.mrf.mxu0
      %v3680 = vadd.f32 %v3445, %v3679
      %3681 = vdwg.mxu0
      %3682 = vmatpush.msra.mxu0 0.0
      %3683 = vmatpush.msra.mxu0 0.0
      %3684 = vmatpush.msra.mxu0 0.0
      %3685 = vmatpush.msra.mxu0 0.0
      %3686 = vmatpush.msra.mxu0 0.0
      %3687 = vmatpush.msra.mxu0 0.0
      %3688 = vmatpush.msra.mxu0 0.0
      %3689 = vmatpush.msra.mxu0 0.0
      %3690 = vmatpush.msra.mxu0 0.0
      %3691 = vmatpush.msra.mxu0 0.0
      %3692 = vmatpush.msra.mxu0 0.0
      %3693 = vmatpush.msra.mxu0 0.0
      %3694 = vmatpush.msra.mxu0 %v3425
      %3695 = vmatpush.msra.mxu0 %v3409
      %3696 = vmatpush.msra.mxu0 %v3393
      %3697 = vmatpush.msra.mxu0 %v3377
      %3698 = vmatmul.f32.gmra.mxu0 %v3470
      %v3699 = vpop.f32.mrf.mxu0
      %v3700 = vadd.f32 %v3446, %v3699
      %3701 = vmatmul.f32.gmra.mxu0 %v3473
      %v3702 = vpop.f32.mrf.mxu0
      %v3703 = vadd.f32 %v3446, %v3702
      %3704 = vdwg.mxu0
      %3705 = vmatpush.msra.mxu0 0.0
      %3706 = vmatpush.msra.mxu0 0.0
      %3707 = vmatpush.msra.mxu0 0.0
      %3708 = vmatpush.msra.mxu0 0.0
      %3709 = vmatpush.msra.mxu0 0.0
      %3710 = vmatpush.msra.mxu0 0.0
      %3711 = vmatpush.msra.mxu0 0.0
      %3712 = vmatpush.msra.mxu0 0.0
      %3713 = vmatpush.msra.mxu0 0.0
      %3714 = vmatpush.msra.mxu0 0.0
      %3715 = vmatpush.msra.mxu0 0.0
      %3716 = vmatpush.msra.mxu0 0.0
      %3717 = vmatpush.msra.mxu0 %v3426
      %3718 = vmatpush.msra.mxu0 %v3410
      %3719 = vmatpush.msra.mxu0 %v3394
      %3720 = vmatpush.msra.mxu0 %v3378
      %3721 = vmatmul.f32.gmra.mxu0 %v3470
      %v3722 = vpop.f32.mrf.mxu0
      %v3723 = vadd.f32 %v3447, %v3722
      %3724 = vmatmul.f32.gmra.mxu0 %v3473
      %v3725 = vpop.f32.mrf.mxu0
      %v3726 = vadd.f32 %v3447, %v3725
      %3727 = vdwg.mxu0
      %3728 = vmatpush.msra.mxu0 0.0
      %3729 = vmatpush.msra.mxu0 0.0
      %3730 = vmatpush.msra.mxu0 0.0
      %3731 = vmatpush.msra.mxu0 0.0
      %3732 = vmatpush.msra.mxu0 0.0
      %3733 = vmatpush.msra.mxu0 0.0
      %3734 = vmatpush.msra.mxu0 0.0
      %3735 = vmatpush.msra.mxu0 0.0
      %3736 = vmatpush.msra.mxu0 0.0
      %3737 = vmatpush.msra.mxu0 0.0
      %3738 = vmatpush.msra.mxu0 0.0
      %3739 = vmatpush.msra.mxu0 0.0
      %3740 = vmatpush.msra.mxu0 %v3427
      %3741 = vmatpush.msra.mxu0 %v3411
      %3742 = vmatpush.msra.mxu0 %v3395
      %3743 = vmatpush.msra.mxu0 %v3379
      %3744 = vmatmul.f32.gmra.mxu0 %v3470
      %v3745 = vpop.f32.mrf.mxu0
      %v3746 = vadd.f32 %v3448, %v3745
      %3747 = vmatmul.f32.gmra.mxu0 %v3473
      %v3748 = vpop.f32.mrf.mxu0
      %v3749 = vadd.f32 %v3448, %v3748
      %3750 = vdwg.mxu0
      %3751 = vmatpush.msra.mxu0 0.0
      %3752 = vmatpush.msra.mxu0 0.0
      %3753 = vmatpush.msra.mxu0 0.0
      %3754 = vmatpush.msra.mxu0 0.0
      %3755 = vmatpush.msra.mxu0 0.0
      %3756 = vmatpush.msra.mxu0 0.0
      %3757 = vmatpush.msra.mxu0 0.0
      %3758 = vmatpush.msra.mxu0 0.0
      %3759 = vmatpush.msra.mxu0 0.0
      %3760 = vmatpush.msra.mxu0 0.0
      %3761 = vmatpush.msra.mxu0 0.0
      %3762 = vmatpush.msra.mxu0 0.0
      %3763 = vmatpush.msra.mxu0 %v3428
      %3764 = vmatpush.msra.mxu0 %v3412
      %3765 = vmatpush.msra.mxu0 %v3396
      %3766 = vmatpush.msra.mxu0 %v3380
      %3767 = vmatmul.f32.gmra.mxu0 %v3470
      %v3768 = vpop.f32.mrf.mxu0
      %v3769 = vadd.f32 %v3449, %v3768
      %3770 = vmatmul.f32.gmra.mxu0 %v3473
      %v3771 = vpop.f32.mrf.mxu0
      %v3772 = vadd.f32 %v3449, %v3771
      %3773 = vdwg.mxu0
      %3774 = vmatpush.msra.mxu0 0.0
      %3775 = vmatpush.msra.mxu0 0.0
      %3776 = vmatpush.msra.mxu0 0.0
      %3777 = vmatpush.msra.mxu0 0.0
      %3778 = vmatpush.msra.mxu0 0.0
      %3779 = vmatpush.msra.mxu0 0.0
      %3780 = vmatpush.msra.mxu0 0.0
      %3781 = vmatpush.msra.mxu0 0.0
      %3782 = vmatpush.msra.mxu0 0.0
      %3783 = vmatpush.msra.mxu0 0.0
      %3784 = vmatpush.msra.mxu0 0.0
      %3785 = vmatpush.msra.mxu0 0.0
      %3786 = vmatpush.msra.mxu0 %v3429
      %3787 = vmatpush.msra.mxu0 %v3413
      %3788 = vmatpush.msra.mxu0 %v3397
      %3789 = vmatpush.msra.mxu0 %v3381
      %3790 = vmatmul.f32.gmra.mxu0 %v3470
      %v3791 = vpop.f32.mrf.mxu0
      %v3792 = vadd.f32 %v3450, %v3791
      %3793 = vmatmul.f32.gmra.mxu0 %v3473
      %v3794 = vpop.f32.mrf.mxu0
      %v3795 = vadd.f32 %v3450, %v3794
      %3796 = vdwg.mxu0
      %3797 = vmatpush.msra.mxu0 0.0
      %3798 = vmatpush.msra.mxu0 0.0
      %3799 = vmatpush.msra.mxu0 0.0
      %3800 = vmatpush.msra.mxu0 0.0
      %3801 = vmatpush.msra.mxu0 0.0
      %3802 = vmatpush.msra.mxu0 0.0
      %3803 = vmatpush.msra.mxu0 0.0
      %3804 = vmatpush.msra.mxu0 0.0
      %3805 = vmatpush.msra.mxu0 0.0
      %3806 = vmatpush.msra.mxu0 0.0
      %3807 = vmatpush.msra.mxu0 0.0
      %3808 = vmatpush.msra.mxu0 0.0
      %3809 = vmatpush.msra.mxu0 %v3430
      %3810 = vmatpush.msra.mxu0 %v3414
      %3811 = vmatpush.msra.mxu0 %v3398
      %3812 = vmatpush.msra.mxu0 %v3382
      %3813 = vmatmul.f32.gmra.mxu0 %v3470
      %v3814 = vpop.f32.mrf.mxu0
      %v3815 = vadd.f32 %v3451, %v3814
      %3816 = vmatmul.f32.gmra.mxu0 %v3473
      %v3817 = vpop.f32.mrf.mxu0
      %v3818 = vadd.f32 %v3451, %v3817
      %3819 = vdwg.mxu0
      %3820 = vmatpush.msra.mxu0 0.0
      %3821 = vmatpush.msra.mxu0 0.0
      %3822 = vmatpush.msra.mxu0 0.0
      %3823 = vmatpush.msra.mxu0 0.0
      %3824 = vmatpush.msra.mxu0 0.0
      %3825 = vmatpush.msra.mxu0 0.0
      %3826 = vmatpush.msra.mxu0 0.0
      %3827 = vmatpush.msra.mxu0 0.0
      %3828 = vmatpush.msra.mxu0 0.0
      %3829 = vmatpush.msra.mxu0 0.0
      %3830 = vmatpush.msra.mxu0 0.0
      %3831 = vmatpush.msra.mxu0 0.0
      %3832 = vmatpush.msra.mxu0 %v3431
      %3833 = vmatpush.msra.mxu0 %v3415
      %3834 = vmatpush.msra.mxu0 %v3399
      %3835 = vmatpush.msra.mxu0 %v3383
      %3836 = vmatmul.f32.gmra.mxu0 %v3470
      %v3837 = vpop.f32.mrf.mxu0
      %v3838 = vadd.f32 %v3452, %v3837
      %3839 = vmatmul.f32.gmra.mxu0 %v3473
      %v3840 = vpop.f32.mrf.mxu0
      %v3841 = vadd.f32 %v3452, %v3840
      %3842 = vdwg.mxu0
      %v3843 = vmax.f32 %v3493, 0.0
      %v3844 = vmax.f32 %v3516, 0.0
      %v3845 = vmax.f32 %v3539, 0.0
      %v3846 = vmax.f32 %v3562, 0.0
      %v3847 = vmax.f32 %v3585, 0.0
      %v3848 = vmax.f32 %v3608, 0.0
      %v3849 = vmax.f32 %v3631, 0.0
      %v3850 = vmax.f32 %v3654, 0.0
      %v3851 = vmax.f32 %v3677, 0.0
      %v3852 = vmax.f32 %v3700, 0.0
      %v3853 = vmax.f32 %v3723, 0.0
      %v3854 = vmax.f32 %v3746, 0.0
      %v3855 = vmax.f32 %v3769, 0.0
      %v3856 = vmax.f32 %v3792, 0.0
      %v3857 = vmax.f32 %v3815, 0.0
      %v3858 = vmax.f32 %v3838, 0.0
      %v3859 = vmax.f32 %v3496, 0.0
      %v3860 = vmax.f32 %v3519, 0.0
      %v3861 = vmax.f32 %v3542, 0.0
      %v3862 = vmax.f32 %v3565, 0.0
      %v3863 = vmax.f32 %v3588, 0.0
      %v3864 = vmax.f32 %v3611, 0.0
      %v3865 = vmax.f32 %v3634, 0.0
      %v3866 = vmax.f32 %v3657, 0.0
      %v3867 = vmax.f32 %v3680, 0.0
      %v3868 = vmax.f32 %v3703, 0.0
      %v3869 = vmax.f32 %v3726, 0.0
      %v3870 = vmax.f32 %v3749, 0.0
      %v3871 = vmax.f32 %v3772, 0.0
      %v3872 = vmax.f32 %v3795, 0.0
      %v3873 = vmax.f32 %v3818, 0.0
      %v3874 = vmax.f32 %v3841, 0.0
      %s3875 = scalar_lea.vmem %s727, 2048
      %v3876 = vld [vmem:[%s3875] sm:$0xff]
      %v3877 = vld [vmem:[%s3875 + $0x8] sm:$0xff]
      %v3878 = vld [vmem:[%s3875 + $0x10] sm:$0xff]
      %v3879 = vld [vmem:[%s3875 + $0x18] sm:$0xff]
      %v3880 = vld [vmem:[%s3875 + $0x20] sm:$0xff]
      %v3881 = vld [vmem:[%s3875 + $0x28] sm:$0xff]
      %v3882 = vld [vmem:[%s3875 + $0x30] sm:$0xff]
      %v3883 = vld [vmem:[%s3875 + $0x38] sm:$0xff]
      %v3884 = vld [vmem:[%s3875 + $0x40] sm:$0xff]
      %v3885 = vld [vmem:[%s3875 + $0x48] sm:$0xff]
      %v3886 = vld [vmem:[%s3875 + $0x50] sm:$0xff]
      %v3887 = vld [vmem:[%s3875 + $0x58] sm:$0xff]
      %v3888 = vld [vmem:[%s3875 + $0x60] sm:$0xff]
      %v3889 = vld [vmem:[%s3875 + $0x68] sm:$0xff]
      %v3890 = vld [vmem:[%s3875 + $0x70] sm:$0xff]
      %v3891 = vld [vmem:[%s3875 + $0x78] sm:$0xff]
      %v3892 = vld [vmem:[%s3875 + $0x80] sm:$0xff]
      %v3893 = vld [vmem:[%s3875 + $0x88] sm:$0xff]
      %v3894 = vld [vmem:[%s3875 + $0x90] sm:$0xff]
      %v3895 = vld [vmem:[%s3875 + $0x98] sm:$0xff]
      %v3896 = vld [vmem:[%s3875 + $0xa0] sm:$0xff]
      %v3897 = vld [vmem:[%s3875 + $0xa8] sm:$0xff]
      %v3898 = vld [vmem:[%s3875 + $0xb0] sm:$0xff]
      %v3899 = vld [vmem:[%s3875 + $0xb8] sm:$0xff]
      %v3900 = vld [vmem:[%s3875 + $0xc0] sm:$0xff]
      %v3901 = vld [vmem:[%s3875 + $0xc8] sm:$0xff]
      %v3902 = vld [vmem:[%s3875 + $0xd0] sm:$0xff]
      %v3903 = vld [vmem:[%s3875 + $0xd8] sm:$0xff]
      %v3904 = vld [vmem:[%s3875 + $0xe0] sm:$0xff]
      %v3905 = vld [vmem:[%s3875 + $0xe8] sm:$0xff]
      %v3906 = vld [vmem:[%s3875 + $0xf0] sm:$0xff]
      %v3907 = vld [vmem:[%s3875 + $0xf8] sm:$0xff]
      %v3908 = vld [vmem:[%s3875 + $0x100] sm:$0xff]
      %v3909 = vld [vmem:[%s3875 + $0x108] sm:$0xff]
      %v3910 = vld [vmem:[%s3875 + $0x110] sm:$0xff]
      %v3911 = vld [vmem:[%s3875 + $0x118] sm:$0xff]
      %v3912 = vld [vmem:[%s3875 + $0x120] sm:$0xff]
      %v3913 = vld [vmem:[%s3875 + $0x128] sm:$0xff]
      %v3914 = vld [vmem:[%s3875 + $0x130] sm:$0xff]
      %v3915 = vld [vmem:[%s3875 + $0x138] sm:$0xff]
      %v3916 = vld [vmem:[%s3875 + $0x140] sm:$0xff]
      %v3917 = vld [vmem:[%s3875 + $0x148] sm:$0xff]
      %v3918 = vld [vmem:[%s3875 + $0x150] sm:$0xff]
      %v3919 = vld [vmem:[%s3875 + $0x158] sm:$0xff]
      %v3920 = vld [vmem:[%s3875 + $0x160] sm:$0xff]
      %v3921 = vld [vmem:[%s3875 + $0x168] sm:$0xff]
      %v3922 = vld [vmem:[%s3875 + $0x170] sm:$0xff]
      %v3923 = vld [vmem:[%s3875 + $0x178] sm:$0xff]
      %v3924 = vld [vmem:[%s3875 + $0x180] sm:$0xff]
      %v3925 = vld [vmem:[%s3875 + $0x188] sm:$0xff]
      %v3926 = vld [vmem:[%s3875 + $0x190] sm:$0xff]
      %v3927 = vld [vmem:[%s3875 + $0x198] sm:$0xff]
      %v3928 = vld [vmem:[%s3875 + $0x1a0] sm:$0xff]
      %v3929 = vld [vmem:[%s3875 + $0x1a8] sm:$0xff]
      %v3930 = vld [vmem:[%s3875 + $0x1b0] sm:$0xff]
      %v3931 = vld [vmem:[%s3875 + $0x1b8] sm:$0xff]
      %v3932 = vld [vmem:[%s3875 + $0x1c0] sm:$0xff]
      %v3933 = vld [vmem:[%s3875 + $0x1c8] sm:$0xff]
      %v3934 = vld [vmem:[%s3875 + $0x1d0] sm:$0xff]
      %v3935 = vld [vmem:[%s3875 + $0x1d8] sm:$0xff]
      %v3936 = vld [vmem:[%s3875 + $0x1e0] sm:$0xff]
      %v3937 = vld [vmem:[%s3875 + $0x1e8] sm:$0xff]
      %v3938 = vld [vmem:[%s3875 + $0x1f0] sm:$0xff]
      %v3939 = vld [vmem:[%s3875 + $0x1f8] sm:$0xff]
      %v3940 = vld [vmem:[%s3875 + $0x200] sm:$0xff]
      %v3941 = vld [vmem:[%s3875 + $0x208] sm:$0xff]
      %v3942 = vld [vmem:[%s3875 + $0x210] sm:$0xff]
      %v3943 = vld [vmem:[%s3875 + $0x218] sm:$0xff]
      %v3944 = vld [vmem:[%s3875 + $0x220] sm:$0xff]
      %v3945 = vld [vmem:[%s3875 + $0x228] sm:$0xff]
      %v3946 = vld [vmem:[%s3875 + $0x230] sm:$0xff]
      %v3947 = vld [vmem:[%s3875 + $0x238] sm:$0xff]
      %v3948 = vld [vmem:[%s3875 + $0x240] sm:$0xff]
      %v3949 = vld [vmem:[%s3875 + $0x248] sm:$0xff]
      %v3950 = vld [vmem:[%s3875 + $0x250] sm:$0xff]
      %v3951 = vld [vmem:[%s3875 + $0x258] sm:$0xff]
      %v3952 = vld [vmem:[%s3875 + $0x260] sm:$0xff]
      %v3953 = vld [vmem:[%s3875 + $0x268] sm:$0xff]
      %v3954 = vld [vmem:[%s3875 + $0x270] sm:$0xff]
      %v3955 = vld [vmem:[%s3875 + $0x278] sm:$0xff]
      %v3956 = vld [vmem:[%s3875 + $0x280] sm:$0xff]
      %v3957 = vld [vmem:[%s3875 + $0x288] sm:$0xff]
      %v3958 = vld [vmem:[%s3875 + $0x290] sm:$0xff]
      %v3959 = vld [vmem:[%s3875 + $0x298] sm:$0xff]
      %v3960 = vld [vmem:[%s3875 + $0x2a0] sm:$0xff]
      %v3961 = vld [vmem:[%s3875 + $0x2a8] sm:$0xff]
      %v3962 = vld [vmem:[%s3875 + $0x2b0] sm:$0xff]
      %v3963 = vld [vmem:[%s3875 + $0x2b8] sm:$0xff]
      %v3964 = vld [vmem:[%s3875 + $0x2c0] sm:$0xff]
      %v3965 = vld [vmem:[%s3875 + $0x2c8] sm:$0xff]
      %v3966 = vld [vmem:[%s3875 + $0x2d0] sm:$0xff]
      %v3967 = vld [vmem:[%s3875 + $0x2d8] sm:$0xff]
      %v3968 = vld [vmem:[%s3875 + $0x2e0] sm:$0xff]
      %v3969 = vld [vmem:[%s3875 + $0x2e8] sm:$0xff]
      %v3970 = vld [vmem:[%s3875 + $0x2f0] sm:$0xff]
      %v3971 = vld [vmem:[%s3875 + $0x2f8] sm:$0xff]
      %v3972 = vld [vmem:[%s3875 + $0x300] sm:$0xff]
      %v3973 = vld [vmem:[%s3875 + $0x308] sm:$0xff]
      %v3974 = vld [vmem:[%s3875 + $0x310] sm:$0xff]
      %v3975 = vld [vmem:[%s3875 + $0x318] sm:$0xff]
      %v3976 = vld [vmem:[%s3875 + $0x320] sm:$0xff]
      %v3977 = vld [vmem:[%s3875 + $0x328] sm:$0xff]
      %v3978 = vld [vmem:[%s3875 + $0x330] sm:$0xff]
      %v3979 = vld [vmem:[%s3875 + $0x338] sm:$0xff]
      %v3980 = vld [vmem:[%s3875 + $0x340] sm:$0xff]
      %v3981 = vld [vmem:[%s3875 + $0x348] sm:$0xff]
      %v3982 = vld [vmem:[%s3875 + $0x350] sm:$0xff]
      %v3983 = vld [vmem:[%s3875 + $0x358] sm:$0xff]
      %v3984 = vld [vmem:[%s3875 + $0x360] sm:$0xff]
      %v3985 = vld [vmem:[%s3875 + $0x368] sm:$0xff]
      %v3986 = vld [vmem:[%s3875 + $0x370] sm:$0xff]
      %v3987 = vld [vmem:[%s3875 + $0x378] sm:$0xff]
      %v3988 = vld [vmem:[%s3875 + $0x380] sm:$0xff]
      %v3989 = vld [vmem:[%s3875 + $0x388] sm:$0xff]
      %v3990 = vld [vmem:[%s3875 + $0x390] sm:$0xff]
      %v3991 = vld [vmem:[%s3875 + $0x398] sm:$0xff]
      %v3992 = vld [vmem:[%s3875 + $0x3a0] sm:$0xff]
      %v3993 = vld [vmem:[%s3875 + $0x3a8] sm:$0xff]
      %v3994 = vld [vmem:[%s3875 + $0x3b0] sm:$0xff]
      %v3995 = vld [vmem:[%s3875 + $0x3b8] sm:$0xff]
      %v3996 = vld [vmem:[%s3875 + $0x3c0] sm:$0xff]
      %v3997 = vld [vmem:[%s3875 + $0x3c8] sm:$0xff]
      %v3998 = vld [vmem:[%s3875 + $0x3d0] sm:$0xff]
      %v3999 = vld [vmem:[%s3875 + $0x3d8] sm:$0xff]
      %v4000 = vld [vmem:[%s3875 + $0x3e0] sm:$0xff]
      %v4001 = vld [vmem:[%s3875 + $0x3e8] sm:$0xff]
      %v4002 = vld [vmem:[%s3875 + $0x3f0] sm:$0xff]
      %v4003 = vld [vmem:[%s3875 + $0x3f8] sm:$0xff]
      %v4004 = vld [vmem:[%s3875 + $0x400] sm:$0xff]
      %v4005 = vld [vmem:[%s3875 + $0x408] sm:$0xff]
      %v4006 = vld [vmem:[%s3875 + $0x410] sm:$0xff]
      %v4007 = vld [vmem:[%s3875 + $0x418] sm:$0xff]
      %v4008 = vld [vmem:[%s3875 + $0x420] sm:$0xff]
      %v4009 = vld [vmem:[%s3875 + $0x428] sm:$0xff]
      %v4010 = vld [vmem:[%s3875 + $0x430] sm:$0xff]
      %v4011 = vld [vmem:[%s3875 + $0x438] sm:$0xff]
      %v4012 = vld [vmem:[%s3875 + $0x440] sm:$0xff]
      %v4013 = vld [vmem:[%s3875 + $0x448] sm:$0xff]
      %v4014 = vld [vmem:[%s3875 + $0x450] sm:$0xff]
      %v4015 = vld [vmem:[%s3875 + $0x458] sm:$0xff]
      %v4016 = vld [vmem:[%s3875 + $0x460] sm:$0xff]
      %v4017 = vld [vmem:[%s3875 + $0x468] sm:$0xff]
      %v4018 = vld [vmem:[%s3875 + $0x470] sm:$0xff]
      %v4019 = vld [vmem:[%s3875 + $0x478] sm:$0xff]
      %v4020 = vld [vmem:[%s3875 + $0x480] sm:$0xff]
      %v4021 = vld [vmem:[%s3875 + $0x488] sm:$0xff]
      %v4022 = vld [vmem:[%s3875 + $0x490] sm:$0xff]
      %v4023 = vld [vmem:[%s3875 + $0x498] sm:$0xff]
      %v4024 = vld [vmem:[%s3875 + $0x4a0] sm:$0xff]
      %v4025 = vld [vmem:[%s3875 + $0x4a8] sm:$0xff]
      %v4026 = vld [vmem:[%s3875 + $0x4b0] sm:$0xff]
      %v4027 = vld [vmem:[%s3875 + $0x4b8] sm:$0xff]
      %v4028 = vld [vmem:[%s3875 + $0x4c0] sm:$0xff]
      %v4029 = vld [vmem:[%s3875 + $0x4c8] sm:$0xff]
      %v4030 = vld [vmem:[%s3875 + $0x4d0] sm:$0xff]
      %v4031 = vld [vmem:[%s3875 + $0x4d8] sm:$0xff]
      %v4032 = vld [vmem:[%s3875 + $0x4e0] sm:$0xff]
      %v4033 = vld [vmem:[%s3875 + $0x4e8] sm:$0xff]
      %v4034 = vld [vmem:[%s3875 + $0x4f0] sm:$0xff]
      %v4035 = vld [vmem:[%s3875 + $0x4f8] sm:$0xff]
      %v4036 = vld [vmem:[%s3875 + $0x500] sm:$0xff]
      %v4037 = vld [vmem:[%s3875 + $0x508] sm:$0xff]
      %v4038 = vld [vmem:[%s3875 + $0x510] sm:$0xff]
      %v4039 = vld [vmem:[%s3875 + $0x518] sm:$0xff]
      %v4040 = vld [vmem:[%s3875 + $0x520] sm:$0xff]
      %v4041 = vld [vmem:[%s3875 + $0x528] sm:$0xff]
      %v4042 = vld [vmem:[%s3875 + $0x530] sm:$0xff]
      %v4043 = vld [vmem:[%s3875 + $0x538] sm:$0xff]
      %v4044 = vld [vmem:[%s3875 + $0x540] sm:$0xff]
      %v4045 = vld [vmem:[%s3875 + $0x548] sm:$0xff]
      %v4046 = vld [vmem:[%s3875 + $0x550] sm:$0xff]
      %v4047 = vld [vmem:[%s3875 + $0x558] sm:$0xff]
      %v4048 = vld [vmem:[%s3875 + $0x560] sm:$0xff]
      %v4049 = vld [vmem:[%s3875 + $0x568] sm:$0xff]
      %v4050 = vld [vmem:[%s3875 + $0x570] sm:$0xff]
      %v4051 = vld [vmem:[%s3875 + $0x578] sm:$0xff]
      %v4052 = vld [vmem:[%s3875 + $0x580] sm:$0xff]
      %v4053 = vld [vmem:[%s3875 + $0x588] sm:$0xff]
      %v4054 = vld [vmem:[%s3875 + $0x590] sm:$0xff]
      %v4055 = vld [vmem:[%s3875 + $0x598] sm:$0xff]
      %v4056 = vld [vmem:[%s3875 + $0x5a0] sm:$0xff]
      %v4057 = vld [vmem:[%s3875 + $0x5a8] sm:$0xff]
      %v4058 = vld [vmem:[%s3875 + $0x5b0] sm:$0xff]
      %v4059 = vld [vmem:[%s3875 + $0x5b8] sm:$0xff]
      %v4060 = vld [vmem:[%s3875 + $0x5c0] sm:$0xff]
      %v4061 = vld [vmem:[%s3875 + $0x5c8] sm:$0xff]
      %v4062 = vld [vmem:[%s3875 + $0x5d0] sm:$0xff]
      %v4063 = vld [vmem:[%s3875 + $0x5d8] sm:$0xff]
      %v4064 = vld [vmem:[%s3875 + $0x5e0] sm:$0xff]
      %v4065 = vld [vmem:[%s3875 + $0x5e8] sm:$0xff]
      %v4066 = vld [vmem:[%s3875 + $0x5f0] sm:$0xff]
      %v4067 = vld [vmem:[%s3875 + $0x5f8] sm:$0xff]
      %v4068 = vld [vmem:[%s3875 + $0x600] sm:$0xff]
      %v4069 = vld [vmem:[%s3875 + $0x608] sm:$0xff]
      %v4070 = vld [vmem:[%s3875 + $0x610] sm:$0xff]
      %v4071 = vld [vmem:[%s3875 + $0x618] sm:$0xff]
      %v4072 = vld [vmem:[%s3875 + $0x620] sm:$0xff]
      %v4073 = vld [vmem:[%s3875 + $0x628] sm:$0xff]
      %v4074 = vld [vmem:[%s3875 + $0x630] sm:$0xff]
      %v4075 = vld [vmem:[%s3875 + $0x638] sm:$0xff]
      %v4076 = vld [vmem:[%s3875 + $0x640] sm:$0xff]
      %v4077 = vld [vmem:[%s3875 + $0x648] sm:$0xff]
      %v4078 = vld [vmem:[%s3875 + $0x650] sm:$0xff]
      %v4079 = vld [vmem:[%s3875 + $0x658] sm:$0xff]
      %v4080 = vld [vmem:[%s3875 + $0x660] sm:$0xff]
      %v4081 = vld [vmem:[%s3875 + $0x668] sm:$0xff]
      %v4082 = vld [vmem:[%s3875 + $0x670] sm:$0xff]
      %v4083 = vld [vmem:[%s3875 + $0x678] sm:$0xff]
      %v4084 = vld [vmem:[%s3875 + $0x680] sm:$0xff]
      %v4085 = vld [vmem:[%s3875 + $0x688] sm:$0xff]
      %v4086 = vld [vmem:[%s3875 + $0x690] sm:$0xff]
      %v4087 = vld [vmem:[%s3875 + $0x698] sm:$0xff]
      %v4088 = vld [vmem:[%s3875 + $0x6a0] sm:$0xff]
      %v4089 = vld [vmem:[%s3875 + $0x6a8] sm:$0xff]
      %v4090 = vld [vmem:[%s3875 + $0x6b0] sm:$0xff]
      %v4091 = vld [vmem:[%s3875 + $0x6b8] sm:$0xff]
      %v4092 = vld [vmem:[%s3875 + $0x6c0] sm:$0xff]
      %v4093 = vld [vmem:[%s3875 + $0x6c8] sm:$0xff]
      %v4094 = vld [vmem:[%s3875 + $0x6d0] sm:$0xff]
      %v4095 = vld [vmem:[%s3875 + $0x6d8] sm:$0xff]
      %v4096 = vld [vmem:[%s3875 + $0x6e0] sm:$0xff]
      %v4097 = vld [vmem:[%s3875 + $0x6e8] sm:$0xff]
      %v4098 = vld [vmem:[%s3875 + $0x6f0] sm:$0xff]
      %v4099 = vld [vmem:[%s3875 + $0x6f8] sm:$0xff]
      %v4100 = vld [vmem:[%s3875 + $0x700] sm:$0xff]
      %v4101 = vld [vmem:[%s3875 + $0x708] sm:$0xff]
      %v4102 = vld [vmem:[%s3875 + $0x710] sm:$0xff]
      %v4103 = vld [vmem:[%s3875 + $0x718] sm:$0xff]
      %v4104 = vld [vmem:[%s3875 + $0x720] sm:$0xff]
      %v4105 = vld [vmem:[%s3875 + $0x728] sm:$0xff]
      %v4106 = vld [vmem:[%s3875 + $0x730] sm:$0xff]
      %v4107 = vld [vmem:[%s3875 + $0x738] sm:$0xff]
      %v4108 = vld [vmem:[%s3875 + $0x740] sm:$0xff]
      %v4109 = vld [vmem:[%s3875 + $0x748] sm:$0xff]
      %v4110 = vld [vmem:[%s3875 + $0x750] sm:$0xff]
      %v4111 = vld [vmem:[%s3875 + $0x758] sm:$0xff]
      %v4112 = vld [vmem:[%s3875 + $0x760] sm:$0xff]
      %v4113 = vld [vmem:[%s3875 + $0x768] sm:$0xff]
      %v4114 = vld [vmem:[%s3875 + $0x770] sm:$0xff]
      %v4115 = vld [vmem:[%s3875 + $0x778] sm:$0xff]
      %v4116 = vld [vmem:[%s3875 + $0x780] sm:$0xff]
      %v4117 = vld [vmem:[%s3875 + $0x788] sm:$0xff]
      %v4118 = vld [vmem:[%s3875 + $0x790] sm:$0xff]
      %v4119 = vld [vmem:[%s3875 + $0x798] sm:$0xff]
      %v4120 = vld [vmem:[%s3875 + $0x7a0] sm:$0xff]
      %v4121 = vld [vmem:[%s3875 + $0x7a8] sm:$0xff]
      %v4122 = vld [vmem:[%s3875 + $0x7b0] sm:$0xff]
      %v4123 = vld [vmem:[%s3875 + $0x7b8] sm:$0xff]
      %v4124 = vld [vmem:[%s3875 + $0x7c0] sm:$0xff]
      %v4125 = vld [vmem:[%s3875 + $0x7c8] sm:$0xff]
      %v4126 = vld [vmem:[%s3875 + $0x7d0] sm:$0xff]
      %v4127 = vld [vmem:[%s3875 + $0x7d8] sm:$0xff]
      %v4128 = vld [vmem:[%s3875 + $0x7e0] sm:$0xff]
      %v4129 = vld [vmem:[%s3875 + $0x7e8] sm:$0xff]
      %v4130 = vld [vmem:[%s3875 + $0x7f0] sm:$0xff]
      %v4131 = vld [vmem:[%s3875 + $0x7f8] sm:$0xff]
      %s4132 = scalar_lea.vmem %s731, 1
      %v4133 = vld [vmem:[%s4132] sm:$0x1]
      %v4135 = vperm.slane %v4133, 0
      %4137 = vmatpush.msra.mxu0 %v3891
      %4138 = vmatpush.msra.mxu0 %v3890
      %4139 = vmatpush.msra.mxu0 %v3889
      %4140 = vmatpush.msra.mxu0 %v3888
      %4141 = vmatpush.msra.mxu0 %v3887
      %4142 = vmatpush.msra.mxu0 %v3886
      %4143 = vmatpush.msra.mxu0 %v3885
      %4144 = vmatpush.msra.mxu0 %v3884
      %4145 = vmatpush.msra.mxu0 %v3883
      %4146 = vmatpush.msra.mxu0 %v3882
      %4147 = vmatpush.msra.mxu0 %v3881
      %4148 = vmatpush.msra.mxu0 %v3880
      %4149 = vmatpush.msra.mxu0 %v3879
      %4150 = vmatpush.msra.mxu0 %v3878
      %4151 = vmatpush.msra.mxu0 %v3877
      %4152 = vmatpush.msra.mxu0 %v3876
      %4153 = vmatmul.f32.gmra.mxu0 %v3843
      %v4154 = vpop.f32.mrf.mxu0
      %v4155 = vadd.f32 %v4135, %v4154
      %4156 = vmatmul.f32.gmra.mxu0 %v3859
      %v4157 = vpop.f32.mrf.mxu0
      %v4158 = vadd.f32 %v4135, %v4157
      %4159 = vdwg.mxu0
      %4160 = vmatpush.msra.mxu0 %v3907
      %4161 = vmatpush.msra.mxu0 %v3906
      %4162 = vmatpush.msra.mxu0 %v3905
      %4163 = vmatpush.msra.mxu0 %v3904
      %4164 = vmatpush.msra.mxu0 %v3903
      %4165 = vmatpush.msra.mxu0 %v3902
      %4166 = vmatpush.msra.mxu0 %v3901
      %4167 = vmatpush.msra.mxu0 %v3900
      %4168 = vmatpush.msra.mxu0 %v3899
      %4169 = vmatpush.msra.mxu0 %v3898
      %4170 = vmatpush.msra.mxu0 %v3897
      %4171 = vmatpush.msra.mxu0 %v3896
      %4172 = vmatpush.msra.mxu0 %v3895
      %4173 = vmatpush.msra.mxu0 %v3894
      %4174 = vmatpush.msra.mxu0 %v3893
      %4175 = vmatpush.msra.mxu0 %v3892
      %4176 = vmatmul.f32.gmra.mxu0 %v3844
      %v4177 = vpop.f32.mrf.mxu0
      %v4178 = vadd.f32 %v4155, %v4177
      %4179 = vmatmul.f32.gmra.mxu0 %v3860
      %v4180 = vpop.f32.mrf.mxu0
      %v4181 = vadd.f32 %v4158, %v4180
      %4182 = vdwg.mxu0
      %4183 = vmatpush.msra.mxu0 %v3923
      %4184 = vmatpush.msra.mxu0 %v3922
      %4185 = vmatpush.msra.mxu0 %v3921
      %4186 = vmatpush.msra.mxu0 %v3920
      %4187 = vmatpush.msra.mxu0 %v3919
      %4188 = vmatpush.msra.mxu0 %v3918
      %4189 = vmatpush.msra.mxu0 %v3917
      %4190 = vmatpush.msra.mxu0 %v3916
      %4191 = vmatpush.msra.mxu0 %v3915
      %4192 = vmatpush.msra.mxu0 %v3914
      %4193 = vmatpush.msra.mxu0 %v3913
      %4194 = vmatpush.msra.mxu0 %v3912
      %4195 = vmatpush.msra.mxu0 %v3911
      %4196 = vmatpush.msra.mxu0 %v3910
      %4197 = vmatpush.msra.mxu0 %v3909
      %4198 = vmatpush.msra.mxu0 %v3908
      %4199 = vmatmul.f32.gmra.mxu0 %v3845
      %v4200 = vpop.f32.mrf.mxu0
      %v4201 = vadd.f32 %v4178, %v4200
      %4202 = vmatmul.f32.gmra.mxu0 %v3861
      %v4203 = vpop.f32.mrf.mxu0
      %v4204 = vadd.f32 %v4181, %v4203
      %4205 = vdwg.mxu0
      %4206 = vmatpush.msra.mxu0 %v3939
      %4207 = vmatpush.msra.mxu0 %v3938
      %4208 = vmatpush.msra.mxu0 %v3937
      %4209 = vmatpush.msra.mxu0 %v3936
      %4210 = vmatpush.msra.mxu0 %v3935
      %4211 = vmatpush.msra.mxu0 %v3934
      %4212 = vmatpush.msra.mxu0 %v3933
      %4213 = vmatpush.msra.mxu0 %v3932
      %4214 = vmatpush.msra.mxu0 %v3931
      %4215 = vmatpush.msra.mxu0 %v3930
      %4216 = vmatpush.msra.mxu0 %v3929
      %4217 = vmatpush.msra.mxu0 %v3928
      %4218 = vmatpush.msra.mxu0 %v3927
      %4219 = vmatpush.msra.mxu0 %v3926
      %4220 = vmatpush.msra.mxu0 %v3925
      %4221 = vmatpush.msra.mxu0 %v3924
      %4222 = vmatmul.f32.gmra.mxu0 %v3846
      %v4223 = vpop.f32.mrf.mxu0
      %v4224 = vadd.f32 %v4201, %v4223
      %4225 = vmatmul.f32.gmra.mxu0 %v3862
      %v4226 = vpop.f32.mrf.mxu0
      %v4227 = vadd.f32 %v4204, %v4226
      %4228 = vdwg.mxu0
      %4229 = vmatpush.msra.mxu0 %v3955
      %4230 = vmatpush.msra.mxu0 %v3954
      %4231 = vmatpush.msra.mxu0 %v3953
      %4232 = vmatpush.msra.mxu0 %v3952
      %4233 = vmatpush.msra.mxu0 %v3951
      %4234 = vmatpush.msra.mxu0 %v3950
      %4235 = vmatpush.msra.mxu0 %v3949
      %4236 = vmatpush.msra.mxu0 %v3948
      %4237 = vmatpush.msra.mxu0 %v3947
      %4238 = vmatpush.msra.mxu0 %v3946
      %4239 = vmatpush.msra.mxu0 %v3945
      %4240 = vmatpush.msra.mxu0 %v3944
      %4241 = vmatpush.msra.mxu0 %v3943
      %4242 = vmatpush.msra.mxu0 %v3942
      %4243 = vmatpush.msra.mxu0 %v3941
      %4244 = vmatpush.msra.mxu0 %v3940
      %4245 = vmatmul.f32.gmra.mxu0 %v3847
      %v4246 = vpop.f32.mrf.mxu0
      %v4247 = vadd.f32 %v4224, %v4246
      %4248 = vmatmul.f32.gmra.mxu0 %v3863
      %v4249 = vpop.f32.mrf.mxu0
      %v4250 = vadd.f32 %v4227, %v4249
      %4251 = vdwg.mxu0
      %4252 = vmatpush.msra.mxu0 %v3971
      %4253 = vmatpush.msra.mxu0 %v3970
      %4254 = vmatpush.msra.mxu0 %v3969
      %4255 = vmatpush.msra.mxu0 %v3968
      %4256 = vmatpush.msra.mxu0 %v3967
      %4257 = vmatpush.msra.mxu0 %v3966
      %4258 = vmatpush.msra.mxu0 %v3965
      %4259 = vmatpush.msra.mxu0 %v3964
      %4260 = vmatpush.msra.mxu0 %v3963
      %4261 = vmatpush.msra.mxu0 %v3962
      %4262 = vmatpush.msra.mxu0 %v3961
      %4263 = vmatpush.msra.mxu0 %v3960
      %4264 = vmatpush.msra.mxu0 %v3959
      %4265 = vmatpush.msra.mxu0 %v3958
      %4266 = vmatpush.msra.mxu0 %v3957
      %4267 = vmatpush.msra.mxu0 %v3956
      %4268 = vmatmul.f32.gmra.mxu0 %v3848
      %v4269 = vpop.f32.mrf.mxu0
      %v4270 = vadd.f32 %v4247, %v4269
      %4271 = vmatmul.f32.gmra.mxu0 %v3864
      %v4272 = vpop.f32.mrf.mxu0
      %v4273 = vadd.f32 %v4250, %v4272
      %4274 = vdwg.mxu0
      %4275 = vmatpush.msra.mxu0 %v3987
      %4276 = vmatpush.msra.mxu0 %v3986
      %4277 = vmatpush.msra.mxu0 %v3985
      %4278 = vmatpush.msra.mxu0 %v3984
      %4279 = vmatpush.msra.mxu0 %v3983
      %4280 = vmatpush.msra.mxu0 %v3982
      %4281 = vmatpush.msra.mxu0 %v3981
      %4282 = vmatpush.msra.mxu0 %v3980
      %4283 = vmatpush.msra.mxu0 %v3979
      %4284 = vmatpush.msra.mxu0 %v3978
      %4285 = vmatpush.msra.mxu0 %v3977
      %4286 = vmatpush.msra.mxu0 %v3976
      %4287 = vmatpush.msra.mxu0 %v3975
      %4288 = vmatpush.msra.mxu0 %v3974
      %4289 = vmatpush.msra.mxu0 %v3973
      %4290 = vmatpush.msra.mxu0 %v3972
      %4291 = vmatmul.f32.gmra.mxu0 %v3849
      %v4292 = vpop.f32.mrf.mxu0
      %v4293 = vadd.f32 %v4270, %v4292
      %4294 = vmatmul.f32.gmra.mxu0 %v3865
      %v4295 = vpop.f32.mrf.mxu0
      %v4296 = vadd.f32 %v4273, %v4295
      %4297 = vdwg.mxu0
      %4298 = vmatpush.msra.mxu0 %v4003
      %4299 = vmatpush.msra.mxu0 %v4002
      %4300 = vmatpush.msra.mxu0 %v4001
      %4301 = vmatpush.msra.mxu0 %v4000
      %4302 = vmatpush.msra.mxu0 %v3999
      %4303 = vmatpush.msra.mxu0 %v3998
      %4304 = vmatpush.msra.mxu0 %v3997
      %4305 = vmatpush.msra.mxu0 %v3996
      %4306 = vmatpush.msra.mxu0 %v3995
      %4307 = vmatpush.msra.mxu0 %v3994
      %4308 = vmatpush.msra.mxu0 %v3993
      %4309 = vmatpush.msra.mxu0 %v3992
      %4310 = vmatpush.msra.mxu0 %v3991
      %4311 = vmatpush.msra.mxu0 %v3990
      %4312 = vmatpush.msra.mxu0 %v3989
      %4313 = vmatpush.msra.mxu0 %v3988
      %4314 = vmatmul.f32.gmra.mxu0 %v3850
      %v4315 = vpop.f32.mrf.mxu0
      %v4316 = vadd.f32 %v4293, %v4315
      %4317 = vmatmul.f32.gmra.mxu0 %v3866
      %v4318 = vpop.f32.mrf.mxu0
      %v4319 = vadd.f32 %v4296, %v4318
      %4320 = vdwg.mxu0
      %4321 = vmatpush.msra.mxu0 %v4019
      %4322 = vmatpush.msra.mxu0 %v4018
      %4323 = vmatpush.msra.mxu0 %v4017
      %4324 = vmatpush.msra.mxu0 %v4016
      %4325 = vmatpush.msra.mxu0 %v4015
      %4326 = vmatpush.msra.mxu0 %v4014
      %4327 = vmatpush.msra.mxu0 %v4013
      %4328 = vmatpush.msra.mxu0 %v4012
      %4329 = vmatpush.msra.mxu0 %v4011
      %4330 = vmatpush.msra.mxu0 %v4010
      %4331 = vmatpush.msra.mxu0 %v4009
      %4332 = vmatpush.msra.mxu0 %v4008
      %4333 = vmatpush.msra.mxu0 %v4007
      %4334 = vmatpush.msra.mxu0 %v4006
      %4335 = vmatpush.msra.mxu0 %v4005
      %4336 = vmatpush.msra.mxu0 %v4004
      %4337 = vmatmul.f32.gmra.mxu0 %v3851
      %v4338 = vpop.f32.mrf.mxu0
      %v4339 = vadd.f32 %v4316, %v4338
      %4340 = vmatmul.f32.gmra.mxu0 %v3867
      %v4341 = vpop.f32.mrf.mxu0
      %v4342 = vadd.f32 %v4319, %v4341
      %4343 = vdwg.mxu0
      %4344 = vmatpush.msra.mxu0 %v4035
      %4345 = vmatpush.msra.mxu0 %v4034
      %4346 = vmatpush.msra.mxu0 %v4033
      %4347 = vmatpush.msra.mxu0 %v4032
      %4348 = vmatpush.msra.mxu0 %v4031
      %4349 = vmatpush.msra.mxu0 %v4030
      %4350 = vmatpush.msra.mxu0 %v4029
      %4351 = vmatpush.msra.mxu0 %v4028
      %4352 = vmatpush.msra.mxu0 %v4027
      %4353 = vmatpush.msra.mxu0 %v4026
      %4354 = vmatpush.msra.mxu0 %v4025
      %4355 = vmatpush.msra.mxu0 %v4024
      %4356 = vmatpush.msra.mxu0 %v4023
      %4357 = vmatpush.msra.mxu0 %v4022
      %4358 = vmatpush.msra.mxu0 %v4021
      %4359 = vmatpush.msra.mxu0 %v4020
      %4360 = vmatmul.f32.gmra.mxu0 %v3852
      %v4361 = vpop.f32.mrf.mxu0
      %v4362 = vadd.f32 %v4339, %v4361
      %4363 = vmatmul.f32.gmra.mxu0 %v3868
      %v4364 = vpop.f32.mrf.mxu0
      %v4365 = vadd.f32 %v4342, %v4364
      %4366 = vdwg.mxu0
      %4367 = vmatpush.msra.mxu0 %v4051
      %4368 = vmatpush.msra.mxu0 %v4050
      %4369 = vmatpush.msra.mxu0 %v4049
      %4370 = vmatpush.msra.mxu0 %v4048
      %4371 = vmatpush.msra.mxu0 %v4047
      %4372 = vmatpush.msra.mxu0 %v4046
      %4373 = vmatpush.msra.mxu0 %v4045
      %4374 = vmatpush.msra.mxu0 %v4044
      %4375 = vmatpush.msra.mxu0 %v4043
      %4376 = vmatpush.msra.mxu0 %v4042
      %4377 = vmatpush.msra.mxu0 %v4041
      %4378 = vmatpush.msra.mxu0 %v4040
      %4379 = vmatpush.msra.mxu0 %v4039
      %4380 = vmatpush.msra.mxu0 %v4038
      %4381 = vmatpush.msra.mxu0 %v4037
      %4382 = vmatpush.msra.mxu0 %v4036
      %4383 = vmatmul.f32.gmra.mxu0 %v3853
      %v4384 = vpop.f32.mrf.mxu0
      %v4385 = vadd.f32 %v4362, %v4384
      %4386 = vmatmul.f32.gmra.mxu0 %v3869
      %v4387 = vpop.f32.mrf.mxu0
      %v4388 = vadd.f32 %v4365, %v4387
      %4389 = vdwg.mxu0
      %4390 = vmatpush.msra.mxu0 %v4067
      %4391 = vmatpush.msra.mxu0 %v4066
      %4392 = vmatpush.msra.mxu0 %v4065
      %4393 = vmatpush.msra.mxu0 %v4064
      %4394 = vmatpush.msra.mxu0 %v4063
      %4395 = vmatpush.msra.mxu0 %v4062
      %4396 = vmatpush.msra.mxu0 %v4061
      %4397 = vmatpush.msra.mxu0 %v4060
      %4398 = vmatpush.msra.mxu0 %v4059
      %4399 = vmatpush.msra.mxu0 %v4058
      %4400 = vmatpush.msra.mxu0 %v4057
      %4401 = vmatpush.msra.mxu0 %v4056
      %4402 = vmatpush.msra.mxu0 %v4055
      %4403 = vmatpush.msra.mxu0 %v4054
      %4404 = vmatpush.msra.mxu0 %v4053
      %4405 = vmatpush.msra.mxu0 %v4052
      %4406 = vmatmul.f32.gmra.mxu0 %v3854
      %v4407 = vpop.f32.mrf.mxu0
      %v4408 = vadd.f32 %v4385, %v4407
      %4409 = vmatmul.f32.gmra.mxu0 %v3870
      %v4410 = vpop.f32.mrf.mxu0
      %v4411 = vadd.f32 %v4388, %v4410
      %4412 = vdwg.mxu0
      %4413 = vmatpush.msra.mxu0 %v4083
      %4414 = vmatpush.msra.mxu0 %v4082
      %4415 = vmatpush.msra.mxu0 %v4081
      %4416 = vmatpush.msra.mxu0 %v4080
      %4417 = vmatpush.msra.mxu0 %v4079
      %4418 = vmatpush.msra.mxu0 %v4078
      %4419 = vmatpush.msra.mxu0 %v4077
      %4420 = vmatpush.msra.mxu0 %v4076
      %4421 = vmatpush.msra.mxu0 %v4075
      %4422 = vmatpush.msra.mxu0 %v4074
      %4423 = vmatpush.msra.mxu0 %v4073
      %4424 = vmatpush.msra.mxu0 %v4072
      %4425 = vmatpush.msra.mxu0 %v4071
      %4426 = vmatpush.msra.mxu0 %v4070
      %4427 = vmatpush.msra.mxu0 %v4069
      %4428 = vmatpush.msra.mxu0 %v4068
      %4429 = vmatmul.f32.gmra.mxu0 %v3855
      %v4430 = vpop.f32.mrf.mxu0
      %v4431 = vadd.f32 %v4408, %v4430
      %4432 = vmatmul.f32.gmra.mxu0 %v3871
      %v4433 = vpop.f32.mrf.mxu0
      %v4434 = vadd.f32 %v4411, %v4433
      %4435 = vdwg.mxu0
      %4436 = vmatpush.msra.mxu0 %v4099
      %4437 = vmatpush.msra.mxu0 %v4098
      %4438 = vmatpush.msra.mxu0 %v4097
      %4439 = vmatpush.msra.mxu0 %v4096
      %4440 = vmatpush.msra.mxu0 %v4095
      %4441 = vmatpush.msra.mxu0 %v4094
      %4442 = vmatpush.msra.mxu0 %v4093
      %4443 = vmatpush.msra.mxu0 %v4092
      %4444 = vmatpush.msra.mxu0 %v4091
      %4445 = vmatpush.msra.mxu0 %v4090
      %4446 = vmatpush.msra.mxu0 %v4089
      %4447 = vmatpush.msra.mxu0 %v4088
      %4448 = vmatpush.msra.mxu0 %v4087
      %4449 = vmatpush.msra.mxu0 %v4086
      %4450 = vmatpush.msra.mxu0 %v4085
      %4451 = vmatpush.msra.mxu0 %v4084
      %4452 = vmatmul.f32.gmra.mxu0 %v3856
      %v4453 = vpop.f32.mrf.mxu0
      %v4454 = vadd.f32 %v4431, %v4453
      %4455 = vmatmul.f32.gmra.mxu0 %v3872
      %v4456 = vpop.f32.mrf.mxu0
      %v4457 = vadd.f32 %v4434, %v4456
      %4458 = vdwg.mxu0
      %4459 = vmatpush.msra.mxu0 %v4115
      %4460 = vmatpush.msra.mxu0 %v4114
      %4461 = vmatpush.msra.mxu0 %v4113
      %4462 = vmatpush.msra.mxu0 %v4112
      %4463 = vmatpush.msra.mxu0 %v4111
      %4464 = vmatpush.msra.mxu0 %v4110
      %4465 = vmatpush.msra.mxu0 %v4109
      %4466 = vmatpush.msra.mxu0 %v4108
      %4467 = vmatpush.msra.mxu0 %v4107
      %4468 = vmatpush.msra.mxu0 %v4106
      %4469 = vmatpush.msra.mxu0 %v4105
      %4470 = vmatpush.msra.mxu0 %v4104
      %4471 = vmatpush.msra.mxu0 %v4103
      %4472 = vmatpush.msra.mxu0 %v4102
      %4473 = vmatpush.msra.mxu0 %v4101
      %4474 = vmatpush.msra.mxu0 %v4100
      %4475 = vmatmul.f32.gmra.mxu0 %v3857
      %v4476 = vpop.f32.mrf.mxu0
      %v4477 = vadd.f32 %v4454, %v4476
      %4478 = vmatmul.f32.gmra.mxu0 %v3873
      %v4479 = vpop.f32.mrf.mxu0
      %v4480 = vadd.f32 %v4457, %v4479
      %4481 = vdwg.mxu0
      %4482 = vmatpush.msra.mxu0 %v4131
      %4483 = vmatpush.msra.mxu0 %v4130
      %4484 = vmatpush.msra.mxu0 %v4129
      %4485 = vmatpush.msra.mxu0 %v4128
      %4486 = vmatpush.msra.mxu0 %v4127
      %4487 = vmatpush.msra.mxu0 %v4126
      %4488 = vmatpush.msra.mxu0 %v4125
      %4489 = vmatpush.msra.mxu0 %v4124
      %4490 = vmatpush.msra.mxu0 %v4123
      %4491 = vmatpush.msra.mxu0 %v4122
      %4492 = vmatpush.msra.mxu0 %v4121
      %4493 = vmatpush.msra.mxu0 %v4120
      %4494 = vmatpush.msra.mxu0 %v4119
      %4495 = vmatpush.msra.mxu0 %v4118
      %4496 = vmatpush.msra.mxu0 %v4117
      %4497 = vmatpush.msra.mxu0 %v4116
      %4498 = vmatmul.f32.gmra.mxu0 %v3858
      %v4499 = vpop.f32.mrf.mxu0
      %v4500 = vadd.f32 %v4477, %v4499
      %4501 = vmatmul.f32.gmra.mxu0 %v3874
      %v4502 = vpop.f32.mrf.mxu0
      %v4503 = vadd.f32 %v4480, %v4502
      %4504 = vdwg.mxu0
      %s4505 = scalar_lea.vmem %s735, 1
      %v4506 = vld [vmem:[%s4505] sm:$0x1]
      %s4507 = scalar_lea.vmem %s739, 1
      %v4508 = vld [vmem:[%s4507] sm:$0x1]
      %v4509 = vadd.f32 %v3365, %v4500
      %v4510 = vadd.f32 %v3366, %v4503
      %v4511 = vsel %vm791, %v4509, 0.0
      %4512 = vadd.xlane.f32.xlu0 %v4511
      %v4513 = vpop.xlane.xlu0 %4512
      %v4514 = vsel %vm791, %v4510, 0.0
      %4515 = vadd.xlane.f32.xlu0 %v4514
      %v4516 = vpop.xlane.xlu0 %4515
      %v4517 = vmul.f32 %v4513, %v1432
      %v4518 = vmul.f32 %v4516, %v1432
      %v4519 = vsub.f32 %v4509, %v4517
      %v4520 = vsub.f32 %v4510, %v4518
      %v4521 = vmul.f32 %v4519, %v4519
      %v4522 = vmul.f32 %v4520, %v4520
      %v4523 = vsel %vm791, %v4521, 0.0
      %4524 = vadd.xlane.f32.xlu0 %v4523
      %v4525 = vpop.xlane.xlu0 %4524
      %v4526 = vsel %vm791, %v4522, 0.0
      %4527 = vadd.xlane.f32.xlu0 %v4526
      %v4528 = vpop.xlane.xlu0 %4527
      %v4529 = vmul.f32 %v4525, %v1432
      %v4530 = vmul.f32 %v4528, %v1432
      %v4531 = vadd.f32 %v4529, 1e-05
      %v4532 = vadd.f32 %v4530, 1e-05
      %v4533 = vrsqrt.pop %v4531
      %v4534 = vmul.f32 %v4533, %v4531
      %v4535 = vmul.f32 %v4534, %v4533
      %v4536 = vmul.f32 0.5, %v4535
      %v4537 = vsub.f32 1.5, %v4536
      %v4538 = vmul.f32 %v4533, %v4537
      %vm4539 = vweird.f32 %v4531
      %vm4540 = vweird.f32 %v4533
      %vm4541 = vmor %vm4539, %vm4540
      %v4542 = vsel %vm4541, %v4533, %v4538
      %v4543 = vrsqrt.pop %v4532
      %v4544 = vmul.f32 %v4543, %v4532
      %v4545 = vmul.f32 %v4544, %v4543
      %v4546 = vmul.f32 0.5, %v4545
      %v4547 = vsub.f32 1.5, %v4546
      %v4548 = vmul.f32 %v4543, %v4547
      %vm4549 = vweird.f32 %v4532
      %vm4550 = vweird.f32 %v4543
      %vm4551 = vmor %vm4549, %vm4550
      %v4552 = vsel %vm4551, %v4543, %v4548
      %v4553 = vmul.f32 %v4519, %v4542
      %v4554 = vmul.f32 %v4520, %v4552
      %v4556 = vperm.slane %v4506, 0
      %v4558 = vmul.f32 %v4553, %v4556
      %v4559 = vmul.f32 %v4554, %v4556
      %v4561 = vperm.slane %v4508, 0
      %v4563 = vadd.f32 %v4558, %v4561
      %v4564 = vadd.f32 %v4559, %v4561
      %4565 = vst.msk [vmem:[%s744] sm:$0xff] %vm791, %v4563
      %4566 = vst.msk [vmem:[%s744 + $0x8] sm:$0xff] %vm791, %v4564
      %p4567 = scmp.lt.s32.totalorder %s26, 1
      %s4568 = scalar_select %p4567, %s26, 1
      %s4569 = smul.addr %s4568, 2
      %s4570 = smul.addr %s4569, 8
      %s4571 = scalar_lea.vmem %s15, %s4570
      // Predicated region
      $region81: #{cael_forward.2} parent=79 // pred_check
        %p4572 = pneg %p434
      $region82: #{cael_forward.2} parent=79 // pred_check_branch
        %4574 = sbr.rel (%p4572) target = $region84
      $region83: #{cael_forward.2} parent=79 // pred_region
        _
      $region84: #{cael_forward.2} parent=79 // pred_fallthru
        _
    $region80: #{cael_forward.2} parent=5 // pred_fallthru
      _
    %p4575 = scmp.le.s32.totalorder 2, %s21
    // Predicated region
    $region85: #{cael_forward.2} parent=5 // pred_check
      %p4576 = pneg %p4575
    $region86: #{cael_forward.2} parent=5 // pred_check_branch
      %4578 = sbr.rel (%p4576) target = $region88
    $region87: #{cael_forward.2} parent=5 // pred_region
      %s4579 = ssub.s32 %s21, 2
      // Predicated region
      $region89: #{cael_forward.2} parent=87 // pred_check
        %p4580 = pneg %p440
      $region90: #{cael_forward.2} parent=87 // pred_check_branch
        %4582 = sbr.rel (%p4580) target = $region92
      $region91: #{cael_forward.2} parent=87 // pred_region
        %p4583 = scmp.lt.s32.totalorder %s27, 1
        %s4584 = scalar_select %p4583, %s27, 1
        %s4585 = smul.addr %s4584, 2
        %s4586 = smul.addr %s4585, 8
        %s4587 = scalar_lea.vmem %s15, %s4586
      $region92: #{cael_forward.2} parent=87 // pred_fallthru
        _
    $region88: #{cael_forward.2} parent=5 // pred_fallthru
      _
  $region6: #{cael_forward.2} parent=0 // loop_footer
    %s25 = sadd.s32 1, %s21
  $region7: #{cael_forward.2} parent=0 // loop_footer_branch
    %20 = sbr.rel target = $region3
  $region8: #{cael_forward.2} parent=0 // loop_exit
    _

</llo_original>
